<compile_context>
chip_gen: v5e
topology: v5e:2x2
jax: 0.10.0
libtpu: 0.0.40
codegen_flags: <defaults>
</compile_context>

<pallas_src>
import functools

import numpy as np

import jax
import jax.numpy as jnp
from jax.experimental import pallas as pl
from jax.experimental.pallas import tpu as pltpu


# ----------------------------- fused Pallas kernel --------------------------

# bias-pack row order (one bias per sublane row of the packed (NB,128) operand)
_BIAS_ROWS = dict(bs1=0, bs2=1, mb1=2, mb2=3, mb3=4,
                  bfr1=5, bfr2=6, btr1=7, btr2=8,
                  bcl1=9, bcl2=10, bcr1=11, bcr2=12,
                  bgt=13, bgc=14, bga=15, ba1=16, ba2=17)


def _make_fused_kernel(Bt, c, t, H, P):
    """Fused forward for one batch tile of Bt samples (static dims)."""
    f32, bf16 = jnp.float32, jnp.bfloat16
    R = _BIAS_ROWS

    def kernel(scalar, food, food_rel, thorn_rel, thorn_mask,
               clone, clone_rel, clone_mask,
               ws1, ws2, m1, m2, m3,
               wfr1, wfr2, wtr1, wtr2, wcl1, wcl2, wcr1, wcr2,
               wgt, wgc, wga, wa1, wa2, biases,
               o_ref, cat4, cat3):

        def dot(x, w_ref):                       # bf16 MXU, f32 accumulate
            return jnp.dot(x.astype(bf16), w_ref[...], preferred_element_type=f32)

        def lin(x, w_ref, brow):                 # Linear + bias + ReLU (f32 epilogue)
            n = w_ref.shape[1]
            return jnp.maximum(dot(x, w_ref) + biases[brow:brow + 1, :n], 0.0)

        # ---- scalar encoder: MLP(scalar, H/4, H, layer_num=2) ----
        s = lin(lin(scalar[...], ws1, R['bs1']), ws2, R['bs2'])          # (Bt, H)

        # ---- food encoder: conv stack as dense matmuls + fused spatial max ----
        f = lin(lin(food[...], m1, R['mb1']), m2, R['mb2'])
        f3 = lin(f, m3, R['mb3'])                                        # (Bt, P*H)
        food_feat = f3[:, 0:H]
        for p in range(1, P):                    # spatial max over P positions
            food_feat = jnp.maximum(food_feat, f3[:, p * H:(p + 1) * H])  # (Bt, H)

        # ---- relation encoders (fused 2-layer MLPs) ----
        fr = lin(lin(food_rel[...], wfr1, R['bfr1']), wfr2, R['bfr2'])   # (Bt*c,   H)
        tr = lin(lin(thorn_rel[...], wtr1, R['btr1']), wtr2, R['btr2'])  # (Bt*c*t, H)
        cl = lin(lin(clone[...], wcl1, R['bcl1']), wcl2, R['bcl2'])      # (Bt*c,   H)
        cr = lin(lin(clone_rel[...], wcr1, R['bcr1']), wcr2, R['bcr2'])  # (Bt*c*c, H)

        # ---- RelationGCN: masked max over thorn / 2nd clone axis ----
        trm = lin(tr, wgt, R['bgt']) * thorn_mask[...]                   # (Bt*c*t, H)
        trm = jnp.max(trm.reshape(Bt * c, t, H), axis=1)                 # (Bt*c, H)
        crm = lin(cr, wgc, R['bgc']) * clone_mask[...]                   # (Bt*c*c, H)
        crm = jnp.max(crm.reshape(Bt * c, c, H), axis=1)                 # (Bt*c, H)

        # concat([cl, fr, trm, crm]) @ W_agg as ONE K=4H dot via scratch staging
        cat4[:, 0 * H:1 * H] = cl
        cat4[:, 1 * H:2 * H] = fr
        cat4[:, 2 * H:3 * H] = trm
        cat4[:, 3 * H:4 * H] = crm
        clone_out = lin(cat4[...], wga, R['bga'])                        # (Bt*c, H)
        clone_max = jnp.max(clone_out.reshape(Bt, c, H), axis=1)         # (Bt, H)

        # ---- final aggregation: MLP(concat([s, food, clone]), H, E, 2) ----
        cat3[:, 0 * H:1 * H] = s
        cat3[:, 1 * H:2 * H] = food_feat
        cat3[:, 2 * H:3 * H] = clone_max
        h = lin(cat3[...], wa1, R['ba1'])                                # (Bt, H)
        o_ref[...] = lin(h, wa2, R['ba2'])                               # (Bt, E)

    return kernel


# ------------------------------- JAX wrapper ---------------------------------

def _choose_batch_tile(B, c, t):
    """Largest batch tile keeping the biggest per-step relation row block at
    ~2048 rows (double-buffered inputs stay well inside v7x's 64 MiB VMEM;
    v5e/v6e have 2x headroom and like big tiles anyway).  Prefer multiples of
    8 so second-minor block dims stay (8,128)-aligned."""
    target = max(1, 2048 // max(c * t, c * c, 1))
    if B <= target:
        return B
    for cand in range(min(B, target), 0, -1):
        if B % cand == 0 and cand % 8 == 0:
            return cand
    return B        # fall back to a single block rather than misaligned tiles


@functools.partial(jax.jit,
                   static_argnames=("hidden", "encode", "conv_positions", "batch_tile"))
def encoder_actor_forward(weights, scalar, food_nchw, food_relation, thorn_relation,
                          thorn_mask, clone, clone_relation, clone_mask, *,
                          hidden, encode, conv_positions, batch_tile=None):
    f32, bf16 = jnp.float32, jnp.bfloat16
    B = scalar.shape[0]
    c = clone.shape[1]
    t = thorn_relation.shape[2]
    H, E, P = hidden, encode, conv_positions

    Bt = batch_tile if batch_tile is not None else _choose_batch_tile(B, c, t)
    assert B % Bt == 0, (B, Bt)
    grid = (B // Bt,)

    # Layout plumbing only (wrapper-side XLA glue; the kernel is pure compute):
    food_flat = jnp.transpose(food_nchw, (0, 2, 3, 1)).reshape(B, -1).astype(bf16)
    thorn_mask_rows = jnp.broadcast_to(
        thorn_mask.astype(f32)[:, None, :, None], (B, c, t, H)).reshape(B * c * t, H)
    clone_mask_rows = jnp.broadcast_to(
        clone_mask.astype(f32)[:, None, :, None], (B, c, c, H)).reshape(B * c * c, H)

    data = [
        scalar.astype(bf16),
        food_flat,
        food_relation.reshape(B * c, -1).astype(bf16),
        thorn_relation.reshape(B * c * t, -1).astype(bf16),
        thorn_mask_rows,
        clone.reshape(B * c, -1).astype(bf16),
        clone_relation.reshape(B * c * c, -1).astype(bf16),
        clone_mask_rows,
    ]

    def row_spec(rows_per_batch, feat):
        return pl.BlockSpec((Bt * rows_per_batch, feat), lambda i: (i, 0))

    data_specs = [
        row_spec(1, scalar.shape[1]),
        row_spec(1, food_flat.shape[1]),
        row_spec(c, food_relation.shape[-1]),
        row_spec(c * t, thorn_relation.shape[-1]),
        row_spec(c * t, H),
        row_spec(c, clone.shape[-1]),
        row_spec(c * c, clone_relation.shape[-1]),
        row_spec(c * c, H),
    ]
    # Weights + packed biases: full block, index (0,0) -> DMA'd once and kept
    # VMEM-resident across the whole row grid (incl. the 1024x128 conv1 matrix).
    weight_specs = [pl.BlockSpec(w.shape, lambda i: (0, 0)) for w in weights]

    kernel = _make_fused_kernel(Bt, c, t, H, P)
    out = pl.pallas_call(
        kernel,
        out_shape=jax.ShapeDtypeStruct((B, E), f32),
        grid_spec=pltpu.PrefetchScalarGridSpec(
            num_scalar_prefetch=0,
            grid=grid,
            in_specs=data_specs + weight_specs,
            out_specs=pl.BlockSpec((Bt, E), lambda i: (i, 0)),
            scratch_shapes=[pltpu.VMEM((Bt * c, 4 * H), f32),   # concat staging (gcn_agg)
                            pltpu.VMEM((Bt, 3 * H), f32)],      # concat staging (agg)
        ),
        compiler_params=pltpu.CompilerParams(
            dimension_semantics=("parallel",),
            vmem_limit_bytes=48 * 1024 * 1024),
    )(*data, *weights)
    return out


# -------------------- parameter preprocessing (wrapper glue) -----------------

def conv_as_matmul(w_oihw, b, hi, wi, stride, pad):
    """Expand a Conv2d (OIHW weight, stride, pad) over a fixed (hi, wi) input
    into an equivalent dense matrix.  Input rows are flattened NHWC (y, x, ci);
    output cols are flattened (oy, ox, co)."""
    co_n, ci_n, kh, kw = w_oihw.shape
    ho = (hi + 2 * pad - kh) // stride + 1
    wo = (wi + 2 * pad - kw) // stride + 1
    rows, cols, widx = [], [], []
    for oy in range(ho):
        for ox in range(wo):
            for ky in range(kh):
                for kx in range(kw):
                    iy = stride * oy + ky - pad
                    ix = stride * ox + kx - pad
                    if 0 <= iy < hi and 0 <= ix < wi:
                        for ci in range(ci_n):
                            for co in range(co_n):
                                rows.append((iy * wi + ix) * ci_n + ci)
                                cols.append((oy * wo + ox) * co_n + co)
                                widx.append(((co * ci_n + ci) * kh + ky) * kw + kx)
    rows = np.asarray(rows, dtype=np.int32)
    cols = np.asarray(cols, dtype=np.int32)
    widx = np.asarray(widx, dtype=np.int32)
    m = jnp.zeros((hi * wi * ci_n, ho * wo * co_n), jnp.float32)
    m = m.at[rows, cols].set(jnp.reshape(w_oihw, (-1,))[widx])
    b_rep = jnp.tile(b, ho * wo).reshape(1, ho * wo * co_n).astype(jnp.float32)
    return m, b_rep, ho, wo


def _pack_biases(biases, min_lanes=128):
    """Stack every bias as one sublane row of a single f32 operand (left
    aligned, zero padded) so 18 tiny (1,N) operands become one DMA / tile."""
    widest = max(int(np.asarray(jax.device_get(b)).size) for b in biases)
    lanes = max(min_lanes, ((widest + 127) // 128) * 128)
    packed = np.zeros((len(biases), lanes), np.float32)
    for i, b in enumerate(biases):
        v = np.asarray(jax.device_get(b), np.float32).reshape(-1)
        packed[i, :v.size] = v
    return jnp.asarray(packed)


def prepare_kernel_weights(params, food_hw):
    """Flatten module parameters into the operand tuple the fused kernel
    consumes: bf16 weight matrices (convs pre-expanded to dense maps, concat
    weights un-split) + one packed f32 bias operand.  Returns (weights, P)."""
    hi, wi = food_hw
    bf16 = jnp.bfloat16

    (w1c, b1c, _, s1, p1), (w2c, b2c, _, s2, p2), (w3c, b3c, _, s3, p3) = params['food_convs']
    m1, mb1, h1, w1_ = conv_as_matmul(w1c, b1c, hi, wi, s1, p1)
    m2, mb2, h2, w2_ = conv_as_matmul(w2c, b2c, h1, w1_, s2, p2)
    m3, mb3, h3, w3_ = conv_as_matmul(w3c, b3c, h2, w2_, s3, p3)
    P = h3 * w3_

    ws1, bs1, ws2, bs2 = params['scalar']
    wfr1, bfr1, wfr2, bfr2 = params['food_rel']
    wtr1, btr1, wtr2, btr2 = params['thorn_rel']
    wcl1, bcl1, wcl2, bcl2 = params['clone']
    wcr1, bcr1, wcr2, bcr2 = params['clone_rel']
    wgt, bgt = params['gcn_thorn']
    wgc, bgc = params['gcn_clone']
    wga, bga = params['gcn_agg']
    wa1, ba1, wa2, ba2 = params['agg']

    weight_mats = [ws1, ws2, m1, m2, m3,
                   wfr1, wfr2, wtr1, wtr2, wcl1, wcl2, wcr1, wcr2,
                   wgt, wgc, wga, wa1, wa2]
    biases = [bs1, bs2, mb1, mb2, mb3,
              bfr1, bfr2, btr1, btr2, bcl1, bcl2, bcr1, bcr2,
              bgt, bgc, bga, ba1, ba2]            # order == _BIAS_ROWS
    bias_pack = _pack_biases(biases)

    weights = tuple(w.astype(bf16) for w in weight_mats) + (bias_pack,)
    return weights, P


def init_params(key, scalar_shape, food_shape, food_relation_shape,
                thorn_relation_shape, clone_shape, clone_relation_shape,
                hidden_shape, encode_shape):
    keys = iter(jax.random.split(key, 64))

    def lin(in_, out_):
        w = jax.random.normal(next(keys), (in_, out_), jnp.float32) / jnp.sqrt(float(in_))
        b = jax.random.normal(next(keys), (out_,), jnp.float32) * 0.01
        return w, b

    def mlp(in_, mid, out_):
        return lin(in_, mid) + lin(mid, out_)      # (w1, b1, w2, b2)

    H = hidden_shape
    params = {
        'hidden': H,
        'encode': encode_shape,
        'scalar': mlp(scalar_shape, H // 4, H),
        'food_rel': mlp(food_relation_shape, H // 2, H),
        'thorn_rel': mlp(thorn_relation_shape, H // 4, H),
        'clone': mlp(clone_shape, H // 4, H),
        'clone_rel': mlp(clone_relation_shape, H // 4, H),
        'gcn_thorn': lin(H, H),
        'gcn_clone': lin(H, H),
        'gcn_agg': lin(4 * H, H),
        'agg': mlp(3 * H, H, encode_shape),
    }
    # food conv stack: Conv2d(in, out, k, s, k//2) + ReLU, three times (OIHW)
    convs = []
    ks, st, sh = [5, 3, 1], [4, 2, 1], [H // 4, H // 2, H]
    cin = food_shape
    for k, s_, cout in zip(ks, st, sh):
        wc = jax.random.normal(next(keys), (cout, cin, k, k), jnp.float32) / jnp.sqrt(
            float(cin * k * k))
        bc = jax.random.normal(next(keys), (cout,), jnp.float32) * 0.01
        convs.append((wc, bc, k, s_, k // 2))
        cin = cout
    params['food_convs'] = convs
    return params


# ------------------------- pure-JAX (XLA) reference --------------------------

def reference_forward(params, scalar, food_nchw, food_relation, thorn_relation,
                      thorn_mask, clone, clone_relation, clone_mask,
                      matmul_dtype=jnp.float32):
    """Module reference.  matmul_dtype=float32 -> exact module semantics;
    matmul_dtype=bfloat16 -> same bf16-operand / f32-accumulate casts as the
    Pallas kernel (for a tight numerical cross-check)."""
    f32 = jnp.float32
    prec = (jax.lax.Precision.HIGHEST if matmul_dtype == jnp.float32
            else jax.lax.Precision.DEFAULT)

    def mm(x, w):
        return jnp.matmul(x.astype(matmul_dtype), w.astype(matmul_dtype),
                          precision=prec, preferred_element_type=f32)

    def lin(x, w, b):
        return jnp.maximum(mm(x, w) + b, 0.0)

    def mlp2(x, p):
        w1, b1, w2, b2 = p
        return lin(lin(x, w1, b1), w2, b2)

    B = scalar.shape[0]
    s = mlp2(scalar, params['scalar'])

    x = food_nchw
    for (wc, bc, _, st, pd) in params['food_convs']:
        x = jax.lax.conv_general_dilated(
            x.astype(matmul_dtype), wc.astype(matmul_dtype),
            window_strides=(st, st), padding=[(pd, pd), (pd, pd)],
            dimension_numbers=('NCHW', 'OIHW', 'NCHW'),
            precision=prec, preferred_element_type=f32)
        x = jnp.maximum(x + bc.reshape(1, -1, 1, 1), 0.0)
    food_feat = jnp.max(x.reshape(B, x.shape[1], -1), axis=-1)

    fr = mlp2(food_relation, params['food_rel'])
    tr = mlp2(thorn_relation, params['thorn_rel'])
    cl = mlp2(clone, params['clone'])
    cr = mlp2(clone_relation, params['clone_rel'])

    wgt, bgt = params['gcn_thorn']
    wgc, bgc = params['gcn_clone']
    wga, bga = params['gcn_agg']
    trm = jnp.max(lin(tr, wgt, bgt) * thorn_mask[:, None, :, None], axis=2)
    crm = jnp.max(lin(cr, wgc, bgc) * clone_mask[:, None, :, None], axis=2)
    agg = jnp.concatenate([cl, fr, trm, crm], axis=2)
    clone_out = lin(agg, wga, bga)
    clone_max = jnp.max(clone_out, axis=1)
    return mlp2(jnp.concatenate([s, food_feat, clone_max], axis=1), params['agg'])


# ---------------------------------- main --------------------------------------

if __name__ == "__main__":
    # Small demo shapes; B=16 with batch_tile=8 exercises a real 2-step
    # "parallel" row grid with (8,128)-aligned blocks.
    B = 16
    scalar_shape = 16
    food_shape = 4           # food channels (NCHW input)
    food_relation_shape = 12
    thorn_relation_shape = 12
    clone_shape = 16
    clone_relation_shape = 12
    hidden_shape = 32
    encode_shape = 32
    c, t, Hs, Ws = 8, 8, 16, 16

    key = jax.random.PRNGKey(0)
    kp, kd = jax.random.split(key)
    params = init_params(kp, scalar_shape, food_shape, food_relation_shape,
                         thorn_relation_shape, clone_shape, clone_relation_shape,
                         hidden_shape, encode_shape)
    weights, P = prepare_kernel_weights(params, (Hs, Ws))

    ks = jax.random.split(kd, 8)
    scalar = jax.random.normal(ks[0], (B, scalar_shape), jnp.float32)
    food = jax.random.normal(ks[1], (B, food_shape, Hs, Ws), jnp.float32)          # NCHW
    food_relation = jax.random.normal(ks[2], (B, c, food_relation_shape), jnp.float32)
    thorn_relation = jax.random.normal(ks[3], (B, c, t, thorn_relation_shape), jnp.float32)
    thorn_mask = (jax.random.uniform(ks[4], (B, t)) > 0.3).astype(jnp.float32)
    clone = jax.random.normal(ks[5], (B, c, clone_shape), jnp.float32)
    clone_relation = jax.random.normal(ks[6], (B, c, c, clone_relation_shape), jnp.float32)
    clone_mask = (jax.random.uniform(ks[7], (B, c)) > 0.3).astype(jnp.float32)

    out = encoder_actor_forward(weights, scalar, food, food_relation, thorn_relation,
                                thorn_mask, clone, clone_relation, clone_mask,
                                hidden=hidden_shape, encode=encode_shape,
                                conv_positions=P, batch_tile=8)
    out = jax.block_until_ready(out)
    assert out.shape == (B, encode_shape), out.shape
    assert bool(jnp.all(jnp.isfinite(out)))

    # Tight check vs. a bf16-matmul-matched XLA reference (same casts as kernel).
    ref_bf16 = reference_forward(params, scalar, food, food_relation, thorn_relation,
                                 thorn_mask, clone, clone_relation, clone_mask,
                                 matmul_dtype=jnp.bfloat16)
    err = float(jnp.max(jnp.abs(out - ref_bf16)))
    tol = 1e-2 * (1.0 + float(jnp.max(jnp.abs(ref_bf16))))
    assert err < tol, f"bf16-matched reference mismatch: max abs err {err} (tol {tol})"

    # Loose sanity check vs. the exact f32 module reference (bf16 MXU rounding only).
    ref_f32 = reference_forward(params, scalar, food, food_relation, thorn_relation,
                                thorn_mask, clone, clone_relation, clone_mask,
                                matmul_dtype=jnp.float32)
    err32 = float(jnp.max(jnp.abs(out - ref_f32)))
    tol32 = 5e-2 * (1.0 + float(jnp.max(jnp.abs(ref_f32))))
    assert err32 < tol32, f"f32 reference mismatch: max abs err {err32} (tol {tol32})"

    print("KERNEL_OK")
</pallas_src>

<mosaic_0001>
module attributes {stable_mosaic.version = 11 : i64} {
  func.func @kernel(%arg0: i32, %arg1: memref<8x16xbf16, #tpu.memory_space<vmem>>, %arg2: memref<8x1024xbf16, #tpu.memory_space<vmem>>, %arg3: memref<64x12xbf16, #tpu.memory_space<vmem>>, %arg4: memref<512x12xbf16, #tpu.memory_space<vmem>>, %arg5: memref<512x32xf32, #tpu.memory_space<vmem>>, %arg6: memref<64x16xbf16, #tpu.memory_space<vmem>>, %arg7: memref<512x12xbf16, #tpu.memory_space<vmem>>, %arg8: memref<512x32xf32, #tpu.memory_space<vmem>>, %arg9: memref<16x8xbf16, #tpu.memory_space<vmem>>, %arg10: memref<8x32xbf16, #tpu.memory_space<vmem>>, %arg11: memref<1024x128xbf16, #tpu.memory_space<vmem>>, %arg12: memref<128x64xbf16, #tpu.memory_space<vmem>>, %arg13: memref<64x128xbf16, #tpu.memory_space<vmem>>, %arg14: memref<12x16xbf16, #tpu.memory_space<vmem>>, %arg15: memref<16x32xbf16, #tpu.memory_space<vmem>>, %arg16: memref<12x8xbf16, #tpu.memory_space<vmem>>, %arg17: memref<8x32xbf16, #tpu.memory_space<vmem>>, %arg18: memref<16x8xbf16, #tpu.memory_space<vmem>>, %arg19: memref<8x32xbf16, #tpu.memory_space<vmem>>, %arg20: memref<12x8xbf16, #tpu.memory_space<vmem>>, %arg21: memref<8x32xbf16, #tpu.memory_space<vmem>>, %arg22: memref<32x32xbf16, #tpu.memory_space<vmem>>, %arg23: memref<32x32xbf16, #tpu.memory_space<vmem>>, %arg24: memref<128x32xbf16, #tpu.memory_space<vmem>>, %arg25: memref<96x32xbf16, #tpu.memory_space<vmem>>, %arg26: memref<32x32xbf16, #tpu.memory_space<vmem>>, %arg27: memref<18x128xf32, #tpu.memory_space<vmem>>, %arg28: memref<8x32xf32, #tpu.memory_space<vmem>>, %arg29: memref<64x128xf32, #tpu.memory_space<vmem>>, %arg30: memref<8x96xf32, #tpu.memory_space<vmem>>) attributes {dimension_semantics = [#tpu.dimension_semantics<parallel>], iteration_bounds = array<i64: 2>, scalar_prefetch = 0 : i64, scratch_operands = 2 : i64, tpu.core_type = #tpu.core_type<tc>, window_params = [{transform_indices = @transform_0, window_bounds = array<i64: 8, 16>}, {transform_indices = @transform_1, window_bounds = array<i64: 8, 1024>}, {transform_indices = @transform_2, window_bounds = array<i64: 64, 12>}, {transform_indices = @transform_3, window_bounds = array<i64: 512, 12>}, {transform_indices = @transform_4, window_bounds = array<i64: 512, 32>}, {transform_indices = @transform_5, window_bounds = array<i64: 64, 16>}, {transform_indices = @transform_6, window_bounds = array<i64: 512, 12>}, {transform_indices = @transform_7, window_bounds = array<i64: 512, 32>}, {pipeline_mode = #tpu.pipeline_mode<synchronous>, transform_indices = @transform_8, window_bounds = array<i64: 16, 8>}, {pipeline_mode = #tpu.pipeline_mode<synchronous>, transform_indices = @transform_9, window_bounds = array<i64: 8, 32>}, {pipeline_mode = #tpu.pipeline_mode<synchronous>, transform_indices = @transform_10, window_bounds = array<i64: 1024, 128>}, {pipeline_mode = #tpu.pipeline_mode<synchronous>, transform_indices = @transform_11, window_bounds = array<i64: 128, 64>}, {pipeline_mode = #tpu.pipeline_mode<synchronous>, transform_indices = @transform_12, window_bounds = array<i64: 64, 128>}, {pipeline_mode = #tpu.pipeline_mode<synchronous>, transform_indices = @transform_13, window_bounds = array<i64: 12, 16>}, {pipeline_mode = #tpu.pipeline_mode<synchronous>, transform_indices = @transform_14, window_bounds = array<i64: 16, 32>}, {pipeline_mode = #tpu.pipeline_mode<synchronous>, transform_indices = @transform_15, window_bounds = array<i64: 12, 8>}, {pipeline_mode = #tpu.pipeline_mode<synchronous>, transform_indices = @transform_16, window_bounds = array<i64: 8, 32>}, {pipeline_mode = #tpu.pipeline_mode<synchronous>, transform_indices = @transform_17, window_bounds = array<i64: 16, 8>}, {pipeline_mode = #tpu.pipeline_mode<synchronous>, transform_indices = @transform_18, window_bounds = array<i64: 8, 32>}, {pipeline_mode = #tpu.pipeline_mode<synchronous>, transform_indices = @transform_19, window_bounds = array<i64: 12, 8>}, {pipeline_mode = #tpu.pipeline_mode<synchronous>, transform_indices = @transform_20, window_bounds = array<i64: 8, 32>}, {pipeline_mode = #tpu.pipeline_mode<synchronous>, transform_indices = @transform_21, window_bounds = array<i64: 32, 32>}, {pipeline_mode = #tpu.pipeline_mode<synchronous>, transform_indices = @transform_22, window_bounds = array<i64: 32, 32>}, {pipeline_mode = #tpu.pipeline_mode<synchronous>, transform_indices = @transform_23, window_bounds = array<i64: 128, 32>}, {pipeline_mode = #tpu.pipeline_mode<synchronous>, transform_indices = @transform_24, window_bounds = array<i64: 96, 32>}, {pipeline_mode = #tpu.pipeline_mode<synchronous>, transform_indices = @transform_25, window_bounds = array<i64: 32, 32>}, {pipeline_mode = #tpu.pipeline_mode<synchronous>, transform_indices = @transform_26, window_bounds = array<i64: 18, 128>}, {transform_indices = @transform_27, window_bounds = array<i64: 8, 32>}]} {
    %c0 = arith.constant 0 : index
    %c0_0 = arith.constant 0 : index
    %0 = vector.load %arg1[%c0, %c0_0] : memref<8x16xbf16, #tpu.memory_space<vmem>>, vector<8x16xbf16>
    %c0_1 = arith.constant 0 : index
    %c0_2 = arith.constant 0 : index
    %1 = vector.load %arg9[%c0_1, %c0_2] : memref<16x8xbf16, #tpu.memory_space<vmem>>, vector<16x8xbf16>
    %cst = arith.constant dense<0.000000e+00> : vector<8x8xf32>
    %2 = tpu.matmul %0, %1, %cst {dimension_numbers = #tpu.dot_dimension_numbers<[1], [0], [0], [1], [0, 0, 1, 1], [], []>} : vector<8x16xbf16>, vector<16x8xbf16>, vector<8x8xf32> -> vector<8x8xf32>
    %c0_3 = arith.constant 0 : index
    %c0_4 = arith.constant 0 : index
    %3 = vector.load %arg27[%c0_3, %c0_4] : memref<18x128xf32, #tpu.memory_space<vmem>>, vector<1x8xf32>
    %4 = vector.broadcast %3 : vector<1x8xf32> to vector<8x8xf32>
    %5 = arith.addf %2, %4 : vector<8x8xf32>
    %cst_5 = arith.constant 0.000000e+00 : f32
    %6 = vector.broadcast %cst_5 : f32 to vector<8x8xf32>
    %7 = arith.maximumf %5, %6 : vector<8x8xf32>
    %8 = arith.truncf %7 : vector<8x8xf32> to vector<8x8xbf16>
    %c0_6 = arith.constant 0 : index
    %c0_7 = arith.constant 0 : index
    %9 = vector.load %arg10[%c0_6, %c0_7] : memref<8x32xbf16, #tpu.memory_space<vmem>>, vector<8x32xbf16>
    %cst_8 = arith.constant dense<0.000000e+00> : vector<8x32xf32>
    %10 = tpu.matmul %8, %9, %cst_8 {dimension_numbers = #tpu.dot_dimension_numbers<[1], [0], [0], [1], [0, 0, 1, 1], [], []>} : vector<8x8xbf16>, vector<8x32xbf16>, vector<8x32xf32> -> vector<8x32xf32>
    %c1 = arith.constant 1 : index
    %c0_9 = arith.constant 0 : index
    %11 = vector.load %arg27[%c1, %c0_9] : memref<18x128xf32, #tpu.memory_space<vmem>>, vector<1x32xf32>
    %12 = vector.broadcast %11 : vector<1x32xf32> to vector<8x32xf32>
    %13 = arith.addf %10, %12 : vector<8x32xf32>
    %cst_10 = arith.constant 0.000000e+00 : f32
    %14 = vector.broadcast %cst_10 : f32 to vector<8x32xf32>
    %15 = arith.maximumf %13, %14 : vector<8x32xf32>
    %c0_11 = arith.constant 0 : index
    %c0_12 = arith.constant 0 : index
    %16 = vector.load %arg2[%c0_11, %c0_12] : memref<8x1024xbf16, #tpu.memory_space<vmem>>, vector<8x1024xbf16>
    %c0_13 = arith.constant 0 : index
    %c0_14 = arith.constant 0 : index
    %17 = vector.load %arg11[%c0_13, %c0_14] : memref<1024x128xbf16, #tpu.memory_space<vmem>>, vector<1024x128xbf16>
    %cst_15 = arith.constant dense<0.000000e+00> : vector<8x128xf32>
    %18 = tpu.matmul %16, %17, %cst_15 {dimension_numbers = #tpu.dot_dimension_numbers<[1], [0], [0], [1], [0, 0, 1, 1], [], []>} : vector<8x1024xbf16>, vector<1024x128xbf16>, vector<8x128xf32> -> vector<8x128xf32>
    %c2 = arith.constant 2 : index
    %c0_16 = arith.constant 0 : index
    %19 = vector.load %arg27[%c2, %c0_16] : memref<18x128xf32, #tpu.memory_space<vmem>>, vector<1x128xf32>
    %20 = vector.broadcast %19 : vector<1x128xf32> to vector<8x128xf32>
    %21 = arith.addf %18, %20 : vector<8x128xf32>
    %cst_17 = arith.constant 0.000000e+00 : f32
    %22 = vector.broadcast %cst_17 : f32 to vector<8x128xf32>
    %23 = arith.maximumf %21, %22 : vector<8x128xf32>
    %24 = arith.truncf %23 : vector<8x128xf32> to vector<8x128xbf16>
    %c0_18 = arith.constant 0 : index
    %c0_19 = arith.constant 0 : index
    %25 = vector.load %arg12[%c0_18, %c0_19] : memref<128x64xbf16, #tpu.memory_space<vmem>>, vector<128x64xbf16>
    %cst_20 = arith.constant dense<0.000000e+00> : vector<8x64xf32>
    %26 = tpu.matmul %24, %25, %cst_20 {dimension_numbers = #tpu.dot_dimension_numbers<[1], [0], [0], [1], [0, 0, 1, 1], [], []>} : vector<8x128xbf16>, vector<128x64xbf16>, vector<8x64xf32> -> vector<8x64xf32>
    %c3 = arith.constant 3 : index
    %c0_21 = arith.constant 0 : index
    %27 = vector.load %arg27[%c3, %c0_21] : memref<18x128xf32, #tpu.memory_space<vmem>>, vector<1x64xf32>
    %28 = vector.broadcast %27 : vector<1x64xf32> to vector<8x64xf32>
    %29 = arith.addf %26, %28 : vector<8x64xf32>
    %cst_22 = arith.constant 0.000000e+00 : f32
    %30 = vector.broadcast %cst_22 : f32 to vector<8x64xf32>
    %31 = arith.maximumf %29, %30 : vector<8x64xf32>
    %32 = arith.truncf %31 : vector<8x64xf32> to vector<8x64xbf16>
    %c0_23 = arith.constant 0 : index
    %c0_24 = arith.constant 0 : index
    %33 = vector.load %arg13[%c0_23, %c0_24] : memref<64x128xbf16, #tpu.memory_space<vmem>>, vector<64x128xbf16>
    %cst_25 = arith.constant dense<0.000000e+00> : vector<8x128xf32>
    %34 = tpu.matmul %32, %33, %cst_25 {dimension_numbers = #tpu.dot_dimension_numbers<[1], [0], [0], [1], [0, 0, 1, 1], [], []>} : vector<8x64xbf16>, vector<64x128xbf16>, vector<8x128xf32> -> vector<8x128xf32>
    %c4 = arith.constant 4 : index
    %c0_26 = arith.constant 0 : index
    %35 = vector.load %arg27[%c4, %c0_26] : memref<18x128xf32, #tpu.memory_space<vmem>>, vector<1x128xf32>
    %36 = vector.broadcast %35 : vector<1x128xf32> to vector<8x128xf32>
    %37 = arith.addf %34, %36 : vector<8x128xf32>
    %cst_27 = arith.constant 0.000000e+00 : f32
    %38 = vector.broadcast %cst_27 : f32 to vector<8x128xf32>
    %39 = arith.maximumf %37, %38 : vector<8x128xf32>
    %40 = vector.extract_strided_slice %39 {offsets = [0, 0], sizes = [8, 32], strides = [1, 1]} : vector<8x128xf32> to vector<8x32xf32>
    %41 = vector.extract_strided_slice %39 {offsets = [0, 32], sizes = [8, 32], strides = [1, 1]} : vector<8x128xf32> to vector<8x32xf32>
    %42 = arith.maximumf %40, %41 : vector<8x32xf32>
    %43 = vector.extract_strided_slice %39 {offsets = [0, 64], sizes = [8, 32], strides = [1, 1]} : vector<8x128xf32> to vector<8x32xf32>
    %44 = arith.maximumf %42, %43 : vector<8x32xf32>
    %45 = vector.extract_strided_slice %39 {offsets = [0, 96], sizes = [8, 32], strides = [1, 1]} : vector<8x128xf32> to vector<8x32xf32>
    %46 = arith.maximumf %44, %45 : vector<8x32xf32>
    %c0_28 = arith.constant 0 : index
    %c0_29 = arith.constant 0 : index
    %47 = vector.load %arg3[%c0_28, %c0_29] : memref<64x12xbf16, #tpu.memory_space<vmem>>, vector<64x12xbf16>
    %c0_30 = arith.constant 0 : index
    %c0_31 = arith.constant 0 : index
    %48 = vector.load %arg14[%c0_30, %c0_31] : memref<12x16xbf16, #tpu.memory_space<vmem>>, vector<12x16xbf16>
    %cst_32 = arith.constant dense<0.000000e+00> : vector<64x16xf32>
    %49 = tpu.matmul %47, %48, %cst_32 {dimension_numbers = #tpu.dot_dimension_numbers<[1], [0], [0], [1], [0, 0, 1, 1], [], []>} : vector<64x12xbf16>, vector<12x16xbf16>, vector<64x16xf32> -> vector<64x16xf32>
    %c5 = arith.constant 5 : index
    %c0_33 = arith.constant 0 : index
    %50 = vector.load %arg27[%c5, %c0_33] : memref<18x128xf32, #tpu.memory_space<vmem>>, vector<1x16xf32>
    %51 = vector.broadcast %50 : vector<1x16xf32> to vector<64x16xf32>
    %52 = arith.addf %49, %51 : vector<64x16xf32>
    %cst_34 = arith.constant 0.000000e+00 : f32
    %53 = vector.broadcast %cst_34 : f32 to vector<64x16xf32>
    %54 = arith.maximumf %52, %53 : vector<64x16xf32>
    %55 = arith.truncf %54 : vector<64x16xf32> to vector<64x16xbf16>
    %c0_35 = arith.constant 0 : index
    %c0_36 = arith.constant 0 : index
    %56 = vector.load %arg15[%c0_35, %c0_36] : memref<16x32xbf16, #tpu.memory_space<vmem>>, vector<16x32xbf16>
    %cst_37 = arith.constant dense<0.000000e+00> : vector<64x32xf32>
    %57 = tpu.matmul %55, %56, %cst_37 {dimension_numbers = #tpu.dot_dimension_numbers<[1], [0], [0], [1], [0, 0, 1, 1], [], []>} : vector<64x16xbf16>, vector<16x32xbf16>, vector<64x32xf32> -> vector<64x32xf32>
    %c6 = arith.constant 6 : index
    %c0_38 = arith.constant 0 : index
    %58 = vector.load %arg27[%c6, %c0_38] : memref<18x128xf32, #tpu.memory_space<vmem>>, vector<1x32xf32>
    %59 = vector.broadcast %58 : vector<1x32xf32> to vector<64x32xf32>
    %60 = arith.addf %57, %59 : vector<64x32xf32>
    %cst_39 = arith.constant 0.000000e+00 : f32
    %61 = vector.broadcast %cst_39 : f32 to vector<64x32xf32>
    %62 = arith.maximumf %60, %61 : vector<64x32xf32>
    %c0_40 = arith.constant 0 : index
    %c0_41 = arith.constant 0 : index
    %63 = vector.load %arg4[%c0_40, %c0_41] : memref<512x12xbf16, #tpu.memory_space<vmem>>, vector<512x12xbf16>
    %c0_42 = arith.constant 0 : index
    %c0_43 = arith.constant 0 : index
    %64 = vector.load %arg16[%c0_42, %c0_43] : memref<12x8xbf16, #tpu.memory_space<vmem>>, vector<12x8xbf16>
    %cst_44 = arith.constant dense<0.000000e+00> : vector<512x8xf32>
    %65 = tpu.matmul %63, %64, %cst_44 {dimension_numbers = #tpu.dot_dimension_numbers<[1], [0], [0], [1], [0, 0, 1, 1], [], []>} : vector<512x12xbf16>, vector<12x8xbf16>, vector<512x8xf32> -> vector<512x8xf32>
    %c7 = arith.constant 7 : index
    %c0_45 = arith.constant 0 : index
    %66 = vector.load %arg27[%c7, %c0_45] : memref<18x128xf32, #tpu.memory_space<vmem>>, vector<1x8xf32>
    %67 = vector.broadcast %66 : vector<1x8xf32> to vector<512x8xf32>
    %68 = arith.addf %65, %67 : vector<512x8xf32>
    %cst_46 = arith.constant 0.000000e+00 : f32
    %69 = vector.broadcast %cst_46 : f32 to vector<512x8xf32>
    %70 = arith.maximumf %68, %69 : vector<512x8xf32>
    %71 = arith.truncf %70 : vector<512x8xf32> to vector<512x8xbf16>
    %c0_47 = arith.constant 0 : index
    %c0_48 = arith.constant 0 : index
    %72 = vector.load %arg17[%c0_47, %c0_48] : memref<8x32xbf16, #tpu.memory_space<vmem>>, vector<8x32xbf16>
    %cst_49 = arith.constant dense<0.000000e+00> : vector<512x32xf32>
    %73 = tpu.matmul %71, %72, %cst_49 {dimension_numbers = #tpu.dot_dimension_numbers<[1], [0], [0], [1], [0, 0, 1, 1], [], []>} : vector<512x8xbf16>, vector<8x32xbf16>, vector<512x32xf32> -> vector<512x32xf32>
    %c8 = arith.constant 8 : index
    %c0_50 = arith.constant 0 : index
    %74 = vector.load %arg27[%c8, %c0_50] : memref<18x128xf32, #tpu.memory_space<vmem>>, vector<1x32xf32>
    %75 = vector.broadcast %74 : vector<1x32xf32> to vector<512x32xf32>
    %76 = arith.addf %73, %75 : vector<512x32xf32>
    %cst_51 = arith.constant 0.000000e+00 : f32
    %77 = vector.broadcast %cst_51 : f32 to vector<512x32xf32>
    %78 = arith.maximumf %76, %77 : vector<512x32xf32>
    %c0_52 = arith.constant 0 : index
    %c0_53 = arith.constant 0 : index
    %79 = vector.load %arg6[%c0_52, %c0_53] : memref<64x16xbf16, #tpu.memory_space<vmem>>, vector<64x16xbf16>
    %c0_54 = arith.constant 0 : index
    %c0_55 = arith.constant 0 : index
    %80 = vector.load %arg18[%c0_54, %c0_55] : memref<16x8xbf16, #tpu.memory_space<vmem>>, vector<16x8xbf16>
    %cst_56 = arith.constant dense<0.000000e+00> : vector<64x8xf32>
    %81 = tpu.matmul %79, %80, %cst_56 {dimension_numbers = #tpu.dot_dimension_numbers<[1], [0], [0], [1], [0, 0, 1, 1], [], []>} : vector<64x16xbf16>, vector<16x8xbf16>, vector<64x8xf32> -> vector<64x8xf32>
    %c9 = arith.constant 9 : index
    %c0_57 = arith.constant 0 : index
    %82 = vector.load %arg27[%c9, %c0_57] : memref<18x128xf32, #tpu.memory_space<vmem>>, vector<1x8xf32>
    %83 = vector.broadcast %82 : vector<1x8xf32> to vector<64x8xf32>
    %84 = arith.addf %81, %83 : vector<64x8xf32>
    %cst_58 = arith.constant 0.000000e+00 : f32
    %85 = vector.broadcast %cst_58 : f32 to vector<64x8xf32>
    %86 = arith.maximumf %84, %85 : vector<64x8xf32>
    %87 = arith.truncf %86 : vector<64x8xf32> to vector<64x8xbf16>
    %c0_59 = arith.constant 0 : index
    %c0_60 = arith.constant 0 : index
    %88 = vector.load %arg19[%c0_59, %c0_60] : memref<8x32xbf16, #tpu.memory_space<vmem>>, vector<8x32xbf16>
    %cst_61 = arith.constant dense<0.000000e+00> : vector<64x32xf32>
    %89 = tpu.matmul %87, %88, %cst_61 {dimension_numbers = #tpu.dot_dimension_numbers<[1], [0], [0], [1], [0, 0, 1, 1], [], []>} : vector<64x8xbf16>, vector<8x32xbf16>, vector<64x32xf32> -> vector<64x32xf32>
    %c10 = arith.constant 10 : index
    %c0_62 = arith.constant 0 : index
    %90 = vector.load %arg27[%c10, %c0_62] : memref<18x128xf32, #tpu.memory_space<vmem>>, vector<1x32xf32>
    %91 = vector.broadcast %90 : vector<1x32xf32> to vector<64x32xf32>
    %92 = arith.addf %89, %91 : vector<64x32xf32>
    %cst_63 = arith.constant 0.000000e+00 : f32
    %93 = vector.broadcast %cst_63 : f32 to vector<64x32xf32>
    %94 = arith.maximumf %92, %93 : vector<64x32xf32>
    %c0_64 = arith.constant 0 : index
    %c0_65 = arith.constant 0 : index
    %95 = vector.load %arg7[%c0_64, %c0_65] : memref<512x12xbf16, #tpu.memory_space<vmem>>, vector<512x12xbf16>
    %c0_66 = arith.constant 0 : index
    %c0_67 = arith.constant 0 : index
    %96 = vector.load %arg20[%c0_66, %c0_67] : memref<12x8xbf16, #tpu.memory_space<vmem>>, vector<12x8xbf16>
    %cst_68 = arith.constant dense<0.000000e+00> : vector<512x8xf32>
    %97 = tpu.matmul %95, %96, %cst_68 {dimension_numbers = #tpu.dot_dimension_numbers<[1], [0], [0], [1], [0, 0, 1, 1], [], []>} : vector<512x12xbf16>, vector<12x8xbf16>, vector<512x8xf32> -> vector<512x8xf32>
    %c11 = arith.constant 11 : index
    %c0_69 = arith.constant 0 : index
    %98 = vector.load %arg27[%c11, %c0_69] : memref<18x128xf32, #tpu.memory_space<vmem>>, vector<1x8xf32>
    %99 = vector.broadcast %98 : vector<1x8xf32> to vector<512x8xf32>
    %100 = arith.addf %97, %99 : vector<512x8xf32>
    %cst_70 = arith.constant 0.000000e+00 : f32
    %101 = vector.broadcast %cst_70 : f32 to vector<512x8xf32>
    %102 = arith.maximumf %100, %101 : vector<512x8xf32>
    %103 = arith.truncf %102 : vector<512x8xf32> to vector<512x8xbf16>
    %c0_71 = arith.constant 0 : index
    %c0_72 = arith.constant 0 : index
    %104 = vector.load %arg21[%c0_71, %c0_72] : memref<8x32xbf16, #tpu.memory_space<vmem>>, vector<8x32xbf16>
    %cst_73 = arith.constant dense<0.000000e+00> : vector<512x32xf32>
    %105 = tpu.matmul %103, %104, %cst_73 {dimension_numbers = #tpu.dot_dimension_numbers<[1], [0], [0], [1], [0, 0, 1, 1], [], []>} : vector<512x8xbf16>, vector<8x32xbf16>, vector<512x32xf32> -> vector<512x32xf32>
    %c12 = arith.constant 12 : index
    %c0_74 = arith.constant 0 : index
    %106 = vector.load %arg27[%c12, %c0_74] : memref<18x128xf32, #tpu.memory_space<vmem>>, vector<1x32xf32>
    %107 = vector.broadcast %106 : vector<1x32xf32> to vector<512x32xf32>
    %108 = arith.addf %105, %107 : vector<512x32xf32>
    %cst_75 = arith.constant 0.000000e+00 : f32
    %109 = vector.broadcast %cst_75 : f32 to vector<512x32xf32>
    %110 = arith.maximumf %108, %109 : vector<512x32xf32>
    %111 = arith.truncf %78 : vector<512x32xf32> to vector<512x32xbf16>
    %c0_76 = arith.constant 0 : index
    %c0_77 = arith.constant 0 : index
    %112 = vector.load %arg22[%c0_76, %c0_77] : memref<32x32xbf16, #tpu.memory_space<vmem>>, vector<32x32xbf16>
    %cst_78 = arith.constant dense<0.000000e+00> : vector<512x32xf32>
    %113 = tpu.matmul %111, %112, %cst_78 {dimension_numbers = #tpu.dot_dimension_numbers<[1], [0], [0], [1], [0, 0, 1, 1], [], []>} : vector<512x32xbf16>, vector<32x32xbf16>, vector<512x32xf32> -> vector<512x32xf32>
    %c13 = arith.constant 13 : index
    %c0_79 = arith.constant 0 : index
    %114 = vector.load %arg27[%c13, %c0_79] : memref<18x128xf32, #tpu.memory_space<vmem>>, vector<1x32xf32>
    %115 = vector.broadcast %114 : vector<1x32xf32> to vector<512x32xf32>
    %116 = arith.addf %113, %115 : vector<512x32xf32>
    %cst_80 = arith.constant 0.000000e+00 : f32
    %117 = vector.broadcast %cst_80 : f32 to vector<512x32xf32>
    %118 = arith.maximumf %116, %117 : vector<512x32xf32>
    %c0_81 = arith.constant 0 : index
    %c0_82 = arith.constant 0 : index
    %119 = vector.load %arg5[%c0_81, %c0_82] : memref<512x32xf32, #tpu.memory_space<vmem>>, vector<512x32xf32>
    %120 = arith.mulf %118, %119 : vector<512x32xf32>
    %121 = vector.shape_cast %120 : vector<512x32xf32> to vector<64x8x32xf32>
    %cst_83 = arith.constant dense<0xFF800000> : vector<64x32xf32>
    %122 = vector.multi_reduction <maximumf>, %121, %cst_83 [1] : vector<64x8x32xf32> to vector<64x32xf32>
    %123 = arith.truncf %110 : vector<512x32xf32> to vector<512x32xbf16>
    %c0_84 = arith.constant 0 : index
    %c0_85 = arith.constant 0 : index
    %124 = vector.load %arg23[%c0_84, %c0_85] : memref<32x32xbf16, #tpu.memory_space<vmem>>, vector<32x32xbf16>
    %cst_86 = arith.constant dense<0.000000e+00> : vector<512x32xf32>
    %125 = tpu.matmul %123, %124, %cst_86 {dimension_numbers = #tpu.dot_dimension_numbers<[1], [0], [0], [1], [0, 0, 1, 1], [], []>} : vector<512x32xbf16>, vector<32x32xbf16>, vector<512x32xf32> -> vector<512x32xf32>
    %c14 = arith.constant 14 : index
    %c0_87 = arith.constant 0 : index
    %126 = vector.load %arg27[%c14, %c0_87] : memref<18x128xf32, #tpu.memory_space<vmem>>, vector<1x32xf32>
    %127 = vector.broadcast %126 : vector<1x32xf32> to vector<512x32xf32>
    %128 = arith.addf %125, %127 : vector<512x32xf32>
    %cst_88 = arith.constant 0.000000e+00 : f32
    %129 = vector.broadcast %cst_88 : f32 to vector<512x32xf32>
    %130 = arith.maximumf %128, %129 : vector<512x32xf32>
    %c0_89 = arith.constant 0 : index
    %c0_90 = arith.constant 0 : index
    %131 = vector.load %arg8[%c0_89, %c0_90] : memref<512x32xf32, #tpu.memory_space<vmem>>, vector<512x32xf32>
    %132 = arith.mulf %130, %131 : vector<512x32xf32>
    %133 = vector.shape_cast %132 : vector<512x32xf32> to vector<64x8x32xf32>
    %cst_91 = arith.constant dense<0xFF800000> : vector<64x32xf32>
    %134 = vector.multi_reduction <maximumf>, %133, %cst_91 [1] : vector<64x8x32xf32> to vector<64x32xf32>
    %c0_92 = arith.constant 0 : index
    %c0_93 = arith.constant 0 : index
    %135 = vector.load %arg29[%c0_92, %c0_93] : memref<64x128xf32, #tpu.memory_space<vmem>>, vector<64x32xf32>
    tpu.vector_store %arg29[%c0_92, %c0_93], %94 {strides = array<i32>} : memref<64x128xf32, #tpu.memory_space<vmem>>, vector<64x32xf32>,
    %c0_94 = arith.constant 0 : index
    %c32 = arith.constant 32 : index
    %136 = vector.load %arg29[%c0_94, %c32] : memref<64x128xf32, #tpu.memory_space<vmem>>, vector<64x32xf32>
    tpu.vector_store %arg29[%c0_94, %c32], %62 {strides = array<i32>} : memref<64x128xf32, #tpu.memory_space<vmem>>, vector<64x32xf32>,
    %c0_95 = arith.constant 0 : index
    %c64 = arith.constant 64 : index
    %137 = vector.load %arg29[%c0_95, %c64] : memref<64x128xf32, #tpu.memory_space<vmem>>, vector<64x32xf32>
    tpu.vector_store %arg29[%c0_95, %c64], %122 {strides = array<i32>} : memref<64x128xf32, #tpu.memory_space<vmem>>, vector<64x32xf32>,
    %c0_96 = arith.constant 0 : index
    %c96 = arith.constant 96 : index
    %138 = vector.load %arg29[%c0_96, %c96] : memref<64x128xf32, #tpu.memory_space<vmem>>, vector<64x32xf32>
    tpu.vector_store %arg29[%c0_96, %c96], %134 {strides = array<i32>} : memref<64x128xf32, #tpu.memory_space<vmem>>, vector<64x32xf32>,
    %c0_97 = arith.constant 0 : index
    %c0_98 = arith.constant 0 : index
    %139 = vector.load %arg29[%c0_97, %c0_98] : memref<64x128xf32, #tpu.memory_space<vmem>>, vector<64x128xf32>
    %140 = arith.truncf %139 : vector<64x128xf32> to vector<64x128xbf16>
    %c0_99 = arith.constant 0 : index
    %c0_100 = arith.constant 0 : index
    %141 = vector.load %arg24[%c0_99, %c0_100] : memref<128x32xbf16, #tpu.memory_space<vmem>>, vector<128x32xbf16>
    %cst_101 = arith.constant dense<0.000000e+00> : vector<64x32xf32>
    %142 = tpu.matmul %140, %141, %cst_101 {dimension_numbers = #tpu.dot_dimension_numbers<[1], [0], [0], [1], [0, 0, 1, 1], [], []>} : vector<64x128xbf16>, vector<128x32xbf16>, vector<64x32xf32> -> vector<64x32xf32>
    %c15 = arith.constant 15 : index
    %c0_102 = arith.constant 0 : index
    %143 = vector.load %arg27[%c15, %c0_102] : memref<18x128xf32, #tpu.memory_space<vmem>>, vector<1x32xf32>
    %144 = vector.broadcast %143 : vector<1x32xf32> to vector<64x32xf32>
    %145 = arith.addf %142, %144 : vector<64x32xf32>
    %cst_103 = arith.constant 0.000000e+00 : f32
    %146 = vector.broadcast %cst_103 : f32 to vector<64x32xf32>
    %147 = arith.maximumf %145, %146 : vector<64x32xf32>
    %148 = vector.shape_cast %147 : vector<64x32xf32> to vector<8x8x32xf32>
    %cst_104 = arith.constant dense<0xFF800000> : vector<8x32xf32>
    %149 = vector.multi_reduction <maximumf>, %148, %cst_104 [1] : vector<8x8x32xf32> to vector<8x32xf32>
    %c0_105 = arith.constant 0 : index
    %c0_106 = arith.constant 0 : index
    %150 = vector.load %arg30[%c0_105, %c0_106] : memref<8x96xf32, #tpu.memory_space<vmem>>, vector<8x32xf32>
    tpu.vector_store %arg30[%c0_105, %c0_106], %15 {strides = array<i32>} : memref<8x96xf32, #tpu.memory_space<vmem>>, vector<8x32xf32>,
    %c0_107 = arith.constant 0 : index
    %c32_108 = arith.constant 32 : index
    %151 = vector.load %arg30[%c0_107, %c32_108] : memref<8x96xf32, #tpu.memory_space<vmem>>, vector<8x32xf32>
    tpu.vector_store %arg30[%c0_107, %c32_108], %46 {strides = array<i32>} : memref<8x96xf32, #tpu.memory_space<vmem>>, vector<8x32xf32>,
    %c0_109 = arith.constant 0 : index
    %c64_110 = arith.constant 64 : index
    %152 = vector.load %arg30[%c0_109, %c64_110] : memref<8x96xf32, #tpu.memory_space<vmem>>, vector<8x32xf32>
    tpu.vector_store %arg30[%c0_109, %c64_110], %149 {strides = array<i32>} : memref<8x96xf32, #tpu.memory_space<vmem>>, vector<8x32xf32>,
    %c0_111 = arith.constant 0 : index
    %c0_112 = arith.constant 0 : index
    %153 = vector.load %arg30[%c0_111, %c0_112] : memref<8x96xf32, #tpu.memory_space<vmem>>, vector<8x96xf32>
    %154 = arith.truncf %153 : vector<8x96xf32> to vector<8x96xbf16>
    %c0_113 = arith.constant 0 : index
    %c0_114 = arith.constant 0 : index
    %155 = vector.load %arg25[%c0_113, %c0_114] : memref<96x32xbf16, #tpu.memory_space<vmem>>, vector<96x32xbf16>
    %cst_115 = arith.constant dense<0.000000e+00> : vector<8x32xf32>
    %156 = tpu.matmul %154, %155, %cst_115 {dimension_numbers = #tpu.dot_dimension_numbers<[1], [0], [0], [1], [0, 0, 1, 1], [], []>} : vector<8x96xbf16>, vector<96x32xbf16>, vector<8x32xf32> -> vector<8x32xf32>
    %c16 = arith.constant 16 : index
    %c0_116 = arith.constant 0 : index
    %157 = vector.load %arg27[%c16, %c0_116] : memref<18x128xf32, #tpu.memory_space<vmem>>, vector<1x32xf32>
    %158 = vector.broadcast %157 : vector<1x32xf32> to vector<8x32xf32>
    %159 = arith.addf %156, %158 : vector<8x32xf32>
    %cst_117 = arith.constant 0.000000e+00 : f32
    %160 = vector.broadcast %cst_117 : f32 to vector<8x32xf32>
    %161 = arith.maximumf %159, %160 : vector<8x32xf32>
    %162 = arith.truncf %161 : vector<8x32xf32> to vector<8x32xbf16>
    %c0_118 = arith.constant 0 : index
    %c0_119 = arith.constant 0 : index
    %163 = vector.load %arg26[%c0_118, %c0_119] : memref<32x32xbf16, #tpu.memory_space<vmem>>, vector<32x32xbf16>
    %cst_120 = arith.constant dense<0.000000e+00> : vector<8x32xf32>
    %164 = tpu.matmul %162, %163, %cst_120 {dimension_numbers = #tpu.dot_dimension_numbers<[1], [0], [0], [1], [0, 0, 1, 1], [], []>} : vector<8x32xbf16>, vector<32x32xbf16>, vector<8x32xf32> -> vector<8x32xf32>
    %c17 = arith.constant 17 : index
    %c0_121 = arith.constant 0 : index
    %165 = vector.load %arg27[%c17, %c0_121] : memref<18x128xf32, #tpu.memory_space<vmem>>, vector<1x32xf32>
    %166 = vector.broadcast %165 : vector<1x32xf32> to vector<8x32xf32>
    %167 = arith.addf %164, %166 : vector<8x32xf32>
    %cst_122 = arith.constant 0.000000e+00 : f32
    %168 = vector.broadcast %cst_122 : f32 to vector<8x32xf32>
    %169 = arith.maximumf %167, %168 : vector<8x32xf32>
    %c0_123 = arith.constant 0 : index
    %c0_124 = arith.constant 0 : index
    %170 = vector.load %arg28[%c0_123, %c0_124] : memref<8x32xf32, #tpu.memory_space<vmem>>, vector<8x32xf32>
    tpu.vector_store %arg28[%c0_123, %c0_124], %169 {strides = array<i32>} : memref<8x32xf32, #tpu.memory_space<vmem>>, vector<8x32xf32>,
    return
  }
  func.func @transform_0(%arg0: i32) -> (i32, i32) {
    %c0_i32 = arith.constant 0 : i32
    %c0_i32_0 = arith.constant 0 : i32
    return %arg0, %c0_i32 : i32, i32
  }
  func.func @transform_1(%arg0: i32) -> (i32, i32) {
    %c0_i32 = arith.constant 0 : i32
    %c0_i32_0 = arith.constant 0 : i32
    return %arg0, %c0_i32 : i32, i32
  }
  func.func @transform_2(%arg0: i32) -> (i32, i32) {
    %c0_i32 = arith.constant 0 : i32
    %c0_i32_0 = arith.constant 0 : i32
    return %arg0, %c0_i32 : i32, i32
  }
  func.func @transform_3(%arg0: i32) -> (i32, i32) {
    %c0_i32 = arith.constant 0 : i32
    %c0_i32_0 = arith.constant 0 : i32
    return %arg0, %c0_i32 : i32, i32
  }
  func.func @transform_4(%arg0: i32) -> (i32, i32) {
    %c0_i32 = arith.constant 0 : i32
    %c0_i32_0 = arith.constant 0 : i32
    return %arg0, %c0_i32 : i32, i32
  }
  func.func @transform_5(%arg0: i32) -> (i32, i32) {
    %c0_i32 = arith.constant 0 : i32
    %c0_i32_0 = arith.constant 0 : i32
    return %arg0, %c0_i32 : i32, i32
  }
  func.func @transform_6(%arg0: i32) -> (i32, i32) {
    %c0_i32 = arith.constant 0 : i32
    %c0_i32_0 = arith.constant 0 : i32
    return %arg0, %c0_i32 : i32, i32
  }
  func.func @transform_7(%arg0: i32) -> (i32, i32) {
    %c0_i32 = arith.constant 0 : i32
    %c0_i32_0 = arith.constant 0 : i32
    return %arg0, %c0_i32 : i32, i32
  }
  func.func @transform_8(%arg0: i32) -> (i32, i32) {
    %c0_i32 = arith.constant 0 : i32
    %c0_i32_0 = arith.constant 0 : i32
    %c0_i32_1 = arith.constant 0 : i32
    return %c0_i32, %c0_i32_0 : i32, i32
  }
  func.func @transform_9(%arg0: i32) -> (i32, i32) {
    %c0_i32 = arith.constant 0 : i32
    %c0_i32_0 = arith.constant 0 : i32
    %c0_i32_1 = arith.constant 0 : i32
    return %c0_i32, %c0_i32_0 : i32, i32
  }
  func.func @transform_10(%arg0: i32) -> (i32, i32) {
    %c0_i32 = arith.constant 0 : i32
    %c0_i32_0 = arith.constant 0 : i32
    %c0_i32_1 = arith.constant 0 : i32
    return %c0_i32, %c0_i32_0 : i32, i32
  }
  func.func @transform_11(%arg0: i32) -> (i32, i32) {
    %c0_i32 = arith.constant 0 : i32
    %c0_i32_0 = arith.constant 0 : i32
    %c0_i32_1 = arith.constant 0 : i32
    return %c0_i32, %c0_i32_0 : i32, i32
  }
  func.func @transform_12(%arg0: i32) -> (i32, i32) {
    %c0_i32 = arith.constant 0 : i32
    %c0_i32_0 = arith.constant 0 : i32
    %c0_i32_1 = arith.constant 0 : i32
    return %c0_i32, %c0_i32_0 : i32, i32
  }
  func.func @transform_13(%arg0: i32) -> (i32, i32) {
    %c0_i32 = arith.constant 0 : i32
    %c0_i32_0 = arith.constant 0 : i32
    %c0_i32_1 = arith.constant 0 : i32
    return %c0_i32, %c0_i32_0 : i32, i32
  }
  func.func @transform_14(%arg0: i32) -> (i32, i32) {
    %c0_i32 = arith.constant 0 : i32
    %c0_i32_0 = arith.constant 0 : i32
    %c0_i32_1 = arith.constant 0 : i32
    return %c0_i32, %c0_i32_0 : i32, i32
  }
  func.func @transform_15(%arg0: i32) -> (i32, i32) {
    %c0_i32 = arith.constant 0 : i32
    %c0_i32_0 = arith.constant 0 : i32
    %c0_i32_1 = arith.constant 0 : i32
    return %c0_i32, %c0_i32_0 : i32, i32
  }
  func.func @transform_16(%arg0: i32) -> (i32, i32) {
    %c0_i32 = arith.constant 0 : i32
    %c0_i32_0 = arith.constant 0 : i32
    %c0_i32_1 = arith.constant 0 : i32
    return %c0_i32, %c0_i32_0 : i32, i32
  }
  func.func @transform_17(%arg0: i32) -> (i32, i32) {
    %c0_i32 = arith.constant 0 : i32
    %c0_i32_0 = arith.constant 0 : i32
    %c0_i32_1 = arith.constant 0 : i32
    return %c0_i32, %c0_i32_0 : i32, i32
  }
  func.func @transform_18(%arg0: i32) -> (i32, i32) {
    %c0_i32 = arith.constant 0 : i32
    %c0_i32_0 = arith.constant 0 : i32
    %c0_i32_1 = arith.constant 0 : i32
    return %c0_i32, %c0_i32_0 : i32, i32
  }
  func.func @transform_19(%arg0: i32) -> (i32, i32) {
    %c0_i32 = arith.constant 0 : i32
    %c0_i32_0 = arith.constant 0 : i32
    %c0_i32_1 = arith.constant 0 : i32
    return %c0_i32, %c0_i32_0 : i32, i32
  }
  func.func @transform_20(%arg0: i32) -> (i32, i32) {
    %c0_i32 = arith.constant 0 : i32
    %c0_i32_0 = arith.constant 0 : i32
    %c0_i32_1 = arith.constant 0 : i32
    return %c0_i32, %c0_i32_0 : i32, i32
  }
  func.func @transform_21(%arg0: i32) -> (i32, i32) {
    %c0_i32 = arith.constant 0 : i32
    %c0_i32_0 = arith.constant 0 : i32
    %c0_i32_1 = arith.constant 0 : i32
    return %c0_i32, %c0_i32_0 : i32, i32
  }
  func.func @transform_22(%arg0: i32) -> (i32, i32) {
    %c0_i32 = arith.constant 0 : i32
    %c0_i32_0 = arith.constant 0 : i32
    %c0_i32_1 = arith.constant 0 : i32
    return %c0_i32, %c0_i32_0 : i32, i32
  }
  func.func @transform_23(%arg0: i32) -> (i32, i32) {
    %c0_i32 = arith.constant 0 : i32
    %c0_i32_0 = arith.constant 0 : i32
    %c0_i32_1 = arith.constant 0 : i32
    return %c0_i32, %c0_i32_0 : i32, i32
  }
  func.func @transform_24(%arg0: i32) -> (i32, i32) {
    %c0_i32 = arith.constant 0 : i32
    %c0_i32_0 = arith.constant 0 : i32
    %c0_i32_1 = arith.constant 0 : i32
    return %c0_i32, %c0_i32_0 : i32, i32
  }
  func.func @transform_25(%arg0: i32) -> (i32, i32) {
    %c0_i32 = arith.constant 0 : i32
    %c0_i32_0 = arith.constant 0 : i32
    %c0_i32_1 = arith.constant 0 : i32
    return %c0_i32, %c0_i32_0 : i32, i32
  }
  func.func @transform_26(%arg0: i32) -> (i32, i32) {
    %c0_i32 = arith.constant 0 : i32
    %c0_i32_0 = arith.constant 0 : i32
    %c0_i32_1 = arith.constant 0 : i32
    return %c0_i32, %c0_i32_0 : i32, i32
  }
  func.func @transform_27(%arg0: i32) -> (i32, i32) {
    %c0_i32 = arith.constant 0 : i32
    %c0_i32_0 = arith.constant 0 : i32
    return %arg0, %c0_i32 : i32, i32
  }
}

</mosaic_0001>

<llo_original>
// kernel: encoder_actor_forward.1
$region0: #{encoder_actor_forward.1}
  #allocation0 [shape = 'u32[]', space=smem, size = 0x4, offset = 0x4, fixed_abs, tag = 'smem constant byte address 0x4 - core index']
  #allocation1 [shape = 'u32[72,128]{1,0:T(1,128)}', space=vmem, size = 0x9000, scoped, tag = 'internal scratch']
  #allocation2 [shape = 'f32[64,128]{1,0:T(8,128)}', space=vmem, size = 0x8000, scoped, tag = 'scratch operand']
  #allocation3 [shape = 'f32[8,96]{1,0:T(8,128)}', space=vmem, size = 0x1000, scoped, tag = 'scratch operand']
  %s0 = inlined_call_operand.vmem [shape: bf16[16,16], index: 0, kind: input, shape index: {}]
  %s1 = inlined_call_operand.vmem [shape: bf16[16,1024], index: 1, kind: input, shape index: {}]
  %s2 = inlined_call_operand.vmem [shape: bf16[128,12], index: 2, kind: input, shape index: {}]
  %s3 = inlined_call_operand.vmem [shape: bf16[1024,12], index: 3, kind: input, shape index: {}]
  %s4 = inlined_call_operand.vmem [shape: f32[1024,32], index: 4, kind: input, shape index: {}]
  %s5 = inlined_call_operand.vmem [shape: bf16[128,16], index: 5, kind: input, shape index: {}]
  %s6 = inlined_call_operand.vmem [shape: bf16[1024,12], index: 6, kind: input, shape index: {}]
  %s7 = inlined_call_operand.vmem [shape: f32[1024,32], index: 7, kind: input, shape index: {}]
  %s8 = inlined_call_operand.vmem [shape: bf16[16,8], index: 8, kind: input, shape index: {}]
  %s9 = inlined_call_operand.vmem [shape: bf16[8,32], index: 9, kind: input, shape index: {}]
  %s10 = inlined_call_operand.vmem [shape: bf16[1024,128], index: 10, kind: input, shape index: {}]
  %s11 = inlined_call_operand.vmem [shape: bf16[128,64], index: 11, kind: input, shape index: {}]
  %s12 = inlined_call_operand.vmem [shape: bf16[64,128], index: 12, kind: input, shape index: {}]
  %s13 = inlined_call_operand.vmem [shape: bf16[12,16], index: 13, kind: input, shape index: {}]
  %s14 = inlined_call_operand.vmem [shape: bf16[16,32], index: 14, kind: input, shape index: {}]
  %s15 = inlined_call_operand.vmem [shape: bf16[12,8], index: 15, kind: input, shape index: {}]
  %s16 = inlined_call_operand.vmem [shape: bf16[8,32], index: 16, kind: input, shape index: {}]
  %s17 = inlined_call_operand.vmem [shape: bf16[16,8], index: 17, kind: input, shape index: {}]
  %s18 = inlined_call_operand.vmem [shape: bf16[8,32], index: 18, kind: input, shape index: {}]
  %s19 = inlined_call_operand.vmem [shape: bf16[12,8], index: 19, kind: input, shape index: {}]
  %s20 = inlined_call_operand.vmem [shape: bf16[8,32], index: 20, kind: input, shape index: {}]
  %s21 = inlined_call_operand.vmem [shape: bf16[32,32], index: 21, kind: input, shape index: {}]
  %s22 = inlined_call_operand.vmem [shape: bf16[32,32], index: 22, kind: input, shape index: {}]
  %s23 = inlined_call_operand.vmem [shape: bf16[128,32], index: 23, kind: input, shape index: {}]
  %s24 = inlined_call_operand.vmem [shape: bf16[96,32], index: 24, kind: input, shape index: {}]
  %s25 = inlined_call_operand.vmem [shape: bf16[32,32], index: 25, kind: input, shape index: {}]
  %s26 = inlined_call_operand.vmem [shape: f32[18,128], index: 26, kind: input, shape index: {}]
  %s27 = inlined_call_operand.hbm [shape: f32[16,32], index: 27, kind: output, shape index: {}]
  %s28 = sld [smem:[#allocation0]]
  $region141: #{encoder_actor_forward.1} parent=0
    _
  %s30 = ssub.s32 1, %s28
  %s31 = scalar_select 0, %s30, %s28
  $region1: #{encoder_actor_forward.1} parent=0
    #allocation4 [shape = 'u8[8192]{0}', space=vmem, size = 0x2000, scoped, tag = 'output window, operand 0']
    #allocation5 [shape = 's32[2]{0}', space=sflag, size = 0x8, scoped, tag = 'scoped memory for encoder_actor_forward.1']
    %32 = vsyncpa [#allocation5], 0
    %s33 = scalar_lea.sflag [#allocation5], 1
    %34 = vsyncpa %s33, 0
    loop: start=0, step=1, limit=4
    $region2: #{encoder_actor_forward.1} parent=1 // loop_pre_header
      _
    $region3: #{encoder_actor_forward.1} parent=1 // loop_header
      %s36 = sphi 0, %s40
      %p37 = scmp.ge.s32.totalorder %s36, 4
      %s46 = sphi 0, %s48
      %s49 = sphi 0, %s46
      %s50 = sphi 0, %s49
      %s66 = sphi 0, %s50
      %s72 = sphi 0, %s74
      %s75 = sphi 0, %s72
      %s76 = sphi 0, %s75
      %s92 = sphi 0, %s76
      %s98 = sphi 0, %s100
      %s101 = sphi 0, %s98
      %s102 = sphi 0, %s101
      %s118 = sphi 0, %s102
      %s124 = sphi 0, %s126
      %s127 = sphi 0, %s124
      %s128 = sphi 0, %s127
      %s144 = sphi 0, %s128
      %s150 = sphi 0, %s152
      %s153 = sphi 0, %s150
      %s154 = sphi 0, %s153
      %s170 = sphi 0, %s154
      %s176 = sphi 0, %s178
      %s179 = sphi 0, %s176
      %s180 = sphi 0, %s179
      %s196 = sphi 0, %s180
      %s202 = sphi 0, %s204
      %s205 = sphi 0, %s202
      %s206 = sphi 0, %s205
      %s222 = sphi 0, %s206
      %s228 = sphi 0, %s230
      %s231 = sphi 0, %s228
      %s232 = sphi 0, %s231
      %s248 = sphi 0, %s232
      %s252 = sphi 0, %s252
      %s254 = sphi 0, %s252
      %s255 = sphi 0, %s254
      %s269 = sphi 0, %s255
      %s273 = sphi 0, %s273
      %s275 = sphi 0, %s273
      %s276 = sphi 0, %s275
      %s290 = sphi 0, %s276
      %s294 = sphi 0, %s294
      %s296 = sphi 0, %s294
      %s297 = sphi 0, %s296
      %s311 = sphi 0, %s297
      %s315 = sphi 0, %s315
      %s317 = sphi 0, %s315
      %s318 = sphi 0, %s317
      %s332 = sphi 0, %s318
      %s336 = sphi 0, %s336
      %s338 = sphi 0, %s336
      %s339 = sphi 0, %s338
      %s353 = sphi 0, %s339
      %s357 = sphi 0, %s357
      %s359 = sphi 0, %s357
      %s360 = sphi 0, %s359
      %s374 = sphi 0, %s360
      %s378 = sphi 0, %s378
      %s380 = sphi 0, %s378
      %s381 = sphi 0, %s380
      %s395 = sphi 0, %s381
      %s399 = sphi 0, %s399
      %s401 = sphi 0, %s399
      %s402 = sphi 0, %s401
      %s416 = sphi 0, %s402
      %s420 = sphi 0, %s420
      %s422 = sphi 0, %s420
      %s423 = sphi 0, %s422
      %s437 = sphi 0, %s423
      %s441 = sphi 0, %s441
      %s443 = sphi 0, %s441
      %s444 = sphi 0, %s443
      %s458 = sphi 0, %s444
      %s462 = sphi 0, %s462
      %s464 = sphi 0, %s462
      %s465 = sphi 0, %s464
      %s479 = sphi 0, %s465
      %s483 = sphi 0, %s483
      %s485 = sphi 0, %s483
      %s486 = sphi 0, %s485
      %s500 = sphi 0, %s486
      %s504 = sphi 0, %s504
      %s506 = sphi 0, %s504
      %s507 = sphi 0, %s506
      %s521 = sphi 0, %s507
      %s525 = sphi 0, %s525
      %s527 = sphi 0, %s525
      %s528 = sphi 0, %s527
      %s542 = sphi 0, %s528
      %s546 = sphi 0, %s546
      %s548 = sphi 0, %s546
      %s549 = sphi 0, %s548
      %s563 = sphi 0, %s549
      %s567 = sphi 0, %s567
      %s569 = sphi 0, %s567
      %s570 = sphi 0, %s569
      %s584 = sphi 0, %s570
      %s588 = sphi 0, %s588
      %s590 = sphi 0, %s588
      %s591 = sphi 0, %s590
      %s605 = sphi 0, %s591
      %s609 = sphi 0, %s609
      %s611 = sphi 0, %s609
      %s612 = sphi 0, %s611
      %s626 = sphi 0, %s612
      %s630 = sphi 0, %s630
      %s632 = sphi 0, %s630
      %s633 = sphi 0, %s632
      %s647 = sphi 0, %s633
      %s653 = sphi 0, %s655
      %s656 = sphi 0, %s653
      %s657 = sphi 0, %s656
      %s673 = sphi 0, %s657
    $region4: #{encoder_actor_forward.1} parent=1 // loop_header_branch
      %39 = sbr.rel (%p37) target = $region8
    $region5: #{encoder_actor_forward.1} parent=1 // loop_body
      %s41 = ssub.s32 %s36, 1
      %s42 = ssub.s32 %s36, 2
      %s43 = sadd.s32 %s36, 1
      %s44 = ssub.s32 %s36, %s43
      %p45 = scmp.eq.s32.totalorder %s44, 0
      %s47 = sadd.s32 %s46, 1
      %s48 = scalar_select %p45, %s46, %s47
      %p51 = pneg %p45
      %p52 = scmp.eq.s32.totalorder %s36, 1
      %p53 = por %p51, %p52
      %p54 = scmp.ne.s32.totalorder %s46, %s49
      %p55 = scmp.eq.s32.totalorder %s36, 0
      %p56 = por %p54, %p55
      %p57 = scmp.ne.s32.totalorder %s46, %s49
      %p58 = scmp.eq.s32.totalorder %s41, 1
      %p59 = por %p57, %p58
      %p60 = scmp.ne.s32.totalorder %s49, %s50
      %p61 = scmp.eq.s32.totalorder %s41, 0
      %p62 = por %p60, %p61
      %p63 = scmp.ne.s32.totalorder %s49, %s50
      %p64 = scmp.eq.s32.totalorder %s42, 1
      %p65 = por %p63, %p64
      %p67 = scmp.ne.s32.totalorder %s50, %s66
      %p68 = scmp.eq.s32.totalorder %s42, 0
      %p69 = por %p67, %p68
      %s70 = ssub.s32 %s36, %s43
      %p71 = scmp.eq.s32.totalorder %s70, 0
      %s73 = sadd.s32 %s72, 1
      %s74 = scalar_select %p71, %s72, %s73
      %p77 = pneg %p71
      %p78 = scmp.eq.s32.totalorder %s36, 1
      %p79 = por %p77, %p78
      %p80 = scmp.ne.s32.totalorder %s72, %s75
      %p81 = scmp.eq.s32.totalorder %s36, 0
      %p82 = por %p80, %p81
      %p83 = scmp.ne.s32.totalorder %s72, %s75
      %p84 = scmp.eq.s32.totalorder %s41, 1
      %p85 = por %p83, %p84
      %p86 = scmp.ne.s32.totalorder %s75, %s76
      %p87 = scmp.eq.s32.totalorder %s41, 0
      %p88 = por %p86, %p87
      %p89 = scmp.ne.s32.totalorder %s75, %s76
      %p90 = scmp.eq.s32.totalorder %s42, 1
      %p91 = por %p89, %p90
      %p93 = scmp.ne.s32.totalorder %s76, %s92
      %p94 = scmp.eq.s32.totalorder %s42, 0
      %p95 = por %p93, %p94
      %s96 = ssub.s32 %s36, %s43
      %p97 = scmp.eq.s32.totalorder %s96, 0
      %s99 = sadd.s32 %s98, 1
      %s100 = scalar_select %p97, %s98, %s99
      %p103 = pneg %p97
      %p104 = scmp.eq.s32.totalorder %s36, 1
      %p105 = por %p103, %p104
      %p106 = scmp.ne.s32.totalorder %s98, %s101
      %p107 = scmp.eq.s32.totalorder %s36, 0
      %p108 = por %p106, %p107
      %p109 = scmp.ne.s32.totalorder %s98, %s101
      %p110 = scmp.eq.s32.totalorder %s41, 1
      %p111 = por %p109, %p110
      %p112 = scmp.ne.s32.totalorder %s101, %s102
      %p113 = scmp.eq.s32.totalorder %s41, 0
      %p114 = por %p112, %p113
      %p115 = scmp.ne.s32.totalorder %s101, %s102
      %p116 = scmp.eq.s32.totalorder %s42, 1
      %p117 = por %p115, %p116
      %p119 = scmp.ne.s32.totalorder %s102, %s118
      %p120 = scmp.eq.s32.totalorder %s42, 0
      %p121 = por %p119, %p120
      %s122 = ssub.s32 %s36, %s43
      %p123 = scmp.eq.s32.totalorder %s122, 0
      %s125 = sadd.s32 %s124, 1
      %s126 = scalar_select %p123, %s124, %s125
      %p129 = pneg %p123
      %p130 = scmp.eq.s32.totalorder %s36, 1
      %p131 = por %p129, %p130
      %p132 = scmp.ne.s32.totalorder %s124, %s127
      %p133 = scmp.eq.s32.totalorder %s36, 0
      %p134 = por %p132, %p133
      %p135 = scmp.ne.s32.totalorder %s124, %s127
      %p136 = scmp.eq.s32.totalorder %s41, 1
      %p137 = por %p135, %p136
      %p138 = scmp.ne.s32.totalorder %s127, %s128
      %p139 = scmp.eq.s32.totalorder %s41, 0
      %p140 = por %p138, %p139
      %p141 = scmp.ne.s32.totalorder %s127, %s128
      %p142 = scmp.eq.s32.totalorder %s42, 1
      %p143 = por %p141, %p142
      %p145 = scmp.ne.s32.totalorder %s128, %s144
      %p146 = scmp.eq.s32.totalorder %s42, 0
      %p147 = por %p145, %p146
      %s148 = ssub.s32 %s36, %s43
      %p149 = scmp.eq.s32.totalorder %s148, 0
      %s151 = sadd.s32 %s150, 1
      %s152 = scalar_select %p149, %s150, %s151
      %p155 = pneg %p149
      %p156 = scmp.eq.s32.totalorder %s36, 1
      %p157 = por %p155, %p156
      %p158 = scmp.ne.s32.totalorder %s150, %s153
      %p159 = scmp.eq.s32.totalorder %s36, 0
      %p160 = por %p158, %p159
      %p161 = scmp.ne.s32.totalorder %s150, %s153
      %p162 = scmp.eq.s32.totalorder %s41, 1
      %p163 = por %p161, %p162
      %p164 = scmp.ne.s32.totalorder %s153, %s154
      %p165 = scmp.eq.s32.totalorder %s41, 0
      %p166 = por %p164, %p165
      %p167 = scmp.ne.s32.totalorder %s153, %s154
      %p168 = scmp.eq.s32.totalorder %s42, 1
      %p169 = por %p167, %p168
      %p171 = scmp.ne.s32.totalorder %s154, %s170
      %p172 = scmp.eq.s32.totalorder %s42, 0
      %p173 = por %p171, %p172
      %s174 = ssub.s32 %s36, %s43
      %p175 = scmp.eq.s32.totalorder %s174, 0
      %s177 = sadd.s32 %s176, 1
      %s178 = scalar_select %p175, %s176, %s177
      %p181 = pneg %p175
      %p182 = scmp.eq.s32.totalorder %s36, 1
      %p183 = por %p181, %p182
      %p184 = scmp.ne.s32.totalorder %s176, %s179
      %p185 = scmp.eq.s32.totalorder %s36, 0
      %p186 = por %p184, %p185
      %p187 = scmp.ne.s32.totalorder %s176, %s179
      %p188 = scmp.eq.s32.totalorder %s41, 1
      %p189 = por %p187, %p188
      %p190 = scmp.ne.s32.totalorder %s179, %s180
      %p191 = scmp.eq.s32.totalorder %s41, 0
      %p192 = por %p190, %p191
      %p193 = scmp.ne.s32.totalorder %s179, %s180
      %p194 = scmp.eq.s32.totalorder %s42, 1
      %p195 = por %p193, %p194
      %p197 = scmp.ne.s32.totalorder %s180, %s196
      %p198 = scmp.eq.s32.totalorder %s42, 0
      %p199 = por %p197, %p198
      %s200 = ssub.s32 %s36, %s43
      %p201 = scmp.eq.s32.totalorder %s200, 0
      %s203 = sadd.s32 %s202, 1
      %s204 = scalar_select %p201, %s202, %s203
      %p207 = pneg %p201
      %p208 = scmp.eq.s32.totalorder %s36, 1
      %p209 = por %p207, %p208
      %p210 = scmp.ne.s32.totalorder %s202, %s205
      %p211 = scmp.eq.s32.totalorder %s36, 0
      %p212 = por %p210, %p211
      %p213 = scmp.ne.s32.totalorder %s202, %s205
      %p214 = scmp.eq.s32.totalorder %s41, 1
      %p215 = por %p213, %p214
      %p216 = scmp.ne.s32.totalorder %s205, %s206
      %p217 = scmp.eq.s32.totalorder %s41, 0
      %p218 = por %p216, %p217
      %p219 = scmp.ne.s32.totalorder %s205, %s206
      %p220 = scmp.eq.s32.totalorder %s42, 1
      %p221 = por %p219, %p220
      %p223 = scmp.ne.s32.totalorder %s206, %s222
      %p224 = scmp.eq.s32.totalorder %s42, 0
      %p225 = por %p223, %p224
      %s226 = ssub.s32 %s36, %s43
      %p227 = scmp.eq.s32.totalorder %s226, 0
      %s229 = sadd.s32 %s228, 1
      %s230 = scalar_select %p227, %s228, %s229
      %p233 = pneg %p227
      %p234 = scmp.eq.s32.totalorder %s36, 1
      %p235 = por %p233, %p234
      %p236 = scmp.ne.s32.totalorder %s228, %s231
      %p237 = scmp.eq.s32.totalorder %s36, 0
      %p238 = por %p236, %p237
      %p239 = scmp.ne.s32.totalorder %s228, %s231
      %p240 = scmp.eq.s32.totalorder %s41, 1
      %p241 = por %p239, %p240
      %p242 = scmp.ne.s32.totalorder %s231, %s232
      %p243 = scmp.eq.s32.totalorder %s41, 0
      %p244 = por %p242, %p243
      %p245 = scmp.ne.s32.totalorder %s231, %s232
      %p246 = scmp.eq.s32.totalorder %s42, 1
      %p247 = por %p245, %p246
      %p249 = scmp.ne.s32.totalorder %s232, %s248
      %p250 = scmp.eq.s32.totalorder %s42, 0
      %p251 = por %p249, %p250
      %s253 = sadd.s32 %s252, 1
      %p256 = scmp.eq.s32.totalorder %s36, 1
      %p257 = scmp.ne.s32.totalorder %s252, %s254
      %p258 = scmp.eq.s32.totalorder %s36, 0
      %p259 = por %p257, %p258
      %p260 = scmp.ne.s32.totalorder %s252, %s254
      %p261 = scmp.eq.s32.totalorder %s41, 1
      %p262 = por %p260, %p261
      %p263 = scmp.ne.s32.totalorder %s254, %s255
      %p264 = scmp.eq.s32.totalorder %s41, 0
      %p265 = por %p263, %p264
      %p266 = scmp.ne.s32.totalorder %s254, %s255
      %p267 = scmp.eq.s32.totalorder %s42, 1
      %p268 = por %p266, %p267
      %p270 = scmp.ne.s32.totalorder %s255, %s269
      %p271 = scmp.eq.s32.totalorder %s42, 0
      %p272 = por %p270, %p271
      %s274 = sadd.s32 %s273, 1
      %p277 = scmp.eq.s32.totalorder %s36, 1
      %p278 = scmp.ne.s32.totalorder %s273, %s275
      %p279 = scmp.eq.s32.totalorder %s36, 0
      %p280 = por %p278, %p279
      %p281 = scmp.ne.s32.totalorder %s273, %s275
      %p282 = scmp.eq.s32.totalorder %s41, 1
      %p283 = por %p281, %p282
      %p284 = scmp.ne.s32.totalorder %s275, %s276
      %p285 = scmp.eq.s32.totalorder %s41, 0
      %p286 = por %p284, %p285
      %p287 = scmp.ne.s32.totalorder %s275, %s276
      %p288 = scmp.eq.s32.totalorder %s42, 1
      %p289 = por %p287, %p288
      %p291 = scmp.ne.s32.totalorder %s276, %s290
      %p292 = scmp.eq.s32.totalorder %s42, 0
      %p293 = por %p291, %p292
      %s295 = sadd.s32 %s294, 1
      %p298 = scmp.eq.s32.totalorder %s36, 1
      %p299 = scmp.ne.s32.totalorder %s294, %s296
      %p300 = scmp.eq.s32.totalorder %s36, 0
      %p301 = por %p299, %p300
      %p302 = scmp.ne.s32.totalorder %s294, %s296
      %p303 = scmp.eq.s32.totalorder %s41, 1
      %p304 = por %p302, %p303
      %p305 = scmp.ne.s32.totalorder %s296, %s297
      %p306 = scmp.eq.s32.totalorder %s41, 0
      %p307 = por %p305, %p306
      %p308 = scmp.ne.s32.totalorder %s296, %s297
      %p309 = scmp.eq.s32.totalorder %s42, 1
      %p310 = por %p308, %p309
      %p312 = scmp.ne.s32.totalorder %s297, %s311
      %p313 = scmp.eq.s32.totalorder %s42, 0
      %p314 = por %p312, %p313
      %s316 = sadd.s32 %s315, 1
      %p319 = scmp.eq.s32.totalorder %s36, 1
      %p320 = scmp.ne.s32.totalorder %s315, %s317
      %p321 = scmp.eq.s32.totalorder %s36, 0
      %p322 = por %p320, %p321
      %p323 = scmp.ne.s32.totalorder %s315, %s317
      %p324 = scmp.eq.s32.totalorder %s41, 1
      %p325 = por %p323, %p324
      %p326 = scmp.ne.s32.totalorder %s317, %s318
      %p327 = scmp.eq.s32.totalorder %s41, 0
      %p328 = por %p326, %p327
      %p329 = scmp.ne.s32.totalorder %s317, %s318
      %p330 = scmp.eq.s32.totalorder %s42, 1
      %p331 = por %p329, %p330
      %p333 = scmp.ne.s32.totalorder %s318, %s332
      %p334 = scmp.eq.s32.totalorder %s42, 0
      %p335 = por %p333, %p334
      %s337 = sadd.s32 %s336, 1
      %p340 = scmp.eq.s32.totalorder %s36, 1
      %p341 = scmp.ne.s32.totalorder %s336, %s338
      %p342 = scmp.eq.s32.totalorder %s36, 0
      %p343 = por %p341, %p342
      %p344 = scmp.ne.s32.totalorder %s336, %s338
      %p345 = scmp.eq.s32.totalorder %s41, 1
      %p346 = por %p344, %p345
      %p347 = scmp.ne.s32.totalorder %s338, %s339
      %p348 = scmp.eq.s32.totalorder %s41, 0
      %p349 = por %p347, %p348
      %p350 = scmp.ne.s32.totalorder %s338, %s339
      %p351 = scmp.eq.s32.totalorder %s42, 1
      %p352 = por %p350, %p351
      %p354 = scmp.ne.s32.totalorder %s339, %s353
      %p355 = scmp.eq.s32.totalorder %s42, 0
      %p356 = por %p354, %p355
      %s358 = sadd.s32 %s357, 1
      %p361 = scmp.eq.s32.totalorder %s36, 1
      %p362 = scmp.ne.s32.totalorder %s357, %s359
      %p363 = scmp.eq.s32.totalorder %s36, 0
      %p364 = por %p362, %p363
      %p365 = scmp.ne.s32.totalorder %s357, %s359
      %p366 = scmp.eq.s32.totalorder %s41, 1
      %p367 = por %p365, %p366
      %p368 = scmp.ne.s32.totalorder %s359, %s360
      %p369 = scmp.eq.s32.totalorder %s41, 0
      %p370 = por %p368, %p369
      %p371 = scmp.ne.s32.totalorder %s359, %s360
      %p372 = scmp.eq.s32.totalorder %s42, 1
      %p373 = por %p371, %p372
      %p375 = scmp.ne.s32.totalorder %s360, %s374
      %p376 = scmp.eq.s32.totalorder %s42, 0
      %p377 = por %p375, %p376
      %s379 = sadd.s32 %s378, 1
      %p382 = scmp.eq.s32.totalorder %s36, 1
      %p383 = scmp.ne.s32.totalorder %s378, %s380
      %p384 = scmp.eq.s32.totalorder %s36, 0
      %p385 = por %p383, %p384
      %p386 = scmp.ne.s32.totalorder %s378, %s380
      %p387 = scmp.eq.s32.totalorder %s41, 1
      %p388 = por %p386, %p387
      %p389 = scmp.ne.s32.totalorder %s380, %s381
      %p390 = scmp.eq.s32.totalorder %s41, 0
      %p391 = por %p389, %p390
      %p392 = scmp.ne.s32.totalorder %s380, %s381
      %p393 = scmp.eq.s32.totalorder %s42, 1
      %p394 = por %p392, %p393
      %p396 = scmp.ne.s32.totalorder %s381, %s395
      %p397 = scmp.eq.s32.totalorder %s42, 0
      %p398 = por %p396, %p397
      %s400 = sadd.s32 %s399, 1
      %p403 = scmp.eq.s32.totalorder %s36, 1
      %p404 = scmp.ne.s32.totalorder %s399, %s401
      %p405 = scmp.eq.s32.totalorder %s36, 0
      %p406 = por %p404, %p405
      %p407 = scmp.ne.s32.totalorder %s399, %s401
      %p408 = scmp.eq.s32.totalorder %s41, 1
      %p409 = por %p407, %p408
      %p410 = scmp.ne.s32.totalorder %s401, %s402
      %p411 = scmp.eq.s32.totalorder %s41, 0
      %p412 = por %p410, %p411
      %p413 = scmp.ne.s32.totalorder %s401, %s402
      %p414 = scmp.eq.s32.totalorder %s42, 1
      %p415 = por %p413, %p414
      %p417 = scmp.ne.s32.totalorder %s402, %s416
      %p418 = scmp.eq.s32.totalorder %s42, 0
      %p419 = por %p417, %p418
      %s421 = sadd.s32 %s420, 1
      %p424 = scmp.eq.s32.totalorder %s36, 1
      %p425 = scmp.ne.s32.totalorder %s420, %s422
      %p426 = scmp.eq.s32.totalorder %s36, 0
      %p427 = por %p425, %p426
      %p428 = scmp.ne.s32.totalorder %s420, %s422
      %p429 = scmp.eq.s32.totalorder %s41, 1
      %p430 = por %p428, %p429
      %p431 = scmp.ne.s32.totalorder %s422, %s423
      %p432 = scmp.eq.s32.totalorder %s41, 0
      %p433 = por %p431, %p432
      %p434 = scmp.ne.s32.totalorder %s422, %s423
      %p435 = scmp.eq.s32.totalorder %s42, 1
      %p436 = por %p434, %p435
      %p438 = scmp.ne.s32.totalorder %s423, %s437
      %p439 = scmp.eq.s32.totalorder %s42, 0
      %p440 = por %p438, %p439
      %s442 = sadd.s32 %s441, 1
      %p445 = scmp.eq.s32.totalorder %s36, 1
      %p446 = scmp.ne.s32.totalorder %s441, %s443
      %p447 = scmp.eq.s32.totalorder %s36, 0
      %p448 = por %p446, %p447
      %p449 = scmp.ne.s32.totalorder %s441, %s443
      %p450 = scmp.eq.s32.totalorder %s41, 1
      %p451 = por %p449, %p450
      %p452 = scmp.ne.s32.totalorder %s443, %s444
      %p453 = scmp.eq.s32.totalorder %s41, 0
      %p454 = por %p452, %p453
      %p455 = scmp.ne.s32.totalorder %s443, %s444
      %p456 = scmp.eq.s32.totalorder %s42, 1
      %p457 = por %p455, %p456
      %p459 = scmp.ne.s32.totalorder %s444, %s458
      %p460 = scmp.eq.s32.totalorder %s42, 0
      %p461 = por %p459, %p460
      %s463 = sadd.s32 %s462, 1
      %p466 = scmp.eq.s32.totalorder %s36, 1
      %p467 = scmp.ne.s32.totalorder %s462, %s464
      %p468 = scmp.eq.s32.totalorder %s36, 0
      %p469 = por %p467, %p468
      %p470 = scmp.ne.s32.totalorder %s462, %s464
      %p471 = scmp.eq.s32.totalorder %s41, 1
      %p472 = por %p470, %p471
      %p473 = scmp.ne.s32.totalorder %s464, %s465
      %p474 = scmp.eq.s32.totalorder %s41, 0
      %p475 = por %p473, %p474
      %p476 = scmp.ne.s32.totalorder %s464, %s465
      %p477 = scmp.eq.s32.totalorder %s42, 1
      %p478 = por %p476, %p477
      %p480 = scmp.ne.s32.totalorder %s465, %s479
      %p481 = scmp.eq.s32.totalorder %s42, 0
      %p482 = por %p480, %p481
      %s484 = sadd.s32 %s483, 1
      %p487 = scmp.eq.s32.totalorder %s36, 1
      %p488 = scmp.ne.s32.totalorder %s483, %s485
      %p489 = scmp.eq.s32.totalorder %s36, 0
      %p490 = por %p488, %p489
      %p491 = scmp.ne.s32.totalorder %s483, %s485
      %p492 = scmp.eq.s32.totalorder %s41, 1
      %p493 = por %p491, %p492
      %p494 = scmp.ne.s32.totalorder %s485, %s486
      %p495 = scmp.eq.s32.totalorder %s41, 0
      %p496 = por %p494, %p495
      %p497 = scmp.ne.s32.totalorder %s485, %s486
      %p498 = scmp.eq.s32.totalorder %s42, 1
      %p499 = por %p497, %p498
      %p501 = scmp.ne.s32.totalorder %s486, %s500
      %p502 = scmp.eq.s32.totalorder %s42, 0
      %p503 = por %p501, %p502
      %s505 = sadd.s32 %s504, 1
      %p508 = scmp.eq.s32.totalorder %s36, 1
      %p509 = scmp.ne.s32.totalorder %s504, %s506
      %p510 = scmp.eq.s32.totalorder %s36, 0
      %p511 = por %p509, %p510
      %p512 = scmp.ne.s32.totalorder %s504, %s506
      %p513 = scmp.eq.s32.totalorder %s41, 1
      %p514 = por %p512, %p513
      %p515 = scmp.ne.s32.totalorder %s506, %s507
      %p516 = scmp.eq.s32.totalorder %s41, 0
      %p517 = por %p515, %p516
      %p518 = scmp.ne.s32.totalorder %s506, %s507
      %p519 = scmp.eq.s32.totalorder %s42, 1
      %p520 = por %p518, %p519
      %p522 = scmp.ne.s32.totalorder %s507, %s521
      %p523 = scmp.eq.s32.totalorder %s42, 0
      %p524 = por %p522, %p523
      %s526 = sadd.s32 %s525, 1
      %p529 = scmp.eq.s32.totalorder %s36, 1
      %p530 = scmp.ne.s32.totalorder %s525, %s527
      %p531 = scmp.eq.s32.totalorder %s36, 0
      %p532 = por %p530, %p531
      %p533 = scmp.ne.s32.totalorder %s525, %s527
      %p534 = scmp.eq.s32.totalorder %s41, 1
      %p535 = por %p533, %p534
      %p536 = scmp.ne.s32.totalorder %s527, %s528
      %p537 = scmp.eq.s32.totalorder %s41, 0
      %p538 = por %p536, %p537
      %p539 = scmp.ne.s32.totalorder %s527, %s528
      %p540 = scmp.eq.s32.totalorder %s42, 1
      %p541 = por %p539, %p540
      %p543 = scmp.ne.s32.totalorder %s528, %s542
      %p544 = scmp.eq.s32.totalorder %s42, 0
      %p545 = por %p543, %p544
      %s547 = sadd.s32 %s546, 1
      %p550 = scmp.eq.s32.totalorder %s36, 1
      %p551 = scmp.ne.s32.totalorder %s546, %s548
      %p552 = scmp.eq.s32.totalorder %s36, 0
      %p553 = por %p551, %p552
      %p554 = scmp.ne.s32.totalorder %s546, %s548
      %p555 = scmp.eq.s32.totalorder %s41, 1
      %p556 = por %p554, %p555
      %p557 = scmp.ne.s32.totalorder %s548, %s549
      %p558 = scmp.eq.s32.totalorder %s41, 0
      %p559 = por %p557, %p558
      %p560 = scmp.ne.s32.totalorder %s548, %s549
      %p561 = scmp.eq.s32.totalorder %s42, 1
      %p562 = por %p560, %p561
      %p564 = scmp.ne.s32.totalorder %s549, %s563
      %p565 = scmp.eq.s32.totalorder %s42, 0
      %p566 = por %p564, %p565
      %s568 = sadd.s32 %s567, 1
      %p571 = scmp.eq.s32.totalorder %s36, 1
      %p572 = scmp.ne.s32.totalorder %s567, %s569
      %p573 = scmp.eq.s32.totalorder %s36, 0
      %p574 = por %p572, %p573
      %p575 = scmp.ne.s32.totalorder %s567, %s569
      %p576 = scmp.eq.s32.totalorder %s41, 1
      %p577 = por %p575, %p576
      %p578 = scmp.ne.s32.totalorder %s569, %s570
      %p579 = scmp.eq.s32.totalorder %s41, 0
      %p580 = por %p578, %p579
      %p581 = scmp.ne.s32.totalorder %s569, %s570
      %p582 = scmp.eq.s32.totalorder %s42, 1
      %p583 = por %p581, %p582
      %p585 = scmp.ne.s32.totalorder %s570, %s584
      %p586 = scmp.eq.s32.totalorder %s42, 0
      %p587 = por %p585, %p586
      %s589 = sadd.s32 %s588, 1
      %p592 = scmp.eq.s32.totalorder %s36, 1
      %p593 = scmp.ne.s32.totalorder %s588, %s590
      %p594 = scmp.eq.s32.totalorder %s36, 0
      %p595 = por %p593, %p594
      %p596 = scmp.ne.s32.totalorder %s588, %s590
      %p597 = scmp.eq.s32.totalorder %s41, 1
      %p598 = por %p596, %p597
      %p599 = scmp.ne.s32.totalorder %s590, %s591
      %p600 = scmp.eq.s32.totalorder %s41, 0
      %p601 = por %p599, %p600
      %p602 = scmp.ne.s32.totalorder %s590, %s591
      %p603 = scmp.eq.s32.totalorder %s42, 1
      %p604 = por %p602, %p603
      %p606 = scmp.ne.s32.totalorder %s591, %s605
      %p607 = scmp.eq.s32.totalorder %s42, 0
      %p608 = por %p606, %p607
      %s610 = sadd.s32 %s609, 1
      %p613 = scmp.eq.s32.totalorder %s36, 1
      %p614 = scmp.ne.s32.totalorder %s609, %s611
      %p615 = scmp.eq.s32.totalorder %s36, 0
      %p616 = por %p614, %p615
      %p617 = scmp.ne.s32.totalorder %s609, %s611
      %p618 = scmp.eq.s32.totalorder %s41, 1
      %p619 = por %p617, %p618
      %p620 = scmp.ne.s32.totalorder %s611, %s612
      %p621 = scmp.eq.s32.totalorder %s41, 0
      %p622 = por %p620, %p621
      %p623 = scmp.ne.s32.totalorder %s611, %s612
      %p624 = scmp.eq.s32.totalorder %s42, 1
      %p625 = por %p623, %p624
      %p627 = scmp.ne.s32.totalorder %s612, %s626
      %p628 = scmp.eq.s32.totalorder %s42, 0
      %p629 = por %p627, %p628
      %s631 = sadd.s32 %s630, 1
      %p634 = scmp.eq.s32.totalorder %s36, 1
      %p635 = scmp.ne.s32.totalorder %s630, %s632
      %p636 = scmp.eq.s32.totalorder %s36, 0
      %p637 = por %p635, %p636
      %p638 = scmp.ne.s32.totalorder %s630, %s632
      %p639 = scmp.eq.s32.totalorder %s41, 1
      %p640 = por %p638, %p639
      %p641 = scmp.ne.s32.totalorder %s632, %s633
      %p642 = scmp.eq.s32.totalorder %s41, 0
      %p643 = por %p641, %p642
      %p644 = scmp.ne.s32.totalorder %s632, %s633
      %p645 = scmp.eq.s32.totalorder %s42, 1
      %p646 = por %p644, %p645
      %p648 = scmp.ne.s32.totalorder %s633, %s647
      %p649 = scmp.eq.s32.totalorder %s42, 0
      %p650 = por %p648, %p649
      %s651 = ssub.s32 %s36, %s43
      %p652 = scmp.eq.s32.totalorder %s651, 0
      %s654 = sadd.s32 %s653, 1
      %s655 = scalar_select %p652, %s653, %s654
      %p658 = pneg %p652
      %p659 = scmp.eq.s32.totalorder %s36, 1
      %p660 = por %p658, %p659
      %p661 = scmp.ne.s32.totalorder %s653, %s656
      %p662 = scmp.eq.s32.totalorder %s36, 0
      %p663 = por %p661, %p662
      %p664 = scmp.ne.s32.totalorder %s653, %s656
      %p665 = scmp.eq.s32.totalorder %s41, 1
      %p666 = por %p664, %p665
      %p667 = scmp.ne.s32.totalorder %s656, %s657
      %p668 = scmp.eq.s32.totalorder %s41, 0
      %p669 = por %p667, %p668
      %p670 = scmp.ne.s32.totalorder %s656, %s657
      %p671 = scmp.eq.s32.totalorder %s42, 1
      %p672 = por %p670, %p671
      %p674 = scmp.ne.s32.totalorder %s657, %s673
      %p675 = scmp.eq.s32.totalorder %s42, 0
      %p676 = por %p674, %p675
      %p677 = scmp.le.s32.totalorder 1, %s36
      %p678 = scmp.lt.s32.totalorder %s36, 3
      %p679 = pnand %p677, %p678
      %p680 = pneg %p679
      // Predicated region
      $region9: #{encoder_actor_forward.1} parent=5 // pred_check
        _
      $region10: #{encoder_actor_forward.1} parent=5 // pred_check_branch
        %682 = sbr.rel (%p679) target = $region12
      $region11: #{encoder_actor_forward.1} parent=5 // pred_region
        %s683 = ssub.s32 %s36, 1
        // Predicated region
        $region13: #{encoder_actor_forward.1} parent=11 // pred_check
          %p684 = pneg %p265
        $region14: #{encoder_actor_forward.1} parent=11 // pred_check_branch
          %686 = sbr.rel (%p684) target = $region16
        $region15: #{encoder_actor_forward.1} parent=11 // pred_region
          _
        $region16: #{encoder_actor_forward.1} parent=11 // pred_fallthru
          _
        // Predicated region
        $region17: #{encoder_actor_forward.1} parent=11 // pred_check
          %p687 = pneg %p286
        $region18: #{encoder_actor_forward.1} parent=11 // pred_check_branch
          %689 = sbr.rel (%p687) target = $region20
        $region19: #{encoder_actor_forward.1} parent=11 // pred_region
          _
        $region20: #{encoder_actor_forward.1} parent=11 // pred_fallthru
          _
        // Predicated region
        $region21: #{encoder_actor_forward.1} parent=11 // pred_check
          %p690 = pneg %p307
        $region22: #{encoder_actor_forward.1} parent=11 // pred_check_branch
          %692 = sbr.rel (%p690) target = $region24
        $region23: #{encoder_actor_forward.1} parent=11 // pred_region
          _
        $region24: #{encoder_actor_forward.1} parent=11 // pred_fallthru
          _
        // Predicated region
        $region25: #{encoder_actor_forward.1} parent=11 // pred_check
          %p693 = pneg %p328
        $region26: #{encoder_actor_forward.1} parent=11 // pred_check_branch
          %695 = sbr.rel (%p693) target = $region28
        $region27: #{encoder_actor_forward.1} parent=11 // pred_region
          _
        $region28: #{encoder_actor_forward.1} parent=11 // pred_fallthru
          _
        // Predicated region
        $region29: #{encoder_actor_forward.1} parent=11 // pred_check
          %p696 = pneg %p349
        $region30: #{encoder_actor_forward.1} parent=11 // pred_check_branch
          %698 = sbr.rel (%p696) target = $region32
        $region31: #{encoder_actor_forward.1} parent=11 // pred_region
          _
        $region32: #{encoder_actor_forward.1} parent=11 // pred_fallthru
          _
        // Predicated region
        $region33: #{encoder_actor_forward.1} parent=11 // pred_check
          %p699 = pneg %p370
        $region34: #{encoder_actor_forward.1} parent=11 // pred_check_branch
          %701 = sbr.rel (%p699) target = $region36
        $region35: #{encoder_actor_forward.1} parent=11 // pred_region
          _
        $region36: #{encoder_actor_forward.1} parent=11 // pred_fallthru
          _
        // Predicated region
        $region37: #{encoder_actor_forward.1} parent=11 // pred_check
          %p702 = pneg %p391
        $region38: #{encoder_actor_forward.1} parent=11 // pred_check_branch
          %704 = sbr.rel (%p702) target = $region40
        $region39: #{encoder_actor_forward.1} parent=11 // pred_region
          _
        $region40: #{encoder_actor_forward.1} parent=11 // pred_fallthru
          _
        // Predicated region
        $region41: #{encoder_actor_forward.1} parent=11 // pred_check
          %p705 = pneg %p412
        $region42: #{encoder_actor_forward.1} parent=11 // pred_check_branch
          %707 = sbr.rel (%p705) target = $region44
        $region43: #{encoder_actor_forward.1} parent=11 // pred_region
          _
        $region44: #{encoder_actor_forward.1} parent=11 // pred_fallthru
          _
        // Predicated region
        $region45: #{encoder_actor_forward.1} parent=11 // pred_check
          %p708 = pneg %p433
        $region46: #{encoder_actor_forward.1} parent=11 // pred_check_branch
          %710 = sbr.rel (%p708) target = $region48
        $region47: #{encoder_actor_forward.1} parent=11 // pred_region
          _
        $region48: #{encoder_actor_forward.1} parent=11 // pred_fallthru
          _
        // Predicated region
        $region49: #{encoder_actor_forward.1} parent=11 // pred_check
          %p711 = pneg %p454
        $region50: #{encoder_actor_forward.1} parent=11 // pred_check_branch
          %713 = sbr.rel (%p711) target = $region52
        $region51: #{encoder_actor_forward.1} parent=11 // pred_region
          _
        $region52: #{encoder_actor_forward.1} parent=11 // pred_fallthru
          _
        // Predicated region
        $region53: #{encoder_actor_forward.1} parent=11 // pred_check
          %p714 = pneg %p475
        $region54: #{encoder_actor_forward.1} parent=11 // pred_check_branch
          %716 = sbr.rel (%p714) target = $region56
        $region55: #{encoder_actor_forward.1} parent=11 // pred_region
          _
        $region56: #{encoder_actor_forward.1} parent=11 // pred_fallthru
          _
        // Predicated region
        $region57: #{encoder_actor_forward.1} parent=11 // pred_check
          %p717 = pneg %p496
        $region58: #{encoder_actor_forward.1} parent=11 // pred_check_branch
          %719 = sbr.rel (%p717) target = $region60
        $region59: #{encoder_actor_forward.1} parent=11 // pred_region
          _
        $region60: #{encoder_actor_forward.1} parent=11 // pred_fallthru
          _
        // Predicated region
        $region61: #{encoder_actor_forward.1} parent=11 // pred_check
          %p720 = pneg %p517
        $region62: #{encoder_actor_forward.1} parent=11 // pred_check_branch
          %722 = sbr.rel (%p720) target = $region64
        $region63: #{encoder_actor_forward.1} parent=11 // pred_region
          _
        $region64: #{encoder_actor_forward.1} parent=11 // pred_fallthru
          _
        // Predicated region
        $region65: #{encoder_actor_forward.1} parent=11 // pred_check
          %p723 = pneg %p538
        $region66: #{encoder_actor_forward.1} parent=11 // pred_check_branch
          %725 = sbr.rel (%p723) target = $region68
        $region67: #{encoder_actor_forward.1} parent=11 // pred_region
          _
        $region68: #{encoder_actor_forward.1} parent=11 // pred_fallthru
          _
        // Predicated region
        $region69: #{encoder_actor_forward.1} parent=11 // pred_check
          %p726 = pneg %p559
        $region70: #{encoder_actor_forward.1} parent=11 // pred_check_branch
          %728 = sbr.rel (%p726) target = $region72
        $region71: #{encoder_actor_forward.1} parent=11 // pred_region
          _
        $region72: #{encoder_actor_forward.1} parent=11 // pred_fallthru
          _
        // Predicated region
        $region73: #{encoder_actor_forward.1} parent=11 // pred_check
          %p729 = pneg %p580
        $region74: #{encoder_actor_forward.1} parent=11 // pred_check_branch
          %731 = sbr.rel (%p729) target = $region76
        $region75: #{encoder_actor_forward.1} parent=11 // pred_region
          _
        $region76: #{encoder_actor_forward.1} parent=11 // pred_fallthru
          _
        // Predicated region
        $region77: #{encoder_actor_forward.1} parent=11 // pred_check
          %p732 = pneg %p601
        $region78: #{encoder_actor_forward.1} parent=11 // pred_check_branch
          %734 = sbr.rel (%p732) target = $region80
        $region79: #{encoder_actor_forward.1} parent=11 // pred_region
          _
        $region80: #{encoder_actor_forward.1} parent=11 // pred_fallthru
          _
        // Predicated region
        $region81: #{encoder_actor_forward.1} parent=11 // pred_check
          %p735 = pneg %p622
        $region82: #{encoder_actor_forward.1} parent=11 // pred_check_branch
          %737 = sbr.rel (%p735) target = $region84
        $region83: #{encoder_actor_forward.1} parent=11 // pred_region
          _
        $region84: #{encoder_actor_forward.1} parent=11 // pred_fallthru
          _
        // Predicated region
        $region85: #{encoder_actor_forward.1} parent=11 // pred_check
          %p738 = pneg %p643
        $region86: #{encoder_actor_forward.1} parent=11 // pred_check_branch
          %740 = sbr.rel (%p738) target = $region88
        $region87: #{encoder_actor_forward.1} parent=11 // pred_region
          _
        $region88: #{encoder_actor_forward.1} parent=11 // pred_fallthru
          _
      $region12: #{encoder_actor_forward.1} parent=5 // pred_fallthru
        _
      %p741 = scmp.lt.s32.totalorder %s36, 2
      // Predicated region
      $region89: #{encoder_actor_forward.1} parent=5 // pred_check
        %p742 = pneg %p741
      $region90: #{encoder_actor_forward.1} parent=5 // pred_check_branch
        %744 = sbr.rel (%p742) target = $region92
      $region91: #{encoder_actor_forward.1} parent=5 // pred_region
        // Predicated region
        $region93: #{encoder_actor_forward.1} parent=91 // pred_check
          %p745 = pneg %p56
        $region94: #{encoder_actor_forward.1} parent=91 // pred_check_branch
          %747 = sbr.rel (%p745) target = $region96
        $region95: #{encoder_actor_forward.1} parent=91 // pred_region
          %p748 = scmp.lt.s32.totalorder %s36, 1
          %s749 = scalar_select %p748, %s36, 1
          %s750 = smul.addr %s749, 4
          %s751 = scalar_lea.vmem %s0, %s750
        $region96: #{encoder_actor_forward.1} parent=91 // pred_fallthru
          _
        // Predicated region
        $region97: #{encoder_actor_forward.1} parent=91 // pred_check
          %p752 = pneg %p82
        $region98: #{encoder_actor_forward.1} parent=91 // pred_check_branch
          %754 = sbr.rel (%p752) target = $region100
        $region99: #{encoder_actor_forward.1} parent=91 // pred_region
          %p755 = scmp.lt.s32.totalorder %s36, 1
          %s756 = scalar_select %p755, %s36, 1
          %s757 = smul.addr %s756, 8
          %s758 = smul.addr %s757, 4
          %s759 = scalar_lea.vmem %s1, %s758
        $region100: #{encoder_actor_forward.1} parent=91 // pred_fallthru
          _
        // Predicated region
        $region101: #{encoder_actor_forward.1} parent=91 // pred_check
          %p760 = pneg %p108
        $region102: #{encoder_actor_forward.1} parent=91 // pred_check_branch
          %762 = sbr.rel (%p760) target = $region104
        $region103: #{encoder_actor_forward.1} parent=91 // pred_region
          %s763 = smul.u32 8, %s36
          %p764 = scmp.lt.s32.totalorder %s763, 15
          %s765 = scalar_select %p764, %s763, 15
          %s766 = smul.addr %s765, 4
          %s767 = scalar_lea.vmem %s2, %s766
          %s768 = smul.u32 8, %s36
        $region104: #{encoder_actor_forward.1} parent=91 // pred_fallthru
          _
        // Predicated region
        $region105: #{encoder_actor_forward.1} parent=91 // pred_check
          %p769 = pneg %p134
        $region106: #{encoder_actor_forward.1} parent=91 // pred_check_branch
          %771 = sbr.rel (%p769) target = $region108
        $region107: #{encoder_actor_forward.1} parent=91 // pred_region
          %s772 = smul.u32 64, %s36
          %p773 = scmp.lt.s32.totalorder %s772, 127
          %s774 = scalar_select %p773, %s772, 127
          %s775 = smul.addr %s774, 4
          %s776 = scalar_lea.vmem %s3, %s775
          %s777 = smul.u32 64, %s36
        $region108: #{encoder_actor_forward.1} parent=91 // pred_fallthru
          _
        // Predicated region
        $region109: #{encoder_actor_forward.1} parent=91 // pred_check
          %p778 = pneg %p160
        $region110: #{encoder_actor_forward.1} parent=91 // pred_check_branch
          %780 = sbr.rel (%p778) target = $region112
        $region111: #{encoder_actor_forward.1} parent=91 // pred_region
          %s781 = smul.u32 64, %s36
          %p782 = scmp.lt.s32.totalorder %s781, 127
          %s783 = scalar_select %p782, %s781, 127
          %s784 = smul.addr %s783, 8
          %s785 = scalar_lea.vmem %s4, %s784
          %s786 = smul.u32 64, %s36
        $region112: #{encoder_actor_forward.1} parent=91 // pred_fallthru
          _
        // Predicated region
        $region113: #{encoder_actor_forward.1} parent=91 // pred_check
          %p787 = pneg %p186
        $region114: #{encoder_actor_forward.1} parent=91 // pred_check_branch
          %789 = sbr.rel (%p787) target = $region116
        $region115: #{encoder_actor_forward.1} parent=91 // pred_region
          %s790 = smul.u32 8, %s36
          %p791 = scmp.lt.s32.totalorder %s790, 15
          %s792 = scalar_select %p791, %s790, 15
          %s793 = smul.addr %s792, 4
          %s794 = scalar_lea.vmem %s5, %s793
          %s795 = smul.u32 8, %s36
        $region116: #{encoder_actor_forward.1} parent=91 // pred_fallthru
          _
        // Predicated region
        $region117: #{encoder_actor_forward.1} parent=91 // pred_check
          %p796 = pneg %p212
        $region118: #{encoder_actor_forward.1} parent=91 // pred_check_branch
          %798 = sbr.rel (%p796) target = $region120
        $region119: #{encoder_actor_forward.1} parent=91 // pred_region
          %s799 = smul.u32 64, %s36
          %p800 = scmp.lt.s32.totalorder %s799, 127
          %s801 = scalar_select %p800, %s799, 127
          %s802 = smul.addr %s801, 4
          %s803 = scalar_lea.vmem %s6, %s802
          %s804 = smul.u32 64, %s36
        $region120: #{encoder_actor_forward.1} parent=91 // pred_fallthru
          _
        // Predicated region
        $region121: #{encoder_actor_forward.1} parent=91 // pred_check
          %p805 = pneg %p238
        $region122: #{encoder_actor_forward.1} parent=91 // pred_check_branch
          %807 = sbr.rel (%p805) target = $region124
        $region123: #{encoder_actor_forward.1} parent=91 // pred_region
          %s808 = smul.u32 64, %s36
          %p809 = scmp.lt.s32.totalorder %s808, 127
          %s810 = scalar_select %p809, %s808, 127
          %s811 = smul.addr %s810, 8
          %s812 = scalar_lea.vmem %s7, %s811
          %s813 = smul.u32 64, %s36
        $region124: #{encoder_actor_forward.1} parent=91 // pred_fallthru
          _
      $region92: #{encoder_actor_forward.1} parent=5 // pred_fallthru
        _
      %p814 = scmp.le.s32.totalorder 1, %s36
      %p815 = scmp.lt.s32.totalorder %s36, 3
      %p816 = pnand %p814, %p815
      %p817 = pneg %p816
      // Predicated region
      $region125: #{encoder_actor_forward.1} parent=5 // pred_check
        _
      $region126: #{encoder_actor_forward.1} parent=5 // pred_check_branch
        %819 = sbr.rel (%p816) target = $region128
      $region127: #{encoder_actor_forward.1} parent=5 // pred_region
        %s820 = ssub.s32 %s36, 1
        %p821 = scmp.lt.s32.totalorder %s41, 1
        %s822 = scalar_select %p821, %s41, 1
        %s823 = smul.addr %s822, 4
        %s824 = scalar_lea.vmem %s0, %s823
        %p825 = pneg %p62
        %p826 = pneg %p59
        %p827 = scmp.lt.s32.totalorder %s41, 1
        %s828 = scalar_select %p827, %s41, 1
        %s829 = smul.addr %s828, 8
        %s830 = smul.addr %s829, 4
        %s831 = scalar_lea.vmem %s1, %s830
        %p832 = pneg %p88
        %p833 = pneg %p85
        %s834 = smul.u32 8, %s41
        %p835 = scmp.lt.s32.totalorder %s834, 15
        %s836 = scalar_select %p835, %s834, 15
        %s837 = smul.addr %s836, 4
        %s838 = scalar_lea.vmem %s2, %s837
        %p839 = pneg %p114
        %p840 = pneg %p111
        %s841 = smul.u32 64, %s41
        %p842 = scmp.lt.s32.totalorder %s841, 127
        %s843 = scalar_select %p842, %s841, 127
        %s844 = smul.addr %s843, 4
        %s845 = scalar_lea.vmem %s3, %s844
        %p846 = pneg %p140
        %p847 = pneg %p137
        %s848 = smul.u32 64, %s41
        %p849 = scmp.lt.s32.totalorder %s848, 127
        %s850 = scalar_select %p849, %s848, 127
        %s851 = smul.addr %s850, 8
        %s852 = scalar_lea.vmem %s4, %s851
        %p853 = pneg %p166
        %p854 = pneg %p163
        %s855 = smul.u32 8, %s41
        %p856 = scmp.lt.s32.totalorder %s855, 15
        %s857 = scalar_select %p856, %s855, 15
        %s858 = smul.addr %s857, 4
        %s859 = scalar_lea.vmem %s5, %s858
        %p860 = pneg %p192
        %p861 = pneg %p189
        %s862 = smul.u32 64, %s41
        %p863 = scmp.lt.s32.totalorder %s862, 127
        %s864 = scalar_select %p863, %s862, 127
        %s865 = smul.addr %s864, 4
        %s866 = scalar_lea.vmem %s6, %s865
        %p867 = pneg %p218
        %p868 = pneg %p215
        %s869 = smul.u32 64, %s41
        %p870 = scmp.lt.s32.totalorder %s869, 127
        %s871 = scalar_select %p870, %s869, 127
        %s872 = smul.addr %s871, 8
        %s873 = scalar_lea.vmem %s7, %s872
        %p874 = pneg %p244
        %p875 = pneg %p241
        %p876 = pneg %p265
        %p877 = pneg %p262
        %p878 = pneg %p286
        %p879 = pneg %p283
        %p880 = pneg %p307
        %p881 = pneg %p304
        %p882 = pneg %p328
        %p883 = pneg %p325
        %p884 = pneg %p349
        %p885 = pneg %p346
        %p886 = pneg %p370
        %p887 = pneg %p367
        %p888 = pneg %p391
        %p889 = pneg %p388
        %p890 = pneg %p412
        %p891 = pneg %p409
        %p892 = pneg %p433
        %p893 = pneg %p430
        %p894 = pneg %p454
        %p895 = pneg %p451
        %p896 = pneg %p475
        %p897 = pneg %p472
        %p898 = pneg %p496
        %p899 = pneg %p493
        %p900 = pneg %p517
        %p901 = pneg %p514
        %p902 = pneg %p538
        %p903 = pneg %p535
        %p904 = pneg %p559
        %p905 = pneg %p556
        %p906 = pneg %p580
        %p907 = pneg %p577
        %p908 = pneg %p601
        %p909 = pneg %p598
        %p910 = pneg %p622
        %p911 = pneg %p619
        %p912 = pneg %p643
        %p913 = pneg %p640
        %p914 = pneg %p669
        %p915 = pneg %p666
        %s916 = sand.u32 %s656, 1
        %s917 = scalar_lea.sflag [#allocation5], %s916
        %s918 = sand.u32 %s656, 1
        %s919 = smul.addr %s918, 8
        %s920 = scalar_lea.vmem [#allocation4], %s919
        %p921 = scmp.lt.s32.totalorder %s41, 1
        %s922 = scalar_select %p921, %s41, 1
        %s923 = smul.addr %s922, 4
        %s924 = scalar_lea.vmem %s0, %s923
        %p925 = scmp.lt.s32.totalorder %s41, 1
        %s926 = scalar_select %p925, %s41, 1
        %s927 = smul.addr %s926, 8
        %s928 = smul.addr %s927, 4
        %s929 = scalar_lea.vmem %s1, %s928
        %s930 = smul.u32 8, %s41
        %p931 = scmp.lt.s32.totalorder %s930, 15
        %s932 = scalar_select %p931, %s930, 15
        %s933 = smul.addr %s932, 4
        %s934 = scalar_lea.vmem %s2, %s933
        %s935 = smul.u32 8, %s41
        %s936 = smul.u32 64, %s41
        %p937 = scmp.lt.s32.totalorder %s936, 127
        %s938 = scalar_select %p937, %s936, 127
        %s939 = smul.addr %s938, 4
        %s940 = scalar_lea.vmem %s3, %s939
        %s941 = smul.u32 64, %s41
        %s942 = smul.u32 64, %s41
        %p943 = scmp.lt.s32.totalorder %s942, 127
        %s944 = scalar_select %p943, %s942, 127
        %s945 = smul.addr %s944, 8
        %s946 = scalar_lea.vmem %s4, %s945
        %s947 = smul.u32 64, %s41
        %s948 = smul.u32 8, %s41
        %p949 = scmp.lt.s32.totalorder %s948, 15
        %s950 = scalar_select %p949, %s948, 15
        %s951 = smul.addr %s950, 4
        %s952 = scalar_lea.vmem %s5, %s951
        %s953 = smul.u32 8, %s41
        %s954 = smul.u32 64, %s41
        %p955 = scmp.lt.s32.totalorder %s954, 127
        %s956 = scalar_select %p955, %s954, 127
        %s957 = smul.addr %s956, 4
        %s958 = scalar_lea.vmem %s6, %s957
        %s959 = smul.u32 64, %s41
        %s960 = smul.u32 64, %s41
        %p961 = scmp.lt.s32.totalorder %s960, 127
        %s962 = scalar_select %p961, %s960, 127
        %s963 = smul.addr %s962, 8
        %s964 = scalar_lea.vmem %s7, %s963
        %s965 = smul.u32 64, %s41
        %v967 = vld [vmem:[%s924] sm:$0xf]
        %v968 = vld [vmem:[%s8] sm:$0xf]
        %v969 = vld [vmem:[%s8 + $0x4] sm:$0xf]
        %v970 = vld [vmem:[%s26] sm:$0x1]
        %v971 = vperm.slane %v970, 0
        %v974 = vunpack.c.l.b16 %v968
        %v975 = vunpack.c.l.b16 %v969
        %v976 = vpack.c.b16 %v975, %v974
        %vm978 = vcmask 130048
        %v980 = vsel %vm978, %v967, 0
        %982 = vmatpush.bf16.msra.mxu0 0
        %983 = vmatpush.bf16.msra.mxu0 0
        %984 = vmatpush.bf16.msra.mxu0 0
        %985 = vmatpush.bf16.msra.mxu0 0
        %986 = vmatpush.bf16.msra.mxu0 0
        %987 = vmatpush.bf16.msra.mxu0 0
        %988 = vmatpush.bf16.msra.mxu0 0
        %989 = vmatpush.bf16.msra.mxu0 %v976
        %990 = vmatmul.bf16.gmra.mxu0 %v980
        %v991 = vpop.f32.mrf.mxu0
        %v992 = vadd.f32 %v971, %v991
        %v993 = vpop.f32.mrf.mxu0
        %994 = vdwg.mxu0
        %v995 = vmax.f32 %v992, 0.0
        %v996 = vpack.c.bf16 %v995, %v995
        %v997 = vld [vmem:[%s9] sm:$0xf]
        %v998 = vld [vmem:[%s26 + $0x1] sm:$0x1]
        %v999 = vperm.slane %v998, 0
        %vm1000 = vcmask 64512
        %v1002 = vsel %vm1000, %v996, 0
        %vm1004 = vcmask 1043456
        %v1006 = vsel %vm1004, %v997, 0
        %1008 = vmatpush.bf16.msra.mxu0 0
        %1009 = vmatpush.bf16.msra.mxu0 0
        %1010 = vmatpush.bf16.msra.mxu0 0
        %1011 = vmatpush.bf16.msra.mxu0 0
        %1012 = vmatpush.bf16.msra.mxu0 0
        %1013 = vmatpush.bf16.msra.mxu0 0
        %1014 = vmatpush.bf16.msra.mxu0 0
        %1015 = vmatpush.bf16.msra.mxu0 %v1006
        %1016 = vmatmul.bf16.gmra.mxu0 %v1002
        %v1017 = vpop.f32.mrf.mxu0
        %v1018 = vadd.f32 %v999, %v1017
        %v1019 = vpop.f32.mrf.mxu0
        %1020 = vdwg.mxu0
        %v1021 = vmax.f32 %v1018, 0.0
        %v1022 = vld [vmem:[%s929] sm:$0xff]
        %v1023 = vld [vmem:[%s929 + $0x8] sm:$0xff]
        %v1024 = vld [vmem:[%s929 + $0x10] sm:$0xff]
        %v1025 = vld [vmem:[%s929 + $0x18] sm:$0xff]
        %v1026 = vld [vmem:[%s10] sm:$0xf]
        %v1027 = vld [vmem:[%s10 + $0x4] sm:$0xf]
        %v1028 = vld [vmem:[%s10 + $0x8] sm:$0xf]
        %v1029 = vld [vmem:[%s10 + $0xc] sm:$0xf]
        %v1030 = vld [vmem:[%s10 + $0x10] sm:$0xf]
        %v1031 = vld [vmem:[%s10 + $0x14] sm:$0xf]
        %v1032 = vld [vmem:[%s10 + $0x18] sm:$0xf]
        %v1033 = vld [vmem:[%s10 + $0x1c] sm:$0xf]
        %v1034 = vld [vmem:[%s10 + $0x20] sm:$0xf]
        %v1035 = vld [vmem:[%s10 + $0x24] sm:$0xf]
        %v1036 = vld [vmem:[%s10 + $0x28] sm:$0xf]
        %v1037 = vld [vmem:[%s10 + $0x2c] sm:$0xf]
        %v1038 = vld [vmem:[%s10 + $0x30] sm:$0xf]
        %v1039 = vld [vmem:[%s10 + $0x34] sm:$0xf]
        %v1040 = vld [vmem:[%s10 + $0x38] sm:$0xf]
        %v1041 = vld [vmem:[%s10 + $0x3c] sm:$0xf]
        %v1042 = vld [vmem:[%s10 + $0x40] sm:$0xf]
        %v1043 = vld [vmem:[%s10 + $0x44] sm:$0xf]
        %v1044 = vld [vmem:[%s10 + $0x48] sm:$0xf]
        %v1045 = vld [vmem:[%s10 + $0x4c] sm:$0xf]
        %v1046 = vld [vmem:[%s10 + $0x50] sm:$0xf]
        %v1047 = vld [vmem:[%s10 + $0x54] sm:$0xf]
        %v1048 = vld [vmem:[%s10 + $0x58] sm:$0xf]
        %v1049 = vld [vmem:[%s10 + $0x5c] sm:$0xf]
        %v1050 = vld [vmem:[%s10 + $0x60] sm:$0xf]
        %v1051 = vld [vmem:[%s10 + $0x64] sm:$0xf]
        %v1052 = vld [vmem:[%s10 + $0x68] sm:$0xf]
        %v1053 = vld [vmem:[%s10 + $0x6c] sm:$0xf]
        %v1054 = vld [vmem:[%s10 + $0x70] sm:$0xf]
        %v1055 = vld [vmem:[%s10 + $0x74] sm:$0xf]
        %v1056 = vld [vmem:[%s10 + $0x78] sm:$0xf]
        %v1057 = vld [vmem:[%s10 + $0x7c] sm:$0xf]
        %v1058 = vld [vmem:[%s10 + $0x80] sm:$0xf]
        %v1059 = vld [vmem:[%s10 + $0x84] sm:$0xf]
        %v1060 = vld [vmem:[%s10 + $0x88] sm:$0xf]
        %v1061 = vld [vmem:[%s10 + $0x8c] sm:$0xf]
        %v1062 = vld [vmem:[%s10 + $0x90] sm:$0xf]
        %v1063 = vld [vmem:[%s10 + $0x94] sm:$0xf]
        %v1064 = vld [vmem:[%s10 + $0x98] sm:$0xf]
        %v1065 = vld [vmem:[%s10 + $0x9c] sm:$0xf]
        %v1066 = vld [vmem:[%s10 + $0xa0] sm:$0xf]
        %v1067 = vld [vmem:[%s10 + $0xa4] sm:$0xf]
        %v1068 = vld [vmem:[%s10 + $0xa8] sm:$0xf]
        %v1069 = vld [vmem:[%s10 + $0xac] sm:$0xf]
        %v1070 = vld [vmem:[%s10 + $0xb0] sm:$0xf]
        %v1071 = vld [vmem:[%s10 + $0xb4] sm:$0xf]
        %v1072 = vld [vmem:[%s10 + $0xb8] sm:$0xf]
        %v1073 = vld [vmem:[%s10 + $0xbc] sm:$0xf]
        %v1074 = vld [vmem:[%s10 + $0xc0] sm:$0xf]
        %v1075 = vld [vmem:[%s10 + $0xc4] sm:$0xf]
        %v1076 = vld [vmem:[%s10 + $0xc8] sm:$0xf]
        %v1077 = vld [vmem:[%s10 + $0xcc] sm:$0xf]
        %v1078 = vld [vmem:[%s10 + $0xd0] sm:$0xf]
        %v1079 = vld [vmem:[%s10 + $0xd4] sm:$0xf]
        %v1080 = vld [vmem:[%s10 + $0xd8] sm:$0xf]
        %v1081 = vld [vmem:[%s10 + $0xdc] sm:$0xf]
        %v1082 = vld [vmem:[%s10 + $0xe0] sm:$0xf]
        %v1083 = vld [vmem:[%s10 + $0xe4] sm:$0xf]
        %v1084 = vld [vmem:[%s10 + $0xe8] sm:$0xf]
        %v1085 = vld [vmem:[%s10 + $0xec] sm:$0xf]
        %v1086 = vld [vmem:[%s10 + $0xf0] sm:$0xf]
        %v1087 = vld [vmem:[%s10 + $0xf4] sm:$0xf]
        %v1088 = vld [vmem:[%s10 + $0xf8] sm:$0xf]
        %v1089 = vld [vmem:[%s10 + $0xfc] sm:$0xf]
        %v1090 = vld [vmem:[%s10 + $0x100] sm:$0xf]
        %v1091 = vld [vmem:[%s10 + $0x104] sm:$0xf]
        %v1092 = vld [vmem:[%s10 + $0x108] sm:$0xf]
        %v1093 = vld [vmem:[%s10 + $0x10c] sm:$0xf]
        %v1094 = vld [vmem:[%s10 + $0x110] sm:$0xf]
        %v1095 = vld [vmem:[%s10 + $0x114] sm:$0xf]
        %v1096 = vld [vmem:[%s10 + $0x118] sm:$0xf]
        %v1097 = vld [vmem:[%s10 + $0x11c] sm:$0xf]
        %v1098 = vld [vmem:[%s10 + $0x120] sm:$0xf]
        %v1099 = vld [vmem:[%s10 + $0x124] sm:$0xf]
        %v1100 = vld [vmem:[%s10 + $0x128] sm:$0xf]
        %v1101 = vld [vmem:[%s10 + $0x12c] sm:$0xf]
        %v1102 = vld [vmem:[%s10 + $0x130] sm:$0xf]
        %v1103 = vld [vmem:[%s10 + $0x134] sm:$0xf]
        %v1104 = vld [vmem:[%s10 + $0x138] sm:$0xf]
        %v1105 = vld [vmem:[%s10 + $0x13c] sm:$0xf]
        %v1106 = vld [vmem:[%s10 + $0x140] sm:$0xf]
        %v1107 = vld [vmem:[%s10 + $0x144] sm:$0xf]
        %v1108 = vld [vmem:[%s10 + $0x148] sm:$0xf]
        %v1109 = vld [vmem:[%s10 + $0x14c] sm:$0xf]
        %v1110 = vld [vmem:[%s10 + $0x150] sm:$0xf]
        %v1111 = vld [vmem:[%s10 + $0x154] sm:$0xf]
        %v1112 = vld [vmem:[%s10 + $0x158] sm:$0xf]
        %v1113 = vld [vmem:[%s10 + $0x15c] sm:$0xf]
        %v1114 = vld [vmem:[%s10 + $0x160] sm:$0xf]
        %v1115 = vld [vmem:[%s10 + $0x164] sm:$0xf]
        %v1116 = vld [vmem:[%s10 + $0x168] sm:$0xf]
        %v1117 = vld [vmem:[%s10 + $0x16c] sm:$0xf]
        %v1118 = vld [vmem:[%s10 + $0x170] sm:$0xf]
        %v1119 = vld [vmem:[%s10 + $0x174] sm:$0xf]
        %v1120 = vld [vmem:[%s10 + $0x178] sm:$0xf]
        %v1121 = vld [vmem:[%s10 + $0x17c] sm:$0xf]
        %v1122 = vld [vmem:[%s10 + $0x180] sm:$0xf]
        %v1123 = vld [vmem:[%s10 + $0x184] sm:$0xf]
        %v1124 = vld [vmem:[%s10 + $0x188] sm:$0xf]
        %v1125 = vld [vmem:[%s10 + $0x18c] sm:$0xf]
        %v1126 = vld [vmem:[%s10 + $0x190] sm:$0xf]
        %v1127 = vld [vmem:[%s10 + $0x194] sm:$0xf]
        %v1128 = vld [vmem:[%s10 + $0x198] sm:$0xf]
        %v1129 = vld [vmem:[%s10 + $0x19c] sm:$0xf]
        %v1130 = vld [vmem:[%s10 + $0x1a0] sm:$0xf]
        %v1131 = vld [vmem:[%s10 + $0x1a4] sm:$0xf]
        %v1132 = vld [vmem:[%s10 + $0x1a8] sm:$0xf]
        %v1133 = vld [vmem:[%s10 + $0x1ac] sm:$0xf]
        %v1134 = vld [vmem:[%s10 + $0x1b0] sm:$0xf]
        %v1135 = vld [vmem:[%s10 + $0x1b4] sm:$0xf]
        %v1136 = vld [vmem:[%s10 + $0x1b8] sm:$0xf]
        %v1137 = vld [vmem:[%s10 + $0x1bc] sm:$0xf]
        %v1138 = vld [vmem:[%s10 + $0x1c0] sm:$0xf]
        %v1139 = vld [vmem:[%s10 + $0x1c4] sm:$0xf]
        %v1140 = vld [vmem:[%s10 + $0x1c8] sm:$0xf]
        %v1141 = vld [vmem:[%s10 + $0x1cc] sm:$0xf]
        %v1142 = vld [vmem:[%s10 + $0x1d0] sm:$0xf]
        %v1143 = vld [vmem:[%s10 + $0x1d4] sm:$0xf]
        %v1144 = vld [vmem:[%s10 + $0x1d8] sm:$0xf]
        %v1145 = vld [vmem:[%s10 + $0x1dc] sm:$0xf]
        %v1146 = vld [vmem:[%s10 + $0x1e0] sm:$0xf]
        %v1147 = vld [vmem:[%s10 + $0x1e4] sm:$0xf]
        %v1148 = vld [vmem:[%s10 + $0x1e8] sm:$0xf]
        %v1149 = vld [vmem:[%s10 + $0x1ec] sm:$0xf]
        %v1150 = vld [vmem:[%s10 + $0x1f0] sm:$0xf]
        %v1151 = vld [vmem:[%s10 + $0x1f4] sm:$0xf]
        %v1152 = vld [vmem:[%s10 + $0x1f8] sm:$0xf]
        %v1153 = vld [vmem:[%s10 + $0x1fc] sm:$0xf]
        %v1154 = vld [vmem:[%s26 + $0x2] sm:$0x1]
        %v1155 = vperm.slane %v1154, 0
        %v1160 = vunpack.c.l.b16 %v1022
        %v1161 = vunpack.c.h.b16 %v1022
        %v1162 = vunpack.c.l.b16 %v1023
        %v1163 = vunpack.c.h.b16 %v1023
        %v1164 = vunpack.c.l.b16 %v1024
        %v1165 = vunpack.c.h.b16 %v1024
        %v1166 = vunpack.c.l.b16 %v1025
        %v1167 = vunpack.c.h.b16 %v1025
        %v1168 = vpack.c.b16 %v1160, %v1160
        %v1169 = vpack.c.b16 %v1161, %v1161
        %v1170 = vpack.c.b16 %v1162, %v1162
        %v1171 = vpack.c.b16 %v1163, %v1163
        %v1172 = vpack.c.b16 %v1164, %v1164
        %v1173 = vpack.c.b16 %v1165, %v1165
        %v1174 = vpack.c.b16 %v1166, %v1166
        %v1175 = vpack.c.b16 %v1167, %v1167
        %v1312 = vunpack.c.l.b16 %v1026
        %v1313 = vunpack.c.l.b16 %v1027
        %v1314 = vunpack.c.l.b16 %v1028
        %v1315 = vunpack.c.l.b16 %v1029
        %v1316 = vunpack.c.l.b16 %v1030
        %v1317 = vunpack.c.l.b16 %v1031
        %v1318 = vunpack.c.l.b16 %v1032
        %v1319 = vunpack.c.l.b16 %v1033
        %v1320 = vunpack.c.l.b16 %v1034
        %v1321 = vunpack.c.l.b16 %v1035
        %v1322 = vunpack.c.l.b16 %v1036
        %v1323 = vunpack.c.l.b16 %v1037
        %v1324 = vunpack.c.l.b16 %v1038
        %v1325 = vunpack.c.l.b16 %v1039
        %v1326 = vunpack.c.l.b16 %v1040
        %v1327 = vunpack.c.l.b16 %v1041
        %v1328 = vunpack.c.l.b16 %v1042
        %v1329 = vunpack.c.l.b16 %v1043
        %v1330 = vunpack.c.l.b16 %v1044
        %v1331 = vunpack.c.l.b16 %v1045
        %v1332 = vunpack.c.l.b16 %v1046
        %v1333 = vunpack.c.l.b16 %v1047
        %v1334 = vunpack.c.l.b16 %v1048
        %v1335 = vunpack.c.l.b16 %v1049
        %v1336 = vunpack.c.l.b16 %v1050
        %v1337 = vunpack.c.l.b16 %v1051
        %v1338 = vunpack.c.l.b16 %v1052
        %v1339 = vunpack.c.l.b16 %v1053
        %v1340 = vunpack.c.l.b16 %v1054
        %v1341 = vunpack.c.l.b16 %v1055
        %v1342 = vunpack.c.l.b16 %v1056
        %v1343 = vunpack.c.l.b16 %v1057
        %v1344 = vunpack.c.l.b16 %v1058
        %v1345 = vunpack.c.l.b16 %v1059
        %v1346 = vunpack.c.l.b16 %v1060
        %v1347 = vunpack.c.l.b16 %v1061
        %v1348 = vunpack.c.l.b16 %v1062
        %v1349 = vunpack.c.l.b16 %v1063
        %v1350 = vunpack.c.l.b16 %v1064
        %v1351 = vunpack.c.l.b16 %v1065
        %v1352 = vunpack.c.l.b16 %v1066
        %v1353 = vunpack.c.l.b16 %v1067
        %v1354 = vunpack.c.l.b16 %v1068
        %v1355 = vunpack.c.l.b16 %v1069
        %v1356 = vunpack.c.l.b16 %v1070
        %v1357 = vunpack.c.l.b16 %v1071
        %v1358 = vunpack.c.l.b16 %v1072
        %v1359 = vunpack.c.l.b16 %v1073
        %v1360 = vunpack.c.l.b16 %v1074
        %v1361 = vunpack.c.l.b16 %v1075
        %v1362 = vunpack.c.l.b16 %v1076
        %v1363 = vunpack.c.l.b16 %v1077
        %v1364 = vunpack.c.l.b16 %v1078
        %v1365 = vunpack.c.l.b16 %v1079
        %v1366 = vunpack.c.l.b16 %v1080
        %v1367 = vunpack.c.l.b16 %v1081
        %v1368 = vunpack.c.l.b16 %v1082
        %v1369 = vunpack.c.l.b16 %v1083
        %v1370 = vunpack.c.l.b16 %v1084
        %v1371 = vunpack.c.l.b16 %v1085
        %v1372 = vunpack.c.l.b16 %v1086
        %v1373 = vunpack.c.l.b16 %v1087
        %v1374 = vunpack.c.l.b16 %v1088
        %v1375 = vunpack.c.l.b16 %v1089
        %v1376 = vunpack.c.l.b16 %v1090
        %v1377 = vunpack.c.l.b16 %v1091
        %v1378 = vunpack.c.l.b16 %v1092
        %v1379 = vunpack.c.l.b16 %v1093
        %v1380 = vunpack.c.l.b16 %v1094
        %v1381 = vunpack.c.l.b16 %v1095
        %v1382 = vunpack.c.l.b16 %v1096
        %v1383 = vunpack.c.l.b16 %v1097
        %v1384 = vunpack.c.l.b16 %v1098
        %v1385 = vunpack.c.l.b16 %v1099
        %v1386 = vunpack.c.l.b16 %v1100
        %v1387 = vunpack.c.l.b16 %v1101
        %v1388 = vunpack.c.l.b16 %v1102
        %v1389 = vunpack.c.l.b16 %v1103
        %v1390 = vunpack.c.l.b16 %v1104
        %v1391 = vunpack.c.l.b16 %v1105
        %v1392 = vunpack.c.l.b16 %v1106
        %v1393 = vunpack.c.l.b16 %v1107
        %v1394 = vunpack.c.l.b16 %v1108
        %v1395 = vunpack.c.l.b16 %v1109
        %v1396 = vunpack.c.l.b16 %v1110
        %v1397 = vunpack.c.l.b16 %v1111
        %v1398 = vunpack.c.l.b16 %v1112
        %v1399 = vunpack.c.l.b16 %v1113
        %v1400 = vunpack.c.l.b16 %v1114
        %v1401 = vunpack.c.l.b16 %v1115
        %v1402 = vunpack.c.l.b16 %v1116
        %v1403 = vunpack.c.l.b16 %v1117
        %v1404 = vunpack.c.l.b16 %v1118
        %v1405 = vunpack.c.l.b16 %v1119
        %v1406 = vunpack.c.l.b16 %v1120
        %v1407 = vunpack.c.l.b16 %v1121
        %v1408 = vunpack.c.l.b16 %v1122
        %v1409 = vunpack.c.l.b16 %v1123
        %v1410 = vunpack.c.l.b16 %v1124
        %v1411 = vunpack.c.l.b16 %v1125
        %v1412 = vunpack.c.l.b16 %v1126
        %v1413 = vunpack.c.l.b16 %v1127
        %v1414 = vunpack.c.l.b16 %v1128
        %v1415 = vunpack.c.l.b16 %v1129
        %v1416 = vunpack.c.l.b16 %v1130
        %v1417 = vunpack.c.l.b16 %v1131
        %v1418 = vunpack.c.l.b16 %v1132
        %v1419 = vunpack.c.l.b16 %v1133
        %v1420 = vunpack.c.l.b16 %v1134
        %v1421 = vunpack.c.l.b16 %v1135
        %v1422 = vunpack.c.l.b16 %v1136
        %v1423 = vunpack.c.l.b16 %v1137
        %v1424 = vunpack.c.l.b16 %v1138
        %v1425 = vunpack.c.l.b16 %v1139
        %v1426 = vunpack.c.l.b16 %v1140
        %v1427 = vunpack.c.l.b16 %v1141
        %v1428 = vunpack.c.l.b16 %v1142
        %v1429 = vunpack.c.l.b16 %v1143
        %v1430 = vunpack.c.l.b16 %v1144
        %v1431 = vunpack.c.l.b16 %v1145
        %v1432 = vunpack.c.l.b16 %v1146
        %v1433 = vunpack.c.l.b16 %v1147
        %v1434 = vunpack.c.l.b16 %v1148
        %v1435 = vunpack.c.l.b16 %v1149
        %v1436 = vunpack.c.l.b16 %v1150
        %v1437 = vunpack.c.l.b16 %v1151
        %v1438 = vunpack.c.l.b16 %v1152
        %v1439 = vunpack.c.l.b16 %v1153
        %v1440 = vpack.c.b16 %v1313, %v1312
        %v1441 = vpack.c.b16 %v1315, %v1314
        %v1442 = vpack.c.b16 %v1317, %v1316
        %v1443 = vpack.c.b16 %v1319, %v1318
        %v1444 = vpack.c.b16 %v1321, %v1320
        %v1445 = vpack.c.b16 %v1323, %v1322
        %v1446 = vpack.c.b16 %v1325, %v1324
        %v1447 = vpack.c.b16 %v1327, %v1326
        %v1448 = vpack.c.b16 %v1329, %v1328
        %v1449 = vpack.c.b16 %v1331, %v1330
        %v1450 = vpack.c.b16 %v1333, %v1332
        %v1451 = vpack.c.b16 %v1335, %v1334
        %v1452 = vpack.c.b16 %v1337, %v1336
        %v1453 = vpack.c.b16 %v1339, %v1338
        %v1454 = vpack.c.b16 %v1341, %v1340
        %v1455 = vpack.c.b16 %v1343, %v1342
        %v1456 = vpack.c.b16 %v1345, %v1344
        %v1457 = vpack.c.b16 %v1347, %v1346
        %v1458 = vpack.c.b16 %v1349, %v1348
        %v1459 = vpack.c.b16 %v1351, %v1350
        %v1460 = vpack.c.b16 %v1353, %v1352
        %v1461 = vpack.c.b16 %v1355, %v1354
        %v1462 = vpack.c.b16 %v1357, %v1356
        %v1463 = vpack.c.b16 %v1359, %v1358
        %v1464 = vpack.c.b16 %v1361, %v1360
        %v1465 = vpack.c.b16 %v1363, %v1362
        %v1466 = vpack.c.b16 %v1365, %v1364
        %v1467 = vpack.c.b16 %v1367, %v1366
        %v1468 = vpack.c.b16 %v1369, %v1368
        %v1469 = vpack.c.b16 %v1371, %v1370
        %v1470 = vpack.c.b16 %v1373, %v1372
        %v1471 = vpack.c.b16 %v1375, %v1374
        %v1472 = vpack.c.b16 %v1377, %v1376
        %v1473 = vpack.c.b16 %v1379, %v1378
        %v1474 = vpack.c.b16 %v1381, %v1380
        %v1475 = vpack.c.b16 %v1383, %v1382
        %v1476 = vpack.c.b16 %v1385, %v1384
        %v1477 = vpack.c.b16 %v1387, %v1386
        %v1478 = vpack.c.b16 %v1389, %v1388
        %v1479 = vpack.c.b16 %v1391, %v1390
        %v1480 = vpack.c.b16 %v1393, %v1392
        %v1481 = vpack.c.b16 %v1395, %v1394
        %v1482 = vpack.c.b16 %v1397, %v1396
        %v1483 = vpack.c.b16 %v1399, %v1398
        %v1484 = vpack.c.b16 %v1401, %v1400
        %v1485 = vpack.c.b16 %v1403, %v1402
        %v1486 = vpack.c.b16 %v1405, %v1404
        %v1487 = vpack.c.b16 %v1407, %v1406
        %v1488 = vpack.c.b16 %v1409, %v1408
        %v1489 = vpack.c.b16 %v1411, %v1410
        %v1490 = vpack.c.b16 %v1413, %v1412
        %v1491 = vpack.c.b16 %v1415, %v1414
        %v1492 = vpack.c.b16 %v1417, %v1416
        %v1493 = vpack.c.b16 %v1419, %v1418
        %v1494 = vpack.c.b16 %v1421, %v1420
        %v1495 = vpack.c.b16 %v1423, %v1422
        %v1496 = vpack.c.b16 %v1425, %v1424
        %v1497 = vpack.c.b16 %v1427, %v1426
        %v1498 = vpack.c.b16 %v1429, %v1428
        %v1499 = vpack.c.b16 %v1431, %v1430
        %v1500 = vpack.c.b16 %v1433, %v1432
        %v1501 = vpack.c.b16 %v1435, %v1434
        %v1502 = vpack.c.b16 %v1437, %v1436
        %v1503 = vpack.c.b16 %v1439, %v1438
        %1568 = vmatpush.bf16.msra.mxu0 %v1447
        %1569 = vmatpush.bf16.msra.mxu0 %v1446
        %1570 = vmatpush.bf16.msra.mxu0 %v1445
        %1571 = vmatpush.bf16.msra.mxu0 %v1444
        %1572 = vmatpush.bf16.msra.mxu0 %v1443
        %1573 = vmatpush.bf16.msra.mxu0 %v1442
        %1574 = vmatpush.bf16.msra.mxu0 %v1441
        %1575 = vmatpush.bf16.msra.mxu0 %v1440
        %1576 = vmatmul.bf16.gmra.mxu0 %v1168
        %v1577 = vpop.f32.mrf.mxu0
        %v1578 = vadd.f32 %v1155, %v1577
        %v1579 = vpop.f32.mrf.mxu0
        %1580 = vdwg.mxu0
        %1581 = vmatpush.bf16.msra.mxu0 %v1455
        %1582 = vmatpush.bf16.msra.mxu0 %v1454
        %1583 = vmatpush.bf16.msra.mxu0 %v1453
        %1584 = vmatpush.bf16.msra.mxu0 %v1452
        %1585 = vmatpush.bf16.msra.mxu0 %v1451
        %1586 = vmatpush.bf16.msra.mxu0 %v1450
        %1587 = vmatpush.bf16.msra.mxu0 %v1449
        %1588 = vmatpush.bf16.msra.mxu0 %v1448
        %1589 = vmatmul.bf16.gmra.mxu0 %v1169
        %v1590 = vpop.f32.mrf.mxu0
        %v1591 = vadd.f32 %v1578, %v1590
        %v1592 = vpop.f32.mrf.mxu0
        %1593 = vdwg.mxu0
        %1594 = vmatpush.bf16.msra.mxu0 %v1463
        %1595 = vmatpush.bf16.msra.mxu0 %v1462
        %1596 = vmatpush.bf16.msra.mxu0 %v1461
        %1597 = vmatpush.bf16.msra.mxu0 %v1460
        %1598 = vmatpush.bf16.msra.mxu0 %v1459
        %1599 = vmatpush.bf16.msra.mxu0 %v1458
        %1600 = vmatpush.bf16.msra.mxu0 %v1457
        %1601 = vmatpush.bf16.msra.mxu0 %v1456
        %1602 = vmatmul.bf16.gmra.mxu0 %v1170
        %v1603 = vpop.f32.mrf.mxu0
        %v1604 = vadd.f32 %v1591, %v1603
        %v1605 = vpop.f32.mrf.mxu0
        %1606 = vdwg.mxu0
        %1607 = vmatpush.bf16.msra.mxu0 %v1471
        %1608 = vmatpush.bf16.msra.mxu0 %v1470
        %1609 = vmatpush.bf16.msra.mxu0 %v1469
        %1610 = vmatpush.bf16.msra.mxu0 %v1468
        %1611 = vmatpush.bf16.msra.mxu0 %v1467
        %1612 = vmatpush.bf16.msra.mxu0 %v1466
        %1613 = vmatpush.bf16.msra.mxu0 %v1465
        %1614 = vmatpush.bf16.msra.mxu0 %v1464
        %1615 = vmatmul.bf16.gmra.mxu0 %v1171
        %v1616 = vpop.f32.mrf.mxu0
        %v1617 = vadd.f32 %v1604, %v1616
        %v1618 = vpop.f32.mrf.mxu0
        %1619 = vdwg.mxu0
        %1620 = vmatpush.bf16.msra.mxu0 %v1479
        %1621 = vmatpush.bf16.msra.mxu0 %v1478
        %1622 = vmatpush.bf16.msra.mxu0 %v1477
        %1623 = vmatpush.bf16.msra.mxu0 %v1476
        %1624 = vmatpush.bf16.msra.mxu0 %v1475
        %1625 = vmatpush.bf16.msra.mxu0 %v1474
        %1626 = vmatpush.bf16.msra.mxu0 %v1473
        %1627 = vmatpush.bf16.msra.mxu0 %v1472
        %1628 = vmatmul.bf16.gmra.mxu0 %v1172
        %v1629 = vpop.f32.mrf.mxu0
        %v1630 = vadd.f32 %v1617, %v1629
        %v1631 = vpop.f32.mrf.mxu0
        %1632 = vdwg.mxu0
        %1633 = vmatpush.bf16.msra.mxu0 %v1487
        %1634 = vmatpush.bf16.msra.mxu0 %v1486
        %1635 = vmatpush.bf16.msra.mxu0 %v1485
        %1636 = vmatpush.bf16.msra.mxu0 %v1484
        %1637 = vmatpush.bf16.msra.mxu0 %v1483
        %1638 = vmatpush.bf16.msra.mxu0 %v1482
        %1639 = vmatpush.bf16.msra.mxu0 %v1481
        %1640 = vmatpush.bf16.msra.mxu0 %v1480
        %1641 = vmatmul.bf16.gmra.mxu0 %v1173
        %v1642 = vpop.f32.mrf.mxu0
        %v1643 = vadd.f32 %v1630, %v1642
        %v1644 = vpop.f32.mrf.mxu0
        %1645 = vdwg.mxu0
        %1646 = vmatpush.bf16.msra.mxu0 %v1495
        %1647 = vmatpush.bf16.msra.mxu0 %v1494
        %1648 = vmatpush.bf16.msra.mxu0 %v1493
        %1649 = vmatpush.bf16.msra.mxu0 %v1492
        %1650 = vmatpush.bf16.msra.mxu0 %v1491
        %1651 = vmatpush.bf16.msra.mxu0 %v1490
        %1652 = vmatpush.bf16.msra.mxu0 %v1489
        %1653 = vmatpush.bf16.msra.mxu0 %v1488
        %1654 = vmatmul.bf16.gmra.mxu0 %v1174
        %v1655 = vpop.f32.mrf.mxu0
        %v1656 = vadd.f32 %v1643, %v1655
        %v1657 = vpop.f32.mrf.mxu0
        %1658 = vdwg.mxu0
        %1659 = vmatpush.bf16.msra.mxu0 %v1503
        %1660 = vmatpush.bf16.msra.mxu0 %v1502
        %1661 = vmatpush.bf16.msra.mxu0 %v1501
        %1662 = vmatpush.bf16.msra.mxu0 %v1500
        %1663 = vmatpush.bf16.msra.mxu0 %v1499
        %1664 = vmatpush.bf16.msra.mxu0 %v1498
        %1665 = vmatpush.bf16.msra.mxu0 %v1497
        %1666 = vmatpush.bf16.msra.mxu0 %v1496
        %1667 = vmatmul.bf16.gmra.mxu0 %v1175
        %v1668 = vpop.f32.mrf.mxu0
        %v1669 = vadd.f32 %v1656, %v1668
        %v1670 = vpop.f32.mrf.mxu0
        %1671 = vdwg.mxu0
        %v1672 = vmax.f32 %v1669, 0.0
        %v1673 = vpack.c.bf16 %v1672, %v1672
        %v1674 = vld [vmem:[%s11] sm:$0xf]
        %v1675 = vld [vmem:[%s11 + $0x4] sm:$0xf]
        %v1676 = vld [vmem:[%s11 + $0x8] sm:$0xf]
        %v1677 = vld [vmem:[%s11 + $0xc] sm:$0xf]
        %v1678 = vld [vmem:[%s11 + $0x10] sm:$0xf]
        %v1679 = vld [vmem:[%s11 + $0x14] sm:$0xf]
        %v1680 = vld [vmem:[%s11 + $0x18] sm:$0xf]
        %v1681 = vld [vmem:[%s11 + $0x1c] sm:$0xf]
        %v1682 = vld [vmem:[%s11 + $0x20] sm:$0xf]
        %v1683 = vld [vmem:[%s11 + $0x24] sm:$0xf]
        %v1684 = vld [vmem:[%s11 + $0x28] sm:$0xf]
        %v1685 = vld [vmem:[%s11 + $0x2c] sm:$0xf]
        %v1686 = vld [vmem:[%s11 + $0x30] sm:$0xf]
        %v1687 = vld [vmem:[%s11 + $0x34] sm:$0xf]
        %v1688 = vld [vmem:[%s11 + $0x38] sm:$0xf]
        %v1689 = vld [vmem:[%s11 + $0x3c] sm:$0xf]
        %v1690 = vld [vmem:[%s26 + $0x3] sm:$0x1]
        %v1691 = vperm.slane %v1690, 0
        %v1708 = vunpack.c.l.b16 %v1674
        %v1709 = vunpack.c.l.b16 %v1675
        %v1710 = vunpack.c.l.b16 %v1676
        %v1711 = vunpack.c.l.b16 %v1677
        %v1712 = vunpack.c.l.b16 %v1678
        %v1713 = vunpack.c.l.b16 %v1679
        %v1714 = vunpack.c.l.b16 %v1680
        %v1715 = vunpack.c.l.b16 %v1681
        %v1716 = vunpack.c.l.b16 %v1682
        %v1717 = vunpack.c.l.b16 %v1683
        %v1718 = vunpack.c.l.b16 %v1684
        %v1719 = vunpack.c.l.b16 %v1685
        %v1720 = vunpack.c.l.b16 %v1686
        %v1721 = vunpack.c.l.b16 %v1687
        %v1722 = vunpack.c.l.b16 %v1688
        %v1723 = vunpack.c.l.b16 %v1689
        %v1724 = vpack.c.b16 %v1709, %v1708
        %v1725 = vpack.c.b16 %v1711, %v1710
        %v1726 = vpack.c.b16 %v1713, %v1712
        %v1727 = vpack.c.b16 %v1715, %v1714
        %v1728 = vpack.c.b16 %v1717, %v1716
        %v1729 = vpack.c.b16 %v1719, %v1718
        %v1730 = vpack.c.b16 %v1721, %v1720
        %v1731 = vpack.c.b16 %v1723, %v1722
        %1740 = vmatpush.bf16.msra.mxu0 %v1731
        %1741 = vmatpush.bf16.msra.mxu0 %v1730
        %1742 = vmatpush.bf16.msra.mxu0 %v1729
        %1743 = vmatpush.bf16.msra.mxu0 %v1728
        %1744 = vmatpush.bf16.msra.mxu0 %v1727
        %1745 = vmatpush.bf16.msra.mxu0 %v1726
        %1746 = vmatpush.bf16.msra.mxu0 %v1725
        %1747 = vmatpush.bf16.msra.mxu0 %v1724
        %1748 = vmatmul.bf16.gmra.mxu0 %v1673
        %v1749 = vpop.f32.mrf.mxu0
        %v1750 = vadd.f32 %v1691, %v1749
        %v1751 = vpop.f32.mrf.mxu0
        %1752 = vdwg.mxu0
        %v1753 = vmax.f32 %v1750, 0.0
        %v1754 = vpack.c.bf16 %v1753, %v1753
        %v1755 = vld [vmem:[%s12] sm:$0xf]
        %v1756 = vld [vmem:[%s12 + $0x4] sm:$0xf]
        %v1757 = vld [vmem:[%s12 + $0x8] sm:$0xf]
        %v1758 = vld [vmem:[%s12 + $0xc] sm:$0xf]
        %v1759 = vld [vmem:[%s12 + $0x10] sm:$0xf]
        %v1760 = vld [vmem:[%s12 + $0x14] sm:$0xf]
        %v1761 = vld [vmem:[%s12 + $0x18] sm:$0xf]
        %v1762 = vld [vmem:[%s12 + $0x1c] sm:$0xf]
        %v1763 = vld [vmem:[%s26 + $0x4] sm:$0x1]
        %v1764 = vperm.slane %v1763, 0
        %v1773 = vunpack.c.l.b16 %v1755
        %v1774 = vunpack.c.l.b16 %v1756
        %v1775 = vunpack.c.l.b16 %v1757
        %v1776 = vunpack.c.l.b16 %v1758
        %v1777 = vunpack.c.l.b16 %v1759
        %v1778 = vunpack.c.l.b16 %v1760
        %v1779 = vunpack.c.l.b16 %v1761
        %v1780 = vunpack.c.l.b16 %v1762
        %v1781 = vpack.c.b16 %v1774, %v1773
        %v1782 = vpack.c.b16 %v1776, %v1775
        %v1783 = vpack.c.b16 %v1778, %v1777
        %v1784 = vpack.c.b16 %v1780, %v1779
        %vm1789 = vcmask 523264
        %v1791 = vsel %vm1789, %v1754, 0
        %1793 = vmatpush.bf16.msra.mxu0 0
        %1794 = vmatpush.bf16.msra.mxu0 0
        %1795 = vmatpush.bf16.msra.mxu0 0
        %1796 = vmatpush.bf16.msra.mxu0 0
        %1797 = vmatpush.bf16.msra.mxu0 %v1784
        %1798 = vmatpush.bf16.msra.mxu0 %v1783
        %1799 = vmatpush.bf16.msra.mxu0 %v1782
        %1800 = vmatpush.bf16.msra.mxu0 %v1781
        %1801 = vmatmul.bf16.gmra.mxu0 %v1791
        %v1802 = vpop.f32.mrf.mxu0
        %v1803 = vadd.f32 %v1764, %v1802
        %v1804 = vpop.f32.mrf.mxu0
        %1805 = vdwg.mxu0
        %v1806 = vmax.f32 %v1803, 0.0
        %1808 = vrot.lane.b32.xlu0 %v1806, 96
        %v1809 = vpop.permute.xlu0 %1808
        %v1811 = vmax.f32 %v1806, %v1809
        %1812 = vrot.lane.b32.xlu0 %v1806, 64
        %v1813 = vpop.permute.xlu0 %1812
        %v1815 = vmax.f32 %v1811, %v1813
        %1816 = vrot.lane.b32.xlu0 %v1806, 32
        %v1817 = vpop.permute.xlu0 %1816
        %v1819 = vmax.f32 %v1815, %v1817
        %v1820 = vld [vmem:[%s934] sm:$0xf]
        %v1821 = vld [vmem:[%s934 + $0x4] sm:$0xf]
        %v1822 = vld [vmem:[%s934 + $0x8] sm:$0xf]
        %v1823 = vld [vmem:[%s934 + $0xc] sm:$0xf]
        %v1824 = vld [vmem:[%s934 + $0x10] sm:$0xf]
        %v1825 = vld [vmem:[%s934 + $0x14] sm:$0xf]
        %v1826 = vld [vmem:[%s934 + $0x18] sm:$0xf]
        %v1827 = vld [vmem:[%s934 + $0x1c] sm:$0xf]
        %v1828 = vld [vmem:[%s13] sm:$0xf]
        %v1829 = vld [vmem:[%s13 + $0x4] sm:$0x3]
        %v1830 = vld [vmem:[%s26 + $0x5] sm:$0x1]
        %v1831 = vperm.slane %v1830, 0
        %v1840 = vunpack.c.l.b16 %v1820
        %v1841 = vunpack.c.l.b16 %v1821
        %v1842 = vunpack.c.l.b16 %v1822
        %v1843 = vunpack.c.l.b16 %v1823
        %v1844 = vunpack.c.l.b16 %v1824
        %v1845 = vunpack.c.l.b16 %v1825
        %v1846 = vunpack.c.l.b16 %v1826
        %v1847 = vunpack.c.l.b16 %v1827
        %v1848 = vpack.c.b16 %v1841, %v1840
        %v1849 = vpack.c.b16 %v1843, %v1842
        %v1850 = vpack.c.b16 %v1845, %v1844
        %v1851 = vpack.c.b16 %v1847, %v1846
        %v1854 = vunpack.c.l.b16 %v1828
        %v1855 = vunpack.c.l.b16 %v1829
        %v1856 = vpack.c.b16 %v1855, %v1854
        %vm1857 = vcmask 97280
        %v1859 = vsel %vm1857, %v1848, 0
        %v1862 = vsel %vm1857, %v1849, 0
        %v1865 = vsel %vm1857, %v1850, 0
        %v1868 = vsel %vm1857, %v1851, 0
        %vm1870 = vcmask 1045504
        %v1872 = vsel %vm1870, %v1856, 0
        %1874 = vmatpush.bf16.msra.mxu0 0
        %1875 = vmatpush.bf16.msra.mxu0 0
        %1876 = vmatpush.bf16.msra.mxu0 0
        %1877 = vmatpush.bf16.msra.mxu0 0
        %1878 = vmatpush.bf16.msra.mxu0 0
        %1879 = vmatpush.bf16.msra.mxu0 0
        %1880 = vmatpush.bf16.msra.mxu0 0
        %1881 = vmatpush.bf16.msra.mxu0 %v1872
        %1882 = vmatmul.bf16.gmra.mxu0 %v1859
        %v1883 = vpop.f32.mrf.mxu0
        %v1884 = vadd.f32 %v1831, %v1883
        %v1885 = vpop.f32.mrf.mxu0
        %v1886 = vadd.f32 %v1831, %v1885
        %1887 = vmatmul.bf16.gmra.mxu0 %v1862
        %v1888 = vpop.f32.mrf.mxu0
        %v1889 = vadd.f32 %v1831, %v1888
        %v1890 = vpop.f32.mrf.mxu0
        %v1891 = vadd.f32 %v1831, %v1890
        %1892 = vmatmul.bf16.gmra.mxu0 %v1865
        %v1893 = vpop.f32.mrf.mxu0
        %v1894 = vadd.f32 %v1831, %v1893
        %v1895 = vpop.f32.mrf.mxu0
        %v1896 = vadd.f32 %v1831, %v1895
        %1897 = vmatmul.bf16.gmra.mxu0 %v1868
        %v1898 = vpop.f32.mrf.mxu0
        %v1899 = vadd.f32 %v1831, %v1898
        %v1900 = vpop.f32.mrf.mxu0
        %v1901 = vadd.f32 %v1831, %v1900
        %1902 = vdwg.mxu0
        %v1903 = vmax.f32 %v1884, 0.0
        %v1904 = vmax.f32 %v1886, 0.0
        %v1905 = vmax.f32 %v1889, 0.0
        %v1906 = vmax.f32 %v1891, 0.0
        %v1907 = vmax.f32 %v1894, 0.0
        %v1908 = vmax.f32 %v1896, 0.0
        %v1909 = vmax.f32 %v1899, 0.0
        %v1910 = vmax.f32 %v1901, 0.0
        %v1911 = vpack.c.bf16 %v1904, %v1903
        %v1912 = vpack.c.bf16 %v1906, %v1905
        %v1913 = vpack.c.bf16 %v1908, %v1907
        %v1914 = vpack.c.bf16 %v1910, %v1909
        %v1915 = vld [vmem:[%s14] sm:$0xf]
        %v1916 = vld [vmem:[%s14 + $0x4] sm:$0xf]
        %v1917 = vld [vmem:[%s26 + $0x6] sm:$0x1]
        %v1918 = vperm.slane %v1917, 0
        %v1921 = vunpack.c.l.b16 %v1915
        %v1922 = vunpack.c.l.b16 %v1916
        %v1923 = vpack.c.b16 %v1922, %v1921
        %v1926 = vsel %vm978, %v1911, 0
        %v1929 = vsel %vm978, %v1912, 0
        %v1932 = vsel %vm978, %v1913, 0
        %v1935 = vsel %vm978, %v1914, 0
        %1937 = vmatpush.bf16.msra.mxu0 0
        %1938 = vmatpush.bf16.msra.mxu0 0
        %1939 = vmatpush.bf16.msra.mxu0 0
        %1940 = vmatpush.bf16.msra.mxu0 0
        %1941 = vmatpush.bf16.msra.mxu0 0
        %1942 = vmatpush.bf16.msra.mxu0 0
        %1943 = vmatpush.bf16.msra.mxu0 0
        %1944 = vmatpush.bf16.msra.mxu0 %v1923
        %1945 = vmatmul.bf16.gmra.mxu0 %v1926
        %v1946 = vpop.f32.mrf.mxu0
        %v1947 = vadd.f32 %v1918, %v1946
        %v1948 = vpop.f32.mrf.mxu0
        %v1949 = vadd.f32 %v1918, %v1948
        %1950 = vmatmul.bf16.gmra.mxu0 %v1929
        %v1951 = vpop.f32.mrf.mxu0
        %v1952 = vadd.f32 %v1918, %v1951
        %v1953 = vpop.f32.mrf.mxu0
        %v1954 = vadd.f32 %v1918, %v1953
        %1955 = vmatmul.bf16.gmra.mxu0 %v1932
        %v1956 = vpop.f32.mrf.mxu0
        %v1957 = vadd.f32 %v1918, %v1956
        %v1958 = vpop.f32.mrf.mxu0
        %v1959 = vadd.f32 %v1918, %v1958
        %1960 = vmatmul.bf16.gmra.mxu0 %v1935
        %v1961 = vpop.f32.mrf.mxu0
        %v1962 = vadd.f32 %v1918, %v1961
        %v1963 = vpop.f32.mrf.mxu0
        %v1964 = vadd.f32 %v1918, %v1963
        %1965 = vdwg.mxu0
        %v1966 = vmax.f32 %v1947, 0.0
        %v1967 = vmax.f32 %v1949, 0.0
        %v1968 = vmax.f32 %v1952, 0.0
        %v1969 = vmax.f32 %v1954, 0.0
        %v1970 = vmax.f32 %v1957, 0.0
        %v1971 = vmax.f32 %v1959, 0.0
        %v1972 = vmax.f32 %v1962, 0.0
        %v1973 = vmax.f32 %v1964, 0.0
        %v1974 = vld [vmem:[%s940] sm:$0xf]
        %v1975 = vld [vmem:[%s940 + $0x4] sm:$0xf]
        %v1976 = vld [vmem:[%s940 + $0x8] sm:$0xf]
        %v1977 = vld [vmem:[%s940 + $0xc] sm:$0xf]
        %v1978 = vld [vmem:[%s940 + $0x10] sm:$0xf]
        %v1979 = vld [vmem:[%s940 + $0x14] sm:$0xf]
        %v1980 = vld [vmem:[%s940 + $0x18] sm:$0xf]
        %v1981 = vld [vmem:[%s940 + $0x1c] sm:$0xf]
        %v1982 = vld [vmem:[%s940 + $0x20] sm:$0xf]
        %v1983 = vld [vmem:[%s940 + $0x24] sm:$0xf]
        %v1984 = vld [vmem:[%s940 + $0x28] sm:$0xf]
        %v1985 = vld [vmem:[%s940 + $0x2c] sm:$0xf]
        %v1986 = vld [vmem:[%s940 + $0x30] sm:$0xf]
        %v1987 = vld [vmem:[%s940 + $0x34] sm:$0xf]
        %v1988 = vld [vmem:[%s940 + $0x38] sm:$0xf]
        %v1989 = vld [vmem:[%s940 + $0x3c] sm:$0xf]
        %v1990 = vld [vmem:[%s940 + $0x40] sm:$0xf]
        %v1991 = vld [vmem:[%s940 + $0x44] sm:$0xf]
        %v1992 = vld [vmem:[%s940 + $0x48] sm:$0xf]
        %v1993 = vld [vmem:[%s940 + $0x4c] sm:$0xf]
        %v1994 = vld [vmem:[%s940 + $0x50] sm:$0xf]
        %v1995 = vld [vmem:[%s940 + $0x54] sm:$0xf]
        %v1996 = vld [vmem:[%s940 + $0x58] sm:$0xf]
        %v1997 = vld [vmem:[%s940 + $0x5c] sm:$0xf]
        %v1998 = vld [vmem:[%s940 + $0x60] sm:$0xf]
        %v1999 = vld [vmem:[%s940 + $0x64] sm:$0xf]
        %v2000 = vld [vmem:[%s940 + $0x68] sm:$0xf]
        %v2001 = vld [vmem:[%s940 + $0x6c] sm:$0xf]
        %v2002 = vld [vmem:[%s940 + $0x70] sm:$0xf]
        %v2003 = vld [vmem:[%s940 + $0x74] sm:$0xf]
        %v2004 = vld [vmem:[%s940 + $0x78] sm:$0xf]
        %v2005 = vld [vmem:[%s940 + $0x7c] sm:$0xf]
        %v2006 = vld [vmem:[%s940 + $0x80] sm:$0xf]
        %v2007 = vld [vmem:[%s940 + $0x84] sm:$0xf]
        %v2008 = vld [vmem:[%s940 + $0x88] sm:$0xf]
        %v2009 = vld [vmem:[%s940 + $0x8c] sm:$0xf]
        %v2010 = vld [vmem:[%s940 + $0x90] sm:$0xf]
        %v2011 = vld [vmem:[%s940 + $0x94] sm:$0xf]
        %v2012 = vld [vmem:[%s940 + $0x98] sm:$0xf]
        %v2013 = vld [vmem:[%s940 + $0x9c] sm:$0xf]
        %v2014 = vld [vmem:[%s940 + $0xa0] sm:$0xf]
        %v2015 = vld [vmem:[%s940 + $0xa4] sm:$0xf]
        %v2016 = vld [vmem:[%s940 + $0xa8] sm:$0xf]
        %v2017 = vld [vmem:[%s940 + $0xac] sm:$0xf]
        %v2018 = vld [vmem:[%s940 + $0xb0] sm:$0xf]
        %v2019 = vld [vmem:[%s940 + $0xb4] sm:$0xf]
        %v2020 = vld [vmem:[%s940 + $0xb8] sm:$0xf]
        %v2021 = vld [vmem:[%s940 + $0xbc] sm:$0xf]
        %v2022 = vld [vmem:[%s940 + $0xc0] sm:$0xf]
        %v2023 = vld [vmem:[%s940 + $0xc4] sm:$0xf]
        %v2024 = vld [vmem:[%s940 + $0xc8] sm:$0xf]
        %v2025 = vld [vmem:[%s940 + $0xcc] sm:$0xf]
        %v2026 = vld [vmem:[%s940 + $0xd0] sm:$0xf]
        %v2027 = vld [vmem:[%s940 + $0xd4] sm:$0xf]
        %v2028 = vld [vmem:[%s940 + $0xd8] sm:$0xf]
        %v2029 = vld [vmem:[%s940 + $0xdc] sm:$0xf]
        %v2030 = vld [vmem:[%s940 + $0xe0] sm:$0xf]
        %v2031 = vld [vmem:[%s940 + $0xe4] sm:$0xf]
        %v2032 = vld [vmem:[%s940 + $0xe8] sm:$0xf]
        %v2033 = vld [vmem:[%s940 + $0xec] sm:$0xf]
        %v2034 = vld [vmem:[%s940 + $0xf0] sm:$0xf]
        %v2035 = vld [vmem:[%s940 + $0xf4] sm:$0xf]
        %v2036 = vld [vmem:[%s940 + $0xf8] sm:$0xf]
        %v2037 = vld [vmem:[%s940 + $0xfc] sm:$0xf]
        %v2038 = vld [vmem:[%s15] sm:$0xf]
        %v2039 = vld [vmem:[%s15 + $0x4] sm:$0x3]
        %v2040 = vld [vmem:[%s26 + $0x7] sm:$0x1]
        %v2041 = vperm.slane %v2040, 0
        %v2106 = vunpack.c.l.b16 %v1974
        %v2107 = vunpack.c.l.b16 %v1975
        %v2108 = vunpack.c.l.b16 %v1976
        %v2109 = vunpack.c.l.b16 %v1977
        %v2110 = vunpack.c.l.b16 %v1978
        %v2111 = vunpack.c.l.b16 %v1979
        %v2112 = vunpack.c.l.b16 %v1980
        %v2113 = vunpack.c.l.b16 %v1981
        %v2114 = vunpack.c.l.b16 %v1982
        %v2115 = vunpack.c.l.b16 %v1983
        %v2116 = vunpack.c.l.b16 %v1984
        %v2117 = vunpack.c.l.b16 %v1985
        %v2118 = vunpack.c.l.b16 %v1986
        %v2119 = vunpack.c.l.b16 %v1987
        %v2120 = vunpack.c.l.b16 %v1988
        %v2121 = vunpack.c.l.b16 %v1989
        %v2122 = vunpack.c.l.b16 %v1990
        %v2123 = vunpack.c.l.b16 %v1991
        %v2124 = vunpack.c.l.b16 %v1992
        %v2125 = vunpack.c.l.b16 %v1993
        %v2126 = vunpack.c.l.b16 %v1994
        %v2127 = vunpack.c.l.b16 %v1995
        %v2128 = vunpack.c.l.b16 %v1996
        %v2129 = vunpack.c.l.b16 %v1997
        %v2130 = vunpack.c.l.b16 %v1998
        %v2131 = vunpack.c.l.b16 %v1999
        %v2132 = vunpack.c.l.b16 %v2000
        %v2133 = vunpack.c.l.b16 %v2001
        %v2134 = vunpack.c.l.b16 %v2002
        %v2135 = vunpack.c.l.b16 %v2003
        %v2136 = vunpack.c.l.b16 %v2004
        %v2137 = vunpack.c.l.b16 %v2005
        %v2138 = vunpack.c.l.b16 %v2006
        %v2139 = vunpack.c.l.b16 %v2007
        %v2140 = vunpack.c.l.b16 %v2008
        %v2141 = vunpack.c.l.b16 %v2009
        %v2142 = vunpack.c.l.b16 %v2010
        %v2143 = vunpack.c.l.b16 %v2011
        %v2144 = vunpack.c.l.b16 %v2012
        %v2145 = vunpack.c.l.b16 %v2013
        %v2146 = vunpack.c.l.b16 %v2014
        %v2147 = vunpack.c.l.b16 %v2015
        %v2148 = vunpack.c.l.b16 %v2016
        %v2149 = vunpack.c.l.b16 %v2017
        %v2150 = vunpack.c.l.b16 %v2018
        %v2151 = vunpack.c.l.b16 %v2019
        %v2152 = vunpack.c.l.b16 %v2020
        %v2153 = vunpack.c.l.b16 %v2021
        %v2154 = vunpack.c.l.b16 %v2022
        %v2155 = vunpack.c.l.b16 %v2023
        %v2156 = vunpack.c.l.b16 %v2024
        %v2157 = vunpack.c.l.b16 %v2025
        %v2158 = vunpack.c.l.b16 %v2026
        %v2159 = vunpack.c.l.b16 %v2027
        %v2160 = vunpack.c.l.b16 %v2028
        %v2161 = vunpack.c.l.b16 %v2029
        %v2162 = vunpack.c.l.b16 %v2030
        %v2163 = vunpack.c.l.b16 %v2031
        %v2164 = vunpack.c.l.b16 %v2032
        %v2165 = vunpack.c.l.b16 %v2033
        %v2166 = vunpack.c.l.b16 %v2034
        %v2167 = vunpack.c.l.b16 %v2035
        %v2168 = vunpack.c.l.b16 %v2036
        %v2169 = vunpack.c.l.b16 %v2037
        %v2170 = vpack.c.b16 %v2107, %v2106
        %v2171 = vpack.c.b16 %v2109, %v2108
        %v2172 = vpack.c.b16 %v2111, %v2110
        %v2173 = vpack.c.b16 %v2113, %v2112
        %v2174 = vpack.c.b16 %v2115, %v2114
        %v2175 = vpack.c.b16 %v2117, %v2116
        %v2176 = vpack.c.b16 %v2119, %v2118
        %v2177 = vpack.c.b16 %v2121, %v2120
        %v2178 = vpack.c.b16 %v2123, %v2122
        %v2179 = vpack.c.b16 %v2125, %v2124
        %v2180 = vpack.c.b16 %v2127, %v2126
        %v2181 = vpack.c.b16 %v2129, %v2128
        %v2182 = vpack.c.b16 %v2131, %v2130
        %v2183 = vpack.c.b16 %v2133, %v2132
        %v2184 = vpack.c.b16 %v2135, %v2134
        %v2185 = vpack.c.b16 %v2137, %v2136
        %v2186 = vpack.c.b16 %v2139, %v2138
        %v2187 = vpack.c.b16 %v2141, %v2140
        %v2188 = vpack.c.b16 %v2143, %v2142
        %v2189 = vpack.c.b16 %v2145, %v2144
        %v2190 = vpack.c.b16 %v2147, %v2146
        %v2191 = vpack.c.b16 %v2149, %v2148
        %v2192 = vpack.c.b16 %v2151, %v2150
        %v2193 = vpack.c.b16 %v2153, %v2152
        %v2194 = vpack.c.b16 %v2155, %v2154
        %v2195 = vpack.c.b16 %v2157, %v2156
        %v2196 = vpack.c.b16 %v2159, %v2158
        %v2197 = vpack.c.b16 %v2161, %v2160
        %v2198 = vpack.c.b16 %v2163, %v2162
        %v2199 = vpack.c.b16 %v2165, %v2164
        %v2200 = vpack.c.b16 %v2167, %v2166
        %v2201 = vpack.c.b16 %v2169, %v2168
        %v2204 = vunpack.c.l.b16 %v2038
        %v2205 = vunpack.c.l.b16 %v2039
        %v2206 = vpack.c.b16 %v2205, %v2204
        %v2208 = vsel %vm1857, %v2170, 0
        %v2211 = vsel %vm1857, %v2171, 0
        %v2214 = vsel %vm1857, %v2172, 0
        %v2217 = vsel %vm1857, %v2173, 0
        %v2220 = vsel %vm1857, %v2174, 0
        %v2223 = vsel %vm1857, %v2175, 0
        %v2226 = vsel %vm1857, %v2176, 0
        %v2229 = vsel %vm1857, %v2177, 0
        %v2232 = vsel %vm1857, %v2178, 0
        %v2235 = vsel %vm1857, %v2179, 0
        %v2238 = vsel %vm1857, %v2180, 0
        %v2241 = vsel %vm1857, %v2181, 0
        %v2244 = vsel %vm1857, %v2182, 0
        %v2247 = vsel %vm1857, %v2183, 0
        %v2250 = vsel %vm1857, %v2184, 0
        %v2253 = vsel %vm1857, %v2185, 0
        %v2256 = vsel %vm1857, %v2186, 0
        %v2259 = vsel %vm1857, %v2187, 0
        %v2262 = vsel %vm1857, %v2188, 0
        %v2265 = vsel %vm1857, %v2189, 0
        %v2268 = vsel %vm1857, %v2190, 0
        %v2271 = vsel %vm1857, %v2191, 0
        %v2274 = vsel %vm1857, %v2192, 0
        %v2277 = vsel %vm1857, %v2193, 0
        %v2280 = vsel %vm1857, %v2194, 0
        %v2283 = vsel %vm1857, %v2195, 0
        %v2286 = vsel %vm1857, %v2196, 0
        %v2289 = vsel %vm1857, %v2197, 0
        %v2292 = vsel %vm1857, %v2198, 0
        %v2295 = vsel %vm1857, %v2199, 0
        %v2298 = vsel %vm1857, %v2200, 0
        %v2301 = vsel %vm1857, %v2201, 0
        %v2304 = vsel %vm1870, %v2206, 0
        %2306 = vmatpush.bf16.msra.mxu0 0
        %2307 = vmatpush.bf16.msra.mxu0 0
        %2308 = vmatpush.bf16.msra.mxu0 0
        %2309 = vmatpush.bf16.msra.mxu0 0
        %2310 = vmatpush.bf16.msra.mxu0 0
        %2311 = vmatpush.bf16.msra.mxu0 0
        %2312 = vmatpush.bf16.msra.mxu0 0
        %2313 = vmatpush.bf16.msra.mxu0 %v2304
        %2314 = vmatmul.bf16.gmra.mxu0 %v2208
        %v2315 = vpop.f32.mrf.mxu0
        %v2316 = vadd.f32 %v2041, %v2315
        %v2317 = vpop.f32.mrf.mxu0
        %v2318 = vadd.f32 %v2041, %v2317
        %2319 = vmatmul.bf16.gmra.mxu0 %v2211
        %v2320 = vpop.f32.mrf.mxu0
        %v2321 = vadd.f32 %v2041, %v2320
        %v2322 = vpop.f32.mrf.mxu0
        %v2323 = vadd.f32 %v2041, %v2322
        %2324 = vmatmul.bf16.gmra.mxu0 %v2214
        %v2325 = vpop.f32.mrf.mxu0
        %v2326 = vadd.f32 %v2041, %v2325
        %v2327 = vpop.f32.mrf.mxu0
        %v2328 = vadd.f32 %v2041, %v2327
        %2329 = vmatmul.bf16.gmra.mxu0 %v2217
        %v2330 = vpop.f32.mrf.mxu0
        %v2331 = vadd.f32 %v2041, %v2330
        %v2332 = vpop.f32.mrf.mxu0
        %v2333 = vadd.f32 %v2041, %v2332
        %2334 = vmatmul.bf16.gmra.mxu0 %v2220
        %v2335 = vpop.f32.mrf.mxu0
        %v2336 = vadd.f32 %v2041, %v2335
        %v2337 = vpop.f32.mrf.mxu0
        %v2338 = vadd.f32 %v2041, %v2337
        %2339 = vmatmul.bf16.gmra.mxu0 %v2223
        %v2340 = vpop.f32.mrf.mxu0
        %v2341 = vadd.f32 %v2041, %v2340
        %v2342 = vpop.f32.mrf.mxu0
        %v2343 = vadd.f32 %v2041, %v2342
        %2344 = vmatmul.bf16.gmra.mxu0 %v2226
        %v2345 = vpop.f32.mrf.mxu0
        %v2346 = vadd.f32 %v2041, %v2345
        %v2347 = vpop.f32.mrf.mxu0
        %v2348 = vadd.f32 %v2041, %v2347
        %2349 = vmatmul.bf16.gmra.mxu0 %v2229
        %v2350 = vpop.f32.mrf.mxu0
        %v2351 = vadd.f32 %v2041, %v2350
        %v2352 = vpop.f32.mrf.mxu0
        %v2353 = vadd.f32 %v2041, %v2352
        %2354 = vmatmul.bf16.gmra.mxu0 %v2232
        %v2355 = vpop.f32.mrf.mxu0
        %v2356 = vadd.f32 %v2041, %v2355
        %v2357 = vpop.f32.mrf.mxu0
        %v2358 = vadd.f32 %v2041, %v2357
        %2359 = vmatmul.bf16.gmra.mxu0 %v2235
        %v2360 = vpop.f32.mrf.mxu0
        %v2361 = vadd.f32 %v2041, %v2360
        %v2362 = vpop.f32.mrf.mxu0
        %v2363 = vadd.f32 %v2041, %v2362
        %2364 = vmatmul.bf16.gmra.mxu0 %v2238
        %v2365 = vpop.f32.mrf.mxu0
        %v2366 = vadd.f32 %v2041, %v2365
        %v2367 = vpop.f32.mrf.mxu0
        %v2368 = vadd.f32 %v2041, %v2367
        %2369 = vmatmul.bf16.gmra.mxu0 %v2241
        %v2370 = vpop.f32.mrf.mxu0
        %v2371 = vadd.f32 %v2041, %v2370
        %v2372 = vpop.f32.mrf.mxu0
        %v2373 = vadd.f32 %v2041, %v2372
        %2374 = vmatmul.bf16.gmra.mxu0 %v2244
        %v2375 = vpop.f32.mrf.mxu0
        %v2376 = vadd.f32 %v2041, %v2375
        %v2377 = vpop.f32.mrf.mxu0
        %v2378 = vadd.f32 %v2041, %v2377
        %2379 = vmatmul.bf16.gmra.mxu0 %v2247
        %v2380 = vpop.f32.mrf.mxu0
        %v2381 = vadd.f32 %v2041, %v2380
        %v2382 = vpop.f32.mrf.mxu0
        %v2383 = vadd.f32 %v2041, %v2382
        %2384 = vmatmul.bf16.gmra.mxu0 %v2250
        %v2385 = vpop.f32.mrf.mxu0
        %v2386 = vadd.f32 %v2041, %v2385
        %v2387 = vpop.f32.mrf.mxu0
        %v2388 = vadd.f32 %v2041, %v2387
        %2389 = vmatmul.bf16.gmra.mxu0 %v2253
        %v2390 = vpop.f32.mrf.mxu0
        %v2391 = vadd.f32 %v2041, %v2390
        %v2392 = vpop.f32.mrf.mxu0
        %v2393 = vadd.f32 %v2041, %v2392
        %2394 = vmatmul.bf16.gmra.mxu0 %v2256
        %v2395 = vpop.f32.mrf.mxu0
        %v2396 = vadd.f32 %v2041, %v2395
        %v2397 = vpop.f32.mrf.mxu0
        %v2398 = vadd.f32 %v2041, %v2397
        %2399 = vmatmul.bf16.gmra.mxu0 %v2259
        %v2400 = vpop.f32.mrf.mxu0
        %v2401 = vadd.f32 %v2041, %v2400
        %v2402 = vpop.f32.mrf.mxu0
        %v2403 = vadd.f32 %v2041, %v2402
        %2404 = vmatmul.bf16.gmra.mxu0 %v2262
        %v2405 = vpop.f32.mrf.mxu0
        %v2406 = vadd.f32 %v2041, %v2405
        %v2407 = vpop.f32.mrf.mxu0
        %v2408 = vadd.f32 %v2041, %v2407
        %2409 = vmatmul.bf16.gmra.mxu0 %v2265
        %v2410 = vpop.f32.mrf.mxu0
        %v2411 = vadd.f32 %v2041, %v2410
        %v2412 = vpop.f32.mrf.mxu0
        %v2413 = vadd.f32 %v2041, %v2412
        %2414 = vmatmul.bf16.gmra.mxu0 %v2268
        %v2415 = vpop.f32.mrf.mxu0
        %v2416 = vadd.f32 %v2041, %v2415
        %v2417 = vpop.f32.mrf.mxu0
        %v2418 = vadd.f32 %v2041, %v2417
        %2419 = vmatmul.bf16.gmra.mxu0 %v2271
        %v2420 = vpop.f32.mrf.mxu0
        %v2421 = vadd.f32 %v2041, %v2420
        %v2422 = vpop.f32.mrf.mxu0
        %v2423 = vadd.f32 %v2041, %v2422
        %2424 = vmatmul.bf16.gmra.mxu0 %v2274
        %v2425 = vpop.f32.mrf.mxu0
        %v2426 = vadd.f32 %v2041, %v2425
        %v2427 = vpop.f32.mrf.mxu0
        %v2428 = vadd.f32 %v2041, %v2427
        %2429 = vmatmul.bf16.gmra.mxu0 %v2277
        %v2430 = vpop.f32.mrf.mxu0
        %v2431 = vadd.f32 %v2041, %v2430
        %v2432 = vpop.f32.mrf.mxu0
        %v2433 = vadd.f32 %v2041, %v2432
        %2434 = vmatmul.bf16.gmra.mxu0 %v2280
        %v2435 = vpop.f32.mrf.mxu0
        %v2436 = vadd.f32 %v2041, %v2435
        %v2437 = vpop.f32.mrf.mxu0
        %v2438 = vadd.f32 %v2041, %v2437
        %2439 = vmatmul.bf16.gmra.mxu0 %v2283
        %v2440 = vpop.f32.mrf.mxu0
        %v2441 = vadd.f32 %v2041, %v2440
        %v2442 = vpop.f32.mrf.mxu0
        %v2443 = vadd.f32 %v2041, %v2442
        %2444 = vmatmul.bf16.gmra.mxu0 %v2286
        %v2445 = vpop.f32.mrf.mxu0
        %v2446 = vadd.f32 %v2041, %v2445
        %v2447 = vpop.f32.mrf.mxu0
        %v2448 = vadd.f32 %v2041, %v2447
        %2449 = vmatmul.bf16.gmra.mxu0 %v2289
        %v2450 = vpop.f32.mrf.mxu0
        %v2451 = vadd.f32 %v2041, %v2450
        %v2452 = vpop.f32.mrf.mxu0
        %v2453 = vadd.f32 %v2041, %v2452
        %2454 = vmatmul.bf16.gmra.mxu0 %v2292
        %v2455 = vpop.f32.mrf.mxu0
        %v2456 = vadd.f32 %v2041, %v2455
        %v2457 = vpop.f32.mrf.mxu0
        %v2458 = vadd.f32 %v2041, %v2457
        %2459 = vmatmul.bf16.gmra.mxu0 %v2295
        %v2460 = vpop.f32.mrf.mxu0
        %v2461 = vadd.f32 %v2041, %v2460
        %v2462 = vpop.f32.mrf.mxu0
        %v2463 = vadd.f32 %v2041, %v2462
        %2464 = vmatmul.bf16.gmra.mxu0 %v2298
        %v2465 = vpop.f32.mrf.mxu0
        %v2466 = vadd.f32 %v2041, %v2465
        %v2467 = vpop.f32.mrf.mxu0
        %v2468 = vadd.f32 %v2041, %v2467
        %2469 = vmatmul.bf16.gmra.mxu0 %v2301
        %v2470 = vpop.f32.mrf.mxu0
        %v2471 = vadd.f32 %v2041, %v2470
        %v2472 = vpop.f32.mrf.mxu0
        %v2473 = vadd.f32 %v2041, %v2472
        %2474 = vdwg.mxu0
        %v2475 = vmax.f32 %v2316, 0.0
        %v2476 = vmax.f32 %v2318, 0.0
        %v2477 = vmax.f32 %v2321, 0.0
        %v2478 = vmax.f32 %v2323, 0.0
        %v2479 = vmax.f32 %v2326, 0.0
        %v2480 = vmax.f32 %v2328, 0.0
        %v2481 = vmax.f32 %v2331, 0.0
        %v2482 = vmax.f32 %v2333, 0.0
        %v2483 = vmax.f32 %v2336, 0.0
        %v2484 = vmax.f32 %v2338, 0.0
        %v2485 = vmax.f32 %v2341, 0.0
        %v2486 = vmax.f32 %v2343, 0.0
        %v2487 = vmax.f32 %v2346, 0.0
        %v2488 = vmax.f32 %v2348, 0.0
        %v2489 = vmax.f32 %v2351, 0.0
        %v2490 = vmax.f32 %v2353, 0.0
        %v2491 = vmax.f32 %v2356, 0.0
        %v2492 = vmax.f32 %v2358, 0.0
        %v2493 = vmax.f32 %v2361, 0.0
        %v2494 = vmax.f32 %v2363, 0.0
        %v2495 = vmax.f32 %v2366, 0.0
        %v2496 = vmax.f32 %v2368, 0.0
        %v2497 = vmax.f32 %v2371, 0.0
        %v2498 = vmax.f32 %v2373, 0.0
        %v2499 = vmax.f32 %v2376, 0.0
        %v2500 = vmax.f32 %v2378, 0.0
        %v2501 = vmax.f32 %v2381, 0.0
        %v2502 = vmax.f32 %v2383, 0.0
        %v2503 = vmax.f32 %v2386, 0.0
        %v2504 = vmax.f32 %v2388, 0.0
        %v2505 = vmax.f32 %v2391, 0.0
        %v2506 = vmax.f32 %v2393, 0.0
        %v2507 = vmax.f32 %v2396, 0.0
        %v2508 = vmax.f32 %v2398, 0.0
        %v2509 = vmax.f32 %v2401, 0.0
        %v2510 = vmax.f32 %v2403, 0.0
        %v2511 = vmax.f32 %v2406, 0.0
        %v2512 = vmax.f32 %v2408, 0.0
        %v2513 = vmax.f32 %v2411, 0.0
        %v2514 = vmax.f32 %v2413, 0.0
        %v2515 = vmax.f32 %v2416, 0.0
        %v2516 = vmax.f32 %v2418, 0.0
        %v2517 = vmax.f32 %v2421, 0.0
        %v2518 = vmax.f32 %v2423, 0.0
        %v2519 = vmax.f32 %v2426, 0.0
        %v2520 = vmax.f32 %v2428, 0.0
        %v2521 = vmax.f32 %v2431, 0.0
        %v2522 = vmax.f32 %v2433, 0.0
        %v2523 = vmax.f32 %v2436, 0.0
        %v2524 = vmax.f32 %v2438, 0.0
        %v2525 = vmax.f32 %v2441, 0.0
        %v2526 = vmax.f32 %v2443, 0.0
        %v2527 = vmax.f32 %v2446, 0.0
        %v2528 = vmax.f32 %v2448, 0.0
        %v2529 = vmax.f32 %v2451, 0.0
        %v2530 = vmax.f32 %v2453, 0.0
        %v2531 = vmax.f32 %v2456, 0.0
        %v2532 = vmax.f32 %v2458, 0.0
        %v2533 = vmax.f32 %v2461, 0.0
        %v2534 = vmax.f32 %v2463, 0.0
        %v2535 = vmax.f32 %v2466, 0.0
        %v2536 = vmax.f32 %v2468, 0.0
        %v2537 = vmax.f32 %v2471, 0.0
        %v2538 = vmax.f32 %v2473, 0.0
        %v2539 = vpack.c.bf16 %v2476, %v2475
        %v2540 = vpack.c.bf16 %v2478, %v2477
        %v2541 = vpack.c.bf16 %v2480, %v2479
        %v2542 = vpack.c.bf16 %v2482, %v2481
        %v2543 = vpack.c.bf16 %v2484, %v2483
        %v2544 = vpack.c.bf16 %v2486, %v2485
        %v2545 = vpack.c.bf16 %v2488, %v2487
        %v2546 = vpack.c.bf16 %v2490, %v2489
        %v2547 = vpack.c.bf16 %v2492, %v2491
        %v2548 = vpack.c.bf16 %v2494, %v2493
        %v2549 = vpack.c.bf16 %v2496, %v2495
        %v2550 = vpack.c.bf16 %v2498, %v2497
        %v2551 = vpack.c.bf16 %v2500, %v2499
        %v2552 = vpack.c.bf16 %v2502, %v2501
        %v2553 = vpack.c.bf16 %v2504, %v2503
        %v2554 = vpack.c.bf16 %v2506, %v2505
        %v2555 = vpack.c.bf16 %v2508, %v2507
        %v2556 = vpack.c.bf16 %v2510, %v2509
        %v2557 = vpack.c.bf16 %v2512, %v2511
        %v2558 = vpack.c.bf16 %v2514, %v2513
        %v2559 = vpack.c.bf16 %v2516, %v2515
        %v2560 = vpack.c.bf16 %v2518, %v2517
        %v2561 = vpack.c.bf16 %v2520, %v2519
        %v2562 = vpack.c.bf16 %v2522, %v2521
        %v2563 = vpack.c.bf16 %v2524, %v2523
        %v2564 = vpack.c.bf16 %v2526, %v2525
        %v2565 = vpack.c.bf16 %v2528, %v2527
        %v2566 = vpack.c.bf16 %v2530, %v2529
        %v2567 = vpack.c.bf16 %v2532, %v2531
        %v2568 = vpack.c.bf16 %v2534, %v2533
        %v2569 = vpack.c.bf16 %v2536, %v2535
        %v2570 = vpack.c.bf16 %v2538, %v2537
        %v2571 = vld [vmem:[%s16] sm:$0xf]
        %v2572 = vld [vmem:[%s26 + $0x8] sm:$0x1]
        %v2573 = vperm.slane %v2572, 0
        %v2575 = vsel %vm1000, %v2539, 0
        %v2578 = vsel %vm1000, %v2540, 0
        %v2581 = vsel %vm1000, %v2541, 0
        %v2584 = vsel %vm1000, %v2542, 0
        %v2587 = vsel %vm1000, %v2543, 0
        %v2590 = vsel %vm1000, %v2544, 0
        %v2593 = vsel %vm1000, %v2545, 0
        %v2596 = vsel %vm1000, %v2546, 0
        %v2599 = vsel %vm1000, %v2547, 0
        %v2602 = vsel %vm1000, %v2548, 0
        %v2605 = vsel %vm1000, %v2549, 0
        %v2608 = vsel %vm1000, %v2550, 0
        %v2611 = vsel %vm1000, %v2551, 0
        %v2614 = vsel %vm1000, %v2552, 0
        %v2617 = vsel %vm1000, %v2553, 0
        %v2620 = vsel %vm1000, %v2554, 0
        %v2623 = vsel %vm1000, %v2555, 0
        %v2626 = vsel %vm1000, %v2556, 0
        %v2629 = vsel %vm1000, %v2557, 0
        %v2632 = vsel %vm1000, %v2558, 0
        %v2635 = vsel %vm1000, %v2559, 0
        %v2638 = vsel %vm1000, %v2560, 0
        %v2641 = vsel %vm1000, %v2561, 0
        %v2644 = vsel %vm1000, %v2562, 0
        %v2647 = vsel %vm1000, %v2563, 0
        %v2650 = vsel %vm1000, %v2564, 0
        %v2653 = vsel %vm1000, %v2565, 0
        %v2656 = vsel %vm1000, %v2566, 0
        %v2659 = vsel %vm1000, %v2567, 0
        %v2662 = vsel %vm1000, %v2568, 0
        %v2665 = vsel %vm1000, %v2569, 0
        %v2668 = vsel %vm1000, %v2570, 0
        %v2671 = vsel %vm1004, %v2571, 0
        %2673 = vmatpush.bf16.msra.mxu0 0
        %2674 = vmatpush.bf16.msra.mxu0 0
        %2675 = vmatpush.bf16.msra.mxu0 0
        %2676 = vmatpush.bf16.msra.mxu0 0
        %2677 = vmatpush.bf16.msra.mxu0 0
        %2678 = vmatpush.bf16.msra.mxu0 0
        %2679 = vmatpush.bf16.msra.mxu0 0
        %2680 = vmatpush.bf16.msra.mxu0 %v2671
        %2681 = vmatmul.bf16.gmra.mxu0 %v2575
        %v2682 = vpop.f32.mrf.mxu0
        %v2683 = vadd.f32 %v2573, %v2682
        %v2684 = vpop.f32.mrf.mxu0
        %v2685 = vadd.f32 %v2573, %v2684
        %2686 = vmatmul.bf16.gmra.mxu0 %v2578
        %v2687 = vpop.f32.mrf.mxu0
        %v2688 = vadd.f32 %v2573, %v2687
        %v2689 = vpop.f32.mrf.mxu0
        %v2690 = vadd.f32 %v2573, %v2689
        %2691 = vmatmul.bf16.gmra.mxu0 %v2581
        %v2692 = vpop.f32.mrf.mxu0
        %v2693 = vadd.f32 %v2573, %v2692
        %v2694 = vpop.f32.mrf.mxu0
        %v2695 = vadd.f32 %v2573, %v2694
        %2696 = vmatmul.bf16.gmra.mxu0 %v2584
        %v2697 = vpop.f32.mrf.mxu0
        %v2698 = vadd.f32 %v2573, %v2697
        %v2699 = vpop.f32.mrf.mxu0
        %v2700 = vadd.f32 %v2573, %v2699
        %2701 = vmatmul.bf16.gmra.mxu0 %v2587
        %v2702 = vpop.f32.mrf.mxu0
        %v2703 = vadd.f32 %v2573, %v2702
        %v2704 = vpop.f32.mrf.mxu0
        %v2705 = vadd.f32 %v2573, %v2704
        %2706 = vmatmul.bf16.gmra.mxu0 %v2590
        %v2707 = vpop.f32.mrf.mxu0
        %v2708 = vadd.f32 %v2573, %v2707
        %v2709 = vpop.f32.mrf.mxu0
        %v2710 = vadd.f32 %v2573, %v2709
        %2711 = vmatmul.bf16.gmra.mxu0 %v2593
        %v2712 = vpop.f32.mrf.mxu0
        %v2713 = vadd.f32 %v2573, %v2712
        %v2714 = vpop.f32.mrf.mxu0
        %v2715 = vadd.f32 %v2573, %v2714
        %2716 = vmatmul.bf16.gmra.mxu0 %v2596
        %v2717 = vpop.f32.mrf.mxu0
        %v2718 = vadd.f32 %v2573, %v2717
        %v2719 = vpop.f32.mrf.mxu0
        %v2720 = vadd.f32 %v2573, %v2719
        %2721 = vmatmul.bf16.gmra.mxu0 %v2599
        %v2722 = vpop.f32.mrf.mxu0
        %v2723 = vadd.f32 %v2573, %v2722
        %v2724 = vpop.f32.mrf.mxu0
        %v2725 = vadd.f32 %v2573, %v2724
        %2726 = vmatmul.bf16.gmra.mxu0 %v2602
        %v2727 = vpop.f32.mrf.mxu0
        %v2728 = vadd.f32 %v2573, %v2727
        %v2729 = vpop.f32.mrf.mxu0
        %v2730 = vadd.f32 %v2573, %v2729
        %2731 = vmatmul.bf16.gmra.mxu0 %v2605
        %v2732 = vpop.f32.mrf.mxu0
        %v2733 = vadd.f32 %v2573, %v2732
        %v2734 = vpop.f32.mrf.mxu0
        %v2735 = vadd.f32 %v2573, %v2734
        %2736 = vmatmul.bf16.gmra.mxu0 %v2608
        %v2737 = vpop.f32.mrf.mxu0
        %v2738 = vadd.f32 %v2573, %v2737
        %v2739 = vpop.f32.mrf.mxu0
        %v2740 = vadd.f32 %v2573, %v2739
        %2741 = vmatmul.bf16.gmra.mxu0 %v2611
        %v2742 = vpop.f32.mrf.mxu0
        %v2743 = vadd.f32 %v2573, %v2742
        %v2744 = vpop.f32.mrf.mxu0
        %v2745 = vadd.f32 %v2573, %v2744
        %2746 = vmatmul.bf16.gmra.mxu0 %v2614
        %v2747 = vpop.f32.mrf.mxu0
        %v2748 = vadd.f32 %v2573, %v2747
        %v2749 = vpop.f32.mrf.mxu0
        %v2750 = vadd.f32 %v2573, %v2749
        %2751 = vmatmul.bf16.gmra.mxu0 %v2617
        %v2752 = vpop.f32.mrf.mxu0
        %v2753 = vadd.f32 %v2573, %v2752
        %v2754 = vpop.f32.mrf.mxu0
        %v2755 = vadd.f32 %v2573, %v2754
        %2756 = vmatmul.bf16.gmra.mxu0 %v2620
        %v2757 = vpop.f32.mrf.mxu0
        %v2758 = vadd.f32 %v2573, %v2757
        %v2759 = vpop.f32.mrf.mxu0
        %v2760 = vadd.f32 %v2573, %v2759
        %2761 = vmatmul.bf16.gmra.mxu0 %v2623
        %v2762 = vpop.f32.mrf.mxu0
        %v2763 = vadd.f32 %v2573, %v2762
        %v2764 = vpop.f32.mrf.mxu0
        %v2765 = vadd.f32 %v2573, %v2764
        %2766 = vmatmul.bf16.gmra.mxu0 %v2626
        %v2767 = vpop.f32.mrf.mxu0
        %v2768 = vadd.f32 %v2573, %v2767
        %v2769 = vpop.f32.mrf.mxu0
        %v2770 = vadd.f32 %v2573, %v2769
        %2771 = vmatmul.bf16.gmra.mxu0 %v2629
        %v2772 = vpop.f32.mrf.mxu0
        %v2773 = vadd.f32 %v2573, %v2772
        %v2774 = vpop.f32.mrf.mxu0
        %v2775 = vadd.f32 %v2573, %v2774
        %2776 = vmatmul.bf16.gmra.mxu0 %v2632
        %v2777 = vpop.f32.mrf.mxu0
        %v2778 = vadd.f32 %v2573, %v2777
        %v2779 = vpop.f32.mrf.mxu0
        %v2780 = vadd.f32 %v2573, %v2779
        %2781 = vmatmul.bf16.gmra.mxu0 %v2635
        %v2782 = vpop.f32.mrf.mxu0
        %v2783 = vadd.f32 %v2573, %v2782
        %v2784 = vpop.f32.mrf.mxu0
        %v2785 = vadd.f32 %v2573, %v2784
        %2786 = vmatmul.bf16.gmra.mxu0 %v2638
        %v2787 = vpop.f32.mrf.mxu0
        %v2788 = vadd.f32 %v2573, %v2787
        %v2789 = vpop.f32.mrf.mxu0
        %v2790 = vadd.f32 %v2573, %v2789
        %2791 = vmatmul.bf16.gmra.mxu0 %v2641
        %v2792 = vpop.f32.mrf.mxu0
        %v2793 = vadd.f32 %v2573, %v2792
        %v2794 = vpop.f32.mrf.mxu0
        %v2795 = vadd.f32 %v2573, %v2794
        %2796 = vmatmul.bf16.gmra.mxu0 %v2644
        %v2797 = vpop.f32.mrf.mxu0
        %v2798 = vadd.f32 %v2573, %v2797
        %v2799 = vpop.f32.mrf.mxu0
        %v2800 = vadd.f32 %v2573, %v2799
        %2801 = vmatmul.bf16.gmra.mxu0 %v2647
        %v2802 = vpop.f32.mrf.mxu0
        %v2803 = vadd.f32 %v2573, %v2802
        %v2804 = vpop.f32.mrf.mxu0
        %v2805 = vadd.f32 %v2573, %v2804
        %2806 = vmatmul.bf16.gmra.mxu0 %v2650
        %v2807 = vpop.f32.mrf.mxu0
        %v2808 = vadd.f32 %v2573, %v2807
        %v2809 = vpop.f32.mrf.mxu0
        %v2810 = vadd.f32 %v2573, %v2809
        %2811 = vmatmul.bf16.gmra.mxu0 %v2653
        %v2812 = vpop.f32.mrf.mxu0
        %v2813 = vadd.f32 %v2573, %v2812
        %v2814 = vpop.f32.mrf.mxu0
        %v2815 = vadd.f32 %v2573, %v2814
        %2816 = vmatmul.bf16.gmra.mxu0 %v2656
        %v2817 = vpop.f32.mrf.mxu0
        %v2818 = vadd.f32 %v2573, %v2817
        %v2819 = vpop.f32.mrf.mxu0
        %v2820 = vadd.f32 %v2573, %v2819
        %2821 = vmatmul.bf16.gmra.mxu0 %v2659
        %v2822 = vpop.f32.mrf.mxu0
        %v2823 = vadd.f32 %v2573, %v2822
        %v2824 = vpop.f32.mrf.mxu0
        %v2825 = vadd.f32 %v2573, %v2824
        %2826 = vmatmul.bf16.gmra.mxu0 %v2662
        %v2827 = vpop.f32.mrf.mxu0
        %v2828 = vadd.f32 %v2573, %v2827
        %v2829 = vpop.f32.mrf.mxu0
        %v2830 = vadd.f32 %v2573, %v2829
        %2831 = vmatmul.bf16.gmra.mxu0 %v2665
        %v2832 = vpop.f32.mrf.mxu0
        %v2833 = vadd.f32 %v2573, %v2832
        %v2834 = vpop.f32.mrf.mxu0
        %v2835 = vadd.f32 %v2573, %v2834
        %2836 = vmatmul.bf16.gmra.mxu0 %v2668
        %v2837 = vpop.f32.mrf.mxu0
        %v2838 = vadd.f32 %v2573, %v2837
        %v2839 = vpop.f32.mrf.mxu0
        %v2840 = vadd.f32 %v2573, %v2839
        %2841 = vdwg.mxu0
        %v2842 = vmax.f32 %v2683, 0.0
        %v2843 = vmax.f32 %v2685, 0.0
        %v2844 = vmax.f32 %v2688, 0.0
        %v2845 = vmax.f32 %v2690, 0.0
        %v2846 = vmax.f32 %v2693, 0.0
        %v2847 = vmax.f32 %v2695, 0.0
        %v2848 = vmax.f32 %v2698, 0.0
        %v2849 = vmax.f32 %v2700, 0.0
        %v2850 = vmax.f32 %v2703, 0.0
        %v2851 = vmax.f32 %v2705, 0.0
        %v2852 = vmax.f32 %v2708, 0.0
        %v2853 = vmax.f32 %v2710, 0.0
        %v2854 = vmax.f32 %v2713, 0.0
        %v2855 = vmax.f32 %v2715, 0.0
        %v2856 = vmax.f32 %v2718, 0.0
        %v2857 = vmax.f32 %v2720, 0.0
        %v2858 = vmax.f32 %v2723, 0.0
        %v2859 = vmax.f32 %v2725, 0.0
        %v2860 = vmax.f32 %v2728, 0.0
        %v2861 = vmax.f32 %v2730, 0.0
        %v2862 = vmax.f32 %v2733, 0.0
        %v2863 = vmax.f32 %v2735, 0.0
        %v2864 = vmax.f32 %v2738, 0.0
        %v2865 = vmax.f32 %v2740, 0.0
        %v2866 = vmax.f32 %v2743, 0.0
        %v2867 = vmax.f32 %v2745, 0.0
        %v2868 = vmax.f32 %v2748, 0.0
        %v2869 = vmax.f32 %v2750, 0.0
        %v2870 = vmax.f32 %v2753, 0.0
        %v2871 = vmax.f32 %v2755, 0.0
        %v2872 = vmax.f32 %v2758, 0.0
        %v2873 = vmax.f32 %v2760, 0.0
        %v2874 = vmax.f32 %v2763, 0.0
        %v2875 = vmax.f32 %v2765, 0.0
        %v2876 = vmax.f32 %v2768, 0.0
        %v2877 = vmax.f32 %v2770, 0.0
        %v2878 = vmax.f32 %v2773, 0.0
        %v2879 = vmax.f32 %v2775, 0.0
        %v2880 = vmax.f32 %v2778, 0.0
        %v2881 = vmax.f32 %v2780, 0.0
        %v2882 = vmax.f32 %v2783, 0.0
        %v2883 = vmax.f32 %v2785, 0.0
        %v2884 = vmax.f32 %v2788, 0.0
        %v2885 = vmax.f32 %v2790, 0.0
        %v2886 = vmax.f32 %v2793, 0.0
        %v2887 = vmax.f32 %v2795, 0.0
        %v2888 = vmax.f32 %v2798, 0.0
        %v2889 = vmax.f32 %v2800, 0.0
        %v2890 = vmax.f32 %v2803, 0.0
        %v2891 = vmax.f32 %v2805, 0.0
        %v2892 = vmax.f32 %v2808, 0.0
        %v2893 = vmax.f32 %v2810, 0.0
        %v2894 = vmax.f32 %v2813, 0.0
        %v2895 = vmax.f32 %v2815, 0.0
        %v2896 = vmax.f32 %v2818, 0.0
        %v2897 = vmax.f32 %v2820, 0.0
        %v2898 = vmax.f32 %v2823, 0.0
        %v2899 = vmax.f32 %v2825, 0.0
        %v2900 = vmax.f32 %v2828, 0.0
        %v2901 = vmax.f32 %v2830, 0.0
        %v2902 = vmax.f32 %v2833, 0.0
        %v2903 = vmax.f32 %v2835, 0.0
        %v2904 = vmax.f32 %v2838, 0.0
        %v2905 = vmax.f32 %v2840, 0.0
        %v2906 = vld [vmem:[%s952] sm:$0xf]
        %v2907 = vld [vmem:[%s952 + $0x4] sm:$0xf]
        %v2908 = vld [vmem:[%s952 + $0x8] sm:$0xf]
        %v2909 = vld [vmem:[%s952 + $0xc] sm:$0xf]
        %v2910 = vld [vmem:[%s952 + $0x10] sm:$0xf]
        %v2911 = vld [vmem:[%s952 + $0x14] sm:$0xf]
        %v2912 = vld [vmem:[%s952 + $0x18] sm:$0xf]
        %v2913 = vld [vmem:[%s952 + $0x1c] sm:$0xf]
        %v2914 = vld [vmem:[%s17] sm:$0xf]
        %v2915 = vld [vmem:[%s17 + $0x4] sm:$0xf]
        %v2916 = vld [vmem:[%s26 + $0x9] sm:$0x1]
        %v2917 = vperm.slane %v2916, 0
        %v2926 = vunpack.c.l.b16 %v2906
        %v2927 = vunpack.c.l.b16 %v2907
        %v2928 = vunpack.c.l.b16 %v2908
        %v2929 = vunpack.c.l.b16 %v2909
        %v2930 = vunpack.c.l.b16 %v2910
        %v2931 = vunpack.c.l.b16 %v2911
        %v2932 = vunpack.c.l.b16 %v2912
        %v2933 = vunpack.c.l.b16 %v2913
        %v2934 = vpack.c.b16 %v2927, %v2926
        %v2935 = vpack.c.b16 %v2929, %v2928
        %v2936 = vpack.c.b16 %v2931, %v2930
        %v2937 = vpack.c.b16 %v2933, %v2932
        %v2940 = vunpack.c.l.b16 %v2914
        %v2941 = vunpack.c.l.b16 %v2915
        %v2942 = vpack.c.b16 %v2941, %v2940
        %v2945 = vsel %vm978, %v2934, 0
        %v2948 = vsel %vm978, %v2935, 0
        %v2951 = vsel %vm978, %v2936, 0
        %v2954 = vsel %vm978, %v2937, 0
        %2956 = vmatpush.bf16.msra.mxu0 0
        %2957 = vmatpush.bf16.msra.mxu0 0
        %2958 = vmatpush.bf16.msra.mxu0 0
        %2959 = vmatpush.bf16.msra.mxu0 0
        %2960 = vmatpush.bf16.msra.mxu0 0
        %2961 = vmatpush.bf16.msra.mxu0 0
        %2962 = vmatpush.bf16.msra.mxu0 0
        %2963 = vmatpush.bf16.msra.mxu0 %v2942
        %2964 = vmatmul.bf16.gmra.mxu0 %v2945
        %v2965 = vpop.f32.mrf.mxu0
        %v2966 = vadd.f32 %v2917, %v2965
        %v2967 = vpop.f32.mrf.mxu0
        %v2968 = vadd.f32 %v2917, %v2967
        %2969 = vmatmul.bf16.gmra.mxu0 %v2948
        %v2970 = vpop.f32.mrf.mxu0
        %v2971 = vadd.f32 %v2917, %v2970
        %v2972 = vpop.f32.mrf.mxu0
        %v2973 = vadd.f32 %v2917, %v2972
        %2974 = vmatmul.bf16.gmra.mxu0 %v2951
        %v2975 = vpop.f32.mrf.mxu0
        %v2976 = vadd.f32 %v2917, %v2975
        %v2977 = vpop.f32.mrf.mxu0
        %v2978 = vadd.f32 %v2917, %v2977
        %2979 = vmatmul.bf16.gmra.mxu0 %v2954
        %v2980 = vpop.f32.mrf.mxu0
        %v2981 = vadd.f32 %v2917, %v2980
        %v2982 = vpop.f32.mrf.mxu0
        %v2983 = vadd.f32 %v2917, %v2982
        %2984 = vdwg.mxu0
        %v2985 = vmax.f32 %v2966, 0.0
        %v2986 = vmax.f32 %v2968, 0.0
        %v2987 = vmax.f32 %v2971, 0.0
        %v2988 = vmax.f32 %v2973, 0.0
        %v2989 = vmax.f32 %v2976, 0.0
        %v2990 = vmax.f32 %v2978, 0.0
        %v2991 = vmax.f32 %v2981, 0.0
        %v2992 = vmax.f32 %v2983, 0.0
        %v2993 = vpack.c.bf16 %v2986, %v2985
        %v2994 = vpack.c.bf16 %v2988, %v2987
        %v2995 = vpack.c.bf16 %v2990, %v2989
        %v2996 = vpack.c.bf16 %v2992, %v2991
        %v2997 = vld [vmem:[%s18] sm:$0xf]
        %v2998 = vld [vmem:[%s26 + $0xa] sm:$0x1]
        %v2999 = vperm.slane %v2998, 0
        %v3001 = vsel %vm1000, %v2993, 0
        %v3004 = vsel %vm1000, %v2994, 0
        %v3007 = vsel %vm1000, %v2995, 0
        %v3010 = vsel %vm1000, %v2996, 0
        %v3013 = vsel %vm1004, %v2997, 0
        %3015 = vmatpush.bf16.msra.mxu0 0
        %3016 = vmatpush.bf16.msra.mxu0 0
        %3017 = vmatpush.bf16.msra.mxu0 0
        %3018 = vmatpush.bf16.msra.mxu0 0
        %3019 = vmatpush.bf16.msra.mxu0 0
        %3020 = vmatpush.bf16.msra.mxu0 0
        %3021 = vmatpush.bf16.msra.mxu0 0
        %3022 = vmatpush.bf16.msra.mxu0 %v3013
        %3023 = vmatmul.bf16.gmra.mxu0 %v3001
        %v3024 = vpop.f32.mrf.mxu0
        %v3025 = vadd.f32 %v2999, %v3024
        %v3026 = vpop.f32.mrf.mxu0
        %v3027 = vadd.f32 %v2999, %v3026
        %3028 = vmatmul.bf16.gmra.mxu0 %v3004
        %v3029 = vpop.f32.mrf.mxu0
        %v3030 = vadd.f32 %v2999, %v3029
        %v3031 = vpop.f32.mrf.mxu0
        %v3032 = vadd.f32 %v2999, %v3031
        %3033 = vmatmul.bf16.gmra.mxu0 %v3007
        %v3034 = vpop.f32.mrf.mxu0
        %v3035 = vadd.f32 %v2999, %v3034
        %v3036 = vpop.f32.mrf.mxu0
        %v3037 = vadd.f32 %v2999, %v3036
        %3038 = vmatmul.bf16.gmra.mxu0 %v3010
        %v3039 = vpop.f32.mrf.mxu0
        %v3040 = vadd.f32 %v2999, %v3039
        %v3041 = vpop.f32.mrf.mxu0
        %v3042 = vadd.f32 %v2999, %v3041
        %3043 = vdwg.mxu0
        %v3044 = vmax.f32 %v3025, 0.0
        %v3045 = vmax.f32 %v3027, 0.0
        %v3046 = vmax.f32 %v3030, 0.0
        %v3047 = vmax.f32 %v3032, 0.0
        %v3048 = vmax.f32 %v3035, 0.0
        %v3049 = vmax.f32 %v3037, 0.0
        %v3050 = vmax.f32 %v3040, 0.0
        %v3051 = vmax.f32 %v3042, 0.0
        %v3052 = vld [vmem:[%s958] sm:$0xf]
        %v3053 = vld [vmem:[%s958 + $0x4] sm:$0xf]
        %v3054 = vld [vmem:[%s958 + $0x8] sm:$0xf]
        %v3055 = vld [vmem:[%s958 + $0xc] sm:$0xf]
        %v3056 = vld [vmem:[%s958 + $0x10] sm:$0xf]
        %v3057 = vld [vmem:[%s958 + $0x14] sm:$0xf]
        %v3058 = vld [vmem:[%s958 + $0x18] sm:$0xf]
        %v3059 = vld [vmem:[%s958 + $0x1c] sm:$0xf]
        %v3060 = vld [vmem:[%s958 + $0x20] sm:$0xf]
        %v3061 = vld [vmem:[%s958 + $0x24] sm:$0xf]
        %v3062 = vld [vmem:[%s958 + $0x28] sm:$0xf]
        %v3063 = vld [vmem:[%s958 + $0x2c] sm:$0xf]
        %v3064 = vld [vmem:[%s958 + $0x30] sm:$0xf]
        %v3065 = vld [vmem:[%s958 + $0x34] sm:$0xf]
        %v3066 = vld [vmem:[%s958 + $0x38] sm:$0xf]
        %v3067 = vld [vmem:[%s958 + $0x3c] sm:$0xf]
        %v3068 = vld [vmem:[%s958 + $0x40] sm:$0xf]
        %v3069 = vld [vmem:[%s958 + $0x44] sm:$0xf]
        %v3070 = vld [vmem:[%s958 + $0x48] sm:$0xf]
        %v3071 = vld [vmem:[%s958 + $0x4c] sm:$0xf]
        %v3072 = vld [vmem:[%s958 + $0x50] sm:$0xf]
        %v3073 = vld [vmem:[%s958 + $0x54] sm:$0xf]
        %v3074 = vld [vmem:[%s958 + $0x58] sm:$0xf]
        %v3075 = vld [vmem:[%s958 + $0x5c] sm:$0xf]
        %v3076 = vld [vmem:[%s958 + $0x60] sm:$0xf]
        %v3077 = vld [vmem:[%s958 + $0x64] sm:$0xf]
        %v3078 = vld [vmem:[%s958 + $0x68] sm:$0xf]
        %v3079 = vld [vmem:[%s958 + $0x6c] sm:$0xf]
        %v3080 = vld [vmem:[%s958 + $0x70] sm:$0xf]
        %v3081 = vld [vmem:[%s958 + $0x74] sm:$0xf]
        %v3082 = vld [vmem:[%s958 + $0x78] sm:$0xf]
        %v3083 = vld [vmem:[%s958 + $0x7c] sm:$0xf]
        %v3084 = vld [vmem:[%s958 + $0x80] sm:$0xf]
        %v3085 = vld [vmem:[%s958 + $0x84] sm:$0xf]
        %v3086 = vld [vmem:[%s958 + $0x88] sm:$0xf]
        %v3087 = vld [vmem:[%s958 + $0x8c] sm:$0xf]
        %v3088 = vld [vmem:[%s958 + $0x90] sm:$0xf]
        %v3089 = vld [vmem:[%s958 + $0x94] sm:$0xf]
        %v3090 = vld [vmem:[%s958 + $0x98] sm:$0xf]
        %v3091 = vld [vmem:[%s958 + $0x9c] sm:$0xf]
        %v3092 = vld [vmem:[%s958 + $0xa0] sm:$0xf]
        %v3093 = vld [vmem:[%s958 + $0xa4] sm:$0xf]
        %v3094 = vld [vmem:[%s958 + $0xa8] sm:$0xf]
        %v3095 = vld [vmem:[%s958 + $0xac] sm:$0xf]
        %v3096 = vld [vmem:[%s958 + $0xb0] sm:$0xf]
        %v3097 = vld [vmem:[%s958 + $0xb4] sm:$0xf]
        %v3098 = vld [vmem:[%s958 + $0xb8] sm:$0xf]
        %v3099 = vld [vmem:[%s958 + $0xbc] sm:$0xf]
        %v3100 = vld [vmem:[%s958 + $0xc0] sm:$0xf]
        %v3101 = vld [vmem:[%s958 + $0xc4] sm:$0xf]
        %v3102 = vld [vmem:[%s958 + $0xc8] sm:$0xf]
        %v3103 = vld [vmem:[%s958 + $0xcc] sm:$0xf]
        %v3104 = vld [vmem:[%s958 + $0xd0] sm:$0xf]
        %v3105 = vld [vmem:[%s958 + $0xd4] sm:$0xf]
        %v3106 = vld [vmem:[%s958 + $0xd8] sm:$0xf]
        %v3107 = vld [vmem:[%s958 + $0xdc] sm:$0xf]
        %v3108 = vld [vmem:[%s958 + $0xe0] sm:$0xf]
        %v3109 = vld [vmem:[%s958 + $0xe4] sm:$0xf]
        %v3110 = vld [vmem:[%s958 + $0xe8] sm:$0xf]
        %v3111 = vld [vmem:[%s958 + $0xec] sm:$0xf]
        %v3112 = vld [vmem:[%s958 + $0xf0] sm:$0xf]
        %v3113 = vld [vmem:[%s958 + $0xf4] sm:$0xf]
        %v3114 = vld [vmem:[%s958 + $0xf8] sm:$0xf]
        %v3115 = vld [vmem:[%s958 + $0xfc] sm:$0xf]
        %v3116 = vld [vmem:[%s19] sm:$0xf]
        %v3117 = vld [vmem:[%s19 + $0x4] sm:$0x3]
        %v3118 = vld [vmem:[%s26 + $0xb] sm:$0x1]
        %v3119 = vperm.slane %v3118, 0
        %v3184 = vunpack.c.l.b16 %v3052
        %v3185 = vunpack.c.l.b16 %v3053
        %v3186 = vunpack.c.l.b16 %v3054
        %v3187 = vunpack.c.l.b16 %v3055
        %v3188 = vunpack.c.l.b16 %v3056
        %v3189 = vunpack.c.l.b16 %v3057
        %v3190 = vunpack.c.l.b16 %v3058
        %v3191 = vunpack.c.l.b16 %v3059
        %v3192 = vunpack.c.l.b16 %v3060
        %v3193 = vunpack.c.l.b16 %v3061
        %v3194 = vunpack.c.l.b16 %v3062
        %v3195 = vunpack.c.l.b16 %v3063
        %v3196 = vunpack.c.l.b16 %v3064
        %v3197 = vunpack.c.l.b16 %v3065
        %v3198 = vunpack.c.l.b16 %v3066
        %v3199 = vunpack.c.l.b16 %v3067
        %v3200 = vunpack.c.l.b16 %v3068
        %v3201 = vunpack.c.l.b16 %v3069
        %v3202 = vunpack.c.l.b16 %v3070
        %v3203 = vunpack.c.l.b16 %v3071
        %v3204 = vunpack.c.l.b16 %v3072
        %v3205 = vunpack.c.l.b16 %v3073
        %v3206 = vunpack.c.l.b16 %v3074
        %v3207 = vunpack.c.l.b16 %v3075
        %v3208 = vunpack.c.l.b16 %v3076
        %v3209 = vunpack.c.l.b16 %v3077
        %v3210 = vunpack.c.l.b16 %v3078
        %v3211 = vunpack.c.l.b16 %v3079
        %v3212 = vunpack.c.l.b16 %v3080
        %v3213 = vunpack.c.l.b16 %v3081
        %v3214 = vunpack.c.l.b16 %v3082
        %v3215 = vunpack.c.l.b16 %v3083
        %v3216 = vunpack.c.l.b16 %v3084
        %v3217 = vunpack.c.l.b16 %v3085
        %v3218 = vunpack.c.l.b16 %v3086
        %v3219 = vunpack.c.l.b16 %v3087
        %v3220 = vunpack.c.l.b16 %v3088
        %v3221 = vunpack.c.l.b16 %v3089
        %v3222 = vunpack.c.l.b16 %v3090
        %v3223 = vunpack.c.l.b16 %v3091
        %v3224 = vunpack.c.l.b16 %v3092
        %v3225 = vunpack.c.l.b16 %v3093
        %v3226 = vunpack.c.l.b16 %v3094
        %v3227 = vunpack.c.l.b16 %v3095
        %v3228 = vunpack.c.l.b16 %v3096
        %v3229 = vunpack.c.l.b16 %v3097
        %v3230 = vunpack.c.l.b16 %v3098
        %v3231 = vunpack.c.l.b16 %v3099
        %v3232 = vunpack.c.l.b16 %v3100
        %v3233 = vunpack.c.l.b16 %v3101
        %v3234 = vunpack.c.l.b16 %v3102
        %v3235 = vunpack.c.l.b16 %v3103
        %v3236 = vunpack.c.l.b16 %v3104
        %v3237 = vunpack.c.l.b16 %v3105
        %v3238 = vunpack.c.l.b16 %v3106
        %v3239 = vunpack.c.l.b16 %v3107
        %v3240 = vunpack.c.l.b16 %v3108
        %v3241 = vunpack.c.l.b16 %v3109
        %v3242 = vunpack.c.l.b16 %v3110
        %v3243 = vunpack.c.l.b16 %v3111
        %v3244 = vunpack.c.l.b16 %v3112
        %v3245 = vunpack.c.l.b16 %v3113
        %v3246 = vunpack.c.l.b16 %v3114
        %v3247 = vunpack.c.l.b16 %v3115
        %v3248 = vpack.c.b16 %v3185, %v3184
        %v3249 = vpack.c.b16 %v3187, %v3186
        %v3250 = vpack.c.b16 %v3189, %v3188
        %v3251 = vpack.c.b16 %v3191, %v3190
        %v3252 = vpack.c.b16 %v3193, %v3192
        %v3253 = vpack.c.b16 %v3195, %v3194
        %v3254 = vpack.c.b16 %v3197, %v3196
        %v3255 = vpack.c.b16 %v3199, %v3198
        %v3256 = vpack.c.b16 %v3201, %v3200
        %v3257 = vpack.c.b16 %v3203, %v3202
        %v3258 = vpack.c.b16 %v3205, %v3204
        %v3259 = vpack.c.b16 %v3207, %v3206
        %v3260 = vpack.c.b16 %v3209, %v3208
        %v3261 = vpack.c.b16 %v3211, %v3210
        %v3262 = vpack.c.b16 %v3213, %v3212
        %v3263 = vpack.c.b16 %v3215, %v3214
        %v3264 = vpack.c.b16 %v3217, %v3216
        %v3265 = vpack.c.b16 %v3219, %v3218
        %v3266 = vpack.c.b16 %v3221, %v3220
        %v3267 = vpack.c.b16 %v3223, %v3222
        %v3268 = vpack.c.b16 %v3225, %v3224
        %v3269 = vpack.c.b16 %v3227, %v3226
        %v3270 = vpack.c.b16 %v3229, %v3228
        %v3271 = vpack.c.b16 %v3231, %v3230
        %v3272 = vpack.c.b16 %v3233, %v3232
        %v3273 = vpack.c.b16 %v3235, %v3234
        %v3274 = vpack.c.b16 %v3237, %v3236
        %v3275 = vpack.c.b16 %v3239, %v3238
        %v3276 = vpack.c.b16 %v3241, %v3240
        %v3277 = vpack.c.b16 %v3243, %v3242
        %v3278 = vpack.c.b16 %v3245, %v3244
        %v3279 = vpack.c.b16 %v3247, %v3246
        %v3282 = vunpack.c.l.b16 %v3116
        %v3283 = vunpack.c.l.b16 %v3117
        %v3284 = vpack.c.b16 %v3283, %v3282
        %v3286 = vsel %vm1857, %v3248, 0
        %v3289 = vsel %vm1857, %v3249, 0
        %v3292 = vsel %vm1857, %v3250, 0
        %v3295 = vsel %vm1857, %v3251, 0
        %v3298 = vsel %vm1857, %v3252, 0
        %v3301 = vsel %vm1857, %v3253, 0
        %v3304 = vsel %vm1857, %v3254, 0
        %v3307 = vsel %vm1857, %v3255, 0
        %v3310 = vsel %vm1857, %v3256, 0
        %v3313 = vsel %vm1857, %v3257, 0
        %v3316 = vsel %vm1857, %v3258, 0
        %v3319 = vsel %vm1857, %v3259, 0
        %v3322 = vsel %vm1857, %v3260, 0
        %v3325 = vsel %vm1857, %v3261, 0
        %v3328 = vsel %vm1857, %v3262, 0
        %v3331 = vsel %vm1857, %v3263, 0
        %v3334 = vsel %vm1857, %v3264, 0
        %v3337 = vsel %vm1857, %v3265, 0
        %v3340 = vsel %vm1857, %v3266, 0
        %v3343 = vsel %vm1857, %v3267, 0
        %v3346 = vsel %vm1857, %v3268, 0
        %v3349 = vsel %vm1857, %v3269, 0
        %v3352 = vsel %vm1857, %v3270, 0
        %v3355 = vsel %vm1857, %v3271, 0
        %v3358 = vsel %vm1857, %v3272, 0
        %v3361 = vsel %vm1857, %v3273, 0
        %v3364 = vsel %vm1857, %v3274, 0
        %v3367 = vsel %vm1857, %v3275, 0
        %v3370 = vsel %vm1857, %v3276, 0
        %v3373 = vsel %vm1857, %v3277, 0
        %v3376 = vsel %vm1857, %v3278, 0
        %v3379 = vsel %vm1857, %v3279, 0
        %v3382 = vsel %vm1870, %v3284, 0
        %3384 = vmatpush.bf16.msra.mxu0 0
        %3385 = vmatpush.bf16.msra.mxu0 0
        %3386 = vmatpush.bf16.msra.mxu0 0
        %3387 = vmatpush.bf16.msra.mxu0 0
        %3388 = vmatpush.bf16.msra.mxu0 0
        %3389 = vmatpush.bf16.msra.mxu0 0
        %3390 = vmatpush.bf16.msra.mxu0 0
        %3391 = vmatpush.bf16.msra.mxu0 %v3382
        %3392 = vmatmul.bf16.gmra.mxu0 %v3286
        %v3393 = vpop.f32.mrf.mxu0
        %v3394 = vadd.f32 %v3119, %v3393
        %v3395 = vpop.f32.mrf.mxu0
        %v3396 = vadd.f32 %v3119, %v3395
        %3397 = vmatmul.bf16.gmra.mxu0 %v3289
        %v3398 = vpop.f32.mrf.mxu0
        %v3399 = vadd.f32 %v3119, %v3398
        %v3400 = vpop.f32.mrf.mxu0
        %v3401 = vadd.f32 %v3119, %v3400
        %3402 = vmatmul.bf16.gmra.mxu0 %v3292
        %v3403 = vpop.f32.mrf.mxu0
        %v3404 = vadd.f32 %v3119, %v3403
        %v3405 = vpop.f32.mrf.mxu0
        %v3406 = vadd.f32 %v3119, %v3405
        %3407 = vmatmul.bf16.gmra.mxu0 %v3295
        %v3408 = vpop.f32.mrf.mxu0
        %v3409 = vadd.f32 %v3119, %v3408
        %v3410 = vpop.f32.mrf.mxu0
        %v3411 = vadd.f32 %v3119, %v3410
        %3412 = vmatmul.bf16.gmra.mxu0 %v3298
        %v3413 = vpop.f32.mrf.mxu0
        %v3414 = vadd.f32 %v3119, %v3413
        %v3415 = vpop.f32.mrf.mxu0
        %v3416 = vadd.f32 %v3119, %v3415
        %3417 = vmatmul.bf16.gmra.mxu0 %v3301
        %v3418 = vpop.f32.mrf.mxu0
        %v3419 = vadd.f32 %v3119, %v3418
        %v3420 = vpop.f32.mrf.mxu0
        %v3421 = vadd.f32 %v3119, %v3420
        %3422 = vmatmul.bf16.gmra.mxu0 %v3304
        %v3423 = vpop.f32.mrf.mxu0
        %v3424 = vadd.f32 %v3119, %v3423
        %v3425 = vpop.f32.mrf.mxu0
        %v3426 = vadd.f32 %v3119, %v3425
        %3427 = vmatmul.bf16.gmra.mxu0 %v3307
        %v3428 = vpop.f32.mrf.mxu0
        %v3429 = vadd.f32 %v3119, %v3428
        %v3430 = vpop.f32.mrf.mxu0
        %v3431 = vadd.f32 %v3119, %v3430
        %3432 = vmatmul.bf16.gmra.mxu0 %v3310
        %v3433 = vpop.f32.mrf.mxu0
        %v3434 = vadd.f32 %v3119, %v3433
        %v3435 = vpop.f32.mrf.mxu0
        %v3436 = vadd.f32 %v3119, %v3435
        %3437 = vmatmul.bf16.gmra.mxu0 %v3313
        %v3438 = vpop.f32.mrf.mxu0
        %v3439 = vadd.f32 %v3119, %v3438
        %v3440 = vpop.f32.mrf.mxu0
        %v3441 = vadd.f32 %v3119, %v3440
        %3442 = vmatmul.bf16.gmra.mxu0 %v3316
        %v3443 = vpop.f32.mrf.mxu0
        %v3444 = vadd.f32 %v3119, %v3443
        %v3445 = vpop.f32.mrf.mxu0
        %v3446 = vadd.f32 %v3119, %v3445
        %3447 = vmatmul.bf16.gmra.mxu0 %v3319
        %v3448 = vpop.f32.mrf.mxu0
        %v3449 = vadd.f32 %v3119, %v3448
        %v3450 = vpop.f32.mrf.mxu0
        %v3451 = vadd.f32 %v3119, %v3450
        %3452 = vmatmul.bf16.gmra.mxu0 %v3322
        %v3453 = vpop.f32.mrf.mxu0
        %v3454 = vadd.f32 %v3119, %v3453
        %v3455 = vpop.f32.mrf.mxu0
        %v3456 = vadd.f32 %v3119, %v3455
        %3457 = vmatmul.bf16.gmra.mxu0 %v3325
        %v3458 = vpop.f32.mrf.mxu0
        %v3459 = vadd.f32 %v3119, %v3458
        %v3460 = vpop.f32.mrf.mxu0
        %v3461 = vadd.f32 %v3119, %v3460
        %3462 = vmatmul.bf16.gmra.mxu0 %v3328
        %v3463 = vpop.f32.mrf.mxu0
        %v3464 = vadd.f32 %v3119, %v3463
        %v3465 = vpop.f32.mrf.mxu0
        %v3466 = vadd.f32 %v3119, %v3465
        %3467 = vmatmul.bf16.gmra.mxu0 %v3331
        %v3468 = vpop.f32.mrf.mxu0
        %v3469 = vadd.f32 %v3119, %v3468
        %v3470 = vpop.f32.mrf.mxu0
        %v3471 = vadd.f32 %v3119, %v3470
        %3472 = vmatmul.bf16.gmra.mxu0 %v3334
        %v3473 = vpop.f32.mrf.mxu0
        %v3474 = vadd.f32 %v3119, %v3473
        %v3475 = vpop.f32.mrf.mxu0
        %v3476 = vadd.f32 %v3119, %v3475
        %3477 = vmatmul.bf16.gmra.mxu0 %v3337
        %v3478 = vpop.f32.mrf.mxu0
        %v3479 = vadd.f32 %v3119, %v3478
        %v3480 = vpop.f32.mrf.mxu0
        %v3481 = vadd.f32 %v3119, %v3480
        %3482 = vmatmul.bf16.gmra.mxu0 %v3340
        %v3483 = vpop.f32.mrf.mxu0
        %v3484 = vadd.f32 %v3119, %v3483
        %v3485 = vpop.f32.mrf.mxu0
        %v3486 = vadd.f32 %v3119, %v3485
        %3487 = vmatmul.bf16.gmra.mxu0 %v3343
        %v3488 = vpop.f32.mrf.mxu0
        %v3489 = vadd.f32 %v3119, %v3488
        %v3490 = vpop.f32.mrf.mxu0
        %v3491 = vadd.f32 %v3119, %v3490
        %3492 = vmatmul.bf16.gmra.mxu0 %v3346
        %v3493 = vpop.f32.mrf.mxu0
        %v3494 = vadd.f32 %v3119, %v3493
        %v3495 = vpop.f32.mrf.mxu0
        %v3496 = vadd.f32 %v3119, %v3495
        %3497 = vmatmul.bf16.gmra.mxu0 %v3349
        %v3498 = vpop.f32.mrf.mxu0
        %v3499 = vadd.f32 %v3119, %v3498
        %v3500 = vpop.f32.mrf.mxu0
        %v3501 = vadd.f32 %v3119, %v3500
        %3502 = vmatmul.bf16.gmra.mxu0 %v3352
        %v3503 = vpop.f32.mrf.mxu0
        %v3504 = vadd.f32 %v3119, %v3503
        %v3505 = vpop.f32.mrf.mxu0
        %v3506 = vadd.f32 %v3119, %v3505
        %3507 = vmatmul.bf16.gmra.mxu0 %v3355
        %v3508 = vpop.f32.mrf.mxu0
        %v3509 = vadd.f32 %v3119, %v3508
        %v3510 = vpop.f32.mrf.mxu0
        %v3511 = vadd.f32 %v3119, %v3510
        %3512 = vmatmul.bf16.gmra.mxu0 %v3358
        %v3513 = vpop.f32.mrf.mxu0
        %v3514 = vadd.f32 %v3119, %v3513
        %v3515 = vpop.f32.mrf.mxu0
        %v3516 = vadd.f32 %v3119, %v3515
        %3517 = vmatmul.bf16.gmra.mxu0 %v3361
        %v3518 = vpop.f32.mrf.mxu0
        %v3519 = vadd.f32 %v3119, %v3518
        %v3520 = vpop.f32.mrf.mxu0
        %v3521 = vadd.f32 %v3119, %v3520
        %3522 = vmatmul.bf16.gmra.mxu0 %v3364
        %v3523 = vpop.f32.mrf.mxu0
        %v3524 = vadd.f32 %v3119, %v3523
        %v3525 = vpop.f32.mrf.mxu0
        %v3526 = vadd.f32 %v3119, %v3525
        %3527 = vmatmul.bf16.gmra.mxu0 %v3367
        %v3528 = vpop.f32.mrf.mxu0
        %v3529 = vadd.f32 %v3119, %v3528
        %v3530 = vpop.f32.mrf.mxu0
        %v3531 = vadd.f32 %v3119, %v3530
        %3532 = vmatmul.bf16.gmra.mxu0 %v3370
        %v3533 = vpop.f32.mrf.mxu0
        %v3534 = vadd.f32 %v3119, %v3533
        %v3535 = vpop.f32.mrf.mxu0
        %v3536 = vadd.f32 %v3119, %v3535
        %3537 = vmatmul.bf16.gmra.mxu0 %v3373
        %v3538 = vpop.f32.mrf.mxu0
        %v3539 = vadd.f32 %v3119, %v3538
        %v3540 = vpop.f32.mrf.mxu0
        %v3541 = vadd.f32 %v3119, %v3540
        %3542 = vmatmul.bf16.gmra.mxu0 %v3376
        %v3543 = vpop.f32.mrf.mxu0
        %v3544 = vadd.f32 %v3119, %v3543
        %v3545 = vpop.f32.mrf.mxu0
        %v3546 = vadd.f32 %v3119, %v3545
        %3547 = vmatmul.bf16.gmra.mxu0 %v3379
        %v3548 = vpop.f32.mrf.mxu0
        %v3549 = vadd.f32 %v3119, %v3548
        %v3550 = vpop.f32.mrf.mxu0
        %v3551 = vadd.f32 %v3119, %v3550
        %3552 = vdwg.mxu0
        %v3553 = vmax.f32 %v3394, 0.0
        %v3554 = vmax.f32 %v3396, 0.0
        %v3555 = vmax.f32 %v3399, 0.0
        %v3556 = vmax.f32 %v3401, 0.0
        %v3557 = vmax.f32 %v3404, 0.0
        %v3558 = vmax.f32 %v3406, 0.0
        %v3559 = vmax.f32 %v3409, 0.0
        %v3560 = vmax.f32 %v3411, 0.0
        %v3561 = vmax.f32 %v3414, 0.0
        %v3562 = vmax.f32 %v3416, 0.0
        %v3563 = vmax.f32 %v3419, 0.0
        %v3564 = vmax.f32 %v3421, 0.0
        %v3565 = vmax.f32 %v3424, 0.0
        %v3566 = vmax.f32 %v3426, 0.0
        %v3567 = vmax.f32 %v3429, 0.0
        %v3568 = vmax.f32 %v3431, 0.0
        %v3569 = vmax.f32 %v3434, 0.0
        %v3570 = vmax.f32 %v3436, 0.0
        %v3571 = vmax.f32 %v3439, 0.0
        %v3572 = vmax.f32 %v3441, 0.0
        %v3573 = vmax.f32 %v3444, 0.0
        %v3574 = vmax.f32 %v3446, 0.0
        %v3575 = vmax.f32 %v3449, 0.0
        %v3576 = vmax.f32 %v3451, 0.0
        %v3577 = vmax.f32 %v3454, 0.0
        %v3578 = vmax.f32 %v3456, 0.0
        %v3579 = vmax.f32 %v3459, 0.0
        %v3580 = vmax.f32 %v3461, 0.0
        %v3581 = vmax.f32 %v3464, 0.0
        %v3582 = vmax.f32 %v3466, 0.0
        %v3583 = vmax.f32 %v3469, 0.0
        %v3584 = vmax.f32 %v3471, 0.0
        %v3585 = vmax.f32 %v3474, 0.0
        %v3586 = vmax.f32 %v3476, 0.0
        %v3587 = vmax.f32 %v3479, 0.0
        %v3588 = vmax.f32 %v3481, 0.0
        %v3589 = vmax.f32 %v3484, 0.0
        %v3590 = vmax.f32 %v3486, 0.0
        %v3591 = vmax.f32 %v3489, 0.0
        %v3592 = vmax.f32 %v3491, 0.0
        %v3593 = vmax.f32 %v3494, 0.0
        %v3594 = vmax.f32 %v3496, 0.0
        %v3595 = vmax.f32 %v3499, 0.0
        %v3596 = vmax.f32 %v3501, 0.0
        %v3597 = vmax.f32 %v3504, 0.0
        %v3598 = vmax.f32 %v3506, 0.0
        %v3599 = vmax.f32 %v3509, 0.0
        %v3600 = vmax.f32 %v3511, 0.0
        %v3601 = vmax.f32 %v3514, 0.0
        %v3602 = vmax.f32 %v3516, 0.0
        %v3603 = vmax.f32 %v3519, 0.0
        %v3604 = vmax.f32 %v3521, 0.0
        %v3605 = vmax.f32 %v3524, 0.0
        %v3606 = vmax.f32 %v3526, 0.0
        %v3607 = vmax.f32 %v3529, 0.0
        %v3608 = vmax.f32 %v3531, 0.0
        %v3609 = vmax.f32 %v3534, 0.0
        %v3610 = vmax.f32 %v3536, 0.0
        %v3611 = vmax.f32 %v3539, 0.0
        %v3612 = vmax.f32 %v3541, 0.0
        %v3613 = vmax.f32 %v3544, 0.0
        %v3614 = vmax.f32 %v3546, 0.0
        %v3615 = vmax.f32 %v3549, 0.0
        %v3616 = vmax.f32 %v3551, 0.0
        %v3617 = vpack.c.bf16 %v3554, %v3553
        %v3618 = vpack.c.bf16 %v3556, %v3555
        %v3619 = vpack.c.bf16 %v3558, %v3557
        %v3620 = vpack.c.bf16 %v3560, %v3559
        %v3621 = vpack.c.bf16 %v3562, %v3561
        %v3622 = vpack.c.bf16 %v3564, %v3563
        %v3623 = vpack.c.bf16 %v3566, %v3565
        %v3624 = vpack.c.bf16 %v3568, %v3567
        %v3625 = vpack.c.bf16 %v3570, %v3569
        %v3626 = vpack.c.bf16 %v3572, %v3571
        %v3627 = vpack.c.bf16 %v3574, %v3573
        %v3628 = vpack.c.bf16 %v3576, %v3575
        %v3629 = vpack.c.bf16 %v3578, %v3577
        %v3630 = vpack.c.bf16 %v3580, %v3579
        %v3631 = vpack.c.bf16 %v3582, %v3581
        %v3632 = vpack.c.bf16 %v3584, %v3583
        %v3633 = vpack.c.bf16 %v3586, %v3585
        %v3634 = vpack.c.bf16 %v3588, %v3587
        %v3635 = vpack.c.bf16 %v3590, %v3589
        %v3636 = vpack.c.bf16 %v3592, %v3591
        %v3637 = vpack.c.bf16 %v3594, %v3593
        %v3638 = vpack.c.bf16 %v3596, %v3595
        %v3639 = vpack.c.bf16 %v3598, %v3597
        %v3640 = vpack.c.bf16 %v3600, %v3599
        %v3641 = vpack.c.bf16 %v3602, %v3601
        %v3642 = vpack.c.bf16 %v3604, %v3603
        %v3643 = vpack.c.bf16 %v3606, %v3605
        %v3644 = vpack.c.bf16 %v3608, %v3607
        %v3645 = vpack.c.bf16 %v3610, %v3609
        %v3646 = vpack.c.bf16 %v3612, %v3611
        %v3647 = vpack.c.bf16 %v3614, %v3613
        %v3648 = vpack.c.bf16 %v3616, %v3615
        %v3649 = vld [vmem:[%s20] sm:$0xf]
        %v3650 = vld [vmem:[%s26 + $0xc] sm:$0x1]
        %v3651 = vperm.slane %v3650, 0
        %v3653 = vsel %vm1000, %v3617, 0
        %v3656 = vsel %vm1000, %v3618, 0
        %v3659 = vsel %vm1000, %v3619, 0
        %v3662 = vsel %vm1000, %v3620, 0
        %v3665 = vsel %vm1000, %v3621, 0
        %v3668 = vsel %vm1000, %v3622, 0
        %v3671 = vsel %vm1000, %v3623, 0
        %v3674 = vsel %vm1000, %v3624, 0
        %v3677 = vsel %vm1000, %v3625, 0
        %v3680 = vsel %vm1000, %v3626, 0
        %v3683 = vsel %vm1000, %v3627, 0
        %v3686 = vsel %vm1000, %v3628, 0
        %v3689 = vsel %vm1000, %v3629, 0
        %v3692 = vsel %vm1000, %v3630, 0
        %v3695 = vsel %vm1000, %v3631, 0
        %v3698 = vsel %vm1000, %v3632, 0
        %v3701 = vsel %vm1000, %v3633, 0
        %v3704 = vsel %vm1000, %v3634, 0
        %v3707 = vsel %vm1000, %v3635, 0
        %v3710 = vsel %vm1000, %v3636, 0
        %v3713 = vsel %vm1000, %v3637, 0
        %v3716 = vsel %vm1000, %v3638, 0
        %v3719 = vsel %vm1000, %v3639, 0
        %v3722 = vsel %vm1000, %v3640, 0
        %v3725 = vsel %vm1000, %v3641, 0
        %v3728 = vsel %vm1000, %v3642, 0
        %v3731 = vsel %vm1000, %v3643, 0
        %v3734 = vsel %vm1000, %v3644, 0
        %v3737 = vsel %vm1000, %v3645, 0
        %v3740 = vsel %vm1000, %v3646, 0
        %v3743 = vsel %vm1000, %v3647, 0
        %v3746 = vsel %vm1000, %v3648, 0
        %v3749 = vsel %vm1004, %v3649, 0
        %3751 = vmatpush.bf16.msra.mxu0 0
        %3752 = vmatpush.bf16.msra.mxu0 0
        %3753 = vmatpush.bf16.msra.mxu0 0
        %3754 = vmatpush.bf16.msra.mxu0 0
        %3755 = vmatpush.bf16.msra.mxu0 0
        %3756 = vmatpush.bf16.msra.mxu0 0
        %3757 = vmatpush.bf16.msra.mxu0 0
        %3758 = vmatpush.bf16.msra.mxu0 %v3749
        %3759 = vmatmul.bf16.gmra.mxu0 %v3653
        %v3760 = vpop.f32.mrf.mxu0
        %v3761 = vadd.f32 %v3651, %v3760
        %v3762 = vpop.f32.mrf.mxu0
        %v3763 = vadd.f32 %v3651, %v3762
        %3764 = vmatmul.bf16.gmra.mxu0 %v3656
        %v3765 = vpop.f32.mrf.mxu0
        %v3766 = vadd.f32 %v3651, %v3765
        %v3767 = vpop.f32.mrf.mxu0
        %v3768 = vadd.f32 %v3651, %v3767
        %3769 = vmatmul.bf16.gmra.mxu0 %v3659
        %v3770 = vpop.f32.mrf.mxu0
        %v3771 = vadd.f32 %v3651, %v3770
        %v3772 = vpop.f32.mrf.mxu0
        %v3773 = vadd.f32 %v3651, %v3772
        %3774 = vmatmul.bf16.gmra.mxu0 %v3662
        %v3775 = vpop.f32.mrf.mxu0
        %v3776 = vadd.f32 %v3651, %v3775
        %v3777 = vpop.f32.mrf.mxu0
        %v3778 = vadd.f32 %v3651, %v3777
        %3779 = vmatmul.bf16.gmra.mxu0 %v3665
        %v3780 = vpop.f32.mrf.mxu0
        %v3781 = vadd.f32 %v3651, %v3780
        %v3782 = vpop.f32.mrf.mxu0
        %v3783 = vadd.f32 %v3651, %v3782
        %3784 = vmatmul.bf16.gmra.mxu0 %v3668
        %v3785 = vpop.f32.mrf.mxu0
        %v3786 = vadd.f32 %v3651, %v3785
        %v3787 = vpop.f32.mrf.mxu0
        %v3788 = vadd.f32 %v3651, %v3787
        %3789 = vmatmul.bf16.gmra.mxu0 %v3671
        %v3790 = vpop.f32.mrf.mxu0
        %v3791 = vadd.f32 %v3651, %v3790
        %v3792 = vpop.f32.mrf.mxu0
        %v3793 = vadd.f32 %v3651, %v3792
        %3794 = vmatmul.bf16.gmra.mxu0 %v3674
        %v3795 = vpop.f32.mrf.mxu0
        %v3796 = vadd.f32 %v3651, %v3795
        %v3797 = vpop.f32.mrf.mxu0
        %v3798 = vadd.f32 %v3651, %v3797
        %3799 = vmatmul.bf16.gmra.mxu0 %v3677
        %v3800 = vpop.f32.mrf.mxu0
        %v3801 = vadd.f32 %v3651, %v3800
        %v3802 = vpop.f32.mrf.mxu0
        %v3803 = vadd.f32 %v3651, %v3802
        %3804 = vmatmul.bf16.gmra.mxu0 %v3680
        %v3805 = vpop.f32.mrf.mxu0
        %v3806 = vadd.f32 %v3651, %v3805
        %v3807 = vpop.f32.mrf.mxu0
        %v3808 = vadd.f32 %v3651, %v3807
        %3809 = vmatmul.bf16.gmra.mxu0 %v3683
        %v3810 = vpop.f32.mrf.mxu0
        %v3811 = vadd.f32 %v3651, %v3810
        %v3812 = vpop.f32.mrf.mxu0
        %v3813 = vadd.f32 %v3651, %v3812
        %3814 = vmatmul.bf16.gmra.mxu0 %v3686
        %v3815 = vpop.f32.mrf.mxu0
        %v3816 = vadd.f32 %v3651, %v3815
        %v3817 = vpop.f32.mrf.mxu0
        %v3818 = vadd.f32 %v3651, %v3817
        %3819 = vmatmul.bf16.gmra.mxu0 %v3689
        %v3820 = vpop.f32.mrf.mxu0
        %v3821 = vadd.f32 %v3651, %v3820
        %v3822 = vpop.f32.mrf.mxu0
        %v3823 = vadd.f32 %v3651, %v3822
        %3824 = vmatmul.bf16.gmra.mxu0 %v3692
        %v3825 = vpop.f32.mrf.mxu0
        %v3826 = vadd.f32 %v3651, %v3825
        %v3827 = vpop.f32.mrf.mxu0
        %v3828 = vadd.f32 %v3651, %v3827
        %3829 = vmatmul.bf16.gmra.mxu0 %v3695
        %v3830 = vpop.f32.mrf.mxu0
        %v3831 = vadd.f32 %v3651, %v3830
        %v3832 = vpop.f32.mrf.mxu0
        %v3833 = vadd.f32 %v3651, %v3832
        %3834 = vmatmul.bf16.gmra.mxu0 %v3698
        %v3835 = vpop.f32.mrf.mxu0
        %v3836 = vadd.f32 %v3651, %v3835
        %v3837 = vpop.f32.mrf.mxu0
        %v3838 = vadd.f32 %v3651, %v3837
        %3839 = vmatmul.bf16.gmra.mxu0 %v3701
        %v3840 = vpop.f32.mrf.mxu0
        %v3841 = vadd.f32 %v3651, %v3840
        %v3842 = vpop.f32.mrf.mxu0
        %v3843 = vadd.f32 %v3651, %v3842
        %3844 = vmatmul.bf16.gmra.mxu0 %v3704
        %v3845 = vpop.f32.mrf.mxu0
        %v3846 = vadd.f32 %v3651, %v3845
        %v3847 = vpop.f32.mrf.mxu0
        %v3848 = vadd.f32 %v3651, %v3847
        %3849 = vmatmul.bf16.gmra.mxu0 %v3707
        %v3850 = vpop.f32.mrf.mxu0
        %v3851 = vadd.f32 %v3651, %v3850
        %v3852 = vpop.f32.mrf.mxu0
        %v3853 = vadd.f32 %v3651, %v3852
        %3854 = vmatmul.bf16.gmra.mxu0 %v3710
        %v3855 = vpop.f32.mrf.mxu0
        %v3856 = vadd.f32 %v3651, %v3855
        %v3857 = vpop.f32.mrf.mxu0
        %v3858 = vadd.f32 %v3651, %v3857
        %3859 = vmatmul.bf16.gmra.mxu0 %v3713
        %v3860 = vpop.f32.mrf.mxu0
        %v3861 = vadd.f32 %v3651, %v3860
        %v3862 = vpop.f32.mrf.mxu0
        %v3863 = vadd.f32 %v3651, %v3862
        %3864 = vmatmul.bf16.gmra.mxu0 %v3716
        %v3865 = vpop.f32.mrf.mxu0
        %v3866 = vadd.f32 %v3651, %v3865
        %v3867 = vpop.f32.mrf.mxu0
        %v3868 = vadd.f32 %v3651, %v3867
        %3869 = vmatmul.bf16.gmra.mxu0 %v3719
        %v3870 = vpop.f32.mrf.mxu0
        %v3871 = vadd.f32 %v3651, %v3870
        %v3872 = vpop.f32.mrf.mxu0
        %v3873 = vadd.f32 %v3651, %v3872
        %3874 = vmatmul.bf16.gmra.mxu0 %v3722
        %v3875 = vpop.f32.mrf.mxu0
        %v3876 = vadd.f32 %v3651, %v3875
        %v3877 = vpop.f32.mrf.mxu0
        %v3878 = vadd.f32 %v3651, %v3877
        %3879 = vmatmul.bf16.gmra.mxu0 %v3725
        %v3880 = vpop.f32.mrf.mxu0
        %v3881 = vadd.f32 %v3651, %v3880
        %v3882 = vpop.f32.mrf.mxu0
        %v3883 = vadd.f32 %v3651, %v3882
        %3884 = vmatmul.bf16.gmra.mxu0 %v3728
        %v3885 = vpop.f32.mrf.mxu0
        %v3886 = vadd.f32 %v3651, %v3885
        %v3887 = vpop.f32.mrf.mxu0
        %v3888 = vadd.f32 %v3651, %v3887
        %3889 = vmatmul.bf16.gmra.mxu0 %v3731
        %v3890 = vpop.f32.mrf.mxu0
        %v3891 = vadd.f32 %v3651, %v3890
        %v3892 = vpop.f32.mrf.mxu0
        %v3893 = vadd.f32 %v3651, %v3892
        %3894 = vmatmul.bf16.gmra.mxu0 %v3734
        %v3895 = vpop.f32.mrf.mxu0
        %v3896 = vadd.f32 %v3651, %v3895
        %v3897 = vpop.f32.mrf.mxu0
        %v3898 = vadd.f32 %v3651, %v3897
        %3899 = vmatmul.bf16.gmra.mxu0 %v3737
        %v3900 = vpop.f32.mrf.mxu0
        %v3901 = vadd.f32 %v3651, %v3900
        %v3902 = vpop.f32.mrf.mxu0
        %v3903 = vadd.f32 %v3651, %v3902
        %3904 = vmatmul.bf16.gmra.mxu0 %v3740
        %v3905 = vpop.f32.mrf.mxu0
        %v3906 = vadd.f32 %v3651, %v3905
        %v3907 = vpop.f32.mrf.mxu0
        %v3908 = vadd.f32 %v3651, %v3907
        %3909 = vmatmul.bf16.gmra.mxu0 %v3743
        %v3910 = vpop.f32.mrf.mxu0
        %v3911 = vadd.f32 %v3651, %v3910
        %v3912 = vpop.f32.mrf.mxu0
        %v3913 = vadd.f32 %v3651, %v3912
        %3914 = vmatmul.bf16.gmra.mxu0 %v3746
        %v3915 = vpop.f32.mrf.mxu0
        %v3916 = vadd.f32 %v3651, %v3915
        %v3917 = vpop.f32.mrf.mxu0
        %v3918 = vadd.f32 %v3651, %v3917
        %3919 = vdwg.mxu0
        %v3920 = vmax.f32 %v3761, 0.0
        %v3921 = vmax.f32 %v3763, 0.0
        %v3922 = vmax.f32 %v3766, 0.0
        %v3923 = vmax.f32 %v3768, 0.0
        %v3924 = vmax.f32 %v3771, 0.0
        %v3925 = vmax.f32 %v3773, 0.0
        %v3926 = vmax.f32 %v3776, 0.0
        %v3927 = vmax.f32 %v3778, 0.0
        %v3928 = vmax.f32 %v3781, 0.0
        %v3929 = vmax.f32 %v3783, 0.0
        %v3930 = vmax.f32 %v3786, 0.0
        %v3931 = vmax.f32 %v3788, 0.0
        %v3932 = vmax.f32 %v3791, 0.0
        %v3933 = vmax.f32 %v3793, 0.0
        %v3934 = vmax.f32 %v3796, 0.0
        %v3935 = vmax.f32 %v3798, 0.0
        %v3936 = vmax.f32 %v3801, 0.0
        %v3937 = vmax.f32 %v3803, 0.0
        %v3938 = vmax.f32 %v3806, 0.0
        %v3939 = vmax.f32 %v3808, 0.0
        %v3940 = vmax.f32 %v3811, 0.0
        %v3941 = vmax.f32 %v3813, 0.0
        %v3942 = vmax.f32 %v3816, 0.0
        %v3943 = vmax.f32 %v3818, 0.0
        %v3944 = vmax.f32 %v3821, 0.0
        %v3945 = vmax.f32 %v3823, 0.0
        %v3946 = vmax.f32 %v3826, 0.0
        %v3947 = vmax.f32 %v3828, 0.0
        %v3948 = vmax.f32 %v3831, 0.0
        %v3949 = vmax.f32 %v3833, 0.0
        %v3950 = vmax.f32 %v3836, 0.0
        %v3951 = vmax.f32 %v3838, 0.0
        %v3952 = vmax.f32 %v3841, 0.0
        %v3953 = vmax.f32 %v3843, 0.0
        %v3954 = vmax.f32 %v3846, 0.0
        %v3955 = vmax.f32 %v3848, 0.0
        %v3956 = vmax.f32 %v3851, 0.0
        %v3957 = vmax.f32 %v3853, 0.0
        %v3958 = vmax.f32 %v3856, 0.0
        %v3959 = vmax.f32 %v3858, 0.0
        %v3960 = vmax.f32 %v3861, 0.0
        %v3961 = vmax.f32 %v3863, 0.0
        %v3962 = vmax.f32 %v3866, 0.0
        %v3963 = vmax.f32 %v3868, 0.0
        %v3964 = vmax.f32 %v3871, 0.0
        %v3965 = vmax.f32 %v3873, 0.0
        %v3966 = vmax.f32 %v3876, 0.0
        %v3967 = vmax.f32 %v3878, 0.0
        %v3968 = vmax.f32 %v3881, 0.0
        %v3969 = vmax.f32 %v3883, 0.0
        %v3970 = vmax.f32 %v3886, 0.0
        %v3971 = vmax.f32 %v3888, 0.0
        %v3972 = vmax.f32 %v3891, 0.0
        %v3973 = vmax.f32 %v3893, 0.0
        %v3974 = vmax.f32 %v3896, 0.0
        %v3975 = vmax.f32 %v3898, 0.0
        %v3976 = vmax.f32 %v3901, 0.0
        %v3977 = vmax.f32 %v3903, 0.0
        %v3978 = vmax.f32 %v3906, 0.0
        %v3979 = vmax.f32 %v3908, 0.0
        %v3980 = vmax.f32 %v3911, 0.0
        %v3981 = vmax.f32 %v3913, 0.0
        %v3982 = vmax.f32 %v3916, 0.0
        %v3983 = vmax.f32 %v3918, 0.0
        %v3984 = vpack.c.bf16 %v2843, %v2842
        %v3985 = vpack.c.bf16 %v2845, %v2844
        %v3986 = vpack.c.bf16 %v2847, %v2846
        %v3987 = vpack.c.bf16 %v2849, %v2848
        %v3988 = vpack.c.bf16 %v2851, %v2850
        %v3989 = vpack.c.bf16 %v2853, %v2852
        %v3990 = vpack.c.bf16 %v2855, %v2854
        %v3991 = vpack.c.bf16 %v2857, %v2856
        %v3992 = vpack.c.bf16 %v2859, %v2858
        %v3993 = vpack.c.bf16 %v2861, %v2860
        %v3994 = vpack.c.bf16 %v2863, %v2862
        %v3995 = vpack.c.bf16 %v2865, %v2864
        %v3996 = vpack.c.bf16 %v2867, %v2866
        %v3997 = vpack.c.bf16 %v2869, %v2868
        %v3998 = vpack.c.bf16 %v2871, %v2870
        %v3999 = vpack.c.bf16 %v2873, %v2872
        %v4000 = vpack.c.bf16 %v2875, %v2874
        %v4001 = vpack.c.bf16 %v2877, %v2876
        %v4002 = vpack.c.bf16 %v2879, %v2878
        %v4003 = vpack.c.bf16 %v2881, %v2880
        %v4004 = vpack.c.bf16 %v2883, %v2882
        %v4005 = vpack.c.bf16 %v2885, %v2884
        %v4006 = vpack.c.bf16 %v2887, %v2886
        %v4007 = vpack.c.bf16 %v2889, %v2888
        %v4008 = vpack.c.bf16 %v2891, %v2890
        %v4009 = vpack.c.bf16 %v2893, %v2892
        %v4010 = vpack.c.bf16 %v2895, %v2894
        %v4011 = vpack.c.bf16 %v2897, %v2896
        %v4012 = vpack.c.bf16 %v2899, %v2898
        %v4013 = vpack.c.bf16 %v2901, %v2900
        %v4014 = vpack.c.bf16 %v2903, %v2902
        %v4015 = vpack.c.bf16 %v2905, %v2904
        %v4016 = vld [vmem:[%s21] sm:$0xf]
        %v4017 = vld [vmem:[%s21 + $0x4] sm:$0xf]
        %v4018 = vld [vmem:[%s21 + $0x8] sm:$0xf]
        %v4019 = vld [vmem:[%s21 + $0xc] sm:$0xf]
        %v4020 = vld [vmem:[%s26 + $0xd] sm:$0x1]
        %v4021 = vperm.slane %v4020, 0
        %v4026 = vunpack.c.l.b16 %v4016
        %v4027 = vunpack.c.l.b16 %v4017
        %v4028 = vunpack.c.l.b16 %v4018
        %v4029 = vunpack.c.l.b16 %v4019
        %v4030 = vpack.c.b16 %v4027, %v4026
        %v4031 = vpack.c.b16 %v4029, %v4028
        %vm4034 = vcmask 261120
        %v4036 = vsel %vm4034, %v3984, 0
        %v4039 = vsel %vm4034, %v3985, 0
        %v4042 = vsel %vm4034, %v3986, 0
        %v4045 = vsel %vm4034, %v3987, 0
        %v4048 = vsel %vm4034, %v3988, 0
        %v4051 = vsel %vm4034, %v3989, 0
        %v4054 = vsel %vm4034, %v3990, 0
        %v4057 = vsel %vm4034, %v3991, 0
        %v4060 = vsel %vm4034, %v3992, 0
        %v4063 = vsel %vm4034, %v3993, 0
        %v4066 = vsel %vm4034, %v3994, 0
        %v4069 = vsel %vm4034, %v3995, 0
        %v4072 = vsel %vm4034, %v3996, 0
        %v4075 = vsel %vm4034, %v3997, 0
        %v4078 = vsel %vm4034, %v3998, 0
        %v4081 = vsel %vm4034, %v3999, 0
        %v4084 = vsel %vm4034, %v4000, 0
        %v4087 = vsel %vm4034, %v4001, 0
        %v4090 = vsel %vm4034, %v4002, 0
        %v4093 = vsel %vm4034, %v4003, 0
        %v4096 = vsel %vm4034, %v4004, 0
        %v4099 = vsel %vm4034, %v4005, 0
        %v4102 = vsel %vm4034, %v4006, 0
        %v4105 = vsel %vm4034, %v4007, 0
        %v4108 = vsel %vm4034, %v4008, 0
        %v4111 = vsel %vm4034, %v4009, 0
        %v4114 = vsel %vm4034, %v4010, 0
        %v4117 = vsel %vm4034, %v4011, 0
        %v4120 = vsel %vm4034, %v4012, 0
        %v4123 = vsel %vm4034, %v4013, 0
        %v4126 = vsel %vm4034, %v4014, 0
        %v4129 = vsel %vm4034, %v4015, 0
        %4131 = vmatpush.bf16.msra.mxu0 0
        %4132 = vmatpush.bf16.msra.mxu0 0
        %4133 = vmatpush.bf16.msra.mxu0 0
        %4134 = vmatpush.bf16.msra.mxu0 0
        %4135 = vmatpush.bf16.msra.mxu0 0
        %4136 = vmatpush.bf16.msra.mxu0 0
        %4137 = vmatpush.bf16.msra.mxu0 %v4031
        %4138 = vmatpush.bf16.msra.mxu0 %v4030
        %4139 = vmatmul.bf16.gmra.mxu0 %v4036
        %v4140 = vpop.f32.mrf.mxu0
        %v4141 = vadd.f32 %v4021, %v4140
        %v4142 = vpop.f32.mrf.mxu0
        %v4143 = vadd.f32 %v4021, %v4142
        %4144 = vmatmul.bf16.gmra.mxu0 %v4039
        %v4145 = vpop.f32.mrf.mxu0
        %v4146 = vadd.f32 %v4021, %v4145
        %v4147 = vpop.f32.mrf.mxu0
        %v4148 = vadd.f32 %v4021, %v4147
        %4149 = vmatmul.bf16.gmra.mxu0 %v4042
        %v4150 = vpop.f32.mrf.mxu0
        %v4151 = vadd.f32 %v4021, %v4150
        %v4152 = vpop.f32.mrf.mxu0
        %v4153 = vadd.f32 %v4021, %v4152
        %4154 = vmatmul.bf16.gmra.mxu0 %v4045
        %v4155 = vpop.f32.mrf.mxu0
        %v4156 = vadd.f32 %v4021, %v4155
        %v4157 = vpop.f32.mrf.mxu0
        %v4158 = vadd.f32 %v4021, %v4157
        %4159 = vmatmul.bf16.gmra.mxu0 %v4048
        %v4160 = vpop.f32.mrf.mxu0
        %v4161 = vadd.f32 %v4021, %v4160
        %v4162 = vpop.f32.mrf.mxu0
        %v4163 = vadd.f32 %v4021, %v4162
        %4164 = vmatmul.bf16.gmra.mxu0 %v4051
        %v4165 = vpop.f32.mrf.mxu0
        %v4166 = vadd.f32 %v4021, %v4165
        %v4167 = vpop.f32.mrf.mxu0
        %v4168 = vadd.f32 %v4021, %v4167
        %4169 = vmatmul.bf16.gmra.mxu0 %v4054
        %v4170 = vpop.f32.mrf.mxu0
        %v4171 = vadd.f32 %v4021, %v4170
        %v4172 = vpop.f32.mrf.mxu0
        %v4173 = vadd.f32 %v4021, %v4172
        %4174 = vmatmul.bf16.gmra.mxu0 %v4057
        %v4175 = vpop.f32.mrf.mxu0
        %v4176 = vadd.f32 %v4021, %v4175
        %v4177 = vpop.f32.mrf.mxu0
        %v4178 = vadd.f32 %v4021, %v4177
        %4179 = vmatmul.bf16.gmra.mxu0 %v4060
        %v4180 = vpop.f32.mrf.mxu0
        %v4181 = vadd.f32 %v4021, %v4180
        %v4182 = vpop.f32.mrf.mxu0
        %v4183 = vadd.f32 %v4021, %v4182
        %4184 = vmatmul.bf16.gmra.mxu0 %v4063
        %v4185 = vpop.f32.mrf.mxu0
        %v4186 = vadd.f32 %v4021, %v4185
        %v4187 = vpop.f32.mrf.mxu0
        %v4188 = vadd.f32 %v4021, %v4187
        %4189 = vmatmul.bf16.gmra.mxu0 %v4066
        %v4190 = vpop.f32.mrf.mxu0
        %v4191 = vadd.f32 %v4021, %v4190
        %v4192 = vpop.f32.mrf.mxu0
        %v4193 = vadd.f32 %v4021, %v4192
        %4194 = vmatmul.bf16.gmra.mxu0 %v4069
        %v4195 = vpop.f32.mrf.mxu0
        %v4196 = vadd.f32 %v4021, %v4195
        %v4197 = vpop.f32.mrf.mxu0
        %v4198 = vadd.f32 %v4021, %v4197
        %4199 = vmatmul.bf16.gmra.mxu0 %v4072
        %v4200 = vpop.f32.mrf.mxu0
        %v4201 = vadd.f32 %v4021, %v4200
        %v4202 = vpop.f32.mrf.mxu0
        %v4203 = vadd.f32 %v4021, %v4202
        %4204 = vmatmul.bf16.gmra.mxu0 %v4075
        %v4205 = vpop.f32.mrf.mxu0
        %v4206 = vadd.f32 %v4021, %v4205
        %v4207 = vpop.f32.mrf.mxu0
        %v4208 = vadd.f32 %v4021, %v4207
        %4209 = vmatmul.bf16.gmra.mxu0 %v4078
        %v4210 = vpop.f32.mrf.mxu0
        %v4211 = vadd.f32 %v4021, %v4210
        %v4212 = vpop.f32.mrf.mxu0
        %v4213 = vadd.f32 %v4021, %v4212
        %4214 = vmatmul.bf16.gmra.mxu0 %v4081
        %v4215 = vpop.f32.mrf.mxu0
        %v4216 = vadd.f32 %v4021, %v4215
        %v4217 = vpop.f32.mrf.mxu0
        %v4218 = vadd.f32 %v4021, %v4217
        %4219 = vmatmul.bf16.gmra.mxu0 %v4084
        %v4220 = vpop.f32.mrf.mxu0
        %v4221 = vadd.f32 %v4021, %v4220
        %v4222 = vpop.f32.mrf.mxu0
        %v4223 = vadd.f32 %v4021, %v4222
        %4224 = vmatmul.bf16.gmra.mxu0 %v4087
        %v4225 = vpop.f32.mrf.mxu0
        %v4226 = vadd.f32 %v4021, %v4225
        %v4227 = vpop.f32.mrf.mxu0
        %v4228 = vadd.f32 %v4021, %v4227
        %4229 = vmatmul.bf16.gmra.mxu0 %v4090
        %v4230 = vpop.f32.mrf.mxu0
        %v4231 = vadd.f32 %v4021, %v4230
        %v4232 = vpop.f32.mrf.mxu0
        %v4233 = vadd.f32 %v4021, %v4232
        %4234 = vmatmul.bf16.gmra.mxu0 %v4093
        %v4235 = vpop.f32.mrf.mxu0
        %v4236 = vadd.f32 %v4021, %v4235
        %v4237 = vpop.f32.mrf.mxu0
        %v4238 = vadd.f32 %v4021, %v4237
        %4239 = vmatmul.bf16.gmra.mxu0 %v4096
        %v4240 = vpop.f32.mrf.mxu0
        %v4241 = vadd.f32 %v4021, %v4240
        %v4242 = vpop.f32.mrf.mxu0
        %v4243 = vadd.f32 %v4021, %v4242
        %4244 = vmatmul.bf16.gmra.mxu0 %v4099
        %v4245 = vpop.f32.mrf.mxu0
        %v4246 = vadd.f32 %v4021, %v4245
        %v4247 = vpop.f32.mrf.mxu0
        %v4248 = vadd.f32 %v4021, %v4247
        %4249 = vmatmul.bf16.gmra.mxu0 %v4102
        %v4250 = vpop.f32.mrf.mxu0
        %v4251 = vadd.f32 %v4021, %v4250
        %v4252 = vpop.f32.mrf.mxu0
        %v4253 = vadd.f32 %v4021, %v4252
        %4254 = vmatmul.bf16.gmra.mxu0 %v4105
        %v4255 = vpop.f32.mrf.mxu0
        %v4256 = vadd.f32 %v4021, %v4255
        %v4257 = vpop.f32.mrf.mxu0
        %v4258 = vadd.f32 %v4021, %v4257
        %4259 = vmatmul.bf16.gmra.mxu0 %v4108
        %v4260 = vpop.f32.mrf.mxu0
        %v4261 = vadd.f32 %v4021, %v4260
        %v4262 = vpop.f32.mrf.mxu0
        %v4263 = vadd.f32 %v4021, %v4262
        %4264 = vmatmul.bf16.gmra.mxu0 %v4111
        %v4265 = vpop.f32.mrf.mxu0
        %v4266 = vadd.f32 %v4021, %v4265
        %v4267 = vpop.f32.mrf.mxu0
        %v4268 = vadd.f32 %v4021, %v4267
        %4269 = vmatmul.bf16.gmra.mxu0 %v4114
        %v4270 = vpop.f32.mrf.mxu0
        %v4271 = vadd.f32 %v4021, %v4270
        %v4272 = vpop.f32.mrf.mxu0
        %v4273 = vadd.f32 %v4021, %v4272
        %4274 = vmatmul.bf16.gmra.mxu0 %v4117
        %v4275 = vpop.f32.mrf.mxu0
        %v4276 = vadd.f32 %v4021, %v4275
        %v4277 = vpop.f32.mrf.mxu0
        %v4278 = vadd.f32 %v4021, %v4277
        %4279 = vmatmul.bf16.gmra.mxu0 %v4120
        %v4280 = vpop.f32.mrf.mxu0
        %v4281 = vadd.f32 %v4021, %v4280
        %v4282 = vpop.f32.mrf.mxu0
        %v4283 = vadd.f32 %v4021, %v4282
        %4284 = vmatmul.bf16.gmra.mxu0 %v4123
        %v4285 = vpop.f32.mrf.mxu0
        %v4286 = vadd.f32 %v4021, %v4285
        %v4287 = vpop.f32.mrf.mxu0
        %v4288 = vadd.f32 %v4021, %v4287
        %4289 = vmatmul.bf16.gmra.mxu0 %v4126
        %v4290 = vpop.f32.mrf.mxu0
        %v4291 = vadd.f32 %v4021, %v4290
        %v4292 = vpop.f32.mrf.mxu0
        %v4293 = vadd.f32 %v4021, %v4292
        %4294 = vmatmul.bf16.gmra.mxu0 %v4129
        %v4295 = vpop.f32.mrf.mxu0
        %v4296 = vadd.f32 %v4021, %v4295
        %v4297 = vpop.f32.mrf.mxu0
        %v4298 = vadd.f32 %v4021, %v4297
        %4299 = vdwg.mxu0
        %v4300 = vmax.f32 %v4141, 0.0
        %v4301 = vmax.f32 %v4143, 0.0
        %v4302 = vmax.f32 %v4146, 0.0
        %v4303 = vmax.f32 %v4148, 0.0
        %v4304 = vmax.f32 %v4151, 0.0
        %v4305 = vmax.f32 %v4153, 0.0
        %v4306 = vmax.f32 %v4156, 0.0
        %v4307 = vmax.f32 %v4158, 0.0
        %v4308 = vmax.f32 %v4161, 0.0
        %v4309 = vmax.f32 %v4163, 0.0
        %v4310 = vmax.f32 %v4166, 0.0
        %v4311 = vmax.f32 %v4168, 0.0
        %v4312 = vmax.f32 %v4171, 0.0
        %v4313 = vmax.f32 %v4173, 0.0
        %v4314 = vmax.f32 %v4176, 0.0
        %v4315 = vmax.f32 %v4178, 0.0
        %v4316 = vmax.f32 %v4181, 0.0
        %v4317 = vmax.f32 %v4183, 0.0
        %v4318 = vmax.f32 %v4186, 0.0
        %v4319 = vmax.f32 %v4188, 0.0
        %v4320 = vmax.f32 %v4191, 0.0
        %v4321 = vmax.f32 %v4193, 0.0
        %v4322 = vmax.f32 %v4196, 0.0
        %v4323 = vmax.f32 %v4198, 0.0
        %v4324 = vmax.f32 %v4201, 0.0
        %v4325 = vmax.f32 %v4203, 0.0
        %v4326 = vmax.f32 %v4206, 0.0
        %v4327 = vmax.f32 %v4208, 0.0
        %v4328 = vmax.f32 %v4211, 0.0
        %v4329 = vmax.f32 %v4213, 0.0
        %v4330 = vmax.f32 %v4216, 0.0
        %v4331 = vmax.f32 %v4218, 0.0
        %v4332 = vmax.f32 %v4221, 0.0
        %v4333 = vmax.f32 %v4223, 0.0
        %v4334 = vmax.f32 %v4226, 0.0
        %v4335 = vmax.f32 %v4228, 0.0
        %v4336 = vmax.f32 %v4231, 0.0
        %v4337 = vmax.f32 %v4233, 0.0
        %v4338 = vmax.f32 %v4236, 0.0
        %v4339 = vmax.f32 %v4238, 0.0
        %v4340 = vmax.f32 %v4241, 0.0
        %v4341 = vmax.f32 %v4243, 0.0
        %v4342 = vmax.f32 %v4246, 0.0
        %v4343 = vmax.f32 %v4248, 0.0
        %v4344 = vmax.f32 %v4251, 0.0
        %v4345 = vmax.f32 %v4253, 0.0
        %v4346 = vmax.f32 %v4256, 0.0
        %v4347 = vmax.f32 %v4258, 0.0
        %v4348 = vmax.f32 %v4261, 0.0
        %v4349 = vmax.f32 %v4263, 0.0
        %v4350 = vmax.f32 %v4266, 0.0
        %v4351 = vmax.f32 %v4268, 0.0
        %v4352 = vmax.f32 %v4271, 0.0
        %v4353 = vmax.f32 %v4273, 0.0
        %v4354 = vmax.f32 %v4276, 0.0
        %v4355 = vmax.f32 %v4278, 0.0
        %v4356 = vmax.f32 %v4281, 0.0
        %v4357 = vmax.f32 %v4283, 0.0
        %v4358 = vmax.f32 %v4286, 0.0
        %v4359 = vmax.f32 %v4288, 0.0
        %v4360 = vmax.f32 %v4291, 0.0
        %v4361 = vmax.f32 %v4293, 0.0
        %v4362 = vmax.f32 %v4296, 0.0
        %v4363 = vmax.f32 %v4298, 0.0
        %v4364 = vld [vmem:[%s946] sm:$0xff]
        %v4365 = vld [vmem:[%s946 + $0x8] sm:$0xff]
        %v4366 = vld [vmem:[%s946 + $0x10] sm:$0xff]
        %v4367 = vld [vmem:[%s946 + $0x18] sm:$0xff]
        %v4368 = vld [vmem:[%s946 + $0x20] sm:$0xff]
        %v4369 = vld [vmem:[%s946 + $0x28] sm:$0xff]
        %v4370 = vld [vmem:[%s946 + $0x30] sm:$0xff]
        %v4371 = vld [vmem:[%s946 + $0x38] sm:$0xff]
        %v4372 = vld [vmem:[%s946 + $0x40] sm:$0xff]
        %v4373 = vld [vmem:[%s946 + $0x48] sm:$0xff]
        %v4374 = vld [vmem:[%s946 + $0x50] sm:$0xff]
        %v4375 = vld [vmem:[%s946 + $0x58] sm:$0xff]
        %v4376 = vld [vmem:[%s946 + $0x60] sm:$0xff]
        %v4377 = vld [vmem:[%s946 + $0x68] sm:$0xff]
        %v4378 = vld [vmem:[%s946 + $0x70] sm:$0xff]
        %v4379 = vld [vmem:[%s946 + $0x78] sm:$0xff]
        %v4380 = vld [vmem:[%s946 + $0x80] sm:$0xff]
        %v4381 = vld [vmem:[%s946 + $0x88] sm:$0xff]
        %v4382 = vld [vmem:[%s946 + $0x90] sm:$0xff]
        %v4383 = vld [vmem:[%s946 + $0x98] sm:$0xff]
        %v4384 = vld [vmem:[%s946 + $0xa0] sm:$0xff]
        %v4385 = vld [vmem:[%s946 + $0xa8] sm:$0xff]
        %v4386 = vld [vmem:[%s946 + $0xb0] sm:$0xff]
        %v4387 = vld [vmem:[%s946 + $0xb8] sm:$0xff]
        %v4388 = vld [vmem:[%s946 + $0xc0] sm:$0xff]
        %v4389 = vld [vmem:[%s946 + $0xc8] sm:$0xff]
        %v4390 = vld [vmem:[%s946 + $0xd0] sm:$0xff]
        %v4391 = vld [vmem:[%s946 + $0xd8] sm:$0xff]
        %v4392 = vld [vmem:[%s946 + $0xe0] sm:$0xff]
        %v4393 = vld [vmem:[%s946 + $0xe8] sm:$0xff]
        %v4394 = vld [vmem:[%s946 + $0xf0] sm:$0xff]
        %v4395 = vld [vmem:[%s946 + $0xf8] sm:$0xff]
        %v4396 = vld [vmem:[%s946 + $0x100] sm:$0xff]
        %v4397 = vld [vmem:[%s946 + $0x108] sm:$0xff]
        %v4398 = vld [vmem:[%s946 + $0x110] sm:$0xff]
        %v4399 = vld [vmem:[%s946 + $0x118] sm:$0xff]
        %v4400 = vld [vmem:[%s946 + $0x120] sm:$0xff]
        %v4401 = vld [vmem:[%s946 + $0x128] sm:$0xff]
        %v4402 = vld [vmem:[%s946 + $0x130] sm:$0xff]
        %v4403 = vld [vmem:[%s946 + $0x138] sm:$0xff]
        %v4404 = vld [vmem:[%s946 + $0x140] sm:$0xff]
        %v4405 = vld [vmem:[%s946 + $0x148] sm:$0xff]
        %v4406 = vld [vmem:[%s946 + $0x150] sm:$0xff]
        %v4407 = vld [vmem:[%s946 + $0x158] sm:$0xff]
        %v4408 = vld [vmem:[%s946 + $0x160] sm:$0xff]
        %v4409 = vld [vmem:[%s946 + $0x168] sm:$0xff]
        %v4410 = vld [vmem:[%s946 + $0x170] sm:$0xff]
        %v4411 = vld [vmem:[%s946 + $0x178] sm:$0xff]
        %v4412 = vld [vmem:[%s946 + $0x180] sm:$0xff]
        %v4413 = vld [vmem:[%s946 + $0x188] sm:$0xff]
        %v4414 = vld [vmem:[%s946 + $0x190] sm:$0xff]
        %v4415 = vld [vmem:[%s946 + $0x198] sm:$0xff]
        %v4416 = vld [vmem:[%s946 + $0x1a0] sm:$0xff]
        %v4417 = vld [vmem:[%s946 + $0x1a8] sm:$0xff]
        %v4418 = vld [vmem:[%s946 + $0x1b0] sm:$0xff]
        %v4419 = vld [vmem:[%s946 + $0x1b8] sm:$0xff]
        %v4420 = vld [vmem:[%s946 + $0x1c0] sm:$0xff]
        %v4421 = vld [vmem:[%s946 + $0x1c8] sm:$0xff]
        %v4422 = vld [vmem:[%s946 + $0x1d0] sm:$0xff]
        %v4423 = vld [vmem:[%s946 + $0x1d8] sm:$0xff]
        %v4424 = vld [vmem:[%s946 + $0x1e0] sm:$0xff]
        %v4425 = vld [vmem:[%s946 + $0x1e8] sm:$0xff]
        %v4426 = vld [vmem:[%s946 + $0x1f0] sm:$0xff]
        %v4427 = vld [vmem:[%s946 + $0x1f8] sm:$0xff]
        %v4428 = vmul.f32 %v4300, %v4364
        %v4429 = vmul.f32 %v4301, %v4365
        %v4430 = vmul.f32 %v4302, %v4366
        %v4431 = vmul.f32 %v4303, %v4367
        %v4432 = vmul.f32 %v4304, %v4368
        %v4433 = vmul.f32 %v4305, %v4369
        %v4434 = vmul.f32 %v4306, %v4370
        %v4435 = vmul.f32 %v4307, %v4371
        %v4436 = vmul.f32 %v4308, %v4372
        %v4437 = vmul.f32 %v4309, %v4373
        %v4438 = vmul.f32 %v4310, %v4374
        %v4439 = vmul.f32 %v4311, %v4375
        %v4440 = vmul.f32 %v4312, %v4376
        %v4441 = vmul.f32 %v4313, %v4377
        %v4442 = vmul.f32 %v4314, %v4378
        %v4443 = vmul.f32 %v4315, %v4379
        %v4444 = vmul.f32 %v4316, %v4380
        %v4445 = vmul.f32 %v4317, %v4381
        %v4446 = vmul.f32 %v4318, %v4382
        %v4447 = vmul.f32 %v4319, %v4383
        %v4448 = vmul.f32 %v4320, %v4384
        %v4449 = vmul.f32 %v4321, %v4385
        %v4450 = vmul.f32 %v4322, %v4386
        %v4451 = vmul.f32 %v4323, %v4387
        %v4452 = vmul.f32 %v4324, %v4388
        %v4453 = vmul.f32 %v4325, %v4389
        %v4454 = vmul.f32 %v4326, %v4390
        %v4455 = vmul.f32 %v4327, %v4391
        %v4456 = vmul.f32 %v4328, %v4392
        %v4457 = vmul.f32 %v4329, %v4393
        %v4458 = vmul.f32 %v4330, %v4394
        %v4459 = vmul.f32 %v4331, %v4395
        %v4460 = vmul.f32 %v4332, %v4396
        %v4461 = vmul.f32 %v4333, %v4397
        %v4462 = vmul.f32 %v4334, %v4398
        %v4463 = vmul.f32 %v4335, %v4399
        %v4464 = vmul.f32 %v4336, %v4400
        %v4465 = vmul.f32 %v4337, %v4401
        %v4466 = vmul.f32 %v4338, %v4402
        %v4467 = vmul.f32 %v4339, %v4403
        %v4468 = vmul.f32 %v4340, %v4404
        %v4469 = vmul.f32 %v4341, %v4405
        %v4470 = vmul.f32 %v4342, %v4406
        %v4471 = vmul.f32 %v4343, %v4407
        %v4472 = vmul.f32 %v4344, %v4408
        %v4473 = vmul.f32 %v4345, %v4409
        %v4474 = vmul.f32 %v4346, %v4410
        %v4475 = vmul.f32 %v4347, %v4411
        %v4476 = vmul.f32 %v4348, %v4412
        %v4477 = vmul.f32 %v4349, %v4413
        %v4478 = vmul.f32 %v4350, %v4414
        %v4479 = vmul.f32 %v4351, %v4415
        %v4480 = vmul.f32 %v4352, %v4416
        %v4481 = vmul.f32 %v4353, %v4417
        %v4482 = vmul.f32 %v4354, %v4418
        %v4483 = vmul.f32 %v4355, %v4419
        %v4484 = vmul.f32 %v4356, %v4420
        %v4485 = vmul.f32 %v4357, %v4421
        %v4486 = vmul.f32 %v4358, %v4422
        %v4487 = vmul.f32 %v4359, %v4423
        %v4488 = vmul.f32 %v4360, %v4424
        %v4489 = vmul.f32 %v4361, %v4425
        %v4490 = vmul.f32 %v4362, %v4426
        %v4491 = vmul.f32 %v4363, %v4427
        %v4492 = vsel %vm4034, %v4428, -inf
        %v4493 = vrot.slane %v4492, 4
        %v4494 = vmax.f32 %v4492, %v4493
        %v4495 = vrot.slane %v4494, 2
        %v4496 = vmax.f32 %v4494, %v4495
        %v4497 = vrot.slane %v4496, 1
        %v4498 = vmax.f32 %v4496, %v4497
        %v4499 = vsel %vm4034, %v4429, -inf
        %v4500 = vrot.slane %v4499, 4
        %v4501 = vmax.f32 %v4499, %v4500
        %v4502 = vrot.slane %v4501, 2
        %v4503 = vmax.f32 %v4501, %v4502
        %v4504 = vrot.slane %v4503, 1
        %v4505 = vmax.f32 %v4503, %v4504
        %v4506 = vsel %vm4034, %v4430, -inf
        %v4507 = vrot.slane %v4506, 4
        %v4508 = vmax.f32 %v4506, %v4507
        %v4509 = vrot.slane %v4508, 2
        %v4510 = vmax.f32 %v4508, %v4509
        %v4511 = vrot.slane %v4510, 1
        %v4512 = vmax.f32 %v4510, %v4511
        %v4513 = vsel %vm4034, %v4431, -inf
        %v4514 = vrot.slane %v4513, 4
        %v4515 = vmax.f32 %v4513, %v4514
        %v4516 = vrot.slane %v4515, 2
        %v4517 = vmax.f32 %v4515, %v4516
        %v4518 = vrot.slane %v4517, 1
        %v4519 = vmax.f32 %v4517, %v4518
        %v4520 = vsel %vm4034, %v4432, -inf
        %v4521 = vrot.slane %v4520, 4
        %v4522 = vmax.f32 %v4520, %v4521
        %v4523 = vrot.slane %v4522, 2
        %v4524 = vmax.f32 %v4522, %v4523
        %v4525 = vrot.slane %v4524, 1
        %v4526 = vmax.f32 %v4524, %v4525
        %v4527 = vsel %vm4034, %v4433, -inf
        %v4528 = vrot.slane %v4527, 4
        %v4529 = vmax.f32 %v4527, %v4528
        %v4530 = vrot.slane %v4529, 2
        %v4531 = vmax.f32 %v4529, %v4530
        %v4532 = vrot.slane %v4531, 1
        %v4533 = vmax.f32 %v4531, %v4532
        %v4534 = vsel %vm4034, %v4434, -inf
        %v4535 = vrot.slane %v4534, 4
        %v4536 = vmax.f32 %v4534, %v4535
        %v4537 = vrot.slane %v4536, 2
        %v4538 = vmax.f32 %v4536, %v4537
        %v4539 = vrot.slane %v4538, 1
        %v4540 = vmax.f32 %v4538, %v4539
        %v4541 = vsel %vm4034, %v4435, -inf
        %v4542 = vrot.slane %v4541, 4
        %v4543 = vmax.f32 %v4541, %v4542
        %v4544 = vrot.slane %v4543, 2
        %v4545 = vmax.f32 %v4543, %v4544
        %v4546 = vrot.slane %v4545, 1
        %v4547 = vmax.f32 %v4545, %v4546
        %v4548 = vsel %vm4034, %v4436, -inf
        %v4549 = vrot.slane %v4548, 4
        %v4550 = vmax.f32 %v4548, %v4549
        %v4551 = vrot.slane %v4550, 2
        %v4552 = vmax.f32 %v4550, %v4551
        %v4553 = vrot.slane %v4552, 1
        %v4554 = vmax.f32 %v4552, %v4553
        %v4555 = vsel %vm4034, %v4437, -inf
        %v4556 = vrot.slane %v4555, 4
        %v4557 = vmax.f32 %v4555, %v4556
        %v4558 = vrot.slane %v4557, 2
        %v4559 = vmax.f32 %v4557, %v4558
        %v4560 = vrot.slane %v4559, 1
        %v4561 = vmax.f32 %v4559, %v4560
        %v4562 = vsel %vm4034, %v4438, -inf
        %v4563 = vrot.slane %v4562, 4
        %v4564 = vmax.f32 %v4562, %v4563
        %v4565 = vrot.slane %v4564, 2
        %v4566 = vmax.f32 %v4564, %v4565
        %v4567 = vrot.slane %v4566, 1
        %v4568 = vmax.f32 %v4566, %v4567
        %v4569 = vsel %vm4034, %v4439, -inf
        %v4570 = vrot.slane %v4569, 4
        %v4571 = vmax.f32 %v4569, %v4570
        %v4572 = vrot.slane %v4571, 2
        %v4573 = vmax.f32 %v4571, %v4572
        %v4574 = vrot.slane %v4573, 1
        %v4575 = vmax.f32 %v4573, %v4574
        %v4576 = vsel %vm4034, %v4440, -inf
        %v4577 = vrot.slane %v4576, 4
        %v4578 = vmax.f32 %v4576, %v4577
        %v4579 = vrot.slane %v4578, 2
        %v4580 = vmax.f32 %v4578, %v4579
        %v4581 = vrot.slane %v4580, 1
        %v4582 = vmax.f32 %v4580, %v4581
        %v4583 = vsel %vm4034, %v4441, -inf
        %v4584 = vrot.slane %v4583, 4
        %v4585 = vmax.f32 %v4583, %v4584
        %v4586 = vrot.slane %v4585, 2
        %v4587 = vmax.f32 %v4585, %v4586
        %v4588 = vrot.slane %v4587, 1
        %v4589 = vmax.f32 %v4587, %v4588
        %v4590 = vsel %vm4034, %v4442, -inf
        %v4591 = vrot.slane %v4590, 4
        %v4592 = vmax.f32 %v4590, %v4591
        %v4593 = vrot.slane %v4592, 2
        %v4594 = vmax.f32 %v4592, %v4593
        %v4595 = vrot.slane %v4594, 1
        %v4596 = vmax.f32 %v4594, %v4595
        %v4597 = vsel %vm4034, %v4443, -inf
        %v4598 = vrot.slane %v4597, 4
        %v4599 = vmax.f32 %v4597, %v4598
        %v4600 = vrot.slane %v4599, 2
        %v4601 = vmax.f32 %v4599, %v4600
        %v4602 = vrot.slane %v4601, 1
        %v4603 = vmax.f32 %v4601, %v4602
        %v4604 = vsel %vm4034, %v4444, -inf
        %v4605 = vrot.slane %v4604, 4
        %v4606 = vmax.f32 %v4604, %v4605
        %v4607 = vrot.slane %v4606, 2
        %v4608 = vmax.f32 %v4606, %v4607
        %v4609 = vrot.slane %v4608, 1
        %v4610 = vmax.f32 %v4608, %v4609
        %v4611 = vsel %vm4034, %v4445, -inf
        %v4612 = vrot.slane %v4611, 4
        %v4613 = vmax.f32 %v4611, %v4612
        %v4614 = vrot.slane %v4613, 2
        %v4615 = vmax.f32 %v4613, %v4614
        %v4616 = vrot.slane %v4615, 1
        %v4617 = vmax.f32 %v4615, %v4616
        %v4618 = vsel %vm4034, %v4446, -inf
        %v4619 = vrot.slane %v4618, 4
        %v4620 = vmax.f32 %v4618, %v4619
        %v4621 = vrot.slane %v4620, 2
        %v4622 = vmax.f32 %v4620, %v4621
        %v4623 = vrot.slane %v4622, 1
        %v4624 = vmax.f32 %v4622, %v4623
        %v4625 = vsel %vm4034, %v4447, -inf
        %v4626 = vrot.slane %v4625, 4
        %v4627 = vmax.f32 %v4625, %v4626
        %v4628 = vrot.slane %v4627, 2
        %v4629 = vmax.f32 %v4627, %v4628
        %v4630 = vrot.slane %v4629, 1
        %v4631 = vmax.f32 %v4629, %v4630
        %v4632 = vsel %vm4034, %v4448, -inf
        %v4633 = vrot.slane %v4632, 4
        %v4634 = vmax.f32 %v4632, %v4633
        %v4635 = vrot.slane %v4634, 2
        %v4636 = vmax.f32 %v4634, %v4635
        %v4637 = vrot.slane %v4636, 1
        %v4638 = vmax.f32 %v4636, %v4637
        %v4639 = vsel %vm4034, %v4449, -inf
        %v4640 = vrot.slane %v4639, 4
        %v4641 = vmax.f32 %v4639, %v4640
        %v4642 = vrot.slane %v4641, 2
        %v4643 = vmax.f32 %v4641, %v4642
        %v4644 = vrot.slane %v4643, 1
        %v4645 = vmax.f32 %v4643, %v4644
        %v4646 = vsel %vm4034, %v4450, -inf
        %v4647 = vrot.slane %v4646, 4
        %v4648 = vmax.f32 %v4646, %v4647
        %v4649 = vrot.slane %v4648, 2
        %v4650 = vmax.f32 %v4648, %v4649
        %v4651 = vrot.slane %v4650, 1
        %v4652 = vmax.f32 %v4650, %v4651
        %v4653 = vsel %vm4034, %v4451, -inf
        %v4654 = vrot.slane %v4653, 4
        %v4655 = vmax.f32 %v4653, %v4654
        %v4656 = vrot.slane %v4655, 2
        %v4657 = vmax.f32 %v4655, %v4656
        %v4658 = vrot.slane %v4657, 1
        %v4659 = vmax.f32 %v4657, %v4658
        %v4660 = vsel %vm4034, %v4452, -inf
        %v4661 = vrot.slane %v4660, 4
        %v4662 = vmax.f32 %v4660, %v4661
        %v4663 = vrot.slane %v4662, 2
        %v4664 = vmax.f32 %v4662, %v4663
        %v4665 = vrot.slane %v4664, 1
        %v4666 = vmax.f32 %v4664, %v4665
        %v4667 = vsel %vm4034, %v4453, -inf
        %v4668 = vrot.slane %v4667, 4
        %v4669 = vmax.f32 %v4667, %v4668
        %v4670 = vrot.slane %v4669, 2
        %v4671 = vmax.f32 %v4669, %v4670
        %v4672 = vrot.slane %v4671, 1
        %v4673 = vmax.f32 %v4671, %v4672
        %v4674 = vsel %vm4034, %v4454, -inf
        %v4675 = vrot.slane %v4674, 4
        %v4676 = vmax.f32 %v4674, %v4675
        %v4677 = vrot.slane %v4676, 2
        %v4678 = vmax.f32 %v4676, %v4677
        %v4679 = vrot.slane %v4678, 1
        %v4680 = vmax.f32 %v4678, %v4679
        %v4681 = vsel %vm4034, %v4455, -inf
        %v4682 = vrot.slane %v4681, 4
        %v4683 = vmax.f32 %v4681, %v4682
        %v4684 = vrot.slane %v4683, 2
        %v4685 = vmax.f32 %v4683, %v4684
        %v4686 = vrot.slane %v4685, 1
        %v4687 = vmax.f32 %v4685, %v4686
        %v4688 = vsel %vm4034, %v4456, -inf
        %v4689 = vrot.slane %v4688, 4
        %v4690 = vmax.f32 %v4688, %v4689
        %v4691 = vrot.slane %v4690, 2
        %v4692 = vmax.f32 %v4690, %v4691
        %v4693 = vrot.slane %v4692, 1
        %v4694 = vmax.f32 %v4692, %v4693
        %v4695 = vsel %vm4034, %v4457, -inf
        %v4696 = vrot.slane %v4695, 4
        %v4697 = vmax.f32 %v4695, %v4696
        %v4698 = vrot.slane %v4697, 2
        %v4699 = vmax.f32 %v4697, %v4698
        %v4700 = vrot.slane %v4699, 1
        %v4701 = vmax.f32 %v4699, %v4700
        %v4702 = vsel %vm4034, %v4458, -inf
        %v4703 = vrot.slane %v4702, 4
        %v4704 = vmax.f32 %v4702, %v4703
        %v4705 = vrot.slane %v4704, 2
        %v4706 = vmax.f32 %v4704, %v4705
        %v4707 = vrot.slane %v4706, 1
        %v4708 = vmax.f32 %v4706, %v4707
        %v4709 = vsel %vm4034, %v4459, -inf
        %v4710 = vrot.slane %v4709, 4
        %v4711 = vmax.f32 %v4709, %v4710
        %v4712 = vrot.slane %v4711, 2
        %v4713 = vmax.f32 %v4711, %v4712
        %v4714 = vrot.slane %v4713, 1
        %v4715 = vmax.f32 %v4713, %v4714
        %v4716 = vsel %vm4034, %v4460, -inf
        %v4717 = vrot.slane %v4716, 4
        %v4718 = vmax.f32 %v4716, %v4717
        %v4719 = vrot.slane %v4718, 2
        %v4720 = vmax.f32 %v4718, %v4719
        %v4721 = vrot.slane %v4720, 1
        %v4722 = vmax.f32 %v4720, %v4721
        %v4723 = vsel %vm4034, %v4461, -inf
        %v4724 = vrot.slane %v4723, 4
        %v4725 = vmax.f32 %v4723, %v4724
        %v4726 = vrot.slane %v4725, 2
        %v4727 = vmax.f32 %v4725, %v4726
        %v4728 = vrot.slane %v4727, 1
        %v4729 = vmax.f32 %v4727, %v4728
        %v4730 = vsel %vm4034, %v4462, -inf
        %v4731 = vrot.slane %v4730, 4
        %v4732 = vmax.f32 %v4730, %v4731
        %v4733 = vrot.slane %v4732, 2
        %v4734 = vmax.f32 %v4732, %v4733
        %v4735 = vrot.slane %v4734, 1
        %v4736 = vmax.f32 %v4734, %v4735
        %v4737 = vsel %vm4034, %v4463, -inf
        %v4738 = vrot.slane %v4737, 4
        %v4739 = vmax.f32 %v4737, %v4738
        %v4740 = vrot.slane %v4739, 2
        %v4741 = vmax.f32 %v4739, %v4740
        %v4742 = vrot.slane %v4741, 1
        %v4743 = vmax.f32 %v4741, %v4742
        %v4744 = vsel %vm4034, %v4464, -inf
        %v4745 = vrot.slane %v4744, 4
        %v4746 = vmax.f32 %v4744, %v4745
        %v4747 = vrot.slane %v4746, 2
        %v4748 = vmax.f32 %v4746, %v4747
        %v4749 = vrot.slane %v4748, 1
        %v4750 = vmax.f32 %v4748, %v4749
        %v4751 = vsel %vm4034, %v4465, -inf
        %v4752 = vrot.slane %v4751, 4
        %v4753 = vmax.f32 %v4751, %v4752
        %v4754 = vrot.slane %v4753, 2
        %v4755 = vmax.f32 %v4753, %v4754
        %v4756 = vrot.slane %v4755, 1
        %v4757 = vmax.f32 %v4755, %v4756
        %v4758 = vsel %vm4034, %v4466, -inf
        %v4759 = vrot.slane %v4758, 4
        %v4760 = vmax.f32 %v4758, %v4759
        %v4761 = vrot.slane %v4760, 2
        %v4762 = vmax.f32 %v4760, %v4761
        %v4763 = vrot.slane %v4762, 1
        %v4764 = vmax.f32 %v4762, %v4763
        %v4765 = vsel %vm4034, %v4467, -inf
        %v4766 = vrot.slane %v4765, 4
        %v4767 = vmax.f32 %v4765, %v4766
        %v4768 = vrot.slane %v4767, 2
        %v4769 = vmax.f32 %v4767, %v4768
        %v4770 = vrot.slane %v4769, 1
        %v4771 = vmax.f32 %v4769, %v4770
        %v4772 = vsel %vm4034, %v4468, -inf
        %v4773 = vrot.slane %v4772, 4
        %v4774 = vmax.f32 %v4772, %v4773
        %v4775 = vrot.slane %v4774, 2
        %v4776 = vmax.f32 %v4774, %v4775
        %v4777 = vrot.slane %v4776, 1
        %v4778 = vmax.f32 %v4776, %v4777
        %v4779 = vsel %vm4034, %v4469, -inf
        %v4780 = vrot.slane %v4779, 4
        %v4781 = vmax.f32 %v4779, %v4780
        %v4782 = vrot.slane %v4781, 2
        %v4783 = vmax.f32 %v4781, %v4782
        %v4784 = vrot.slane %v4783, 1
        %v4785 = vmax.f32 %v4783, %v4784
        %v4786 = vsel %vm4034, %v4470, -inf
        %v4787 = vrot.slane %v4786, 4
        %v4788 = vmax.f32 %v4786, %v4787
        %v4789 = vrot.slane %v4788, 2
        %v4790 = vmax.f32 %v4788, %v4789
        %v4791 = vrot.slane %v4790, 1
        %v4792 = vmax.f32 %v4790, %v4791
        %v4793 = vsel %vm4034, %v4471, -inf
        %v4794 = vrot.slane %v4793, 4
        %v4795 = vmax.f32 %v4793, %v4794
        %v4796 = vrot.slane %v4795, 2
        %v4797 = vmax.f32 %v4795, %v4796
        %v4798 = vrot.slane %v4797, 1
        %v4799 = vmax.f32 %v4797, %v4798
        %v4800 = vsel %vm4034, %v4472, -inf
        %v4801 = vrot.slane %v4800, 4
        %v4802 = vmax.f32 %v4800, %v4801
        %v4803 = vrot.slane %v4802, 2
        %v4804 = vmax.f32 %v4802, %v4803
        %v4805 = vrot.slane %v4804, 1
        %v4806 = vmax.f32 %v4804, %v4805
        %v4807 = vsel %vm4034, %v4473, -inf
        %v4808 = vrot.slane %v4807, 4
        %v4809 = vmax.f32 %v4807, %v4808
        %v4810 = vrot.slane %v4809, 2
        %v4811 = vmax.f32 %v4809, %v4810
        %v4812 = vrot.slane %v4811, 1
        %v4813 = vmax.f32 %v4811, %v4812
        %v4814 = vsel %vm4034, %v4474, -inf
        %v4815 = vrot.slane %v4814, 4
        %v4816 = vmax.f32 %v4814, %v4815
        %v4817 = vrot.slane %v4816, 2
        %v4818 = vmax.f32 %v4816, %v4817
        %v4819 = vrot.slane %v4818, 1
        %v4820 = vmax.f32 %v4818, %v4819
        %v4821 = vsel %vm4034, %v4475, -inf
        %v4822 = vrot.slane %v4821, 4
        %v4823 = vmax.f32 %v4821, %v4822
        %v4824 = vrot.slane %v4823, 2
        %v4825 = vmax.f32 %v4823, %v4824
        %v4826 = vrot.slane %v4825, 1
        %v4827 = vmax.f32 %v4825, %v4826
        %v4828 = vsel %vm4034, %v4476, -inf
        %v4829 = vrot.slane %v4828, 4
        %v4830 = vmax.f32 %v4828, %v4829
        %v4831 = vrot.slane %v4830, 2
        %v4832 = vmax.f32 %v4830, %v4831
        %v4833 = vrot.slane %v4832, 1
        %v4834 = vmax.f32 %v4832, %v4833
        %v4835 = vsel %vm4034, %v4477, -inf
        %v4836 = vrot.slane %v4835, 4
        %v4837 = vmax.f32 %v4835, %v4836
        %v4838 = vrot.slane %v4837, 2
        %v4839 = vmax.f32 %v4837, %v4838
        %v4840 = vrot.slane %v4839, 1
        %v4841 = vmax.f32 %v4839, %v4840
        %v4842 = vsel %vm4034, %v4478, -inf
        %v4843 = vrot.slane %v4842, 4
        %v4844 = vmax.f32 %v4842, %v4843
        %v4845 = vrot.slane %v4844, 2
        %v4846 = vmax.f32 %v4844, %v4845
        %v4847 = vrot.slane %v4846, 1
        %v4848 = vmax.f32 %v4846, %v4847
        %v4849 = vsel %vm4034, %v4479, -inf
        %v4850 = vrot.slane %v4849, 4
        %v4851 = vmax.f32 %v4849, %v4850
        %v4852 = vrot.slane %v4851, 2
        %v4853 = vmax.f32 %v4851, %v4852
        %v4854 = vrot.slane %v4853, 1
        %v4855 = vmax.f32 %v4853, %v4854
        %v4856 = vsel %vm4034, %v4480, -inf
        %v4857 = vrot.slane %v4856, 4
        %v4858 = vmax.f32 %v4856, %v4857
        %v4859 = vrot.slane %v4858, 2
        %v4860 = vmax.f32 %v4858, %v4859
        %v4861 = vrot.slane %v4860, 1
        %v4862 = vmax.f32 %v4860, %v4861
        %v4863 = vsel %vm4034, %v4481, -inf
        %v4864 = vrot.slane %v4863, 4
        %v4865 = vmax.f32 %v4863, %v4864
        %v4866 = vrot.slane %v4865, 2
        %v4867 = vmax.f32 %v4865, %v4866
        %v4868 = vrot.slane %v4867, 1
        %v4869 = vmax.f32 %v4867, %v4868
        %v4870 = vsel %vm4034, %v4482, -inf
        %v4871 = vrot.slane %v4870, 4
        %v4872 = vmax.f32 %v4870, %v4871
        %v4873 = vrot.slane %v4872, 2
        %v4874 = vmax.f32 %v4872, %v4873
        %v4875 = vrot.slane %v4874, 1
        %v4876 = vmax.f32 %v4874, %v4875
        %v4877 = vsel %vm4034, %v4483, -inf
        %v4878 = vrot.slane %v4877, 4
        %v4879 = vmax.f32 %v4877, %v4878
        %v4880 = vrot.slane %v4879, 2
        %v4881 = vmax.f32 %v4879, %v4880
        %v4882 = vrot.slane %v4881, 1
        %v4883 = vmax.f32 %v4881, %v4882
        %v4884 = vsel %vm4034, %v4484, -inf
        %v4885 = vrot.slane %v4884, 4
        %v4886 = vmax.f32 %v4884, %v4885
        %v4887 = vrot.slane %v4886, 2
        %v4888 = vmax.f32 %v4886, %v4887
        %v4889 = vrot.slane %v4888, 1
        %v4890 = vmax.f32 %v4888, %v4889
        %v4891 = vsel %vm4034, %v4485, -inf
        %v4892 = vrot.slane %v4891, 4
        %v4893 = vmax.f32 %v4891, %v4892
        %v4894 = vrot.slane %v4893, 2
        %v4895 = vmax.f32 %v4893, %v4894
        %v4896 = vrot.slane %v4895, 1
        %v4897 = vmax.f32 %v4895, %v4896
        %v4898 = vsel %vm4034, %v4486, -inf
        %v4899 = vrot.slane %v4898, 4
        %v4900 = vmax.f32 %v4898, %v4899
        %v4901 = vrot.slane %v4900, 2
        %v4902 = vmax.f32 %v4900, %v4901
        %v4903 = vrot.slane %v4902, 1
        %v4904 = vmax.f32 %v4902, %v4903
        %v4905 = vsel %vm4034, %v4487, -inf
        %v4906 = vrot.slane %v4905, 4
        %v4907 = vmax.f32 %v4905, %v4906
        %v4908 = vrot.slane %v4907, 2
        %v4909 = vmax.f32 %v4907, %v4908
        %v4910 = vrot.slane %v4909, 1
        %v4911 = vmax.f32 %v4909, %v4910
        %v4912 = vsel %vm4034, %v4488, -inf
        %v4913 = vrot.slane %v4912, 4
        %v4914 = vmax.f32 %v4912, %v4913
        %v4915 = vrot.slane %v4914, 2
        %v4916 = vmax.f32 %v4914, %v4915
        %v4917 = vrot.slane %v4916, 1
        %v4918 = vmax.f32 %v4916, %v4917
        %v4919 = vsel %vm4034, %v4489, -inf
        %v4920 = vrot.slane %v4919, 4
        %v4921 = vmax.f32 %v4919, %v4920
        %v4922 = vrot.slane %v4921, 2
        %v4923 = vmax.f32 %v4921, %v4922
        %v4924 = vrot.slane %v4923, 1
        %v4925 = vmax.f32 %v4923, %v4924
        %v4926 = vsel %vm4034, %v4490, -inf
        %v4927 = vrot.slane %v4926, 4
        %v4928 = vmax.f32 %v4926, %v4927
        %v4929 = vrot.slane %v4928, 2
        %v4930 = vmax.f32 %v4928, %v4929
        %v4931 = vrot.slane %v4930, 1
        %v4932 = vmax.f32 %v4930, %v4931
        %v4933 = vsel %vm4034, %v4491, -inf
        %v4934 = vrot.slane %v4933, 4
        %v4935 = vmax.f32 %v4933, %v4934
        %v4936 = vrot.slane %v4935, 2
        %v4937 = vmax.f32 %v4935, %v4936
        %v4938 = vrot.slane %v4937, 1
        %v4939 = vmax.f32 %v4937, %v4938
        %v4940 = vpack.c.bf16 %v3921, %v3920
        %v4941 = vpack.c.bf16 %v3923, %v3922
        %v4942 = vpack.c.bf16 %v3925, %v3924
        %v4943 = vpack.c.bf16 %v3927, %v3926
        %v4944 = vpack.c.bf16 %v3929, %v3928
        %v4945 = vpack.c.bf16 %v3931, %v3930
        %v4946 = vpack.c.bf16 %v3933, %v3932
        %v4947 = vpack.c.bf16 %v3935, %v3934
        %v4948 = vpack.c.bf16 %v3937, %v3936
        %v4949 = vpack.c.bf16 %v3939, %v3938
        %v4950 = vpack.c.bf16 %v3941, %v3940
        %v4951 = vpack.c.bf16 %v3943, %v3942
        %v4952 = vpack.c.bf16 %v3945, %v3944
        %v4953 = vpack.c.bf16 %v3947, %v3946
        %v4954 = vpack.c.bf16 %v3949, %v3948
        %v4955 = vpack.c.bf16 %v3951, %v3950
        %v4956 = vpack.c.bf16 %v3953, %v3952
        %v4957 = vpack.c.bf16 %v3955, %v3954
        %v4958 = vpack.c.bf16 %v3957, %v3956
        %v4959 = vpack.c.bf16 %v3959, %v3958
        %v4960 = vpack.c.bf16 %v3961, %v3960
        %v4961 = vpack.c.bf16 %v3963, %v3962
        %v4962 = vpack.c.bf16 %v3965, %v3964
        %v4963 = vpack.c.bf16 %v3967, %v3966
        %v4964 = vpack.c.bf16 %v3969, %v3968
        %v4965 = vpack.c.bf16 %v3971, %v3970
        %v4966 = vpack.c.bf16 %v3973, %v3972
        %v4967 = vpack.c.bf16 %v3975, %v3974
        %v4968 = vpack.c.bf16 %v3977, %v3976
        %v4969 = vpack.c.bf16 %v3979, %v3978
        %v4970 = vpack.c.bf16 %v3981, %v3980
        %v4971 = vpack.c.bf16 %v3983, %v3982
        %v4972 = vld [vmem:[%s22] sm:$0xf]
        %v4973 = vld [vmem:[%s22 + $0x4] sm:$0xf]
        %v4974 = vld [vmem:[%s22 + $0x8] sm:$0xf]
        %v4975 = vld [vmem:[%s22 + $0xc] sm:$0xf]
        %v4976 = vld [vmem:[%s26 + $0xe] sm:$0x1]
        %v4977 = vperm.slane %v4976, 0
        %v4982 = vunpack.c.l.b16 %v4972
        %v4983 = vunpack.c.l.b16 %v4973
        %v4984 = vunpack.c.l.b16 %v4974
        %v4985 = vunpack.c.l.b16 %v4975
        %v4986 = vpack.c.b16 %v4983, %v4982
        %v4987 = vpack.c.b16 %v4985, %v4984
        %v4991 = vsel %vm4034, %v4940, 0
        %v4994 = vsel %vm4034, %v4941, 0
        %v4997 = vsel %vm4034, %v4942, 0
        %v5000 = vsel %vm4034, %v4943, 0
        %v5003 = vsel %vm4034, %v4944, 0
        %v5006 = vsel %vm4034, %v4945, 0
        %v5009 = vsel %vm4034, %v4946, 0
        %v5012 = vsel %vm4034, %v4947, 0
        %v5015 = vsel %vm4034, %v4948, 0
        %v5018 = vsel %vm4034, %v4949, 0
        %v5021 = vsel %vm4034, %v4950, 0
        %v5024 = vsel %vm4034, %v4951, 0
        %v5027 = vsel %vm4034, %v4952, 0
        %v5030 = vsel %vm4034, %v4953, 0
        %v5033 = vsel %vm4034, %v4954, 0
        %v5036 = vsel %vm4034, %v4955, 0
        %v5039 = vsel %vm4034, %v4956, 0
        %v5042 = vsel %vm4034, %v4957, 0
        %v5045 = vsel %vm4034, %v4958, 0
        %v5048 = vsel %vm4034, %v4959, 0
        %v5051 = vsel %vm4034, %v4960, 0
        %v5054 = vsel %vm4034, %v4961, 0
        %v5057 = vsel %vm4034, %v4962, 0
        %v5060 = vsel %vm4034, %v4963, 0
        %v5063 = vsel %vm4034, %v4964, 0
        %v5066 = vsel %vm4034, %v4965, 0
        %v5069 = vsel %vm4034, %v4966, 0
        %v5072 = vsel %vm4034, %v4967, 0
        %v5075 = vsel %vm4034, %v4968, 0
        %v5078 = vsel %vm4034, %v4969, 0
        %v5081 = vsel %vm4034, %v4970, 0
        %v5084 = vsel %vm4034, %v4971, 0
        %5086 = vmatpush.bf16.msra.mxu0 0
        %5087 = vmatpush.bf16.msra.mxu0 0
        %5088 = vmatpush.bf16.msra.mxu0 0
        %5089 = vmatpush.bf16.msra.mxu0 0
        %5090 = vmatpush.bf16.msra.mxu0 0
        %5091 = vmatpush.bf16.msra.mxu0 0
        %5092 = vmatpush.bf16.msra.mxu0 %v4987
        %5093 = vmatpush.bf16.msra.mxu0 %v4986
        %5094 = vmatmul.bf16.gmra.mxu0 %v4991
        %v5095 = vpop.f32.mrf.mxu0
        %v5096 = vadd.f32 %v4977, %v5095
        %v5097 = vpop.f32.mrf.mxu0
        %v5098 = vadd.f32 %v4977, %v5097
        %5099 = vmatmul.bf16.gmra.mxu0 %v4994
        %v5100 = vpop.f32.mrf.mxu0
        %v5101 = vadd.f32 %v4977, %v5100
        %v5102 = vpop.f32.mrf.mxu0
        %v5103 = vadd.f32 %v4977, %v5102
        %5104 = vmatmul.bf16.gmra.mxu0 %v4997
        %v5105 = vpop.f32.mrf.mxu0
        %v5106 = vadd.f32 %v4977, %v5105
        %v5107 = vpop.f32.mrf.mxu0
        %v5108 = vadd.f32 %v4977, %v5107
        %5109 = vmatmul.bf16.gmra.mxu0 %v5000
        %v5110 = vpop.f32.mrf.mxu0
        %v5111 = vadd.f32 %v4977, %v5110
        %v5112 = vpop.f32.mrf.mxu0
        %v5113 = vadd.f32 %v4977, %v5112
        %5114 = vmatmul.bf16.gmra.mxu0 %v5003
        %v5115 = vpop.f32.mrf.mxu0
        %v5116 = vadd.f32 %v4977, %v5115
        %v5117 = vpop.f32.mrf.mxu0
        %v5118 = vadd.f32 %v4977, %v5117
        %5119 = vmatmul.bf16.gmra.mxu0 %v5006
        %v5120 = vpop.f32.mrf.mxu0
        %v5121 = vadd.f32 %v4977, %v5120
        %v5122 = vpop.f32.mrf.mxu0
        %v5123 = vadd.f32 %v4977, %v5122
        %5124 = vmatmul.bf16.gmra.mxu0 %v5009
        %v5125 = vpop.f32.mrf.mxu0
        %v5126 = vadd.f32 %v4977, %v5125
        %v5127 = vpop.f32.mrf.mxu0
        %v5128 = vadd.f32 %v4977, %v5127
        %5129 = vmatmul.bf16.gmra.mxu0 %v5012
        %v5130 = vpop.f32.mrf.mxu0
        %v5131 = vadd.f32 %v4977, %v5130
        %v5132 = vpop.f32.mrf.mxu0
        %v5133 = vadd.f32 %v4977, %v5132
        %5134 = vmatmul.bf16.gmra.mxu0 %v5015
        %v5135 = vpop.f32.mrf.mxu0
        %v5136 = vadd.f32 %v4977, %v5135
        %v5137 = vpop.f32.mrf.mxu0
        %v5138 = vadd.f32 %v4977, %v5137
        %5139 = vmatmul.bf16.gmra.mxu0 %v5018
        %v5140 = vpop.f32.mrf.mxu0
        %v5141 = vadd.f32 %v4977, %v5140
        %v5142 = vpop.f32.mrf.mxu0
        %v5143 = vadd.f32 %v4977, %v5142
        %5144 = vmatmul.bf16.gmra.mxu0 %v5021
        %v5145 = vpop.f32.mrf.mxu0
        %v5146 = vadd.f32 %v4977, %v5145
        %v5147 = vpop.f32.mrf.mxu0
        %v5148 = vadd.f32 %v4977, %v5147
        %5149 = vmatmul.bf16.gmra.mxu0 %v5024
        %v5150 = vpop.f32.mrf.mxu0
        %v5151 = vadd.f32 %v4977, %v5150
        %v5152 = vpop.f32.mrf.mxu0
        %v5153 = vadd.f32 %v4977, %v5152
        %5154 = vmatmul.bf16.gmra.mxu0 %v5027
        %v5155 = vpop.f32.mrf.mxu0
        %v5156 = vadd.f32 %v4977, %v5155
        %v5157 = vpop.f32.mrf.mxu0
        %v5158 = vadd.f32 %v4977, %v5157
        %5159 = vmatmul.bf16.gmra.mxu0 %v5030
        %v5160 = vpop.f32.mrf.mxu0
        %v5161 = vadd.f32 %v4977, %v5160
        %v5162 = vpop.f32.mrf.mxu0
        %v5163 = vadd.f32 %v4977, %v5162
        %5164 = vmatmul.bf16.gmra.mxu0 %v5033
        %v5165 = vpop.f32.mrf.mxu0
        %v5166 = vadd.f32 %v4977, %v5165
        %v5167 = vpop.f32.mrf.mxu0
        %v5168 = vadd.f32 %v4977, %v5167
        %5169 = vmatmul.bf16.gmra.mxu0 %v5036
        %v5170 = vpop.f32.mrf.mxu0
        %v5171 = vadd.f32 %v4977, %v5170
        %v5172 = vpop.f32.mrf.mxu0
        %v5173 = vadd.f32 %v4977, %v5172
        %5174 = vmatmul.bf16.gmra.mxu0 %v5039
        %v5175 = vpop.f32.mrf.mxu0
        %v5176 = vadd.f32 %v4977, %v5175
        %v5177 = vpop.f32.mrf.mxu0
        %v5178 = vadd.f32 %v4977, %v5177
        %5179 = vmatmul.bf16.gmra.mxu0 %v5042
        %v5180 = vpop.f32.mrf.mxu0
        %v5181 = vadd.f32 %v4977, %v5180
        %v5182 = vpop.f32.mrf.mxu0
        %v5183 = vadd.f32 %v4977, %v5182
        %5184 = vmatmul.bf16.gmra.mxu0 %v5045
        %v5185 = vpop.f32.mrf.mxu0
        %v5186 = vadd.f32 %v4977, %v5185
        %v5187 = vpop.f32.mrf.mxu0
        %v5188 = vadd.f32 %v4977, %v5187
        %5189 = vmatmul.bf16.gmra.mxu0 %v5048
        %v5190 = vpop.f32.mrf.mxu0
        %v5191 = vadd.f32 %v4977, %v5190
        %v5192 = vpop.f32.mrf.mxu0
        %v5193 = vadd.f32 %v4977, %v5192
        %5194 = vmatmul.bf16.gmra.mxu0 %v5051
        %v5195 = vpop.f32.mrf.mxu0
        %v5196 = vadd.f32 %v4977, %v5195
        %v5197 = vpop.f32.mrf.mxu0
        %v5198 = vadd.f32 %v4977, %v5197
        %5199 = vmatmul.bf16.gmra.mxu0 %v5054
        %v5200 = vpop.f32.mrf.mxu0
        %v5201 = vadd.f32 %v4977, %v5200
        %v5202 = vpop.f32.mrf.mxu0
        %v5203 = vadd.f32 %v4977, %v5202
        %5204 = vmatmul.bf16.gmra.mxu0 %v5057
        %v5205 = vpop.f32.mrf.mxu0
        %v5206 = vadd.f32 %v4977, %v5205
        %v5207 = vpop.f32.mrf.mxu0
        %v5208 = vadd.f32 %v4977, %v5207
        %5209 = vmatmul.bf16.gmra.mxu0 %v5060
        %v5210 = vpop.f32.mrf.mxu0
        %v5211 = vadd.f32 %v4977, %v5210
        %v5212 = vpop.f32.mrf.mxu0
        %v5213 = vadd.f32 %v4977, %v5212
        %5214 = vmatmul.bf16.gmra.mxu0 %v5063
        %v5215 = vpop.f32.mrf.mxu0
        %v5216 = vadd.f32 %v4977, %v5215
        %v5217 = vpop.f32.mrf.mxu0
        %v5218 = vadd.f32 %v4977, %v5217
        %5219 = vmatmul.bf16.gmra.mxu0 %v5066
        %v5220 = vpop.f32.mrf.mxu0
        %v5221 = vadd.f32 %v4977, %v5220
        %v5222 = vpop.f32.mrf.mxu0
        %v5223 = vadd.f32 %v4977, %v5222
        %5224 = vmatmul.bf16.gmra.mxu0 %v5069
        %v5225 = vpop.f32.mrf.mxu0
        %v5226 = vadd.f32 %v4977, %v5225
        %v5227 = vpop.f32.mrf.mxu0
        %v5228 = vadd.f32 %v4977, %v5227
        %5229 = vmatmul.bf16.gmra.mxu0 %v5072
        %v5230 = vpop.f32.mrf.mxu0
        %v5231 = vadd.f32 %v4977, %v5230
        %v5232 = vpop.f32.mrf.mxu0
        %v5233 = vadd.f32 %v4977, %v5232
        %5234 = vmatmul.bf16.gmra.mxu0 %v5075
        %v5235 = vpop.f32.mrf.mxu0
        %v5236 = vadd.f32 %v4977, %v5235
        %v5237 = vpop.f32.mrf.mxu0
        %v5238 = vadd.f32 %v4977, %v5237
        %5239 = vmatmul.bf16.gmra.mxu0 %v5078
        %v5240 = vpop.f32.mrf.mxu0
        %v5241 = vadd.f32 %v4977, %v5240
        %v5242 = vpop.f32.mrf.mxu0
        %v5243 = vadd.f32 %v4977, %v5242
        %5244 = vmatmul.bf16.gmra.mxu0 %v5081
        %v5245 = vpop.f32.mrf.mxu0
        %v5246 = vadd.f32 %v4977, %v5245
        %v5247 = vpop.f32.mrf.mxu0
        %v5248 = vadd.f32 %v4977, %v5247
        %5249 = vmatmul.bf16.gmra.mxu0 %v5084
        %v5250 = vpop.f32.mrf.mxu0
        %v5251 = vadd.f32 %v4977, %v5250
        %v5252 = vpop.f32.mrf.mxu0
        %v5253 = vadd.f32 %v4977, %v5252
        %5254 = vdwg.mxu0
        %v5255 = vmax.f32 %v5096, 0.0
        %v5256 = vmax.f32 %v5098, 0.0
        %v5257 = vmax.f32 %v5101, 0.0
        %v5258 = vmax.f32 %v5103, 0.0
        %v5259 = vmax.f32 %v5106, 0.0
        %v5260 = vmax.f32 %v5108, 0.0
        %v5261 = vmax.f32 %v5111, 0.0
        %v5262 = vmax.f32 %v5113, 0.0
        %v5263 = vmax.f32 %v5116, 0.0
        %v5264 = vmax.f32 %v5118, 0.0
        %v5265 = vmax.f32 %v5121, 0.0
        %v5266 = vmax.f32 %v5123, 0.0
        %v5267 = vmax.f32 %v5126, 0.0
        %v5268 = vmax.f32 %v5128, 0.0
        %v5269 = vmax.f32 %v5131, 0.0
        %v5270 = vmax.f32 %v5133, 0.0
        %v5271 = vmax.f32 %v5136, 0.0
        %v5272 = vmax.f32 %v5138, 0.0
        %v5273 = vmax.f32 %v5141, 0.0
        %v5274 = vmax.f32 %v5143, 0.0
        %v5275 = vmax.f32 %v5146, 0.0
        %v5276 = vmax.f32 %v5148, 0.0
        %v5277 = vmax.f32 %v5151, 0.0
        %v5278 = vmax.f32 %v5153, 0.0
        %v5279 = vmax.f32 %v5156, 0.0
        %v5280 = vmax.f32 %v5158, 0.0
        %v5281 = vmax.f32 %v5161, 0.0
        %v5282 = vmax.f32 %v5163, 0.0
        %v5283 = vmax.f32 %v5166, 0.0
        %v5284 = vmax.f32 %v5168, 0.0
        %v5285 = vmax.f32 %v5171, 0.0
        %v5286 = vmax.f32 %v5173, 0.0
        %v5287 = vmax.f32 %v5176, 0.0
        %v5288 = vmax.f32 %v5178, 0.0
        %v5289 = vmax.f32 %v5181, 0.0
        %v5290 = vmax.f32 %v5183, 0.0
        %v5291 = vmax.f32 %v5186, 0.0
        %v5292 = vmax.f32 %v5188, 0.0
        %v5293 = vmax.f32 %v5191, 0.0
        %v5294 = vmax.f32 %v5193, 0.0
        %v5295 = vmax.f32 %v5196, 0.0
        %v5296 = vmax.f32 %v5198, 0.0
        %v5297 = vmax.f32 %v5201, 0.0
        %v5298 = vmax.f32 %v5203, 0.0
        %v5299 = vmax.f32 %v5206, 0.0
        %v5300 = vmax.f32 %v5208, 0.0
        %v5301 = vmax.f32 %v5211, 0.0
        %v5302 = vmax.f32 %v5213, 0.0
        %v5303 = vmax.f32 %v5216, 0.0
        %v5304 = vmax.f32 %v5218, 0.0
        %v5305 = vmax.f32 %v5221, 0.0
        %v5306 = vmax.f32 %v5223, 0.0
        %v5307 = vmax.f32 %v5226, 0.0
        %v5308 = vmax.f32 %v5228, 0.0
        %v5309 = vmax.f32 %v5231, 0.0
        %v5310 = vmax.f32 %v5233, 0.0
        %v5311 = vmax.f32 %v5236, 0.0
        %v5312 = vmax.f32 %v5238, 0.0
        %v5313 = vmax.f32 %v5241, 0.0
        %v5314 = vmax.f32 %v5243, 0.0
        %v5315 = vmax.f32 %v5246, 0.0
        %v5316 = vmax.f32 %v5248, 0.0
        %v5317 = vmax.f32 %v5251, 0.0
        %v5318 = vmax.f32 %v5253, 0.0
        %v5319 = vld [vmem:[%s964] sm:$0xff]
        %v5320 = vld [vmem:[%s964 + $0x8] sm:$0xff]
        %v5321 = vld [vmem:[%s964 + $0x10] sm:$0xff]
        %v5322 = vld [vmem:[%s964 + $0x18] sm:$0xff]
        %v5323 = vld [vmem:[%s964 + $0x20] sm:$0xff]
        %v5324 = vld [vmem:[%s964 + $0x28] sm:$0xff]
        %v5325 = vld [vmem:[%s964 + $0x30] sm:$0xff]
        %v5326 = vld [vmem:[%s964 + $0x38] sm:$0xff]
        %v5327 = vld [vmem:[%s964 + $0x40] sm:$0xff]
        %v5328 = vld [vmem:[%s964 + $0x48] sm:$0xff]
        %v5329 = vld [vmem:[%s964 + $0x50] sm:$0xff]
        %v5330 = vld [vmem:[%s964 + $0x58] sm:$0xff]
        %v5331 = vld [vmem:[%s964 + $0x60] sm:$0xff]
        %v5332 = vld [vmem:[%s964 + $0x68] sm:$0xff]
        %v5333 = vld [vmem:[%s964 + $0x70] sm:$0xff]
        %v5334 = vld [vmem:[%s964 + $0x78] sm:$0xff]
        %v5335 = vld [vmem:[%s964 + $0x80] sm:$0xff]
        %v5336 = vld [vmem:[%s964 + $0x88] sm:$0xff]
        %v5337 = vld [vmem:[%s964 + $0x90] sm:$0xff]
        %v5338 = vld [vmem:[%s964 + $0x98] sm:$0xff]
        %v5339 = vld [vmem:[%s964 + $0xa0] sm:$0xff]
        %v5340 = vld [vmem:[%s964 + $0xa8] sm:$0xff]
        %v5341 = vld [vmem:[%s964 + $0xb0] sm:$0xff]
        %v5342 = vld [vmem:[%s964 + $0xb8] sm:$0xff]
        %v5343 = vld [vmem:[%s964 + $0xc0] sm:$0xff]
        %v5344 = vld [vmem:[%s964 + $0xc8] sm:$0xff]
        %v5345 = vld [vmem:[%s964 + $0xd0] sm:$0xff]
        %v5346 = vld [vmem:[%s964 + $0xd8] sm:$0xff]
        %v5347 = vld [vmem:[%s964 + $0xe0] sm:$0xff]
        %v5348 = vld [vmem:[%s964 + $0xe8] sm:$0xff]
        %v5349 = vld [vmem:[%s964 + $0xf0] sm:$0xff]
        %v5350 = vld [vmem:[%s964 + $0xf8] sm:$0xff]
        %v5351 = vld [vmem:[%s964 + $0x100] sm:$0xff]
        %v5352 = vld [vmem:[%s964 + $0x108] sm:$0xff]
        %v5353 = vld [vmem:[%s964 + $0x110] sm:$0xff]
        %v5354 = vld [vmem:[%s964 + $0x118] sm:$0xff]
        %v5355 = vld [vmem:[%s964 + $0x120] sm:$0xff]
        %v5356 = vld [vmem:[%s964 + $0x128] sm:$0xff]
        %v5357 = vld [vmem:[%s964 + $0x130] sm:$0xff]
        %v5358 = vld [vmem:[%s964 + $0x138] sm:$0xff]
        %v5359 = vld [vmem:[%s964 + $0x140] sm:$0xff]
        %v5360 = vld [vmem:[%s964 + $0x148] sm:$0xff]
        %v5361 = vld [vmem:[%s964 + $0x150] sm:$0xff]
        %v5362 = vld [vmem:[%s964 + $0x158] sm:$0xff]
        %v5363 = vld [vmem:[%s964 + $0x160] sm:$0xff]
        %v5364 = vld [vmem:[%s964 + $0x168] sm:$0xff]
        %v5365 = vld [vmem:[%s964 + $0x170] sm:$0xff]
        %v5366 = vld [vmem:[%s964 + $0x178] sm:$0xff]
        %v5367 = vld [vmem:[%s964 + $0x180] sm:$0xff]
        %v5368 = vld [vmem:[%s964 + $0x188] sm:$0xff]
        %v5369 = vld [vmem:[%s964 + $0x190] sm:$0xff]
        %v5370 = vld [vmem:[%s964 + $0x198] sm:$0xff]
        %v5371 = vld [vmem:[%s964 + $0x1a0] sm:$0xff]
        %v5372 = vld [vmem:[%s964 + $0x1a8] sm:$0xff]
        %v5373 = vld [vmem:[%s964 + $0x1b0] sm:$0xff]
        %v5374 = vld [vmem:[%s964 + $0x1b8] sm:$0xff]
        %v5375 = vld [vmem:[%s964 + $0x1c0] sm:$0xff]
        %v5376 = vld [vmem:[%s964 + $0x1c8] sm:$0xff]
        %v5377 = vld [vmem:[%s964 + $0x1d0] sm:$0xff]
        %v5378 = vld [vmem:[%s964 + $0x1d8] sm:$0xff]
        %v5379 = vld [vmem:[%s964 + $0x1e0] sm:$0xff]
        %v5380 = vld [vmem:[%s964 + $0x1e8] sm:$0xff]
        %v5381 = vld [vmem:[%s964 + $0x1f0] sm:$0xff]
        %v5382 = vld [vmem:[%s964 + $0x1f8] sm:$0xff]
        %v5383 = vmul.f32 %v5255, %v5319
        %v5384 = vmul.f32 %v5256, %v5320
        %v5385 = vmul.f32 %v5257, %v5321
        %v5386 = vmul.f32 %v5258, %v5322
        %v5387 = vmul.f32 %v5259, %v5323
        %v5388 = vmul.f32 %v5260, %v5324
        %v5389 = vmul.f32 %v5261, %v5325
        %v5390 = vmul.f32 %v5262, %v5326
        %v5391 = vmul.f32 %v5263, %v5327
        %v5392 = vmul.f32 %v5264, %v5328
        %v5393 = vmul.f32 %v5265, %v5329
        %v5394 = vmul.f32 %v5266, %v5330
        %v5395 = vmul.f32 %v5267, %v5331
        %v5396 = vmul.f32 %v5268, %v5332
        %v5397 = vmul.f32 %v5269, %v5333
        %v5398 = vmul.f32 %v5270, %v5334
        %v5399 = vmul.f32 %v5271, %v5335
        %v5400 = vmul.f32 %v5272, %v5336
        %v5401 = vmul.f32 %v5273, %v5337
        %v5402 = vmul.f32 %v5274, %v5338
        %v5403 = vmul.f32 %v5275, %v5339
        %v5404 = vmul.f32 %v5276, %v5340
        %v5405 = vmul.f32 %v5277, %v5341
        %v5406 = vmul.f32 %v5278, %v5342
        %v5407 = vmul.f32 %v5279, %v5343
        %v5408 = vmul.f32 %v5280, %v5344
        %v5409 = vmul.f32 %v5281, %v5345
        %v5410 = vmul.f32 %v5282, %v5346
        %v5411 = vmul.f32 %v5283, %v5347
        %v5412 = vmul.f32 %v5284, %v5348
        %v5413 = vmul.f32 %v5285, %v5349
        %v5414 = vmul.f32 %v5286, %v5350
        %v5415 = vmul.f32 %v5287, %v5351
        %v5416 = vmul.f32 %v5288, %v5352
        %v5417 = vmul.f32 %v5289, %v5353
        %v5418 = vmul.f32 %v5290, %v5354
        %v5419 = vmul.f32 %v5291, %v5355
        %v5420 = vmul.f32 %v5292, %v5356
        %v5421 = vmul.f32 %v5293, %v5357
        %v5422 = vmul.f32 %v5294, %v5358
        %v5423 = vmul.f32 %v5295, %v5359
        %v5424 = vmul.f32 %v5296, %v5360
        %v5425 = vmul.f32 %v5297, %v5361
        %v5426 = vmul.f32 %v5298, %v5362
        %v5427 = vmul.f32 %v5299, %v5363
        %v5428 = vmul.f32 %v5300, %v5364
        %v5429 = vmul.f32 %v5301, %v5365
        %v5430 = vmul.f32 %v5302, %v5366
        %v5431 = vmul.f32 %v5303, %v5367
        %v5432 = vmul.f32 %v5304, %v5368
        %v5433 = vmul.f32 %v5305, %v5369
        %v5434 = vmul.f32 %v5306, %v5370
        %v5435 = vmul.f32 %v5307, %v5371
        %v5436 = vmul.f32 %v5308, %v5372
        %v5437 = vmul.f32 %v5309, %v5373
        %v5438 = vmul.f32 %v5310, %v5374
        %v5439 = vmul.f32 %v5311, %v5375
        %v5440 = vmul.f32 %v5312, %v5376
        %v5441 = vmul.f32 %v5313, %v5377
        %v5442 = vmul.f32 %v5314, %v5378
        %v5443 = vmul.f32 %v5315, %v5379
        %v5444 = vmul.f32 %v5316, %v5380
        %v5445 = vmul.f32 %v5317, %v5381
        %v5446 = vmul.f32 %v5318, %v5382
        %v5447 = vsel %vm4034, %v5383, -inf
        %v5448 = vrot.slane %v5447, 4
        %v5449 = vmax.f32 %v5447, %v5448
        %v5450 = vrot.slane %v5449, 2
        %v5451 = vmax.f32 %v5449, %v5450
        %v5452 = vrot.slane %v5451, 1
        %v5453 = vmax.f32 %v5451, %v5452
        %v5454 = vsel %vm4034, %v5384, -inf
        %v5455 = vrot.slane %v5454, 4
        %v5456 = vmax.f32 %v5454, %v5455
        %v5457 = vrot.slane %v5456, 2
        %v5458 = vmax.f32 %v5456, %v5457
        %v5459 = vrot.slane %v5458, 1
        %v5460 = vmax.f32 %v5458, %v5459
        %v5461 = vsel %vm4034, %v5385, -inf
        %v5462 = vrot.slane %v5461, 4
        %v5463 = vmax.f32 %v5461, %v5462
        %v5464 = vrot.slane %v5463, 2
        %v5465 = vmax.f32 %v5463, %v5464
        %v5466 = vrot.slane %v5465, 1
        %v5467 = vmax.f32 %v5465, %v5466
        %v5468 = vsel %vm4034, %v5386, -inf
        %v5469 = vrot.slane %v5468, 4
        %v5470 = vmax.f32 %v5468, %v5469
        %v5471 = vrot.slane %v5470, 2
        %v5472 = vmax.f32 %v5470, %v5471
        %v5473 = vrot.slane %v5472, 1
        %v5474 = vmax.f32 %v5472, %v5473
        %v5475 = vsel %vm4034, %v5387, -inf
        %v5476 = vrot.slane %v5475, 4
        %v5477 = vmax.f32 %v5475, %v5476
        %v5478 = vrot.slane %v5477, 2
        %v5479 = vmax.f32 %v5477, %v5478
        %v5480 = vrot.slane %v5479, 1
        %v5481 = vmax.f32 %v5479, %v5480
        %v5482 = vsel %vm4034, %v5388, -inf
        %v5483 = vrot.slane %v5482, 4
        %v5484 = vmax.f32 %v5482, %v5483
        %v5485 = vrot.slane %v5484, 2
        %v5486 = vmax.f32 %v5484, %v5485
        %v5487 = vrot.slane %v5486, 1
        %v5488 = vmax.f32 %v5486, %v5487
        %v5489 = vsel %vm4034, %v5389, -inf
        %v5490 = vrot.slane %v5489, 4
        %v5491 = vmax.f32 %v5489, %v5490
        %v5492 = vrot.slane %v5491, 2
        %v5493 = vmax.f32 %v5491, %v5492
        %v5494 = vrot.slane %v5493, 1
        %v5495 = vmax.f32 %v5493, %v5494
        %v5496 = vsel %vm4034, %v5390, -inf
        %v5497 = vrot.slane %v5496, 4
        %v5498 = vmax.f32 %v5496, %v5497
        %v5499 = vrot.slane %v5498, 2
        %v5500 = vmax.f32 %v5498, %v5499
        %v5501 = vrot.slane %v5500, 1
        %v5502 = vmax.f32 %v5500, %v5501
        %v5503 = vsel %vm4034, %v5391, -inf
        %v5504 = vrot.slane %v5503, 4
        %v5505 = vmax.f32 %v5503, %v5504
        %v5506 = vrot.slane %v5505, 2
        %v5507 = vmax.f32 %v5505, %v5506
        %v5508 = vrot.slane %v5507, 1
        %v5509 = vmax.f32 %v5507, %v5508
        %v5510 = vsel %vm4034, %v5392, -inf
        %v5511 = vrot.slane %v5510, 4
        %v5512 = vmax.f32 %v5510, %v5511
        %v5513 = vrot.slane %v5512, 2
        %v5514 = vmax.f32 %v5512, %v5513
        %v5515 = vrot.slane %v5514, 1
        %v5516 = vmax.f32 %v5514, %v5515
        %v5517 = vsel %vm4034, %v5393, -inf
        %v5518 = vrot.slane %v5517, 4
        %v5519 = vmax.f32 %v5517, %v5518
        %v5520 = vrot.slane %v5519, 2
        %v5521 = vmax.f32 %v5519, %v5520
        %v5522 = vrot.slane %v5521, 1
        %v5523 = vmax.f32 %v5521, %v5522
        %v5524 = vsel %vm4034, %v5394, -inf
        %v5525 = vrot.slane %v5524, 4
        %v5526 = vmax.f32 %v5524, %v5525
        %v5527 = vrot.slane %v5526, 2
        %v5528 = vmax.f32 %v5526, %v5527
        %v5529 = vrot.slane %v5528, 1
        %v5530 = vmax.f32 %v5528, %v5529
        %v5531 = vsel %vm4034, %v5395, -inf
        %v5532 = vrot.slane %v5531, 4
        %v5533 = vmax.f32 %v5531, %v5532
        %v5534 = vrot.slane %v5533, 2
        %v5535 = vmax.f32 %v5533, %v5534
        %v5536 = vrot.slane %v5535, 1
        %v5537 = vmax.f32 %v5535, %v5536
        %v5538 = vsel %vm4034, %v5396, -inf
        %v5539 = vrot.slane %v5538, 4
        %v5540 = vmax.f32 %v5538, %v5539
        %v5541 = vrot.slane %v5540, 2
        %v5542 = vmax.f32 %v5540, %v5541
        %v5543 = vrot.slane %v5542, 1
        %v5544 = vmax.f32 %v5542, %v5543
        %v5545 = vsel %vm4034, %v5397, -inf
        %v5546 = vrot.slane %v5545, 4
        %v5547 = vmax.f32 %v5545, %v5546
        %v5548 = vrot.slane %v5547, 2
        %v5549 = vmax.f32 %v5547, %v5548
        %v5550 = vrot.slane %v5549, 1
        %v5551 = vmax.f32 %v5549, %v5550
        %v5552 = vsel %vm4034, %v5398, -inf
        %v5553 = vrot.slane %v5552, 4
        %v5554 = vmax.f32 %v5552, %v5553
        %v5555 = vrot.slane %v5554, 2
        %v5556 = vmax.f32 %v5554, %v5555
        %v5557 = vrot.slane %v5556, 1
        %v5558 = vmax.f32 %v5556, %v5557
        %v5559 = vsel %vm4034, %v5399, -inf
        %v5560 = vrot.slane %v5559, 4
        %v5561 = vmax.f32 %v5559, %v5560
        %v5562 = vrot.slane %v5561, 2
        %v5563 = vmax.f32 %v5561, %v5562
        %v5564 = vrot.slane %v5563, 1
        %v5565 = vmax.f32 %v5563, %v5564
        %v5566 = vsel %vm4034, %v5400, -inf
        %v5567 = vrot.slane %v5566, 4
        %v5568 = vmax.f32 %v5566, %v5567
        %v5569 = vrot.slane %v5568, 2
        %v5570 = vmax.f32 %v5568, %v5569
        %v5571 = vrot.slane %v5570, 1
        %v5572 = vmax.f32 %v5570, %v5571
        %v5573 = vsel %vm4034, %v5401, -inf
        %v5574 = vrot.slane %v5573, 4
        %v5575 = vmax.f32 %v5573, %v5574
        %v5576 = vrot.slane %v5575, 2
        %v5577 = vmax.f32 %v5575, %v5576
        %v5578 = vrot.slane %v5577, 1
        %v5579 = vmax.f32 %v5577, %v5578
        %v5580 = vsel %vm4034, %v5402, -inf
        %v5581 = vrot.slane %v5580, 4
        %v5582 = vmax.f32 %v5580, %v5581
        %v5583 = vrot.slane %v5582, 2
        %v5584 = vmax.f32 %v5582, %v5583
        %v5585 = vrot.slane %v5584, 1
        %v5586 = vmax.f32 %v5584, %v5585
        %v5587 = vsel %vm4034, %v5403, -inf
        %v5588 = vrot.slane %v5587, 4
        %v5589 = vmax.f32 %v5587, %v5588
        %v5590 = vrot.slane %v5589, 2
        %v5591 = vmax.f32 %v5589, %v5590
        %v5592 = vrot.slane %v5591, 1
        %v5593 = vmax.f32 %v5591, %v5592
        %v5594 = vsel %vm4034, %v5404, -inf
        %v5595 = vrot.slane %v5594, 4
        %v5596 = vmax.f32 %v5594, %v5595
        %v5597 = vrot.slane %v5596, 2
        %v5598 = vmax.f32 %v5596, %v5597
        %v5599 = vrot.slane %v5598, 1
        %v5600 = vmax.f32 %v5598, %v5599
        %v5601 = vsel %vm4034, %v5405, -inf
        %v5602 = vrot.slane %v5601, 4
        %v5603 = vmax.f32 %v5601, %v5602
        %v5604 = vrot.slane %v5603, 2
        %v5605 = vmax.f32 %v5603, %v5604
        %v5606 = vrot.slane %v5605, 1
        %v5607 = vmax.f32 %v5605, %v5606
        %v5608 = vsel %vm4034, %v5406, -inf
        %v5609 = vrot.slane %v5608, 4
        %v5610 = vmax.f32 %v5608, %v5609
        %v5611 = vrot.slane %v5610, 2
        %v5612 = vmax.f32 %v5610, %v5611
        %v5613 = vrot.slane %v5612, 1
        %v5614 = vmax.f32 %v5612, %v5613
        %v5615 = vsel %vm4034, %v5407, -inf
        %v5616 = vrot.slane %v5615, 4
        %v5617 = vmax.f32 %v5615, %v5616
        %v5618 = vrot.slane %v5617, 2
        %v5619 = vmax.f32 %v5617, %v5618
        %v5620 = vrot.slane %v5619, 1
        %v5621 = vmax.f32 %v5619, %v5620
        %v5622 = vsel %vm4034, %v5408, -inf
        %v5623 = vrot.slane %v5622, 4
        %v5624 = vmax.f32 %v5622, %v5623
        %v5625 = vrot.slane %v5624, 2
        %v5626 = vmax.f32 %v5624, %v5625
        %v5627 = vrot.slane %v5626, 1
        %v5628 = vmax.f32 %v5626, %v5627
        %v5629 = vsel %vm4034, %v5409, -inf
        %v5630 = vrot.slane %v5629, 4
        %v5631 = vmax.f32 %v5629, %v5630
        %v5632 = vrot.slane %v5631, 2
        %v5633 = vmax.f32 %v5631, %v5632
        %v5634 = vrot.slane %v5633, 1
        %v5635 = vmax.f32 %v5633, %v5634
        %v5636 = vsel %vm4034, %v5410, -inf
        %v5637 = vrot.slane %v5636, 4
        %v5638 = vmax.f32 %v5636, %v5637
        %v5639 = vrot.slane %v5638, 2
        %v5640 = vmax.f32 %v5638, %v5639
        %v5641 = vrot.slane %v5640, 1
        %v5642 = vmax.f32 %v5640, %v5641
        %v5643 = vsel %vm4034, %v5411, -inf
        %v5644 = vrot.slane %v5643, 4
        %v5645 = vmax.f32 %v5643, %v5644
        %v5646 = vrot.slane %v5645, 2
        %v5647 = vmax.f32 %v5645, %v5646
        %v5648 = vrot.slane %v5647, 1
        %v5649 = vmax.f32 %v5647, %v5648
        %v5650 = vsel %vm4034, %v5412, -inf
        %v5651 = vrot.slane %v5650, 4
        %v5652 = vmax.f32 %v5650, %v5651
        %v5653 = vrot.slane %v5652, 2
        %v5654 = vmax.f32 %v5652, %v5653
        %v5655 = vrot.slane %v5654, 1
        %v5656 = vmax.f32 %v5654, %v5655
        %v5657 = vsel %vm4034, %v5413, -inf
        %v5658 = vrot.slane %v5657, 4
        %v5659 = vmax.f32 %v5657, %v5658
        %v5660 = vrot.slane %v5659, 2
        %v5661 = vmax.f32 %v5659, %v5660
        %v5662 = vrot.slane %v5661, 1
        %v5663 = vmax.f32 %v5661, %v5662
        %v5664 = vsel %vm4034, %v5414, -inf
        %v5665 = vrot.slane %v5664, 4
        %v5666 = vmax.f32 %v5664, %v5665
        %v5667 = vrot.slane %v5666, 2
        %v5668 = vmax.f32 %v5666, %v5667
        %v5669 = vrot.slane %v5668, 1
        %v5670 = vmax.f32 %v5668, %v5669
        %v5671 = vsel %vm4034, %v5415, -inf
        %v5672 = vrot.slane %v5671, 4
        %v5673 = vmax.f32 %v5671, %v5672
        %v5674 = vrot.slane %v5673, 2
        %v5675 = vmax.f32 %v5673, %v5674
        %v5676 = vrot.slane %v5675, 1
        %v5677 = vmax.f32 %v5675, %v5676
        %v5678 = vsel %vm4034, %v5416, -inf
        %v5679 = vrot.slane %v5678, 4
        %v5680 = vmax.f32 %v5678, %v5679
        %v5681 = vrot.slane %v5680, 2
        %v5682 = vmax.f32 %v5680, %v5681
        %v5683 = vrot.slane %v5682, 1
        %v5684 = vmax.f32 %v5682, %v5683
        %v5685 = vsel %vm4034, %v5417, -inf
        %v5686 = vrot.slane %v5685, 4
        %v5687 = vmax.f32 %v5685, %v5686
        %v5688 = vrot.slane %v5687, 2
        %v5689 = vmax.f32 %v5687, %v5688
        %v5690 = vrot.slane %v5689, 1
        %v5691 = vmax.f32 %v5689, %v5690
        %v5692 = vsel %vm4034, %v5418, -inf
        %v5693 = vrot.slane %v5692, 4
        %v5694 = vmax.f32 %v5692, %v5693
        %v5695 = vrot.slane %v5694, 2
        %v5696 = vmax.f32 %v5694, %v5695
        %v5697 = vrot.slane %v5696, 1
        %v5698 = vmax.f32 %v5696, %v5697
        %v5699 = vsel %vm4034, %v5419, -inf
        %v5700 = vrot.slane %v5699, 4
        %v5701 = vmax.f32 %v5699, %v5700
        %v5702 = vrot.slane %v5701, 2
        %v5703 = vmax.f32 %v5701, %v5702
        %v5704 = vrot.slane %v5703, 1
        %v5705 = vmax.f32 %v5703, %v5704
        %v5706 = vsel %vm4034, %v5420, -inf
        %v5707 = vrot.slane %v5706, 4
        %v5708 = vmax.f32 %v5706, %v5707
        %v5709 = vrot.slane %v5708, 2
        %v5710 = vmax.f32 %v5708, %v5709
        %v5711 = vrot.slane %v5710, 1
        %v5712 = vmax.f32 %v5710, %v5711
        %v5713 = vsel %vm4034, %v5421, -inf
        %v5714 = vrot.slane %v5713, 4
        %v5715 = vmax.f32 %v5713, %v5714
        %v5716 = vrot.slane %v5715, 2
        %v5717 = vmax.f32 %v5715, %v5716
        %v5718 = vrot.slane %v5717, 1
        %v5719 = vmax.f32 %v5717, %v5718
        %v5720 = vsel %vm4034, %v5422, -inf
        %v5721 = vrot.slane %v5720, 4
        %v5722 = vmax.f32 %v5720, %v5721
        %v5723 = vrot.slane %v5722, 2
        %v5724 = vmax.f32 %v5722, %v5723
        %v5725 = vrot.slane %v5724, 1
        %v5726 = vmax.f32 %v5724, %v5725
        %v5727 = vsel %vm4034, %v5423, -inf
        %v5728 = vrot.slane %v5727, 4
        %v5729 = vmax.f32 %v5727, %v5728
        %v5730 = vrot.slane %v5729, 2
        %v5731 = vmax.f32 %v5729, %v5730
        %v5732 = vrot.slane %v5731, 1
        %v5733 = vmax.f32 %v5731, %v5732
        %v5734 = vsel %vm4034, %v5424, -inf
        %v5735 = vrot.slane %v5734, 4
        %v5736 = vmax.f32 %v5734, %v5735
        %v5737 = vrot.slane %v5736, 2
        %v5738 = vmax.f32 %v5736, %v5737
        %v5739 = vrot.slane %v5738, 1
        %v5740 = vmax.f32 %v5738, %v5739
        %v5741 = vsel %vm4034, %v5425, -inf
        %v5742 = vrot.slane %v5741, 4
        %v5743 = vmax.f32 %v5741, %v5742
        %v5744 = vrot.slane %v5743, 2
        %v5745 = vmax.f32 %v5743, %v5744
        %v5746 = vrot.slane %v5745, 1
        %v5747 = vmax.f32 %v5745, %v5746
        %v5748 = vsel %vm4034, %v5426, -inf
        %v5749 = vrot.slane %v5748, 4
        %v5750 = vmax.f32 %v5748, %v5749
        %v5751 = vrot.slane %v5750, 2
        %v5752 = vmax.f32 %v5750, %v5751
        %v5753 = vrot.slane %v5752, 1
        %v5754 = vmax.f32 %v5752, %v5753
        %v5755 = vsel %vm4034, %v5427, -inf
        %v5756 = vrot.slane %v5755, 4
        %v5757 = vmax.f32 %v5755, %v5756
        %v5758 = vrot.slane %v5757, 2
        %v5759 = vmax.f32 %v5757, %v5758
        %v5760 = vrot.slane %v5759, 1
        %v5761 = vmax.f32 %v5759, %v5760
        %v5762 = vsel %vm4034, %v5428, -inf
        %v5763 = vrot.slane %v5762, 4
        %v5764 = vmax.f32 %v5762, %v5763
        %v5765 = vrot.slane %v5764, 2
        %v5766 = vmax.f32 %v5764, %v5765
        %v5767 = vrot.slane %v5766, 1
        %v5768 = vmax.f32 %v5766, %v5767
        %v5769 = vsel %vm4034, %v5429, -inf
        %v5770 = vrot.slane %v5769, 4
        %v5771 = vmax.f32 %v5769, %v5770
        %v5772 = vrot.slane %v5771, 2
        %v5773 = vmax.f32 %v5771, %v5772
        %v5774 = vrot.slane %v5773, 1
        %v5775 = vmax.f32 %v5773, %v5774
        %v5776 = vsel %vm4034, %v5430, -inf
        %v5777 = vrot.slane %v5776, 4
        %v5778 = vmax.f32 %v5776, %v5777
        %v5779 = vrot.slane %v5778, 2
        %v5780 = vmax.f32 %v5778, %v5779
        %v5781 = vrot.slane %v5780, 1
        %v5782 = vmax.f32 %v5780, %v5781
        %v5783 = vsel %vm4034, %v5431, -inf
        %v5784 = vrot.slane %v5783, 4
        %v5785 = vmax.f32 %v5783, %v5784
        %v5786 = vrot.slane %v5785, 2
        %v5787 = vmax.f32 %v5785, %v5786
        %v5788 = vrot.slane %v5787, 1
        %v5789 = vmax.f32 %v5787, %v5788
        %v5790 = vsel %vm4034, %v5432, -inf
        %v5791 = vrot.slane %v5790, 4
        %v5792 = vmax.f32 %v5790, %v5791
        %v5793 = vrot.slane %v5792, 2
        %v5794 = vmax.f32 %v5792, %v5793
        %v5795 = vrot.slane %v5794, 1
        %v5796 = vmax.f32 %v5794, %v5795
        %v5797 = vsel %vm4034, %v5433, -inf
        %v5798 = vrot.slane %v5797, 4
        %v5799 = vmax.f32 %v5797, %v5798
        %v5800 = vrot.slane %v5799, 2
        %v5801 = vmax.f32 %v5799, %v5800
        %v5802 = vrot.slane %v5801, 1
        %v5803 = vmax.f32 %v5801, %v5802
        %v5804 = vsel %vm4034, %v5434, -inf
        %v5805 = vrot.slane %v5804, 4
        %v5806 = vmax.f32 %v5804, %v5805
        %v5807 = vrot.slane %v5806, 2
        %v5808 = vmax.f32 %v5806, %v5807
        %v5809 = vrot.slane %v5808, 1
        %v5810 = vmax.f32 %v5808, %v5809
        %v5811 = vsel %vm4034, %v5435, -inf
        %v5812 = vrot.slane %v5811, 4
        %v5813 = vmax.f32 %v5811, %v5812
        %v5814 = vrot.slane %v5813, 2
        %v5815 = vmax.f32 %v5813, %v5814
        %v5816 = vrot.slane %v5815, 1
        %v5817 = vmax.f32 %v5815, %v5816
        %v5818 = vsel %vm4034, %v5436, -inf
        %v5819 = vrot.slane %v5818, 4
        %v5820 = vmax.f32 %v5818, %v5819
        %v5821 = vrot.slane %v5820, 2
        %v5822 = vmax.f32 %v5820, %v5821
        %v5823 = vrot.slane %v5822, 1
        %v5824 = vmax.f32 %v5822, %v5823
        %v5825 = vsel %vm4034, %v5437, -inf
        %v5826 = vrot.slane %v5825, 4
        %v5827 = vmax.f32 %v5825, %v5826
        %v5828 = vrot.slane %v5827, 2
        %v5829 = vmax.f32 %v5827, %v5828
        %v5830 = vrot.slane %v5829, 1
        %v5831 = vmax.f32 %v5829, %v5830
        %v5832 = vsel %vm4034, %v5438, -inf
        %v5833 = vrot.slane %v5832, 4
        %v5834 = vmax.f32 %v5832, %v5833
        %v5835 = vrot.slane %v5834, 2
        %v5836 = vmax.f32 %v5834, %v5835
        %v5837 = vrot.slane %v5836, 1
        %v5838 = vmax.f32 %v5836, %v5837
        %v5839 = vsel %vm4034, %v5439, -inf
        %v5840 = vrot.slane %v5839, 4
        %v5841 = vmax.f32 %v5839, %v5840
        %v5842 = vrot.slane %v5841, 2
        %v5843 = vmax.f32 %v5841, %v5842
        %v5844 = vrot.slane %v5843, 1
        %v5845 = vmax.f32 %v5843, %v5844
        %v5846 = vsel %vm4034, %v5440, -inf
        %v5847 = vrot.slane %v5846, 4
        %v5848 = vmax.f32 %v5846, %v5847
        %v5849 = vrot.slane %v5848, 2
        %v5850 = vmax.f32 %v5848, %v5849
        %v5851 = vrot.slane %v5850, 1
        %v5852 = vmax.f32 %v5850, %v5851
        %v5853 = vsel %vm4034, %v5441, -inf
        %v5854 = vrot.slane %v5853, 4
        %v5855 = vmax.f32 %v5853, %v5854
        %v5856 = vrot.slane %v5855, 2
        %v5857 = vmax.f32 %v5855, %v5856
        %v5858 = vrot.slane %v5857, 1
        %v5859 = vmax.f32 %v5857, %v5858
        %v5860 = vsel %vm4034, %v5442, -inf
        %v5861 = vrot.slane %v5860, 4
        %v5862 = vmax.f32 %v5860, %v5861
        %v5863 = vrot.slane %v5862, 2
        %v5864 = vmax.f32 %v5862, %v5863
        %v5865 = vrot.slane %v5864, 1
        %v5866 = vmax.f32 %v5864, %v5865
        %v5867 = vsel %vm4034, %v5443, -inf
        %v5868 = vrot.slane %v5867, 4
        %v5869 = vmax.f32 %v5867, %v5868
        %v5870 = vrot.slane %v5869, 2
        %v5871 = vmax.f32 %v5869, %v5870
        %v5872 = vrot.slane %v5871, 1
        %v5873 = vmax.f32 %v5871, %v5872
        %v5874 = vsel %vm4034, %v5444, -inf
        %v5875 = vrot.slane %v5874, 4
        %v5876 = vmax.f32 %v5874, %v5875
        %v5877 = vrot.slane %v5876, 2
        %v5878 = vmax.f32 %v5876, %v5877
        %v5879 = vrot.slane %v5878, 1
        %v5880 = vmax.f32 %v5878, %v5879
        %v5881 = vsel %vm4034, %v5445, -inf
        %v5882 = vrot.slane %v5881, 4
        %v5883 = vmax.f32 %v5881, %v5882
        %v5884 = vrot.slane %v5883, 2
        %v5885 = vmax.f32 %v5883, %v5884
        %v5886 = vrot.slane %v5885, 1
        %v5887 = vmax.f32 %v5885, %v5886
        %v5888 = vsel %vm4034, %v5446, -inf
        %v5889 = vrot.slane %v5888, 4
        %v5890 = vmax.f32 %v5888, %v5889
        %v5891 = vrot.slane %v5890, 2
        %v5892 = vmax.f32 %v5890, %v5891
        %v5893 = vrot.slane %v5892, 1
        %v5894 = vmax.f32 %v5892, %v5893
        %5895 = vst.msk [vmem:[#allocation2] sm:$0xff] %vm4034, %v3044
        %5896 = vst.msk [vmem:[#allocation2 + $0x8] sm:$0xff] %vm4034, %v3045
        %5897 = vst.msk [vmem:[#allocation2 + $0x10] sm:$0xff] %vm4034, %v3046
        %5898 = vst.msk [vmem:[#allocation2 + $0x18] sm:$0xff] %vm4034, %v3047
        %5899 = vst.msk [vmem:[#allocation2 + $0x20] sm:$0xff] %vm4034, %v3048
        %5900 = vst.msk [vmem:[#allocation2 + $0x28] sm:$0xff] %vm4034, %v3049
        %5901 = vst.msk [vmem:[#allocation2 + $0x30] sm:$0xff] %vm4034, %v3050
        %5902 = vst.msk [vmem:[#allocation2 + $0x38] sm:$0xff] %vm4034, %v3051
        %5911 = vrot.lane.b32.xlu0 %v1966, 32
        %v5912 = vpop.permute.xlu0 %5911
        %5913 = vrot.lane.b32.xlu0 %v1967, 32
        %v5914 = vpop.permute.xlu0 %5913
        %5915 = vrot.lane.b32.xlu0 %v1968, 32
        %v5916 = vpop.permute.xlu0 %5915
        %5917 = vrot.lane.b32.xlu0 %v1969, 32
        %v5918 = vpop.permute.xlu0 %5917
        %5919 = vrot.lane.b32.xlu0 %v1970, 32
        %v5920 = vpop.permute.xlu0 %5919
        %5921 = vrot.lane.b32.xlu0 %v1971, 32
        %v5922 = vpop.permute.xlu0 %5921
        %5923 = vrot.lane.b32.xlu0 %v1972, 32
        %v5924 = vpop.permute.xlu0 %5923
        %5925 = vrot.lane.b32.xlu0 %v1973, 32
        %v5926 = vpop.permute.xlu0 %5925
        %vm5935 = vcmask 523520
        %5936 = vst.msk [vmem:[#allocation2] sm:$0xff] %vm5935, %v5912
        %5937 = vst.msk [vmem:[#allocation2 + $0x8] sm:$0xff] %vm5935, %v5914
        %5938 = vst.msk [vmem:[#allocation2 + $0x10] sm:$0xff] %vm5935, %v5916
        %5939 = vst.msk [vmem:[#allocation2 + $0x18] sm:$0xff] %vm5935, %v5918
        %5940 = vst.msk [vmem:[#allocation2 + $0x20] sm:$0xff] %vm5935, %v5920
        %5941 = vst.msk [vmem:[#allocation2 + $0x28] sm:$0xff] %vm5935, %v5922
        %5942 = vst.msk [vmem:[#allocation2 + $0x30] sm:$0xff] %vm5935, %v5924
        %5943 = vst.msk [vmem:[#allocation2 + $0x38] sm:$0xff] %vm5935, %v5926
        %vm6008 = vcmask 1041409
        %v6009 = vsel %vm6008, %v4505, %v4498
        %vm6010 = vcmask 1042434
        %v6011 = vsel %vm6010, %v4512, %v6009
        %vm6012 = vcmask 1043459
        %v6013 = vsel %vm6012, %v4519, %v6011
        %vm6014 = vcmask 1044484
        %v6015 = vsel %vm6014, %v4526, %v6013
        %vm6016 = vcmask 1045509
        %v6017 = vsel %vm6016, %v4533, %v6015
        %vm6018 = vcmask 1046534
        %v6019 = vsel %vm6018, %v4540, %v6017
        %vm6020 = vcmask 1047559
        %v6021 = vsel %vm6020, %v4547, %v6019
        %v6022 = vsel %vm6008, %v4561, %v4554
        %v6023 = vsel %vm6010, %v4568, %v6022
        %v6024 = vsel %vm6012, %v4575, %v6023
        %v6025 = vsel %vm6014, %v4582, %v6024
        %v6026 = vsel %vm6016, %v4589, %v6025
        %v6027 = vsel %vm6018, %v4596, %v6026
        %v6028 = vsel %vm6020, %v4603, %v6027
        %v6029 = vsel %vm6008, %v4617, %v4610
        %v6030 = vsel %vm6010, %v4624, %v6029
        %v6031 = vsel %vm6012, %v4631, %v6030
        %v6032 = vsel %vm6014, %v4638, %v6031
        %v6033 = vsel %vm6016, %v4645, %v6032
        %v6034 = vsel %vm6018, %v4652, %v6033
        %v6035 = vsel %vm6020, %v4659, %v6034
        %v6036 = vsel %vm6008, %v4673, %v4666
        %v6037 = vsel %vm6010, %v4680, %v6036
        %v6038 = vsel %vm6012, %v4687, %v6037
        %v6039 = vsel %vm6014, %v4694, %v6038
        %v6040 = vsel %vm6016, %v4701, %v6039
        %v6041 = vsel %vm6018, %v4708, %v6040
        %v6042 = vsel %vm6020, %v4715, %v6041
        %v6043 = vsel %vm6008, %v4729, %v4722
        %v6044 = vsel %vm6010, %v4736, %v6043
        %v6045 = vsel %vm6012, %v4743, %v6044
        %v6046 = vsel %vm6014, %v4750, %v6045
        %v6047 = vsel %vm6016, %v4757, %v6046
        %v6048 = vsel %vm6018, %v4764, %v6047
        %v6049 = vsel %vm6020, %v4771, %v6048
        %v6050 = vsel %vm6008, %v4785, %v4778
        %v6051 = vsel %vm6010, %v4792, %v6050
        %v6052 = vsel %vm6012, %v4799, %v6051
        %v6053 = vsel %vm6014, %v4806, %v6052
        %v6054 = vsel %vm6016, %v4813, %v6053
        %v6055 = vsel %vm6018, %v4820, %v6054
        %v6056 = vsel %vm6020, %v4827, %v6055
        %v6057 = vsel %vm6008, %v4841, %v4834
        %v6058 = vsel %vm6010, %v4848, %v6057
        %v6059 = vsel %vm6012, %v4855, %v6058
        %v6060 = vsel %vm6014, %v4862, %v6059
        %v6061 = vsel %vm6016, %v4869, %v6060
        %v6062 = vsel %vm6018, %v4876, %v6061
        %v6063 = vsel %vm6020, %v4883, %v6062
        %v6064 = vsel %vm6008, %v4897, %v4890
        %v6065 = vsel %vm6010, %v4904, %v6064
        %v6066 = vsel %vm6012, %v4911, %v6065
        %v6067 = vsel %vm6014, %v4918, %v6066
        %v6068 = vsel %vm6016, %v4925, %v6067
        %v6069 = vsel %vm6018, %v4932, %v6068
        %v6070 = vsel %vm6020, %v4939, %v6069
        %6071 = vrot.lane.b32.xlu0 %v6021, 64
        %v6072 = vpop.permute.xlu0 %6071
        %6073 = vrot.lane.b32.xlu0 %v6028, 64
        %v6074 = vpop.permute.xlu0 %6073
        %6075 = vrot.lane.b32.xlu0 %v6035, 64
        %v6076 = vpop.permute.xlu0 %6075
        %6077 = vrot.lane.b32.xlu0 %v6042, 64
        %v6078 = vpop.permute.xlu0 %6077
        %6079 = vrot.lane.b32.xlu0 %v6049, 64
        %v6080 = vpop.permute.xlu0 %6079
        %6081 = vrot.lane.b32.xlu0 %v6056, 64
        %v6082 = vpop.permute.xlu0 %6081
        %6083 = vrot.lane.b32.xlu0 %v6063, 64
        %v6084 = vpop.permute.xlu0 %6083
        %6085 = vrot.lane.b32.xlu0 %v6070, 64
        %v6086 = vpop.permute.xlu0 %6085
        %vm6095 = vcmask 785920
        %6096 = vst.msk [vmem:[#allocation2] sm:$0xff] %vm6095, %v6072
        %6097 = vst.msk [vmem:[#allocation2 + $0x8] sm:$0xff] %vm6095, %v6074
        %6098 = vst.msk [vmem:[#allocation2 + $0x10] sm:$0xff] %vm6095, %v6076
        %6099 = vst.msk [vmem:[#allocation2 + $0x18] sm:$0xff] %vm6095, %v6078
        %6100 = vst.msk [vmem:[#allocation2 + $0x20] sm:$0xff] %vm6095, %v6080
        %6101 = vst.msk [vmem:[#allocation2 + $0x28] sm:$0xff] %vm6095, %v6082
        %6102 = vst.msk [vmem:[#allocation2 + $0x30] sm:$0xff] %vm6095, %v6084
        %6103 = vst.msk [vmem:[#allocation2 + $0x38] sm:$0xff] %vm6095, %v6086
        %v6168 = vsel %vm6008, %v5460, %v5453
        %v6169 = vsel %vm6010, %v5467, %v6168
        %v6170 = vsel %vm6012, %v5474, %v6169
        %v6171 = vsel %vm6014, %v5481, %v6170
        %v6172 = vsel %vm6016, %v5488, %v6171
        %v6173 = vsel %vm6018, %v5495, %v6172
        %v6174 = vsel %vm6020, %v5502, %v6173
        %v6175 = vsel %vm6008, %v5516, %v5509
        %v6176 = vsel %vm6010, %v5523, %v6175
        %v6177 = vsel %vm6012, %v5530, %v6176
        %v6178 = vsel %vm6014, %v5537, %v6177
        %v6179 = vsel %vm6016, %v5544, %v6178
        %v6180 = vsel %vm6018, %v5551, %v6179
        %v6181 = vsel %vm6020, %v5558, %v6180
        %v6182 = vsel %vm6008, %v5572, %v5565
        %v6183 = vsel %vm6010, %v5579, %v6182
        %v6184 = vsel %vm6012, %v5586, %v6183
        %v6185 = vsel %vm6014, %v5593, %v6184
        %v6186 = vsel %vm6016, %v5600, %v6185
        %v6187 = vsel %vm6018, %v5607, %v6186
        %v6188 = vsel %vm6020, %v5614, %v6187
        %v6189 = vsel %vm6008, %v5628, %v5621
        %v6190 = vsel %vm6010, %v5635, %v6189
        %v6191 = vsel %vm6012, %v5642, %v6190
        %v6192 = vsel %vm6014, %v5649, %v6191
        %v6193 = vsel %vm6016, %v5656, %v6192
        %v6194 = vsel %vm6018, %v5663, %v6193
        %v6195 = vsel %vm6020, %v5670, %v6194
        %v6196 = vsel %vm6008, %v5684, %v5677
        %v6197 = vsel %vm6010, %v5691, %v6196
        %v6198 = vsel %vm6012, %v5698, %v6197
        %v6199 = vsel %vm6014, %v5705, %v6198
        %v6200 = vsel %vm6016, %v5712, %v6199
        %v6201 = vsel %vm6018, %v5719, %v6200
        %v6202 = vsel %vm6020, %v5726, %v6201
        %v6203 = vsel %vm6008, %v5740, %v5733
        %v6204 = vsel %vm6010, %v5747, %v6203
        %v6205 = vsel %vm6012, %v5754, %v6204
        %v6206 = vsel %vm6014, %v5761, %v6205
        %v6207 = vsel %vm6016, %v5768, %v6206
        %v6208 = vsel %vm6018, %v5775, %v6207
        %v6209 = vsel %vm6020, %v5782, %v6208
        %v6210 = vsel %vm6008, %v5796, %v5789
        %v6211 = vsel %vm6010, %v5803, %v6210
        %v6212 = vsel %vm6012, %v5810, %v6211
        %v6213 = vsel %vm6014, %v5817, %v6212
        %v6214 = vsel %vm6016, %v5824, %v6213
        %v6215 = vsel %vm6018, %v5831, %v6214
        %v6216 = vsel %vm6020, %v5838, %v6215
        %v6217 = vsel %vm6008, %v5852, %v5845
        %v6218 = vsel %vm6010, %v5859, %v6217
        %v6219 = vsel %vm6012, %v5866, %v6218
        %v6220 = vsel %vm6014, %v5873, %v6219
        %v6221 = vsel %vm6016, %v5880, %v6220
        %v6222 = vsel %vm6018, %v5887, %v6221
        %v6223 = vsel %vm6020, %v5894, %v6222
        %6224 = vrot.lane.b32.xlu0 %v6174, 96
        %v6225 = vpop.permute.xlu0 %6224
        %6226 = vrot.lane.b32.xlu0 %v6181, 96
        %v6227 = vpop.permute.xlu0 %6226
        %6228 = vrot.lane.b32.xlu0 %v6188, 96
        %v6229 = vpop.permute.xlu0 %6228
        %6230 = vrot.lane.b32.xlu0 %v6195, 96
        %v6231 = vpop.permute.xlu0 %6230
        %6232 = vrot.lane.b32.xlu0 %v6202, 96
        %v6233 = vpop.permute.xlu0 %6232
        %6234 = vrot.lane.b32.xlu0 %v6209, 96
        %v6235 = vpop.permute.xlu0 %6234
        %6236 = vrot.lane.b32.xlu0 %v6216, 96
        %v6237 = vpop.permute.xlu0 %6236
        %6238 = vrot.lane.b32.xlu0 %v6223, 96
        %v6239 = vpop.permute.xlu0 %6238
        %vm6248 = vcmask 1048320
        %6249 = vst.msk [vmem:[#allocation2] sm:$0xff] %vm6248, %v6225
        %6250 = vst.msk [vmem:[#allocation2 + $0x8] sm:$0xff] %vm6248, %v6227
        %6251 = vst.msk [vmem:[#allocation2 + $0x10] sm:$0xff] %vm6248, %v6229
        %6252 = vst.msk [vmem:[#allocation2 + $0x18] sm:$0xff] %vm6248, %v6231
        %6253 = vst.msk [vmem:[#allocation2 + $0x20] sm:$0xff] %vm6248, %v6233
        %6254 = vst.msk [vmem:[#allocation2 + $0x28] sm:$0xff] %vm6248, %v6235
        %6255 = vst.msk [vmem:[#allocation2 + $0x30] sm:$0xff] %vm6248, %v6237
        %6256 = vst.msk [vmem:[#allocation2 + $0x38] sm:$0xff] %vm6248, %v6239
        %v6257 = vld [vmem:[#allocation2] sm:$0xff]
        %v6258 = vld [vmem:[#allocation2 + $0x8] sm:$0xff]
        %v6259 = vld [vmem:[#allocation2 + $0x10] sm:$0xff]
        %v6260 = vld [vmem:[#allocation2 + $0x18] sm:$0xff]
        %v6261 = vld [vmem:[#allocation2 + $0x20] sm:$0xff]
        %v6262 = vld [vmem:[#allocation2 + $0x28] sm:$0xff]
        %v6263 = vld [vmem:[#allocation2 + $0x30] sm:$0xff]
        %v6264 = vld [vmem:[#allocation2 + $0x38] sm:$0xff]
        %v6265 = vpack.c.bf16 %v6258, %v6257
        %v6266 = vpack.c.bf16 %v6260, %v6259
        %v6267 = vpack.c.bf16 %v6262, %v6261
        %v6268 = vpack.c.bf16 %v6264, %v6263
        %v6269 = vld [vmem:[%s23] sm:$0xf]
        %v6270 = vld [vmem:[%s23 + $0x4] sm:$0xf]
        %v6271 = vld [vmem:[%s23 + $0x8] sm:$0xf]
        %v6272 = vld [vmem:[%s23 + $0xc] sm:$0xf]
        %v6273 = vld [vmem:[%s23 + $0x10] sm:$0xf]
        %v6274 = vld [vmem:[%s23 + $0x14] sm:$0xf]
        %v6275 = vld [vmem:[%s23 + $0x18] sm:$0xf]
        %v6276 = vld [vmem:[%s23 + $0x1c] sm:$0xf]
        %v6277 = vld [vmem:[%s23 + $0x20] sm:$0xf]
        %v6278 = vld [vmem:[%s23 + $0x24] sm:$0xf]
        %v6279 = vld [vmem:[%s23 + $0x28] sm:$0xf]
        %v6280 = vld [vmem:[%s23 + $0x2c] sm:$0xf]
        %v6281 = vld [vmem:[%s23 + $0x30] sm:$0xf]
        %v6282 = vld [vmem:[%s23 + $0x34] sm:$0xf]
        %v6283 = vld [vmem:[%s23 + $0x38] sm:$0xf]
        %v6284 = vld [vmem:[%s23 + $0x3c] sm:$0xf]
        %v6285 = vld [vmem:[%s26 + $0xf] sm:$0x1]
        %v6286 = vperm.slane %v6285, 0
        %v6303 = vunpack.c.l.b16 %v6269
        %v6304 = vunpack.c.l.b16 %v6270
        %v6305 = vunpack.c.l.b16 %v6271
        %v6306 = vunpack.c.l.b16 %v6272
        %v6307 = vunpack.c.l.b16 %v6273
        %v6308 = vunpack.c.l.b16 %v6274
        %v6309 = vunpack.c.l.b16 %v6275
        %v6310 = vunpack.c.l.b16 %v6276
        %v6311 = vunpack.c.l.b16 %v6277
        %v6312 = vunpack.c.l.b16 %v6278
        %v6313 = vunpack.c.l.b16 %v6279
        %v6314 = vunpack.c.l.b16 %v6280
        %v6315 = vunpack.c.l.b16 %v6281
        %v6316 = vunpack.c.l.b16 %v6282
        %v6317 = vunpack.c.l.b16 %v6283
        %v6318 = vunpack.c.l.b16 %v6284
        %v6319 = vpack.c.b16 %v6304, %v6303
        %v6320 = vpack.c.b16 %v6306, %v6305
        %v6321 = vpack.c.b16 %v6308, %v6307
        %v6322 = vpack.c.b16 %v6310, %v6309
        %v6323 = vpack.c.b16 %v6312, %v6311
        %v6324 = vpack.c.b16 %v6314, %v6313
        %v6325 = vpack.c.b16 %v6316, %v6315
        %v6326 = vpack.c.b16 %v6318, %v6317
        %6335 = vmatpush.bf16.msra.mxu0 %v6326
        %6336 = vmatpush.bf16.msra.mxu0 %v6325
        %6337 = vmatpush.bf16.msra.mxu0 %v6324
        %6338 = vmatpush.bf16.msra.mxu0 %v6323
        %6339 = vmatpush.bf16.msra.mxu0 %v6322
        %6340 = vmatpush.bf16.msra.mxu0 %v6321
        %6341 = vmatpush.bf16.msra.mxu0 %v6320
        %6342 = vmatpush.bf16.msra.mxu0 %v6319
        %6343 = vmatmul.bf16.gmra.mxu0 %v6265
        %v6344 = vpop.f32.mrf.mxu0
        %v6345 = vadd.f32 %v6286, %v6344
        %v6346 = vpop.f32.mrf.mxu0
        %v6347 = vadd.f32 %v6286, %v6346
        %6348 = vmatmul.bf16.gmra.mxu0 %v6266
        %v6349 = vpop.f32.mrf.mxu0
        %v6350 = vadd.f32 %v6286, %v6349
        %v6351 = vpop.f32.mrf.mxu0
        %v6352 = vadd.f32 %v6286, %v6351
        %6353 = vmatmul.bf16.gmra.mxu0 %v6267
        %v6354 = vpop.f32.mrf.mxu0
        %v6355 = vadd.f32 %v6286, %v6354
        %v6356 = vpop.f32.mrf.mxu0
        %v6357 = vadd.f32 %v6286, %v6356
        %6358 = vmatmul.bf16.gmra.mxu0 %v6268
        %v6359 = vpop.f32.mrf.mxu0
        %v6360 = vadd.f32 %v6286, %v6359
        %v6361 = vpop.f32.mrf.mxu0
        %v6362 = vadd.f32 %v6286, %v6361
        %6363 = vdwg.mxu0
        %v6364 = vmax.f32 %v6345, 0.0
        %v6365 = vmax.f32 %v6347, 0.0
        %v6366 = vmax.f32 %v6350, 0.0
        %v6367 = vmax.f32 %v6352, 0.0
        %v6368 = vmax.f32 %v6355, 0.0
        %v6369 = vmax.f32 %v6357, 0.0
        %v6370 = vmax.f32 %v6360, 0.0
        %v6371 = vmax.f32 %v6362, 0.0
        %v6372 = vsel %vm4034, %v6364, -inf
        %v6373 = vrot.slane %v6372, 4
        %v6374 = vmax.f32 %v6372, %v6373
        %v6375 = vrot.slane %v6374, 2
        %v6376 = vmax.f32 %v6374, %v6375
        %v6377 = vrot.slane %v6376, 1
        %v6378 = vmax.f32 %v6376, %v6377
        %v6379 = vsel %vm4034, %v6365, -inf
        %v6380 = vrot.slane %v6379, 4
        %v6381 = vmax.f32 %v6379, %v6380
        %v6382 = vrot.slane %v6381, 2
        %v6383 = vmax.f32 %v6381, %v6382
        %v6384 = vrot.slane %v6383, 1
        %v6385 = vmax.f32 %v6383, %v6384
        %v6386 = vsel %vm4034, %v6366, -inf
        %v6387 = vrot.slane %v6386, 4
        %v6388 = vmax.f32 %v6386, %v6387
        %v6389 = vrot.slane %v6388, 2
        %v6390 = vmax.f32 %v6388, %v6389
        %v6391 = vrot.slane %v6390, 1
        %v6392 = vmax.f32 %v6390, %v6391
        %v6393 = vsel %vm4034, %v6367, -inf
        %v6394 = vrot.slane %v6393, 4
        %v6395 = vmax.f32 %v6393, %v6394
        %v6396 = vrot.slane %v6395, 2
        %v6397 = vmax.f32 %v6395, %v6396
        %v6398 = vrot.slane %v6397, 1
        %v6399 = vmax.f32 %v6397, %v6398
        %v6400 = vsel %vm4034, %v6368, -inf
        %v6401 = vrot.slane %v6400, 4
        %v6402 = vmax.f32 %v6400, %v6401
        %v6403 = vrot.slane %v6402, 2
        %v6404 = vmax.f32 %v6402, %v6403
        %v6405 = vrot.slane %v6404, 1
        %v6406 = vmax.f32 %v6404, %v6405
        %v6407 = vsel %vm4034, %v6369, -inf
        %v6408 = vrot.slane %v6407, 4
        %v6409 = vmax.f32 %v6407, %v6408
        %v6410 = vrot.slane %v6409, 2
        %v6411 = vmax.f32 %v6409, %v6410
        %v6412 = vrot.slane %v6411, 1
        %v6413 = vmax.f32 %v6411, %v6412
        %v6414 = vsel %vm4034, %v6370, -inf
        %v6415 = vrot.slane %v6414, 4
        %v6416 = vmax.f32 %v6414, %v6415
        %v6417 = vrot.slane %v6416, 2
        %v6418 = vmax.f32 %v6416, %v6417
        %v6419 = vrot.slane %v6418, 1
        %v6420 = vmax.f32 %v6418, %v6419
        %v6421 = vsel %vm4034, %v6371, -inf
        %v6422 = vrot.slane %v6421, 4
        %v6423 = vmax.f32 %v6421, %v6422
        %v6424 = vrot.slane %v6423, 2
        %v6425 = vmax.f32 %v6423, %v6424
        %v6426 = vrot.slane %v6425, 1
        %v6427 = vmax.f32 %v6425, %v6426
        %6428 = vst.msk [vmem:[#allocation3] sm:$0xff] %vm4034, %v1021
        %6430 = vrot.lane.b32.xlu0 %v1819, 32
        %v6431 = vpop.permute.xlu0 %6430
        %6433 = vst.msk [vmem:[#allocation3] sm:$0xff] %vm5935, %v6431
        %v6442 = vsel %vm6008, %v6385, %v6378
        %v6443 = vsel %vm6010, %v6392, %v6442
        %v6444 = vsel %vm6012, %v6399, %v6443
        %v6445 = vsel %vm6014, %v6406, %v6444
        %v6446 = vsel %vm6016, %v6413, %v6445
        %v6447 = vsel %vm6018, %v6420, %v6446
        %v6448 = vsel %vm6020, %v6427, %v6447
        %6449 = vrot.lane.b32.xlu0 %v6448, 64
        %v6450 = vpop.permute.xlu0 %6449
        %6452 = vst.msk [vmem:[#allocation3] sm:$0xff] %vm6095, %v6450
        %v6453 = vld [vmem:[#allocation3] sm:$0xff]
        %v6454 = vpack.c.bf16 %v6453, %v6453
        %v6455 = vld [vmem:[%s24] sm:$0xf]
        %v6456 = vld [vmem:[%s24 + $0x4] sm:$0xf]
        %v6457 = vld [vmem:[%s24 + $0x8] sm:$0xf]
        %v6458 = vld [vmem:[%s24 + $0xc] sm:$0xf]
        %v6459 = vld [vmem:[%s24 + $0x10] sm:$0xf]
        %v6460 = vld [vmem:[%s24 + $0x14] sm:$0xf]
        %v6461 = vld [vmem:[%s24 + $0x18] sm:$0xf]
        %v6462 = vld [vmem:[%s24 + $0x1c] sm:$0xf]
        %v6463 = vld [vmem:[%s24 + $0x20] sm:$0xf]
        %v6464 = vld [vmem:[%s24 + $0x24] sm:$0xf]
        %v6465 = vld [vmem:[%s24 + $0x28] sm:$0xf]
        %v6466 = vld [vmem:[%s24 + $0x2c] sm:$0xf]
        %v6467 = vld [vmem:[%s26 + $0x10] sm:$0x1]
        %v6468 = vperm.slane %v6467, 0
        %v6481 = vunpack.c.l.b16 %v6455
        %v6482 = vunpack.c.l.b16 %v6456
        %v6483 = vunpack.c.l.b16 %v6457
        %v6484 = vunpack.c.l.b16 %v6458
        %v6485 = vunpack.c.l.b16 %v6459
        %v6486 = vunpack.c.l.b16 %v6460
        %v6487 = vunpack.c.l.b16 %v6461
        %v6488 = vunpack.c.l.b16 %v6462
        %v6489 = vunpack.c.l.b16 %v6463
        %v6490 = vunpack.c.l.b16 %v6464
        %v6491 = vunpack.c.l.b16 %v6465
        %v6492 = vunpack.c.l.b16 %v6466
        %v6493 = vpack.c.b16 %v6482, %v6481
        %v6494 = vpack.c.b16 %v6484, %v6483
        %v6495 = vpack.c.b16 %v6486, %v6485
        %v6496 = vpack.c.b16 %v6488, %v6487
        %v6497 = vpack.c.b16 %v6490, %v6489
        %v6498 = vpack.c.b16 %v6492, %v6491
        %vm6505 = vcmask 785408
        %v6507 = vsel %vm6505, %v6454, 0
        %6509 = vmatpush.bf16.msra.mxu0 0
        %6510 = vmatpush.bf16.msra.mxu0 0
        %6511 = vmatpush.bf16.msra.mxu0 %v6498
        %6512 = vmatpush.bf16.msra.mxu0 %v6497
        %6513 = vmatpush.bf16.msra.mxu0 %v6496
        %6514 = vmatpush.bf16.msra.mxu0 %v6495
        %6515 = vmatpush.bf16.msra.mxu0 %v6494
        %6516 = vmatpush.bf16.msra.mxu0 %v6493
        %6517 = vmatmul.bf16.gmra.mxu0 %v6507
        %v6518 = vpop.f32.mrf.mxu0
        %v6519 = vadd.f32 %v6468, %v6518
        %v6520 = vpop.f32.mrf.mxu0
        %6521 = vdwg.mxu0
        %v6522 = vmax.f32 %v6519, 0.0
        %v6523 = vpack.c.bf16 %v6522, %v6522
        %v6524 = vld [vmem:[%s25] sm:$0xf]
        %v6525 = vld [vmem:[%s25 + $0x4] sm:$0xf]
        %v6526 = vld [vmem:[%s25 + $0x8] sm:$0xf]
        %v6527 = vld [vmem:[%s25 + $0xc] sm:$0xf]
        %v6528 = vld [vmem:[%s26 + $0x11] sm:$0x1]
        %v6529 = vperm.slane %v6528, 0
        %v6534 = vunpack.c.l.b16 %v6524
        %v6535 = vunpack.c.l.b16 %v6525
        %v6536 = vunpack.c.l.b16 %v6526
        %v6537 = vunpack.c.l.b16 %v6527
        %v6538 = vpack.c.b16 %v6535, %v6534
        %v6539 = vpack.c.b16 %v6537, %v6536
        %v6543 = vsel %vm4034, %v6523, 0
        %6545 = vmatpush.bf16.msra.mxu0 0
        %6546 = vmatpush.bf16.msra.mxu0 0
        %6547 = vmatpush.bf16.msra.mxu0 0
        %6548 = vmatpush.bf16.msra.mxu0 0
        %6549 = vmatpush.bf16.msra.mxu0 0
        %6550 = vmatpush.bf16.msra.mxu0 0
        %6551 = vmatpush.bf16.msra.mxu0 %v6539
        %6552 = vmatpush.bf16.msra.mxu0 %v6538
        %6553 = vmatmul.bf16.gmra.mxu0 %v6543
        %v6554 = vpop.f32.mrf.mxu0
        %v6555 = vadd.f32 %v6529, %v6554
        %v6556 = vpop.f32.mrf.mxu0
        %6557 = vdwg.mxu0
        %v6558 = vmax.f32 %v6555, 0.0
        %6559 = vst.msk [vmem:[%s920] sm:$0xff] %vm4034, %v6558
        %s6560 = sand.u32 %s656, 1
        %s6561 = scalar_lea.sflag [#allocation5], %s6560
        %s6562 = sand.u32 %s656, 1
        %s6563 = smul.addr %s6562, 8
        %s6564 = scalar_lea.vmem [#allocation4], %s6563
        // Predicated region
        $region129: #{encoder_actor_forward.1} parent=127 // pred_check
          %p6565 = pneg %p666
        $region130: #{encoder_actor_forward.1} parent=127 // pred_check_branch
          %6567 = sbr.rel (%p6565) target = $region132
        $region131: #{encoder_actor_forward.1} parent=127 // pred_region
          %6569 = vsyncadd %s6561, 0
          %s6570 = smul.addr %s41, 8
          %s6571 = scalar_lea.hbm %s27, %s6570
          %s6573 = sshll.u32 %s6564, 4
          %s6574 = int_to_ptr.vmem [resolvable:$true] %s6573
          %s6575 = sshll.u32 %s6571, 4
          %s6576 = int_to_ptr.hbm [resolvable:$true] %s6575
          %6578 = dma.vmem_to_hbm [thread:$0]  %s6574, 128, %s6576, %s6561
        $region132: #{encoder_actor_forward.1} parent=127 // pred_fallthru
          _
      $region128: #{encoder_actor_forward.1} parent=5 // pred_fallthru
        _
      %p6579 = scmp.le.s32.totalorder 2, %s36
      // Predicated region
      $region133: #{encoder_actor_forward.1} parent=5 // pred_check
        %p6580 = pneg %p6579
      $region134: #{encoder_actor_forward.1} parent=5 // pred_check_branch
        %6582 = sbr.rel (%p6580) target = $region136
      $region135: #{encoder_actor_forward.1} parent=5 // pred_region
        %s6583 = ssub.s32 %s36, 2
        // Predicated region
        $region137: #{encoder_actor_forward.1} parent=135 // pred_check
          %p6584 = pneg %p672
        $region138: #{encoder_actor_forward.1} parent=135 // pred_check_branch
          %6586 = sbr.rel (%p6584) target = $region140
        $region139: #{encoder_actor_forward.1} parent=135 // pred_region
          %s6587 = sand.u32 %s657, 1
          %s6588 = scalar_lea.sflag [#allocation5], %s6587
          %s6589 = sand.u32 %s657, 1
          %s6590 = smul.addr %s6589, 8
          %s6591 = scalar_lea.vmem [#allocation4], %s6590
          %6593 = dma.done %s6588, 128
        $region140: #{encoder_actor_forward.1} parent=135 // pred_fallthru
          _
      $region136: #{encoder_actor_forward.1} parent=5 // pred_fallthru
        _
    $region6: #{encoder_actor_forward.1} parent=1 // loop_footer
      %s40 = sadd.s32 1, %s36
    $region7: #{encoder_actor_forward.1} parent=1 // loop_footer_branch
      %35 = sbr.rel target = $region3
    $region8: #{encoder_actor_forward.1} parent=1 // loop_exit
      _
    %6594 = vsyncpa [#allocation5], 1
    %s6595 = scalar_lea.sflag [#allocation5], 1
    %6596 = vsyncpa %s6595, 1

</llo_original>
